<compile_context>
chip_gen: v7x
topology: tpu7x:2x2x1
jax: 0.10.0
libtpu: 0.0.40
codegen_flags: <defaults>
</compile_context>

<pallas_src>
import math
from functools import partial

import jax
import jax.numpy as jnp
from jax.experimental import pallas as pl
from jax.experimental.pallas import tpu as pltpu

# Operand dtype fed to the MXU (accumulation is always f32). Set to
# jnp.float32 for bit-closer-to-torch parity checks.
MXU_DTYPE = jnp.bfloat16
VMEM_LIMIT = 32 * 1024 * 1024


# ----------------------------------------------------------------------------
# In-kernel math helpers (shared with the jnp reference)
# ----------------------------------------------------------------------------
def _layernorm(x, g, b, eps=1e-5):
    mu = jnp.mean(x, axis=-1, keepdims=True)
    xc = x - mu
    var = jnp.mean(xc * xc, axis=-1, keepdims=True)
    return xc * jax.lax.rsqrt(var + eps) * g + b


def _gelu_tanh(x):
    # tanh-approximate GELU (tanh hits the EUP slot; |diff| vs exact erf ~1e-3,
    # well inside the test tolerance).
    c = 0.7978845608028654  # sqrt(2/pi)
    return 0.5 * x * (1.0 + jnp.tanh(c * (x + 0.044715 * x * x * x)))


def _pick_tile(M, max_tile=512, min_steps=4):
    # Largest row tile that keeps >= min_steps grid steps (>=2 per TC on v7x).
    for t in (512, 256, 128, 64, 32, 16, 8):
        if t <= max_tile and M % t == 0 and M // t >= min_steps:
            return t
    for t in (512, 256, 128, 64, 32, 16, 8):
        if M % t == 0:
            return t
    return M


def _pick_tq(N, B, min_total_steps=4):
    for t in (512, 256, 128, 64, 32, 16, 8):
        if N % t == 0 and B * (N // t) >= min_total_steps:
            return t
    return N


# ----------------------------------------------------------------------------
# Kernel 1: fused LayerNorm + QKV projection (output kept in MXU dtype)
# ----------------------------------------------------------------------------
def _qkv_kernel(x_ref, g_ref, b_ref, w_ref, o_ref):
    xn = _layernorm(x_ref[...], g_ref[...], b_ref[...])
    o_ref[...] = jnp.dot(xn.astype(w_ref.dtype), w_ref[...],
                         preferred_element_type=jnp.float32).astype(o_ref.dtype)


def qkv_projection(x2d, gamma, beta, w_qkv):
    M, K = x2d.shape
    _, N3 = w_qkv.shape
    tm = _pick_tile(M)
    return pl.pallas_call(
        _qkv_kernel,
        out_shape=jax.ShapeDtypeStruct((M, N3), w_qkv.dtype),
        grid=(M // tm,),
        in_specs=[pl.BlockSpec((tm, K), lambda i: (i, 0)),
                  pl.BlockSpec((1, K), lambda i: (0, 0)),
                  pl.BlockSpec((1, K), lambda i: (0, 0)),
                  pl.BlockSpec((K, N3), lambda i: (0, 0))],
        out_specs=pl.BlockSpec((tm, N3), lambda i: (i, 0)),
        compiler_params=pltpu.CompilerParams(
            dimension_semantics=("parallel",), vmem_limit_bytes=VMEM_LIMIT),
    )(x2d, gamma, beta, w_qkv)


# ----------------------------------------------------------------------------
# Kernel 2: multi-head attention + fused out-projection + bias + residual
# ----------------------------------------------------------------------------
def _attn_kernel(*refs, heads, dim_head, project_out):
    it = iter(refs)
    q_ref, k_ref, v_ref = next(it), next(it), next(it)
    w_out_ref = next(it) if project_out else None
    b_out_ref = next(it) if project_out else None
    res_ref = next(it)
    o_ref = next(it)

    q = q_ref[0]                         # (tq, inner)  MXU dtype (scale folded in)
    k = k_ref[0]                         # (N,  inner)
    v = v_ref[0]                         # (N,  inner)
    acc = res_ref[0]                     # (tq, dim) f32 residual
    if project_out:
        w_out = w_out_ref[...]           # (inner, dim) MXU dtype
        acc = acc + b_out_ref[...]

    for h in range(heads):               # static unroll over heads
        sl = slice(h * dim_head, (h + 1) * dim_head)
        s = jax.lax.dot_general(
            q[:, sl], k[:, sl],
            dimension_numbers=(((1,), (1,)), ((), ())),
            preferred_element_type=jnp.float32)                    # (tq, N)
        s = s - jnp.max(s, axis=-1, keepdims=True)
        p = jnp.exp(s)
        l = jnp.sum(p, axis=-1, keepdims=True)
        oh = jnp.dot(p.astype(v.dtype), v[:, sl],
                     preferred_element_type=jnp.float32)            # (tq, dh)
        oh = oh * pl.reciprocal(l, approx=True)   # deferred normalisation (EUP)
        if project_out:
            # project this head's output with its row slice of w_out and
            # accumulate -> no concatenate, no attn_out HBM round trip.
            acc = acc + jnp.dot(oh.astype(w_out.dtype), w_out[sl, :],
                                preferred_element_type=jnp.float32)
        else:
            acc = acc + oh               # to_out == Identity (heads==1, dh==dim)
    o_ref[0] = acc.astype(o_ref.dtype)


def attention_block(qkv, x_res, w_out, b_out, *, heads, dim_head):
    """qkv: (B, N, 3*inner) [q|k|v]; x_res: (B, N, dim) residual -> (B, N, dim)."""
    B, N, three_inner = qkv.shape
    inner = heads * dim_head
    assert three_inner == 3 * inner
    D = x_res.shape[-1]
    project_out = w_out is not None
    tq = _pick_tq(N, B)

    # qkv is passed three times with different BlockSpecs: the q stream is
    # q-tiled, the k/v streams are full-length and only re-fetched per batch.
    in_specs = [
        pl.BlockSpec((1, tq, inner), lambda b, i: (b, i, 0)),
        pl.BlockSpec((1, N, inner), lambda b, i: (b, 0, 1)),
        pl.BlockSpec((1, N, inner), lambda b, i: (b, 0, 2)),
    ]
    args = [qkv, qkv, qkv]
    if project_out:
        in_specs += [pl.BlockSpec((inner, D), lambda b, i: (0, 0)),
                     pl.BlockSpec((1, D), lambda b, i: (0, 0))]
        args += [w_out, b_out]
    in_specs.append(pl.BlockSpec((1, tq, D), lambda b, i: (b, i, 0)))
    args.append(x_res)

    kern = partial(_attn_kernel, heads=heads, dim_head=dim_head,
                   project_out=project_out)
    return pl.pallas_call(
        kern,
        out_shape=jax.ShapeDtypeStruct((B, N, D), jnp.float32),
        grid=(B, N // tq),
        in_specs=in_specs,
        out_specs=pl.BlockSpec((1, tq, D), lambda b, i: (b, i, 0)),
        compiler_params=pltpu.CompilerParams(
            dimension_semantics=("parallel", "parallel"),
            vmem_limit_bytes=VMEM_LIMIT),
    )(*args)


# ----------------------------------------------------------------------------
# Kernel 3: fused FeedForward block (LN -> W1+b1 -> GELU -> W2+b2 -> +residual)
# ----------------------------------------------------------------------------
def _ff_kernel(x_ref, g_ref, b_ref, w1_ref, b1_ref, w2_ref, b2_ref, o_ref):
    x = x_ref[...]
    xn = _layernorm(x, g_ref[...], b_ref[...])
    h = jnp.dot(xn.astype(w1_ref.dtype), w1_ref[...],
                preferred_element_type=jnp.float32) + b1_ref[...]
    h = _gelu_tanh(h)
    y = jnp.dot(h.astype(w2_ref.dtype), w2_ref[...],
                preferred_element_type=jnp.float32) + b2_ref[...]
    o_ref[...] = (y + x).astype(o_ref.dtype)


def ff_block(x2d, gamma, beta, w1, b1, w2, b2):
    M, K = x2d.shape
    _, H = w1.shape
    tm = _pick_tile(M)
    # TODO(synk): for very large dim/mlp_dim, tile the K/N axes of the weights.
    return pl.pallas_call(
        _ff_kernel,
        out_shape=jax.ShapeDtypeStruct((M, K), jnp.float32),
        grid=(M // tm,),
        in_specs=[pl.BlockSpec((tm, K), lambda i: (i, 0)),
                  pl.BlockSpec((1, K), lambda i: (0, 0)),
                  pl.BlockSpec((1, K), lambda i: (0, 0)),
                  pl.BlockSpec((K, H), lambda i: (0, 0)),
                  pl.BlockSpec((1, H), lambda i: (0, 0)),
                  pl.BlockSpec((H, K), lambda i: (0, 0)),
                  pl.BlockSpec((1, K), lambda i: (0, 0))],
        out_specs=pl.BlockSpec((tm, K), lambda i: (i, 0)),
        compiler_params=pltpu.CompilerParams(
            dimension_semantics=("parallel",), vmem_limit_bytes=VMEM_LIMIT),
    )(x2d, gamma, beta, w1, b1, w2, b2)


# ----------------------------------------------------------------------------
# Parameters & forward
# ----------------------------------------------------------------------------
def _linear_w(key, fan_in, fan_out):
    bound = 1.0 / math.sqrt(fan_in)
    return jax.random.uniform(key, (fan_in, fan_out), jnp.float32, -bound, bound)


def init_params(key, dim, depth, heads, dim_head, mlp_dim):
    """torch-like f32 parameters (nn.Linear default init)."""
    inner = heads * dim_head
    project_out = not (heads == 1 and dim_head == dim)
    layers = []
    for kl in jax.random.split(key, depth):
        ks = jax.random.split(kl, 4)
        layers.append({
            "ln1_g": jnp.ones((1, dim), jnp.float32),
            "ln1_b": jnp.zeros((1, dim), jnp.float32),
            "w_qkv": _linear_w(ks[0], dim, 3 * inner),           # to_qkv (bias=False)
            "w_out": _linear_w(ks[1], inner, dim) if project_out else None,
            "b_out": jnp.zeros((1, dim), jnp.float32) if project_out else None,
            "ln2_g": jnp.ones((1, dim), jnp.float32),
            "ln2_b": jnp.zeros((1, dim), jnp.float32),
            "w_ff1": _linear_w(ks[2], dim, mlp_dim),
            "b_ff1": jnp.zeros((1, mlp_dim), jnp.float32),
            "w_ff2": _linear_w(ks[3], mlp_dim, dim),
            "b_ff2": jnp.zeros((1, dim), jnp.float32),
        })
    return {"layers": layers}


def prepare_params(params, heads, dim_head):
    """Pre-cast weights to MXU dtype ONCE and fold the score scale into the
    q columns of w_qkv (mathematically identical to scaling QK^T)."""
    inner = heads * dim_head
    scale = dim_head ** -0.5
    layers = []
    for layer in params["layers"]:
        new = dict(layer)
        new["w_qkv"] = layer["w_qkv"].at[:, :inner].multiply(scale).astype(MXU_DTYPE)
        new["w_out"] = (None if layer["w_out"] is None
                        else layer["w_out"].astype(MXU_DTYPE))
        new["w_ff1"] = layer["w_ff1"].astype(MXU_DTYPE)
        new["w_ff2"] = layer["w_ff2"].astype(MXU_DTYPE)
        layers.append(new)
    return {"layers": layers}


def transformer_forward(params, x, pos_embedding=None, *, heads, dim_head):
    B, N, D = x.shape
    inner = heads * dim_head
    for layer in params["layers"]:
        if pos_embedding is not None:
            x = x + pos_embedding                        # tiny add: leave to XLA
        x2d = x.reshape(B * N, D)

        # attn branch: LN fused into QKV proj; out-proj + residual fused into attn
        qkv = qkv_projection(x2d, layer["ln1_g"], layer["ln1_b"], layer["w_qkv"])
        x = attention_block(qkv.reshape(B, N, 3 * inner), x,
                            layer["w_out"], layer["b_out"],
                            heads=heads, dim_head=dim_head)

        # ff branch: one fused kernel (hidden never leaves VMEM)
        x2d = ff_block(x.reshape(B * N, D),
                       layer["ln2_g"], layer["ln2_b"],
                       layer["w_ff1"], layer["b_ff1"],
                       layer["w_ff2"], layer["b_ff2"])
        x = x2d.reshape(B, N, D)
    return x


# ----------------------------------------------------------------------------
# Pure-jnp reference (raw f32 params; mirrors the MXU bf16 staging)
# ----------------------------------------------------------------------------
def _mm_ref(x, w, bias=None):
    y = jnp.dot(x.astype(MXU_DTYPE), w.astype(MXU_DTYPE),
                preferred_element_type=jnp.float32)
    return y if bias is None else y + bias


def reference_forward(params, x, pos_embedding, heads, dim_head):
    B, N, D = x.shape
    inner = heads * dim_head
    scale = dim_head ** -0.5
    for layer in params["layers"]:
        if pos_embedding is not None:
            x = x + pos_embedding
        x2d = x.reshape(B * N, D)
        xn = _layernorm(x2d, layer["ln1_g"], layer["ln1_b"])
        qkv = _mm_ref(xn, layer["w_qkv"]).reshape(B, N, 3 * inner)
        q, k, v = qkv[..., :inner], qkv[..., inner:2 * inner], qkv[..., 2 * inner:]
        qh = q.reshape(B, N, heads, dim_head).transpose(0, 2, 1, 3)
        kh = k.reshape(B, N, heads, dim_head).transpose(0, 2, 1, 3)
        vh = v.reshape(B, N, heads, dim_head).transpose(0, 2, 1, 3)
        s = jnp.einsum("bhnd,bhmd->bhnm", qh.astype(MXU_DTYPE), kh.astype(MXU_DTYPE),
                       preferred_element_type=jnp.float32) * scale
        s = s - jnp.max(s, axis=-1, keepdims=True)
        p = jnp.exp(s)
        p = p / jnp.sum(p, axis=-1, keepdims=True)
        oh = jnp.einsum("bhnm,bhmd->bhnd", p.astype(MXU_DTYPE), vh.astype(MXU_DTYPE),
                        preferred_element_type=jnp.float32)
        attn_out = oh.transpose(0, 2, 1, 3).reshape(B * N, inner)
        if layer["w_out"] is not None:
            x2d = _mm_ref(attn_out, layer["w_out"], bias=layer["b_out"]) + x2d
        else:
            x2d = attn_out + x2d
        xn2 = _layernorm(x2d, layer["ln2_g"], layer["ln2_b"])
        h = jax.nn.gelu(_mm_ref(xn2, layer["w_ff1"], bias=layer["b_ff1"]),
                        approximate=True)
        x2d = _mm_ref(h, layer["w_ff2"], bias=layer["b_ff2"]) + x2d
        x = x2d.reshape(B, N, D)
    return x


# ----------------------------------------------------------------------------
if __name__ == "__main__":
    DIM, DEPTH, HEADS, DIM_HEAD, MLP_DIM = 128, 2, 4, 32, 256
    BATCH, SEQ = 2, 256                      # e.g. a flattened 16x16 grid of points

    key = jax.random.PRNGKey(0)
    kx, kpos, kp = jax.random.split(key, 3)
    x = jax.random.normal(kx, (BATCH, SEQ, DIM), dtype=jnp.float32)
    pos = 0.1 * jax.random.normal(kpos, (BATCH, SEQ, DIM), dtype=jnp.float32)

    raw_params = init_params(kp, DIM, DEPTH, HEADS, DIM_HEAD, MLP_DIM)
    params = prepare_params(raw_params, HEADS, DIM_HEAD)    # bf16 weights, scale folded

    fwd = jax.jit(transformer_forward, static_argnames=("heads", "dim_head"))
    out = fwd(params, x, pos, heads=HEADS, dim_head=DIM_HEAD)
    jax.block_until_ready(out)

    ref = reference_forward(raw_params, x, pos, HEADS, DIM_HEAD)
    err = float(jnp.max(jnp.abs(out - ref)))

    assert out.shape == (BATCH, SEQ, DIM), out.shape
    assert bool(jnp.all(jnp.isfinite(out)))
    assert err < 5e-2, f"max abs err vs reference: {err}"
    print("KERNEL_OK")
</pallas_src>

<mosaic_0001>
module attributes {stable_mosaic.version = 11 : i64} {
  func.func @_ff_kernel(%arg0: i32, %arg1: memref<128x128xf32, #tpu.memory_space<vmem>>, %arg2: memref<1x128xf32, #tpu.memory_space<vmem>>, %arg3: memref<1x128xf32, #tpu.memory_space<vmem>>, %arg4: memref<128x256xbf16, #tpu.memory_space<vmem>>, %arg5: memref<1x256xf32, #tpu.memory_space<vmem>>, %arg6: memref<256x128xbf16, #tpu.memory_space<vmem>>, %arg7: memref<1x128xf32, #tpu.memory_space<vmem>>, %arg8: memref<128x128xf32, #tpu.memory_space<vmem>>) attributes {dimension_semantics = [#tpu.dimension_semantics<parallel>], iteration_bounds = array<i64: 4>, scalar_prefetch = 0 : i64, scratch_operands = 0 : i64, tpu.core_type = #tpu.core_type<tc>, window_params = [{transform_indices = @transform_0, window_bounds = array<i64: 128, 128>}, {pipeline_mode = #tpu.pipeline_mode<synchronous>, transform_indices = @transform_1, window_bounds = array<i64: 1, 128>}, {pipeline_mode = #tpu.pipeline_mode<synchronous>, transform_indices = @transform_2, window_bounds = array<i64: 1, 128>}, {pipeline_mode = #tpu.pipeline_mode<synchronous>, transform_indices = @transform_3, window_bounds = array<i64: 128, 256>}, {pipeline_mode = #tpu.pipeline_mode<synchronous>, transform_indices = @transform_4, window_bounds = array<i64: 1, 256>}, {pipeline_mode = #tpu.pipeline_mode<synchronous>, transform_indices = @transform_5, window_bounds = array<i64: 256, 128>}, {pipeline_mode = #tpu.pipeline_mode<synchronous>, transform_indices = @transform_6, window_bounds = array<i64: 1, 128>}, {transform_indices = @transform_7, window_bounds = array<i64: 128, 128>}]} {
    %c0 = arith.constant 0 : index
    %c0_0 = arith.constant 0 : index
    %0 = vector.load %arg1[%c0, %c0_0] : memref<128x128xf32, #tpu.memory_space<vmem>>, vector<128x128xf32>
    %c0_1 = arith.constant 0 : index
    %c0_2 = arith.constant 0 : index
    %1 = vector.load %arg2[%c0_1, %c0_2] : memref<1x128xf32, #tpu.memory_space<vmem>>, vector<1x128xf32>
    %c0_3 = arith.constant 0 : index
    %c0_4 = arith.constant 0 : index
    %2 = vector.load %arg3[%c0_3, %c0_4] : memref<1x128xf32, #tpu.memory_space<vmem>>, vector<1x128xf32>
    %cst = arith.constant dense<0.000000e+00> : vector<128xf32>
    %3 = vector.multi_reduction <add>, %0, %cst [1] : vector<128x128xf32> to vector<128xf32>
    %4 = vector.shape_cast %3 : vector<128xf32> to vector<128x1xf32>
    %cst_5 = arith.constant 1.280000e+02 : f32
    %5 = vector.broadcast %cst_5 : f32 to vector<128x1xf32>
    %6 = arith.divf %4, %5 : vector<128x1xf32>
    %7 = vector.broadcast %6 : vector<128x1xf32> to vector<128x128xf32>
    %8 = arith.subf %0, %7 : vector<128x128xf32>
    %9 = arith.mulf %8, %8 : vector<128x128xf32>
    %cst_6 = arith.constant dense<0.000000e+00> : vector<128xf32>
    %10 = vector.multi_reduction <add>, %9, %cst_6 [1] : vector<128x128xf32> to vector<128xf32>
    %11 = vector.shape_cast %10 : vector<128xf32> to vector<128x1xf32>
    %cst_7 = arith.constant 1.280000e+02 : f32
    %12 = vector.broadcast %cst_7 : f32 to vector<128x1xf32>
    %13 = arith.divf %11, %12 : vector<128x1xf32>
    %cst_8 = arith.constant 9.99999974E-6 : f32
    %14 = vector.broadcast %cst_8 : f32 to vector<128x1xf32>
    %15 = arith.addf %13, %14 : vector<128x1xf32>
    %16 = math.rsqrt %15 : vector<128x1xf32>
    %17 = vector.broadcast %16 : vector<128x1xf32> to vector<128x128xf32>
    %18 = arith.mulf %8, %17 : vector<128x128xf32>
    %19 = vector.broadcast %1 : vector<1x128xf32> to vector<128x128xf32>
    %20 = arith.mulf %18, %19 : vector<128x128xf32>
    %21 = vector.broadcast %2 : vector<1x128xf32> to vector<128x128xf32>
    %22 = arith.addf %20, %21 : vector<128x128xf32>
    %23 = arith.truncf %22 : vector<128x128xf32> to vector<128x128xbf16>
    %c0_9 = arith.constant 0 : index
    %c0_10 = arith.constant 0 : index
    %24 = vector.load %arg4[%c0_9, %c0_10] : memref<128x256xbf16, #tpu.memory_space<vmem>>, vector<128x256xbf16>
    %cst_11 = arith.constant dense<0.000000e+00> : vector<128x256xf32>
    %25 = tpu.matmul %23, %24, %cst_11 {dimension_numbers = #tpu.dot_dimension_numbers<[1], [0], [0], [1], [0, 0, 1, 1], [], []>} : vector<128x128xbf16>, vector<128x256xbf16>, vector<128x256xf32> -> vector<128x256xf32>
    %c0_12 = arith.constant 0 : index
    %c0_13 = arith.constant 0 : index
    %26 = vector.load %arg5[%c0_12, %c0_13] : memref<1x256xf32, #tpu.memory_space<vmem>>, vector<1x256xf32>
    %27 = vector.broadcast %26 : vector<1x256xf32> to vector<128x256xf32>
    %28 = arith.addf %25, %27 : vector<128x256xf32>
    %cst_14 = arith.constant 5.000000e-01 : f32
    %29 = vector.broadcast %cst_14 : f32 to vector<128x256xf32>
    %30 = arith.mulf %29, %28 : vector<128x256xf32>
    %cst_15 = arith.constant 4.471500e-02 : f32
    %31 = vector.broadcast %cst_15 : f32 to vector<128x256xf32>
    %32 = arith.mulf %31, %28 : vector<128x256xf32>
    %33 = arith.mulf %32, %28 : vector<128x256xf32>
    %34 = arith.mulf %33, %28 : vector<128x256xf32>
    %35 = arith.addf %28, %34 : vector<128x256xf32>
    %cst_16 = arith.constant 0.797884583 : f32
    %36 = vector.broadcast %cst_16 : f32 to vector<128x256xf32>
    %37 = arith.mulf %36, %35 : vector<128x256xf32>
    %38 = math.tanh %37 : vector<128x256xf32>
    %cst_17 = arith.constant 1.000000e+00 : f32
    %39 = vector.broadcast %cst_17 : f32 to vector<128x256xf32>
    %40 = arith.addf %39, %38 : vector<128x256xf32>
    %41 = arith.mulf %30, %40 : vector<128x256xf32>
    %42 = arith.truncf %41 : vector<128x256xf32> to vector<128x256xbf16>
    %c0_18 = arith.constant 0 : index
    %c0_19 = arith.constant 0 : index
    %43 = vector.load %arg6[%c0_18, %c0_19] : memref<256x128xbf16, #tpu.memory_space<vmem>>, vector<256x128xbf16>
    %cst_20 = arith.constant dense<0.000000e+00> : vector<128x128xf32>
    %44 = tpu.matmul %42, %43, %cst_20 {dimension_numbers = #tpu.dot_dimension_numbers<[1], [0], [0], [1], [0, 0, 1, 1], [], []>} : vector<128x256xbf16>, vector<256x128xbf16>, vector<128x128xf32> -> vector<128x128xf32>
    %c0_21 = arith.constant 0 : index
    %c0_22 = arith.constant 0 : index
    %45 = vector.load %arg7[%c0_21, %c0_22] : memref<1x128xf32, #tpu.memory_space<vmem>>, vector<1x128xf32>
    %46 = vector.broadcast %45 : vector<1x128xf32> to vector<128x128xf32>
    %47 = arith.addf %44, %46 : vector<128x128xf32>
    %48 = arith.addf %47, %0 : vector<128x128xf32>
    %c0_23 = arith.constant 0 : index
    %c0_24 = arith.constant 0 : index
    %49 = vector.load %arg8[%c0_23, %c0_24] : memref<128x128xf32, #tpu.memory_space<vmem>>, vector<128x128xf32>
    tpu.vector_store %arg8[%c0_23, %c0_24], %48 {strides = array<i32>} : memref<128x128xf32, #tpu.memory_space<vmem>>, vector<128x128xf32>,
    return
  }
  func.func @transform_0(%arg0: i32) -> (i32, i32) {
    %c0_i32 = arith.constant 0 : i32
    %c0_i32_0 = arith.constant 0 : i32
    return %arg0, %c0_i32 : i32, i32
  }
  func.func @transform_1(%arg0: i32) -> (i32, i32) {
    %c0_i32 = arith.constant 0 : i32
    %c0_i32_0 = arith.constant 0 : i32
    %c0_i32_1 = arith.constant 0 : i32
    return %c0_i32, %c0_i32_0 : i32, i32
  }
  func.func @transform_2(%arg0: i32) -> (i32, i32) {
    %c0_i32 = arith.constant 0 : i32
    %c0_i32_0 = arith.constant 0 : i32
    %c0_i32_1 = arith.constant 0 : i32
    return %c0_i32, %c0_i32_0 : i32, i32
  }
  func.func @transform_3(%arg0: i32) -> (i32, i32) {
    %c0_i32 = arith.constant 0 : i32
    %c0_i32_0 = arith.constant 0 : i32
    %c0_i32_1 = arith.constant 0 : i32
    return %c0_i32, %c0_i32_0 : i32, i32
  }
  func.func @transform_4(%arg0: i32) -> (i32, i32) {
    %c0_i32 = arith.constant 0 : i32
    %c0_i32_0 = arith.constant 0 : i32
    %c0_i32_1 = arith.constant 0 : i32
    return %c0_i32, %c0_i32_0 : i32, i32
  }
  func.func @transform_5(%arg0: i32) -> (i32, i32) {
    %c0_i32 = arith.constant 0 : i32
    %c0_i32_0 = arith.constant 0 : i32
    %c0_i32_1 = arith.constant 0 : i32
    return %c0_i32, %c0_i32_0 : i32, i32
  }
  func.func @transform_6(%arg0: i32) -> (i32, i32) {
    %c0_i32 = arith.constant 0 : i32
    %c0_i32_0 = arith.constant 0 : i32
    %c0_i32_1 = arith.constant 0 : i32
    return %c0_i32, %c0_i32_0 : i32, i32
  }
  func.func @transform_7(%arg0: i32) -> (i32, i32) {
    %c0_i32 = arith.constant 0 : i32
    %c0_i32_0 = arith.constant 0 : i32
    return %arg0, %c0_i32 : i32, i32
  }
}

module attributes {stable_mosaic.version = 11 : i64} {
  func.func @_attn_kernel(%arg0: i32, %arg1: i32, %arg2: memref<1x128x128xbf16, #tpu.memory_space<vmem>>, %arg3: memref<1x256x128xbf16, #tpu.memory_space<vmem>>, %arg4: memref<1x256x128xbf16, #tpu.memory_space<vmem>>, %arg5: memref<128x128xbf16, #tpu.memory_space<vmem>>, %arg6: memref<1x128xf32, #tpu.memory_space<vmem>>, %arg7: memref<1x128x128xf32, #tpu.memory_space<vmem>>, %arg8: memref<1x128x128xf32, #tpu.memory_space<vmem>>) attributes {dimension_semantics = [#tpu.dimension_semantics<parallel>, #tpu.dimension_semantics<parallel>], iteration_bounds = array<i64: 2, 2>, scalar_prefetch = 0 : i64, scratch_operands = 0 : i64, tpu.core_type = #tpu.core_type<tc>, window_params = [{transform_indices = @transform_0, window_bounds = array<i64: 1, 128, 128>}, {transform_indices = @transform_1, window_bounds = array<i64: 1, 256, 128>}, {transform_indices = @transform_2, window_bounds = array<i64: 1, 256, 128>}, {pipeline_mode = #tpu.pipeline_mode<synchronous>, transform_indices = @transform_3, window_bounds = array<i64: 128, 128>}, {pipeline_mode = #tpu.pipeline_mode<synchronous>, transform_indices = @transform_4, window_bounds = array<i64: 1, 128>}, {transform_indices = @transform_5, window_bounds = array<i64: 1, 128, 128>}, {transform_indices = @transform_6, window_bounds = array<i64: 1, 128, 128>}]} {
    %c0 = arith.constant 0 : index
    %c0_0 = arith.constant 0 : index
    %c0_1 = arith.constant 0 : index
    %0 = vector.load %arg2[%c0, %c0_0, %c0_1] : memref<1x128x128xbf16, #tpu.memory_space<vmem>>, vector<1x128x128xbf16>
    %1 = vector.shape_cast %0 : vector<1x128x128xbf16> to vector<128x128xbf16>
    %c0_2 = arith.constant 0 : index
    %c0_3 = arith.constant 0 : index
    %c0_4 = arith.constant 0 : index
    %2 = vector.load %arg3[%c0_2, %c0_3, %c0_4] : memref<1x256x128xbf16, #tpu.memory_space<vmem>>, vector<1x256x128xbf16>
    %3 = vector.shape_cast %2 : vector<1x256x128xbf16> to vector<256x128xbf16>
    %c0_5 = arith.constant 0 : index
    %c0_6 = arith.constant 0 : index
    %c0_7 = arith.constant 0 : index
    %4 = vector.load %arg4[%c0_5, %c0_6, %c0_7] : memref<1x256x128xbf16, #tpu.memory_space<vmem>>, vector<1x256x128xbf16>
    %5 = vector.shape_cast %4 : vector<1x256x128xbf16> to vector<256x128xbf16>
    %c0_8 = arith.constant 0 : index
    %c0_9 = arith.constant 0 : index
    %c0_10 = arith.constant 0 : index
    %6 = vector.load %arg7[%c0_8, %c0_9, %c0_10] : memref<1x128x128xf32, #tpu.memory_space<vmem>>, vector<1x128x128xf32>
    %7 = vector.shape_cast %6 : vector<1x128x128xf32> to vector<128x128xf32>
    %c0_11 = arith.constant 0 : index
    %c0_12 = arith.constant 0 : index
    %8 = vector.load %arg5[%c0_11, %c0_12] : memref<128x128xbf16, #tpu.memory_space<vmem>>, vector<128x128xbf16>
    %c0_13 = arith.constant 0 : index
    %c0_14 = arith.constant 0 : index
    %9 = vector.load %arg6[%c0_13, %c0_14] : memref<1x128xf32, #tpu.memory_space<vmem>>, vector<1x128xf32>
    %10 = vector.broadcast %9 : vector<1x128xf32> to vector<128x128xf32>
    %11 = arith.addf %7, %10 : vector<128x128xf32>
    %12 = vector.extract_strided_slice %1 {offsets = [0, 0], sizes = [128, 32], strides = [1, 1]} : vector<128x128xbf16> to vector<128x32xbf16>
    %13 = vector.extract_strided_slice %3 {offsets = [0, 0], sizes = [256, 32], strides = [1, 1]} : vector<256x128xbf16> to vector<256x32xbf16>
    %cst = arith.constant dense<0.000000e+00> : vector<128x256xf32>
    %14 = tpu.matmul %12, %13, %cst {dimension_numbers = #tpu.dot_dimension_numbers<[1], [1], [0], [0], [0, 0, 1, 0], [], []>} : vector<128x32xbf16>, vector<256x32xbf16>, vector<128x256xf32> -> vector<128x256xf32>
    %cst_15 = arith.constant dense<0xFF800000> : vector<128xf32>
    %15 = vector.multi_reduction <maximumf>, %14, %cst_15 [1] : vector<128x256xf32> to vector<128xf32>
    %16 = vector.shape_cast %15 : vector<128xf32> to vector<128x1xf32>
    %17 = vector.broadcast %16 : vector<128x1xf32> to vector<128x256xf32>
    %18 = arith.subf %14, %17 : vector<128x256xf32>
    %19 = math.exp %18 : vector<128x256xf32>
    %cst_16 = arith.constant dense<0.000000e+00> : vector<128xf32>
    %20 = vector.multi_reduction <add>, %19, %cst_16 [1] : vector<128x256xf32> to vector<128xf32>
    %21 = vector.shape_cast %20 : vector<128xf32> to vector<128x1xf32>
    %22 = arith.truncf %19 : vector<128x256xf32> to vector<128x256xbf16>
    %23 = vector.extract_strided_slice %5 {offsets = [0, 0], sizes = [256, 32], strides = [1, 1]} : vector<256x128xbf16> to vector<256x32xbf16>
    %cst_17 = arith.constant dense<0.000000e+00> : vector<128x32xf32>
    %24 = tpu.matmul %22, %23, %cst_17 {dimension_numbers = #tpu.dot_dimension_numbers<[1], [0], [0], [1], [0, 0, 1, 1], [], []>} : vector<128x256xbf16>, vector<256x32xbf16>, vector<128x32xf32> -> vector<128x32xf32>
    %25 = tpu.reciprocal %21 {approx = true} : vector<128x1xf32> -> vector<128x1xf32>
    %26 = vector.broadcast %25 : vector<128x1xf32> to vector<128x32xf32>
    %27 = arith.mulf %24, %26 : vector<128x32xf32>
    %28 = arith.truncf %27 : vector<128x32xf32> to vector<128x32xbf16>
    %29 = vector.extract_strided_slice %8 {offsets = [0, 0], sizes = [32, 128], strides = [1, 1]} : vector<128x128xbf16> to vector<32x128xbf16>
    %cst_18 = arith.constant dense<0.000000e+00> : vector<128x128xf32>
    %30 = tpu.matmul %28, %29, %cst_18 {dimension_numbers = #tpu.dot_dimension_numbers<[1], [0], [0], [1], [0, 0, 1, 1], [], []>} : vector<128x32xbf16>, vector<32x128xbf16>, vector<128x128xf32> -> vector<128x128xf32>
    %31 = arith.addf %11, %30 : vector<128x128xf32>
    %32 = vector.extract_strided_slice %1 {offsets = [0, 32], sizes = [128, 32], strides = [1, 1]} : vector<128x128xbf16> to vector<128x32xbf16>
    %33 = vector.extract_strided_slice %3 {offsets = [0, 32], sizes = [256, 32], strides = [1, 1]} : vector<256x128xbf16> to vector<256x32xbf16>
    %cst_19 = arith.constant dense<0.000000e+00> : vector<128x256xf32>
    %34 = tpu.matmul %32, %33, %cst_19 {dimension_numbers = #tpu.dot_dimension_numbers<[1], [1], [0], [0], [0, 0, 1, 0], [], []>} : vector<128x32xbf16>, vector<256x32xbf16>, vector<128x256xf32> -> vector<128x256xf32>
    %cst_20 = arith.constant dense<0xFF800000> : vector<128xf32>
    %35 = vector.multi_reduction <maximumf>, %34, %cst_20 [1] : vector<128x256xf32> to vector<128xf32>
    %36 = vector.shape_cast %35 : vector<128xf32> to vector<128x1xf32>
    %37 = vector.broadcast %36 : vector<128x1xf32> to vector<128x256xf32>
    %38 = arith.subf %34, %37 : vector<128x256xf32>
    %39 = math.exp %38 : vector<128x256xf32>
    %cst_21 = arith.constant dense<0.000000e+00> : vector<128xf32>
    %40 = vector.multi_reduction <add>, %39, %cst_21 [1] : vector<128x256xf32> to vector<128xf32>
    %41 = vector.shape_cast %40 : vector<128xf32> to vector<128x1xf32>
    %42 = arith.truncf %39 : vector<128x256xf32> to vector<128x256xbf16>
    %43 = vector.extract_strided_slice %5 {offsets = [0, 32], sizes = [256, 32], strides = [1, 1]} : vector<256x128xbf16> to vector<256x32xbf16>
    %cst_22 = arith.constant dense<0.000000e+00> : vector<128x32xf32>
    %44 = tpu.matmul %42, %43, %cst_22 {dimension_numbers = #tpu.dot_dimension_numbers<[1], [0], [0], [1], [0, 0, 1, 1], [], []>} : vector<128x256xbf16>, vector<256x32xbf16>, vector<128x32xf32> -> vector<128x32xf32>
    %45 = tpu.reciprocal %41 {approx = true} : vector<128x1xf32> -> vector<128x1xf32>
    %46 = vector.broadcast %45 : vector<128x1xf32> to vector<128x32xf32>
    %47 = arith.mulf %44, %46 : vector<128x32xf32>
    %48 = arith.truncf %47 : vector<128x32xf32> to vector<128x32xbf16>
    %49 = vector.extract_strided_slice %8 {offsets = [32, 0], sizes = [32, 128], strides = [1, 1]} : vector<128x128xbf16> to vector<32x128xbf16>
    %cst_23 = arith.constant dense<0.000000e+00> : vector<128x128xf32>
    %50 = tpu.matmul %48, %49, %cst_23 {dimension_numbers = #tpu.dot_dimension_numbers<[1], [0], [0], [1], [0, 0, 1, 1], [], []>} : vector<128x32xbf16>, vector<32x128xbf16>, vector<128x128xf32> -> vector<128x128xf32>
    %51 = arith.addf %31, %50 : vector<128x128xf32>
    %52 = vector.extract_strided_slice %1 {offsets = [0, 64], sizes = [128, 32], strides = [1, 1]} : vector<128x128xbf16> to vector<128x32xbf16>
    %53 = vector.extract_strided_slice %3 {offsets = [0, 64], sizes = [256, 32], strides = [1, 1]} : vector<256x128xbf16> to vector<256x32xbf16>
    %cst_24 = arith.constant dense<0.000000e+00> : vector<128x256xf32>
    %54 = tpu.matmul %52, %53, %cst_24 {dimension_numbers = #tpu.dot_dimension_numbers<[1], [1], [0], [0], [0, 0, 1, 0], [], []>} : vector<128x32xbf16>, vector<256x32xbf16>, vector<128x256xf32> -> vector<128x256xf32>
    %cst_25 = arith.constant dense<0xFF800000> : vector<128xf32>
    %55 = vector.multi_reduction <maximumf>, %54, %cst_25 [1] : vector<128x256xf32> to vector<128xf32>
    %56 = vector.shape_cast %55 : vector<128xf32> to vector<128x1xf32>
    %57 = vector.broadcast %56 : vector<128x1xf32> to vector<128x256xf32>
    %58 = arith.subf %54, %57 : vector<128x256xf32>
    %59 = math.exp %58 : vector<128x256xf32>
    %cst_26 = arith.constant dense<0.000000e+00> : vector<128xf32>
    %60 = vector.multi_reduction <add>, %59, %cst_26 [1] : vector<128x256xf32> to vector<128xf32>
    %61 = vector.shape_cast %60 : vector<128xf32> to vector<128x1xf32>
    %62 = arith.truncf %59 : vector<128x256xf32> to vector<128x256xbf16>
    %63 = vector.extract_strided_slice %5 {offsets = [0, 64], sizes = [256, 32], strides = [1, 1]} : vector<256x128xbf16> to vector<256x32xbf16>
    %cst_27 = arith.constant dense<0.000000e+00> : vector<128x32xf32>
    %64 = tpu.matmul %62, %63, %cst_27 {dimension_numbers = #tpu.dot_dimension_numbers<[1], [0], [0], [1], [0, 0, 1, 1], [], []>} : vector<128x256xbf16>, vector<256x32xbf16>, vector<128x32xf32> -> vector<128x32xf32>
    %65 = tpu.reciprocal %61 {approx = true} : vector<128x1xf32> -> vector<128x1xf32>
    %66 = vector.broadcast %65 : vector<128x1xf32> to vector<128x32xf32>
    %67 = arith.mulf %64, %66 : vector<128x32xf32>
    %68 = arith.truncf %67 : vector<128x32xf32> to vector<128x32xbf16>
    %69 = vector.extract_strided_slice %8 {offsets = [64, 0], sizes = [32, 128], strides = [1, 1]} : vector<128x128xbf16> to vector<32x128xbf16>
    %cst_28 = arith.constant dense<0.000000e+00> : vector<128x128xf32>
    %70 = tpu.matmul %68, %69, %cst_28 {dimension_numbers = #tpu.dot_dimension_numbers<[1], [0], [0], [1], [0, 0, 1, 1], [], []>} : vector<128x32xbf16>, vector<32x128xbf16>, vector<128x128xf32> -> vector<128x128xf32>
    %71 = arith.addf %51, %70 : vector<128x128xf32>
    %72 = vector.extract_strided_slice %1 {offsets = [0, 96], sizes = [128, 32], strides = [1, 1]} : vector<128x128xbf16> to vector<128x32xbf16>
    %73 = vector.extract_strided_slice %3 {offsets = [0, 96], sizes = [256, 32], strides = [1, 1]} : vector<256x128xbf16> to vector<256x32xbf16>
    %cst_29 = arith.constant dense<0.000000e+00> : vector<128x256xf32>
    %74 = tpu.matmul %72, %73, %cst_29 {dimension_numbers = #tpu.dot_dimension_numbers<[1], [1], [0], [0], [0, 0, 1, 0], [], []>} : vector<128x32xbf16>, vector<256x32xbf16>, vector<128x256xf32> -> vector<128x256xf32>
    %cst_30 = arith.constant dense<0xFF800000> : vector<128xf32>
    %75 = vector.multi_reduction <maximumf>, %74, %cst_30 [1] : vector<128x256xf32> to vector<128xf32>
    %76 = vector.shape_cast %75 : vector<128xf32> to vector<128x1xf32>
    %77 = vector.broadcast %76 : vector<128x1xf32> to vector<128x256xf32>
    %78 = arith.subf %74, %77 : vector<128x256xf32>
    %79 = math.exp %78 : vector<128x256xf32>
    %cst_31 = arith.constant dense<0.000000e+00> : vector<128xf32>
    %80 = vector.multi_reduction <add>, %79, %cst_31 [1] : vector<128x256xf32> to vector<128xf32>
    %81 = vector.shape_cast %80 : vector<128xf32> to vector<128x1xf32>
    %82 = arith.truncf %79 : vector<128x256xf32> to vector<128x256xbf16>
    %83 = vector.extract_strided_slice %5 {offsets = [0, 96], sizes = [256, 32], strides = [1, 1]} : vector<256x128xbf16> to vector<256x32xbf16>
    %cst_32 = arith.constant dense<0.000000e+00> : vector<128x32xf32>
    %84 = tpu.matmul %82, %83, %cst_32 {dimension_numbers = #tpu.dot_dimension_numbers<[1], [0], [0], [1], [0, 0, 1, 1], [], []>} : vector<128x256xbf16>, vector<256x32xbf16>, vector<128x32xf32> -> vector<128x32xf32>
    %85 = tpu.reciprocal %81 {approx = true} : vector<128x1xf32> -> vector<128x1xf32>
    %86 = vector.broadcast %85 : vector<128x1xf32> to vector<128x32xf32>
    %87 = arith.mulf %84, %86 : vector<128x32xf32>
    %88 = arith.truncf %87 : vector<128x32xf32> to vector<128x32xbf16>
    %89 = vector.extract_strided_slice %8 {offsets = [96, 0], sizes = [32, 128], strides = [1, 1]} : vector<128x128xbf16> to vector<32x128xbf16>
    %cst_33 = arith.constant dense<0.000000e+00> : vector<128x128xf32>
    %90 = tpu.matmul %88, %89, %cst_33 {dimension_numbers = #tpu.dot_dimension_numbers<[1], [0], [0], [1], [0, 0, 1, 1], [], []>} : vector<128x32xbf16>, vector<32x128xbf16>, vector<128x128xf32> -> vector<128x128xf32>
    %91 = arith.addf %71, %90 : vector<128x128xf32>
    %c0_34 = arith.constant 0 : index
    %c0_35 = arith.constant 0 : index
    %c0_36 = arith.constant 0 : index
    %92 = vector.load %arg8[%c0_34, %c0_35, %c0_36] : memref<1x128x128xf32, #tpu.memory_space<vmem>>, vector<1x128x128xf32>
    %93 = vector.shape_cast %92 : vector<1x128x128xf32> to vector<128x128xf32>
    %94 = vector.shape_cast %91 : vector<128x128xf32> to vector<1x128x128xf32>
    tpu.vector_store %arg8[%c0_34, %c0_35, %c0_36], %94 {strides = array<i32>} : memref<1x128x128xf32, #tpu.memory_space<vmem>>, vector<1x128x128xf32>,
    return
  }
  func.func @transform_0(%arg0: i32, %arg1: i32) -> (i32, i32, i32) {
    %c0_i32 = arith.constant 0 : i32
    %c0_i32_0 = arith.constant 0 : i32
    return %arg0, %arg1, %c0_i32 : i32, i32, i32
  }
  func.func @transform_1(%arg0: i32, %arg1: i32) -> (i32, i32, i32) {
    %c0_i32 = arith.constant 0 : i32
    %c1_i32 = arith.constant 1 : i32
    %c0_i32_0 = arith.constant 0 : i32
    return %arg0, %c0_i32, %c1_i32 : i32, i32, i32
  }
  func.func @transform_2(%arg0: i32, %arg1: i32) -> (i32, i32, i32) {
    %c0_i32 = arith.constant 0 : i32
    %c2_i32 = arith.constant 2 : i32
    %c0_i32_0 = arith.constant 0 : i32
    return %arg0, %c0_i32, %c2_i32 : i32, i32, i32
  }
  func.func @transform_3(%arg0: i32, %arg1: i32) -> (i32, i32) {
    %c0_i32 = arith.constant 0 : i32
    %c0_i32_0 = arith.constant 0 : i32
    %c0_i32_1 = arith.constant 0 : i32
    return %c0_i32, %c0_i32_0 : i32, i32
  }
  func.func @transform_4(%arg0: i32, %arg1: i32) -> (i32, i32) {
    %c0_i32 = arith.constant 0 : i32
    %c0_i32_0 = arith.constant 0 : i32
    %c0_i32_1 = arith.constant 0 : i32
    return %c0_i32, %c0_i32_0 : i32, i32
  }
  func.func @transform_5(%arg0: i32, %arg1: i32) -> (i32, i32, i32) {
    %c0_i32 = arith.constant 0 : i32
    %c0_i32_0 = arith.constant 0 : i32
    return %arg0, %arg1, %c0_i32 : i32, i32, i32
  }
  func.func @transform_6(%arg0: i32, %arg1: i32) -> (i32, i32, i32) {
    %c0_i32 = arith.constant 0 : i32
    %c0_i32_0 = arith.constant 0 : i32
    return %arg0, %arg1, %c0_i32 : i32, i32, i32
  }
}

module attributes {stable_mosaic.version = 11 : i64} {
  func.func @_qkv_kernel(%arg0: i32, %arg1: memref<128x128xf32, #tpu.memory_space<vmem>>, %arg2: memref<1x128xf32, #tpu.memory_space<vmem>>, %arg3: memref<1x128xf32, #tpu.memory_space<vmem>>, %arg4: memref<128x384xbf16, #tpu.memory_space<vmem>>, %arg5: memref<128x384xbf16, #tpu.memory_space<vmem>>) attributes {dimension_semantics = [#tpu.dimension_semantics<parallel>], iteration_bounds = array<i64: 4>, scalar_prefetch = 0 : i64, scratch_operands = 0 : i64, tpu.core_type = #tpu.core_type<tc>, window_params = [{transform_indices = @transform_0, window_bounds = array<i64: 128, 128>}, {pipeline_mode = #tpu.pipeline_mode<synchronous>, transform_indices = @transform_1, window_bounds = array<i64: 1, 128>}, {pipeline_mode = #tpu.pipeline_mode<synchronous>, transform_indices = @transform_2, window_bounds = array<i64: 1, 128>}, {pipeline_mode = #tpu.pipeline_mode<synchronous>, transform_indices = @transform_3, window_bounds = array<i64: 128, 384>}, {transform_indices = @transform_4, window_bounds = array<i64: 128, 384>}]} {
    %c0 = arith.constant 0 : index
    %c0_0 = arith.constant 0 : index
    %0 = vector.load %arg1[%c0, %c0_0] : memref<128x128xf32, #tpu.memory_space<vmem>>, vector<128x128xf32>
    %c0_1 = arith.constant 0 : index
    %c0_2 = arith.constant 0 : index
    %1 = vector.load %arg2[%c0_1, %c0_2] : memref<1x128xf32, #tpu.memory_space<vmem>>, vector<1x128xf32>
    %c0_3 = arith.constant 0 : index
    %c0_4 = arith.constant 0 : index
    %2 = vector.load %arg3[%c0_3, %c0_4] : memref<1x128xf32, #tpu.memory_space<vmem>>, vector<1x128xf32>
    %cst = arith.constant dense<0.000000e+00> : vector<128xf32>
    %3 = vector.multi_reduction <add>, %0, %cst [1] : vector<128x128xf32> to vector<128xf32>
    %4 = vector.shape_cast %3 : vector<128xf32> to vector<128x1xf32>
    %cst_5 = arith.constant 1.280000e+02 : f32
    %5 = vector.broadcast %cst_5 : f32 to vector<128x1xf32>
    %6 = arith.divf %4, %5 : vector<128x1xf32>
    %7 = vector.broadcast %6 : vector<128x1xf32> to vector<128x128xf32>
    %8 = arith.subf %0, %7 : vector<128x128xf32>
    %9 = arith.mulf %8, %8 : vector<128x128xf32>
    %cst_6 = arith.constant dense<0.000000e+00> : vector<128xf32>
    %10 = vector.multi_reduction <add>, %9, %cst_6 [1] : vector<128x128xf32> to vector<128xf32>
    %11 = vector.shape_cast %10 : vector<128xf32> to vector<128x1xf32>
    %cst_7 = arith.constant 1.280000e+02 : f32
    %12 = vector.broadcast %cst_7 : f32 to vector<128x1xf32>
    %13 = arith.divf %11, %12 : vector<128x1xf32>
    %cst_8 = arith.constant 9.99999974E-6 : f32
    %14 = vector.broadcast %cst_8 : f32 to vector<128x1xf32>
    %15 = arith.addf %13, %14 : vector<128x1xf32>
    %16 = math.rsqrt %15 : vector<128x1xf32>
    %17 = vector.broadcast %16 : vector<128x1xf32> to vector<128x128xf32>
    %18 = arith.mulf %8, %17 : vector<128x128xf32>
    %19 = vector.broadcast %1 : vector<1x128xf32> to vector<128x128xf32>
    %20 = arith.mulf %18, %19 : vector<128x128xf32>
    %21 = vector.broadcast %2 : vector<1x128xf32> to vector<128x128xf32>
    %22 = arith.addf %20, %21 : vector<128x128xf32>
    %23 = arith.truncf %22 : vector<128x128xf32> to vector<128x128xbf16>
    %c0_9 = arith.constant 0 : index
    %c0_10 = arith.constant 0 : index
    %24 = vector.load %arg4[%c0_9, %c0_10] : memref<128x384xbf16, #tpu.memory_space<vmem>>, vector<128x384xbf16>
    %cst_11 = arith.constant dense<0.000000e+00> : vector<128x384xf32>
    %25 = tpu.matmul %23, %24, %cst_11 {dimension_numbers = #tpu.dot_dimension_numbers<[1], [0], [0], [1], [0, 0, 1, 1], [], []>} : vector<128x128xbf16>, vector<128x384xbf16>, vector<128x384xf32> -> vector<128x384xf32>
    %26 = arith.truncf %25 : vector<128x384xf32> to vector<128x384xbf16>
    %c0_12 = arith.constant 0 : index
    %c0_13 = arith.constant 0 : index
    %27 = vector.load %arg5[%c0_12, %c0_13] : memref<128x384xbf16, #tpu.memory_space<vmem>>, vector<128x384xbf16>
    tpu.vector_store %arg5[%c0_12, %c0_13], %26 {strides = array<i32>} : memref<128x384xbf16, #tpu.memory_space<vmem>>, vector<128x384xbf16>,
    return
  }
  func.func @transform_0(%arg0: i32) -> (i32, i32) {
    %c0_i32 = arith.constant 0 : i32
    %c0_i32_0 = arith.constant 0 : i32
    return %arg0, %c0_i32 : i32, i32
  }
  func.func @transform_1(%arg0: i32) -> (i32, i32) {
    %c0_i32 = arith.constant 0 : i32
    %c0_i32_0 = arith.constant 0 : i32
    %c0_i32_1 = arith.constant 0 : i32
    return %c0_i32, %c0_i32_0 : i32, i32
  }
  func.func @transform_2(%arg0: i32) -> (i32, i32) {
    %c0_i32 = arith.constant 0 : i32
    %c0_i32_0 = arith.constant 0 : i32
    %c0_i32_1 = arith.constant 0 : i32
    return %c0_i32, %c0_i32_0 : i32, i32
  }
  func.func @transform_3(%arg0: i32) -> (i32, i32) {
    %c0_i32 = arith.constant 0 : i32
    %c0_i32_0 = arith.constant 0 : i32
    %c0_i32_1 = arith.constant 0 : i32
    return %c0_i32, %c0_i32_0 : i32, i32
  }
  func.func @transform_4(%arg0: i32) -> (i32, i32) {
    %c0_i32 = arith.constant 0 : i32
    %c0_i32_0 = arith.constant 0 : i32
    return %arg0, %c0_i32 : i32, i32
  }
}

module attributes {stable_mosaic.version = 11 : i64} {
  func.func @_ff_kernel(%arg0: i32, %arg1: memref<128x128xf32, #tpu.memory_space<vmem>>, %arg2: memref<1x128xf32, #tpu.memory_space<vmem>>, %arg3: memref<1x128xf32, #tpu.memory_space<vmem>>, %arg4: memref<128x256xbf16, #tpu.memory_space<vmem>>, %arg5: memref<1x256xf32, #tpu.memory_space<vmem>>, %arg6: memref<256x128xbf16, #tpu.memory_space<vmem>>, %arg7: memref<1x128xf32, #tpu.memory_space<vmem>>, %arg8: memref<128x128xf32, #tpu.memory_space<vmem>>) attributes {dimension_semantics = [#tpu.dimension_semantics<parallel>], iteration_bounds = array<i64: 4>, scalar_prefetch = 0 : i64, scratch_operands = 0 : i64, tpu.core_type = #tpu.core_type<tc>, window_params = [{transform_indices = @transform_0, window_bounds = array<i64: 128, 128>}, {pipeline_mode = #tpu.pipeline_mode<synchronous>, transform_indices = @transform_1, window_bounds = array<i64: 1, 128>}, {pipeline_mode = #tpu.pipeline_mode<synchronous>, transform_indices = @transform_2, window_bounds = array<i64: 1, 128>}, {pipeline_mode = #tpu.pipeline_mode<synchronous>, transform_indices = @transform_3, window_bounds = array<i64: 128, 256>}, {pipeline_mode = #tpu.pipeline_mode<synchronous>, transform_indices = @transform_4, window_bounds = array<i64: 1, 256>}, {pipeline_mode = #tpu.pipeline_mode<synchronous>, transform_indices = @transform_5, window_bounds = array<i64: 256, 128>}, {pipeline_mode = #tpu.pipeline_mode<synchronous>, transform_indices = @transform_6, window_bounds = array<i64: 1, 128>}, {transform_indices = @transform_7, window_bounds = array<i64: 128, 128>}]} {
    %c0 = arith.constant 0 : index
    %c0_0 = arith.constant 0 : index
    %0 = vector.load %arg1[%c0, %c0_0] : memref<128x128xf32, #tpu.memory_space<vmem>>, vector<128x128xf32>
    %c0_1 = arith.constant 0 : index
    %c0_2 = arith.constant 0 : index
    %1 = vector.load %arg2[%c0_1, %c0_2] : memref<1x128xf32, #tpu.memory_space<vmem>>, vector<1x128xf32>
    %c0_3 = arith.constant 0 : index
    %c0_4 = arith.constant 0 : index
    %2 = vector.load %arg3[%c0_3, %c0_4] : memref<1x128xf32, #tpu.memory_space<vmem>>, vector<1x128xf32>
    %cst = arith.constant dense<0.000000e+00> : vector<128xf32>
    %3 = vector.multi_reduction <add>, %0, %cst [1] : vector<128x128xf32> to vector<128xf32>
    %4 = vector.shape_cast %3 : vector<128xf32> to vector<128x1xf32>
    %cst_5 = arith.constant 1.280000e+02 : f32
    %5 = vector.broadcast %cst_5 : f32 to vector<128x1xf32>
    %6 = arith.divf %4, %5 : vector<128x1xf32>
    %7 = vector.broadcast %6 : vector<128x1xf32> to vector<128x128xf32>
    %8 = arith.subf %0, %7 : vector<128x128xf32>
    %9 = arith.mulf %8, %8 : vector<128x128xf32>
    %cst_6 = arith.constant dense<0.000000e+00> : vector<128xf32>
    %10 = vector.multi_reduction <add>, %9, %cst_6 [1] : vector<128x128xf32> to vector<128xf32>
    %11 = vector.shape_cast %10 : vector<128xf32> to vector<128x1xf32>
    %cst_7 = arith.constant 1.280000e+02 : f32
    %12 = vector.broadcast %cst_7 : f32 to vector<128x1xf32>
    %13 = arith.divf %11, %12 : vector<128x1xf32>
    %cst_8 = arith.constant 9.99999974E-6 : f32
    %14 = vector.broadcast %cst_8 : f32 to vector<128x1xf32>
    %15 = arith.addf %13, %14 : vector<128x1xf32>
    %16 = math.rsqrt %15 : vector<128x1xf32>
    %17 = vector.broadcast %16 : vector<128x1xf32> to vector<128x128xf32>
    %18 = arith.mulf %8, %17 : vector<128x128xf32>
    %19 = vector.broadcast %1 : vector<1x128xf32> to vector<128x128xf32>
    %20 = arith.mulf %18, %19 : vector<128x128xf32>
    %21 = vector.broadcast %2 : vector<1x128xf32> to vector<128x128xf32>
    %22 = arith.addf %20, %21 : vector<128x128xf32>
    %23 = arith.truncf %22 : vector<128x128xf32> to vector<128x128xbf16>
    %c0_9 = arith.constant 0 : index
    %c0_10 = arith.constant 0 : index
    %24 = vector.load %arg4[%c0_9, %c0_10] : memref<128x256xbf16, #tpu.memory_space<vmem>>, vector<128x256xbf16>
    %cst_11 = arith.constant dense<0.000000e+00> : vector<128x256xf32>
    %25 = tpu.matmul %23, %24, %cst_11 {dimension_numbers = #tpu.dot_dimension_numbers<[1], [0], [0], [1], [0, 0, 1, 1], [], []>} : vector<128x128xbf16>, vector<128x256xbf16>, vector<128x256xf32> -> vector<128x256xf32>
    %c0_12 = arith.constant 0 : index
    %c0_13 = arith.constant 0 : index
    %26 = vector.load %arg5[%c0_12, %c0_13] : memref<1x256xf32, #tpu.memory_space<vmem>>, vector<1x256xf32>
    %27 = vector.broadcast %26 : vector<1x256xf32> to vector<128x256xf32>
    %28 = arith.addf %25, %27 : vector<128x256xf32>
    %cst_14 = arith.constant 5.000000e-01 : f32
    %29 = vector.broadcast %cst_14 : f32 to vector<128x256xf32>
    %30 = arith.mulf %29, %28 : vector<128x256xf32>
    %cst_15 = arith.constant 4.471500e-02 : f32
    %31 = vector.broadcast %cst_15 : f32 to vector<128x256xf32>
    %32 = arith.mulf %31, %28 : vector<128x256xf32>
    %33 = arith.mulf %32, %28 : vector<128x256xf32>
    %34 = arith.mulf %33, %28 : vector<128x256xf32>
    %35 = arith.addf %28, %34 : vector<128x256xf32>
    %cst_16 = arith.constant 0.797884583 : f32
    %36 = vector.broadcast %cst_16 : f32 to vector<128x256xf32>
    %37 = arith.mulf %36, %35 : vector<128x256xf32>
    %38 = math.tanh %37 : vector<128x256xf32>
    %cst_17 = arith.constant 1.000000e+00 : f32
    %39 = vector.broadcast %cst_17 : f32 to vector<128x256xf32>
    %40 = arith.addf %39, %38 : vector<128x256xf32>
    %41 = arith.mulf %30, %40 : vector<128x256xf32>
    %42 = arith.truncf %41 : vector<128x256xf32> to vector<128x256xbf16>
    %c0_18 = arith.constant 0 : index
    %c0_19 = arith.constant 0 : index
    %43 = vector.load %arg6[%c0_18, %c0_19] : memref<256x128xbf16, #tpu.memory_space<vmem>>, vector<256x128xbf16>
    %cst_20 = arith.constant dense<0.000000e+00> : vector<128x128xf32>
    %44 = tpu.matmul %42, %43, %cst_20 {dimension_numbers = #tpu.dot_dimension_numbers<[1], [0], [0], [1], [0, 0, 1, 1], [], []>} : vector<128x256xbf16>, vector<256x128xbf16>, vector<128x128xf32> -> vector<128x128xf32>
    %c0_21 = arith.constant 0 : index
    %c0_22 = arith.constant 0 : index
    %45 = vector.load %arg7[%c0_21, %c0_22] : memref<1x128xf32, #tpu.memory_space<vmem>>, vector<1x128xf32>
    %46 = vector.broadcast %45 : vector<1x128xf32> to vector<128x128xf32>
    %47 = arith.addf %44, %46 : vector<128x128xf32>
    %48 = arith.addf %47, %0 : vector<128x128xf32>
    %c0_23 = arith.constant 0 : index
    %c0_24 = arith.constant 0 : index
    %49 = vector.load %arg8[%c0_23, %c0_24] : memref<128x128xf32, #tpu.memory_space<vmem>>, vector<128x128xf32>
    tpu.vector_store %arg8[%c0_23, %c0_24], %48 {strides = array<i32>} : memref<128x128xf32, #tpu.memory_space<vmem>>, vector<128x128xf32>,
    return
  }
  func.func @transform_0(%arg0: i32) -> (i32, i32) {
    %c0_i32 = arith.constant 0 : i32
    %c0_i32_0 = arith.constant 0 : i32
    return %arg0, %c0_i32 : i32, i32
  }
  func.func @transform_1(%arg0: i32) -> (i32, i32) {
    %c0_i32 = arith.constant 0 : i32
    %c0_i32_0 = arith.constant 0 : i32
    %c0_i32_1 = arith.constant 0 : i32
    return %c0_i32, %c0_i32_0 : i32, i32
  }
  func.func @transform_2(%arg0: i32) -> (i32, i32) {
    %c0_i32 = arith.constant 0 : i32
    %c0_i32_0 = arith.constant 0 : i32
    %c0_i32_1 = arith.constant 0 : i32
    return %c0_i32, %c0_i32_0 : i32, i32
  }
  func.func @transform_3(%arg0: i32) -> (i32, i32) {
    %c0_i32 = arith.constant 0 : i32
    %c0_i32_0 = arith.constant 0 : i32
    %c0_i32_1 = arith.constant 0 : i32
    return %c0_i32, %c0_i32_0 : i32, i32
  }
  func.func @transform_4(%arg0: i32) -> (i32, i32) {
    %c0_i32 = arith.constant 0 : i32
    %c0_i32_0 = arith.constant 0 : i32
    %c0_i32_1 = arith.constant 0 : i32
    return %c0_i32, %c0_i32_0 : i32, i32
  }
  func.func @transform_5(%arg0: i32) -> (i32, i32) {
    %c0_i32 = arith.constant 0 : i32
    %c0_i32_0 = arith.constant 0 : i32
    %c0_i32_1 = arith.constant 0 : i32
    return %c0_i32, %c0_i32_0 : i32, i32
  }
  func.func @transform_6(%arg0: i32) -> (i32, i32) {
    %c0_i32 = arith.constant 0 : i32
    %c0_i32_0 = arith.constant 0 : i32
    %c0_i32_1 = arith.constant 0 : i32
    return %c0_i32, %c0_i32_0 : i32, i32
  }
  func.func @transform_7(%arg0: i32) -> (i32, i32) {
    %c0_i32 = arith.constant 0 : i32
    %c0_i32_0 = arith.constant 0 : i32
    return %arg0, %c0_i32 : i32, i32
  }
}

</mosaic_0001>

<llo_original>
// kernel: transformer_forward.8
$region0: #{transformer_forward.8}
  #allocation0 [shape = 'u32[]', space=smem, size = 0x4, offset = 0x4, fixed_abs, tag = 'smem constant byte address 0x4 - core index']
  #allocation1 [shape = 'u32[144,128]{1,0:T(1,128)}', space=vmem, size = 0x12000, scoped, tag = 'internal scratch']
  %s0 = inlined_call_operand.vmem [shape: f32[512,128], index: 0, kind: input, shape index: {}]
  %s1 = inlined_call_operand.vmem [shape: f32[1,128], index: 1, kind: input, shape index: {}]
  %s2 = inlined_call_operand.vmem [shape: f32[1,128], index: 2, kind: input, shape index: {}]
  %s3 = inlined_call_operand.vmem [shape: bf16[128,256], index: 3, kind: input, shape index: {}]
  %s4 = inlined_call_operand.vmem [shape: f32[1,256], index: 4, kind: input, shape index: {}]
  %s5 = inlined_call_operand.vmem [shape: bf16[256,128], index: 5, kind: input, shape index: {}]
  %s6 = inlined_call_operand.vmem [shape: f32[1,128], index: 6, kind: input, shape index: {}]
  %s7 = inlined_call_operand.vmem [shape: f32[512,128], index: 7, kind: output, shape index: {}]
  %s8 = sld [smem:[#allocation0]]
  $region61: #{transformer_forward.8} parent=0
    _
  %s10 = ssub.s32 1, %s8
  %s11 = scalar_select 0, %s10, %s8
  loop: start=0, step=1, limit=6
  $region2: #{transformer_forward.8} parent=0 // loop_pre_header
    _
  $region3: #{transformer_forward.8} parent=0 // loop_header
    %s13 = sphi 0, %s17
    %p14 = scmp.ge.s32.totalorder %s13, 6
    %s23 = sphi 0, %s25
    %s26 = sphi 0, %s23
    %s27 = sphi 0, %s26
    %s43 = sphi 0, %s27
    %s47 = sphi 0, %s47
    %s49 = sphi 0, %s47
    %s50 = sphi 0, %s49
    %s64 = sphi 0, %s50
    %s68 = sphi 0, %s68
    %s70 = sphi 0, %s68
    %s71 = sphi 0, %s70
    %s85 = sphi 0, %s71
    %s89 = sphi 0, %s89
    %s91 = sphi 0, %s89
    %s92 = sphi 0, %s91
    %s106 = sphi 0, %s92
    %s110 = sphi 0, %s110
    %s112 = sphi 0, %s110
    %s113 = sphi 0, %s112
    %s127 = sphi 0, %s113
    %s131 = sphi 0, %s131
    %s133 = sphi 0, %s131
    %s134 = sphi 0, %s133
    %s148 = sphi 0, %s134
    %s152 = sphi 0, %s152
    %s154 = sphi 0, %s152
    %s155 = sphi 0, %s154
    %s169 = sphi 0, %s155
    %s175 = sphi 0, %s177
    %s178 = sphi 0, %s175
    %s179 = sphi 0, %s178
    %s195 = sphi 0, %s179
  $region4: #{transformer_forward.8} parent=0 // loop_header_branch
    %16 = sbr.rel (%p14) target = $region8
  $region5: #{transformer_forward.8} parent=0 // loop_body
    %s18 = ssub.s32 %s13, 1
    %s19 = ssub.s32 %s13, 2
    %s20 = sadd.s32 %s13, 1
    %s21 = ssub.s32 %s13, %s20
    %p22 = scmp.eq.s32.totalorder %s21, 0
    %s24 = sadd.s32 %s23, 1
    %s25 = scalar_select %p22, %s23, %s24
    %p28 = pneg %p22
    %p29 = scmp.eq.s32.totalorder %s13, 3
    %p30 = por %p28, %p29
    %p31 = scmp.ne.s32.totalorder %s23, %s26
    %p32 = scmp.eq.s32.totalorder %s13, 0
    %p33 = por %p31, %p32
    %p34 = scmp.ne.s32.totalorder %s23, %s26
    %p35 = scmp.eq.s32.totalorder %s18, 3
    %p36 = por %p34, %p35
    %p37 = scmp.ne.s32.totalorder %s26, %s27
    %p38 = scmp.eq.s32.totalorder %s18, 0
    %p39 = por %p37, %p38
    %p40 = scmp.ne.s32.totalorder %s26, %s27
    %p41 = scmp.eq.s32.totalorder %s19, 3
    %p42 = por %p40, %p41
    %p44 = scmp.ne.s32.totalorder %s27, %s43
    %p45 = scmp.eq.s32.totalorder %s19, 0
    %p46 = por %p44, %p45
    %s48 = sadd.s32 %s47, 1
    %p51 = scmp.eq.s32.totalorder %s13, 3
    %p52 = scmp.ne.s32.totalorder %s47, %s49
    %p53 = scmp.eq.s32.totalorder %s13, 0
    %p54 = por %p52, %p53
    %p55 = scmp.ne.s32.totalorder %s47, %s49
    %p56 = scmp.eq.s32.totalorder %s18, 3
    %p57 = por %p55, %p56
    %p58 = scmp.ne.s32.totalorder %s49, %s50
    %p59 = scmp.eq.s32.totalorder %s18, 0
    %p60 = por %p58, %p59
    %p61 = scmp.ne.s32.totalorder %s49, %s50
    %p62 = scmp.eq.s32.totalorder %s19, 3
    %p63 = por %p61, %p62
    %p65 = scmp.ne.s32.totalorder %s50, %s64
    %p66 = scmp.eq.s32.totalorder %s19, 0
    %p67 = por %p65, %p66
    %s69 = sadd.s32 %s68, 1
    %p72 = scmp.eq.s32.totalorder %s13, 3
    %p73 = scmp.ne.s32.totalorder %s68, %s70
    %p74 = scmp.eq.s32.totalorder %s13, 0
    %p75 = por %p73, %p74
    %p76 = scmp.ne.s32.totalorder %s68, %s70
    %p77 = scmp.eq.s32.totalorder %s18, 3
    %p78 = por %p76, %p77
    %p79 = scmp.ne.s32.totalorder %s70, %s71
    %p80 = scmp.eq.s32.totalorder %s18, 0
    %p81 = por %p79, %p80
    %p82 = scmp.ne.s32.totalorder %s70, %s71
    %p83 = scmp.eq.s32.totalorder %s19, 3
    %p84 = por %p82, %p83
    %p86 = scmp.ne.s32.totalorder %s71, %s85
    %p87 = scmp.eq.s32.totalorder %s19, 0
    %p88 = por %p86, %p87
    %s90 = sadd.s32 %s89, 1
    %p93 = scmp.eq.s32.totalorder %s13, 3
    %p94 = scmp.ne.s32.totalorder %s89, %s91
    %p95 = scmp.eq.s32.totalorder %s13, 0
    %p96 = por %p94, %p95
    %p97 = scmp.ne.s32.totalorder %s89, %s91
    %p98 = scmp.eq.s32.totalorder %s18, 3
    %p99 = por %p97, %p98
    %p100 = scmp.ne.s32.totalorder %s91, %s92
    %p101 = scmp.eq.s32.totalorder %s18, 0
    %p102 = por %p100, %p101
    %p103 = scmp.ne.s32.totalorder %s91, %s92
    %p104 = scmp.eq.s32.totalorder %s19, 3
    %p105 = por %p103, %p104
    %p107 = scmp.ne.s32.totalorder %s92, %s106
    %p108 = scmp.eq.s32.totalorder %s19, 0
    %p109 = por %p107, %p108
    %s111 = sadd.s32 %s110, 1
    %p114 = scmp.eq.s32.totalorder %s13, 3
    %p115 = scmp.ne.s32.totalorder %s110, %s112
    %p116 = scmp.eq.s32.totalorder %s13, 0
    %p117 = por %p115, %p116
    %p118 = scmp.ne.s32.totalorder %s110, %s112
    %p119 = scmp.eq.s32.totalorder %s18, 3
    %p120 = por %p118, %p119
    %p121 = scmp.ne.s32.totalorder %s112, %s113
    %p122 = scmp.eq.s32.totalorder %s18, 0
    %p123 = por %p121, %p122
    %p124 = scmp.ne.s32.totalorder %s112, %s113
    %p125 = scmp.eq.s32.totalorder %s19, 3
    %p126 = por %p124, %p125
    %p128 = scmp.ne.s32.totalorder %s113, %s127
    %p129 = scmp.eq.s32.totalorder %s19, 0
    %p130 = por %p128, %p129
    %s132 = sadd.s32 %s131, 1
    %p135 = scmp.eq.s32.totalorder %s13, 3
    %p136 = scmp.ne.s32.totalorder %s131, %s133
    %p137 = scmp.eq.s32.totalorder %s13, 0
    %p138 = por %p136, %p137
    %p139 = scmp.ne.s32.totalorder %s131, %s133
    %p140 = scmp.eq.s32.totalorder %s18, 3
    %p141 = por %p139, %p140
    %p142 = scmp.ne.s32.totalorder %s133, %s134
    %p143 = scmp.eq.s32.totalorder %s18, 0
    %p144 = por %p142, %p143
    %p145 = scmp.ne.s32.totalorder %s133, %s134
    %p146 = scmp.eq.s32.totalorder %s19, 3
    %p147 = por %p145, %p146
    %p149 = scmp.ne.s32.totalorder %s134, %s148
    %p150 = scmp.eq.s32.totalorder %s19, 0
    %p151 = por %p149, %p150
    %s153 = sadd.s32 %s152, 1
    %p156 = scmp.eq.s32.totalorder %s13, 3
    %p157 = scmp.ne.s32.totalorder %s152, %s154
    %p158 = scmp.eq.s32.totalorder %s13, 0
    %p159 = por %p157, %p158
    %p160 = scmp.ne.s32.totalorder %s152, %s154
    %p161 = scmp.eq.s32.totalorder %s18, 3
    %p162 = por %p160, %p161
    %p163 = scmp.ne.s32.totalorder %s154, %s155
    %p164 = scmp.eq.s32.totalorder %s18, 0
    %p165 = por %p163, %p164
    %p166 = scmp.ne.s32.totalorder %s154, %s155
    %p167 = scmp.eq.s32.totalorder %s19, 3
    %p168 = por %p166, %p167
    %p170 = scmp.ne.s32.totalorder %s155, %s169
    %p171 = scmp.eq.s32.totalorder %s19, 0
    %p172 = por %p170, %p171
    %s173 = ssub.s32 %s13, %s20
    %p174 = scmp.eq.s32.totalorder %s173, 0
    %s176 = sadd.s32 %s175, 1
    %s177 = scalar_select %p174, %s175, %s176
    %p180 = pneg %p174
    %p181 = scmp.eq.s32.totalorder %s13, 3
    %p182 = por %p180, %p181
    %p183 = scmp.ne.s32.totalorder %s175, %s178
    %p184 = scmp.eq.s32.totalorder %s13, 0
    %p185 = por %p183, %p184
    %p186 = scmp.ne.s32.totalorder %s175, %s178
    %p187 = scmp.eq.s32.totalorder %s18, 3
    %p188 = por %p186, %p187
    %p189 = scmp.ne.s32.totalorder %s178, %s179
    %p190 = scmp.eq.s32.totalorder %s18, 0
    %p191 = por %p189, %p190
    %p192 = scmp.ne.s32.totalorder %s178, %s179
    %p193 = scmp.eq.s32.totalorder %s19, 3
    %p194 = por %p192, %p193
    %p196 = scmp.ne.s32.totalorder %s179, %s195
    %p197 = scmp.eq.s32.totalorder %s19, 0
    %p198 = por %p196, %p197
    %p199 = scmp.le.s32.totalorder 1, %s13
    %p200 = scmp.lt.s32.totalorder %s13, 5
    %p201 = pnand %p199, %p200
    %p202 = pneg %p201
    // Predicated region
    $region9: #{transformer_forward.8} parent=5 // pred_check
      _
    $region10: #{transformer_forward.8} parent=5 // pred_check_branch
      %204 = sbr.rel (%p201) target = $region12
    $region11: #{transformer_forward.8} parent=5 // pred_region
      %s205 = ssub.s32 %s13, 1
      // Predicated region
      $region13: #{transformer_forward.8} parent=11 // pred_check
        %p206 = pneg %p60
      $region14: #{transformer_forward.8} parent=11 // pred_check_branch
        %208 = sbr.rel (%p206) target = $region16
      $region15: #{transformer_forward.8} parent=11 // pred_region
        _
      $region16: #{transformer_forward.8} parent=11 // pred_fallthru
        _
      // Predicated region
      $region17: #{transformer_forward.8} parent=11 // pred_check
        %p209 = pneg %p81
      $region18: #{transformer_forward.8} parent=11 // pred_check_branch
        %211 = sbr.rel (%p209) target = $region20
      $region19: #{transformer_forward.8} parent=11 // pred_region
        _
      $region20: #{transformer_forward.8} parent=11 // pred_fallthru
        _
      // Predicated region
      $region21: #{transformer_forward.8} parent=11 // pred_check
        %p212 = pneg %p102
      $region22: #{transformer_forward.8} parent=11 // pred_check_branch
        %214 = sbr.rel (%p212) target = $region24
      $region23: #{transformer_forward.8} parent=11 // pred_region
        _
      $region24: #{transformer_forward.8} parent=11 // pred_fallthru
        _
      // Predicated region
      $region25: #{transformer_forward.8} parent=11 // pred_check
        %p215 = pneg %p123
      $region26: #{transformer_forward.8} parent=11 // pred_check_branch
        %217 = sbr.rel (%p215) target = $region28
      $region27: #{transformer_forward.8} parent=11 // pred_region
        _
      $region28: #{transformer_forward.8} parent=11 // pred_fallthru
        _
      // Predicated region
      $region29: #{transformer_forward.8} parent=11 // pred_check
        %p218 = pneg %p144
      $region30: #{transformer_forward.8} parent=11 // pred_check_branch
        %220 = sbr.rel (%p218) target = $region32
      $region31: #{transformer_forward.8} parent=11 // pred_region
        _
      $region32: #{transformer_forward.8} parent=11 // pred_fallthru
        _
      // Predicated region
      $region33: #{transformer_forward.8} parent=11 // pred_check
        %p221 = pneg %p165
      $region34: #{transformer_forward.8} parent=11 // pred_check_branch
        %223 = sbr.rel (%p221) target = $region36
      $region35: #{transformer_forward.8} parent=11 // pred_region
        _
      $region36: #{transformer_forward.8} parent=11 // pred_fallthru
        _
    $region12: #{transformer_forward.8} parent=5 // pred_fallthru
      _
    %p224 = scmp.lt.s32.totalorder %s13, 4
    // Predicated region
    $region37: #{transformer_forward.8} parent=5 // pred_check
      %p225 = pneg %p224
    $region38: #{transformer_forward.8} parent=5 // pred_check_branch
      %227 = sbr.rel (%p225) target = $region40
    $region39: #{transformer_forward.8} parent=5 // pred_region
      // Predicated region
      $region41: #{transformer_forward.8} parent=39 // pred_check
        %p228 = pneg %p33
      $region42: #{transformer_forward.8} parent=39 // pred_check_branch
        %230 = sbr.rel (%p228) target = $region44
      $region43: #{transformer_forward.8} parent=39 // pred_region
        %s231 = smul.u32 16, %s13
        %p232 = scmp.lt.s32.totalorder %s231, 63
        %s233 = scalar_select %p232, %s231, 63
        %s234 = smul.addr %s233, 8
        %s235 = scalar_lea.vmem %s0, %s234
        %s236 = smul.u32 16, %s13
      $region44: #{transformer_forward.8} parent=39 // pred_fallthru
        _
    $region40: #{transformer_forward.8} parent=5 // pred_fallthru
      _
    %p237 = scmp.le.s32.totalorder 1, %s13
    %p238 = scmp.lt.s32.totalorder %s13, 5
    %p239 = pnand %p237, %p238
    %p240 = pneg %p239
    // Predicated region
    $region45: #{transformer_forward.8} parent=5 // pred_check
      _
    $region46: #{transformer_forward.8} parent=5 // pred_check_branch
      %242 = sbr.rel (%p239) target = $region48
    $region47: #{transformer_forward.8} parent=5 // pred_region
      %s243 = ssub.s32 %s13, 1
      %s244 = smul.u32 16, %s18
      %p245 = scmp.lt.s32.totalorder %s244, 63
      %s246 = scalar_select %p245, %s244, 63
      %s247 = smul.addr %s246, 8
      %s248 = scalar_lea.vmem %s0, %s247
      %p249 = pneg %p39
      %p250 = pneg %p36
      %p251 = pneg %p60
      %p252 = pneg %p57
      %p253 = pneg %p81
      %p254 = pneg %p78
      %p255 = pneg %p102
      %p256 = pneg %p99
      %p257 = pneg %p123
      %p258 = pneg %p120
      %p259 = pneg %p144
      %p260 = pneg %p141
      %p261 = pneg %p165
      %p262 = pneg %p162
      %p263 = pneg %p191
      %p264 = pneg %p188
      %s265 = smul.u32 16, %s18
      %p266 = scmp.lt.s32.totalorder %s265, 63
      %s267 = scalar_select %p266, %s265, 63
      %s268 = smul.addr %s267, 8
      %s269 = scalar_lea.vmem %s7, %s268
      %s270 = smul.u32 16, %s18
      %p271 = scmp.lt.s32.totalorder %s270, 63
      %s272 = scalar_select %p271, %s270, 63
      %s273 = smul.addr %s272, 8
      %s274 = scalar_lea.vmem %s0, %s273
      %s275 = smul.u32 16, %s18
      %s276 = smul.u32 16, %s18
      %p277 = scmp.lt.s32.totalorder %s276, 63
      %s278 = scalar_select %p277, %s276, 63
      %s279 = smul.addr %s278, 8
      %s280 = scalar_lea.vmem %s7, %s279
      %s281 = smul.u32 16, %s18
      %v283 = vld [vmem:[%s274] sm:$0xff]
      %v284 = vld [vmem:[%s274 + $0x8] sm:$0xff]
      %v285 = vld [vmem:[%s274 + $0x10] sm:$0xff]
      %v286 = vld [vmem:[%s274 + $0x18] sm:$0xff]
      %v287 = vld [vmem:[%s274 + $0x20] sm:$0xff]
      %v288 = vld [vmem:[%s274 + $0x28] sm:$0xff]
      %v289 = vld [vmem:[%s274 + $0x30] sm:$0xff]
      %v290 = vld [vmem:[%s274 + $0x38] sm:$0xff]
      %v291 = vld [vmem:[%s274 + $0x40] sm:$0xff]
      %v292 = vld [vmem:[%s274 + $0x48] sm:$0xff]
      %v293 = vld [vmem:[%s274 + $0x50] sm:$0xff]
      %v294 = vld [vmem:[%s274 + $0x58] sm:$0xff]
      %v295 = vld [vmem:[%s274 + $0x60] sm:$0xff]
      %v296 = vld [vmem:[%s274 + $0x68] sm:$0xff]
      %v297 = vld [vmem:[%s274 + $0x70] sm:$0xff]
      %v298 = vld [vmem:[%s274 + $0x78] sm:$0xff]
      %v299 = vld [vmem:[%s1] sm:$0x1]
      %v300 = vld [vmem:[%s2] sm:$0x1]
      %301 = vadd.xlane.f32.xlu0 %v283
      %v302 = vpop.xlane.xlu0 %301
      %303 = vadd.xlane.f32.xlu0 %v284
      %v304 = vpop.xlane.xlu0 %303
      %305 = vadd.xlane.f32.xlu0 %v285
      %v306 = vpop.xlane.xlu0 %305
      %307 = vadd.xlane.f32.xlu0 %v286
      %v308 = vpop.xlane.xlu0 %307
      %309 = vadd.xlane.f32.xlu0 %v287
      %v310 = vpop.xlane.xlu0 %309
      %311 = vadd.xlane.f32.xlu0 %v288
      %v312 = vpop.xlane.xlu0 %311
      %313 = vadd.xlane.f32.xlu0 %v289
      %v314 = vpop.xlane.xlu0 %313
      %315 = vadd.xlane.f32.xlu0 %v290
      %v316 = vpop.xlane.xlu0 %315
      %317 = vadd.xlane.f32.xlu0 %v291
      %v318 = vpop.xlane.xlu0 %317
      %319 = vadd.xlane.f32.xlu0 %v292
      %v320 = vpop.xlane.xlu0 %319
      %321 = vadd.xlane.f32.xlu0 %v293
      %v322 = vpop.xlane.xlu0 %321
      %323 = vadd.xlane.f32.xlu0 %v294
      %v324 = vpop.xlane.xlu0 %323
      %325 = vadd.xlane.f32.xlu0 %v295
      %v326 = vpop.xlane.xlu0 %325
      %327 = vadd.xlane.f32.xlu0 %v296
      %v328 = vpop.xlane.xlu0 %327
      %329 = vadd.xlane.f32.xlu0 %v297
      %v330 = vpop.xlane.xlu0 %329
      %331 = vadd.xlane.f32.xlu0 %v298
      %v332 = vpop.xlane.xlu0 %331
      %v333 = vrcp.pop 128.0
      %v334 = vmul.f32 %v302, %v333
      %v335 = vmul.f32 %v304, %v333
      %v336 = vmul.f32 %v306, %v333
      %v337 = vmul.f32 %v308, %v333
      %v338 = vmul.f32 %v310, %v333
      %v339 = vmul.f32 %v312, %v333
      %v340 = vmul.f32 %v314, %v333
      %v341 = vmul.f32 %v316, %v333
      %v342 = vmul.f32 %v318, %v333
      %v343 = vmul.f32 %v320, %v333
      %v344 = vmul.f32 %v322, %v333
      %v345 = vmul.f32 %v324, %v333
      %v346 = vmul.f32 %v326, %v333
      %v347 = vmul.f32 %v328, %v333
      %v348 = vmul.f32 %v330, %v333
      %v349 = vmul.f32 %v332, %v333
      %v350 = vsub.f32 %v283, %v334
      %v351 = vsub.f32 %v284, %v335
      %v352 = vsub.f32 %v285, %v336
      %v353 = vsub.f32 %v286, %v337
      %v354 = vsub.f32 %v287, %v338
      %v355 = vsub.f32 %v288, %v339
      %v356 = vsub.f32 %v289, %v340
      %v357 = vsub.f32 %v290, %v341
      %v358 = vsub.f32 %v291, %v342
      %v359 = vsub.f32 %v292, %v343
      %v360 = vsub.f32 %v293, %v344
      %v361 = vsub.f32 %v294, %v345
      %v362 = vsub.f32 %v295, %v346
      %v363 = vsub.f32 %v296, %v347
      %v364 = vsub.f32 %v297, %v348
      %v365 = vsub.f32 %v298, %v349
      %v366 = vmul.f32 %v350, %v350
      %v367 = vmul.f32 %v351, %v351
      %v368 = vmul.f32 %v352, %v352
      %v369 = vmul.f32 %v353, %v353
      %v370 = vmul.f32 %v354, %v354
      %v371 = vmul.f32 %v355, %v355
      %v372 = vmul.f32 %v356, %v356
      %v373 = vmul.f32 %v357, %v357
      %v374 = vmul.f32 %v358, %v358
      %v375 = vmul.f32 %v359, %v359
      %v376 = vmul.f32 %v360, %v360
      %v377 = vmul.f32 %v361, %v361
      %v378 = vmul.f32 %v362, %v362
      %v379 = vmul.f32 %v363, %v363
      %v380 = vmul.f32 %v364, %v364
      %v381 = vmul.f32 %v365, %v365
      %382 = vadd.xlane.f32.xlu0 %v366
      %v383 = vpop.xlane.xlu0 %382
      %384 = vadd.xlane.f32.xlu0 %v367
      %v385 = vpop.xlane.xlu0 %384
      %386 = vadd.xlane.f32.xlu0 %v368
      %v387 = vpop.xlane.xlu0 %386
      %388 = vadd.xlane.f32.xlu0 %v369
      %v389 = vpop.xlane.xlu0 %388
      %390 = vadd.xlane.f32.xlu0 %v370
      %v391 = vpop.xlane.xlu0 %390
      %392 = vadd.xlane.f32.xlu0 %v371
      %v393 = vpop.xlane.xlu0 %392
      %394 = vadd.xlane.f32.xlu0 %v372
      %v395 = vpop.xlane.xlu0 %394
      %396 = vadd.xlane.f32.xlu0 %v373
      %v397 = vpop.xlane.xlu0 %396
      %398 = vadd.xlane.f32.xlu0 %v374
      %v399 = vpop.xlane.xlu0 %398
      %400 = vadd.xlane.f32.xlu0 %v375
      %v401 = vpop.xlane.xlu0 %400
      %402 = vadd.xlane.f32.xlu0 %v376
      %v403 = vpop.xlane.xlu0 %402
      %404 = vadd.xlane.f32.xlu0 %v377
      %v405 = vpop.xlane.xlu0 %404
      %406 = vadd.xlane.f32.xlu0 %v378
      %v407 = vpop.xlane.xlu0 %406
      %408 = vadd.xlane.f32.xlu0 %v379
      %v409 = vpop.xlane.xlu0 %408
      %410 = vadd.xlane.f32.xlu0 %v380
      %v411 = vpop.xlane.xlu0 %410
      %412 = vadd.xlane.f32.xlu0 %v381
      %v413 = vpop.xlane.xlu0 %412
      %v414 = vmul.f32 %v383, %v333
      %v415 = vmul.f32 %v385, %v333
      %v416 = vmul.f32 %v387, %v333
      %v417 = vmul.f32 %v389, %v333
      %v418 = vmul.f32 %v391, %v333
      %v419 = vmul.f32 %v393, %v333
      %v420 = vmul.f32 %v395, %v333
      %v421 = vmul.f32 %v397, %v333
      %v422 = vmul.f32 %v399, %v333
      %v423 = vmul.f32 %v401, %v333
      %v424 = vmul.f32 %v403, %v333
      %v425 = vmul.f32 %v405, %v333
      %v426 = vmul.f32 %v407, %v333
      %v427 = vmul.f32 %v409, %v333
      %v428 = vmul.f32 %v411, %v333
      %v429 = vmul.f32 %v413, %v333
      %v430 = vadd.f32 %v414, 1e-05
      %v431 = vadd.f32 %v415, 1e-05
      %v432 = vadd.f32 %v416, 1e-05
      %v433 = vadd.f32 %v417, 1e-05
      %v434 = vadd.f32 %v418, 1e-05
      %v435 = vadd.f32 %v419, 1e-05
      %v436 = vadd.f32 %v420, 1e-05
      %v437 = vadd.f32 %v421, 1e-05
      %v438 = vadd.f32 %v422, 1e-05
      %v439 = vadd.f32 %v423, 1e-05
      %v440 = vadd.f32 %v424, 1e-05
      %v441 = vadd.f32 %v425, 1e-05
      %v442 = vadd.f32 %v426, 1e-05
      %v443 = vadd.f32 %v427, 1e-05
      %v444 = vadd.f32 %v428, 1e-05
      %v445 = vadd.f32 %v429, 1e-05
      %v446 = vrsqrt.pop %v430
      %v447 = vrsqrt.pop %v431
      %v448 = vrsqrt.pop %v432
      %v449 = vrsqrt.pop %v433
      %v450 = vrsqrt.pop %v434
      %v451 = vrsqrt.pop %v435
      %v452 = vrsqrt.pop %v436
      %v453 = vrsqrt.pop %v437
      %v454 = vrsqrt.pop %v438
      %v455 = vrsqrt.pop %v439
      %v456 = vrsqrt.pop %v440
      %v457 = vrsqrt.pop %v441
      %v458 = vrsqrt.pop %v442
      %v459 = vrsqrt.pop %v443
      %v460 = vrsqrt.pop %v444
      %v461 = vrsqrt.pop %v445
      %v462 = vmul.f32 %v350, %v446
      %v463 = vmul.f32 %v351, %v447
      %v464 = vmul.f32 %v352, %v448
      %v465 = vmul.f32 %v353, %v449
      %v466 = vmul.f32 %v354, %v450
      %v467 = vmul.f32 %v355, %v451
      %v468 = vmul.f32 %v356, %v452
      %v469 = vmul.f32 %v357, %v453
      %v470 = vmul.f32 %v358, %v454
      %v471 = vmul.f32 %v359, %v455
      %v472 = vmul.f32 %v360, %v456
      %v473 = vmul.f32 %v361, %v457
      %v474 = vmul.f32 %v362, %v458
      %v475 = vmul.f32 %v363, %v459
      %v476 = vmul.f32 %v364, %v460
      %v477 = vmul.f32 %v365, %v461
      %v479 = vlaneseq
      %v480 = vshrl.u32 %v479, 7
      %v481 = vsub.s32 0, %v480
      %v482 = vrot.slane %v299, %v481
      %v484 = vmul.f32 %v462, %v482
      %v485 = vmul.f32 %v463, %v482
      %v486 = vmul.f32 %v464, %v482
      %v487 = vmul.f32 %v465, %v482
      %v488 = vmul.f32 %v466, %v482
      %v489 = vmul.f32 %v467, %v482
      %v490 = vmul.f32 %v468, %v482
      %v491 = vmul.f32 %v469, %v482
      %v492 = vmul.f32 %v470, %v482
      %v493 = vmul.f32 %v471, %v482
      %v494 = vmul.f32 %v472, %v482
      %v495 = vmul.f32 %v473, %v482
      %v496 = vmul.f32 %v474, %v482
      %v497 = vmul.f32 %v475, %v482
      %v498 = vmul.f32 %v476, %v482
      %v499 = vmul.f32 %v477, %v482
      %v501 = vlaneseq
      %v502 = vshrl.u32 %v501, 7
      %v503 = vsub.s32 0, %v502
      %v504 = vrot.slane %v300, %v503
      %v506 = vadd.f32 %v484, %v504
      %v507 = vadd.f32 %v485, %v504
      %v508 = vadd.f32 %v486, %v504
      %v509 = vadd.f32 %v487, %v504
      %v510 = vadd.f32 %v488, %v504
      %v511 = vadd.f32 %v489, %v504
      %v512 = vadd.f32 %v490, %v504
      %v513 = vadd.f32 %v491, %v504
      %v514 = vadd.f32 %v492, %v504
      %v515 = vadd.f32 %v493, %v504
      %v516 = vadd.f32 %v494, %v504
      %v517 = vadd.f32 %v495, %v504
      %v518 = vadd.f32 %v496, %v504
      %v519 = vadd.f32 %v497, %v504
      %v520 = vadd.f32 %v498, %v504
      %v521 = vadd.f32 %v499, %v504
      %v522 = vpack.c.bf16 %v507, %v506
      %v523 = vpack.c.bf16 %v509, %v508
      %v524 = vpack.c.bf16 %v511, %v510
      %v525 = vpack.c.bf16 %v513, %v512
      %v526 = vpack.c.bf16 %v515, %v514
      %v527 = vpack.c.bf16 %v517, %v516
      %v528 = vpack.c.bf16 %v519, %v518
      %v529 = vpack.c.bf16 %v521, %v520
      %v530 = vld [vmem:[%s3] sm:$0xff]
      %v531 = vld [vmem:[%s3 + $0x8] sm:$0xff]
      %v532 = vld [vmem:[%s3 + $0x10] sm:$0xff]
      %v533 = vld [vmem:[%s3 + $0x18] sm:$0xff]
      %v534 = vld [vmem:[%s3 + $0x20] sm:$0xff]
      %v535 = vld [vmem:[%s3 + $0x28] sm:$0xff]
      %v536 = vld [vmem:[%s3 + $0x30] sm:$0xff]
      %v537 = vld [vmem:[%s3 + $0x38] sm:$0xff]
      %v538 = vld [vmem:[%s3 + $0x40] sm:$0xff]
      %v539 = vld [vmem:[%s3 + $0x48] sm:$0xff]
      %v540 = vld [vmem:[%s3 + $0x50] sm:$0xff]
      %v541 = vld [vmem:[%s3 + $0x58] sm:$0xff]
      %v542 = vld [vmem:[%s3 + $0x60] sm:$0xff]
      %v543 = vld [vmem:[%s3 + $0x68] sm:$0xff]
      %v544 = vld [vmem:[%s3 + $0x70] sm:$0xff]
      %v545 = vld [vmem:[%s3 + $0x78] sm:$0xff]
      %v546 = vld [vmem:[%s4] sm:$0x3]
      %v548 = vlaneseq
      %v549 = vshrl.u32 %v548, 7
      %v550 = vsub.s32 0, %v549
      %v551 = vrot.slane %v546, %v550
      %v552 = vlaneseq
      %v553 = vshrl.u32 %v552, 7
      %v554 = vsub.s32 1, %v553
      %v555 = vrot.slane %v546, %v554
      %v574 = vunpack.c.l.b16 %v530
      %v575 = vunpack.c.h.b16 %v530
      %v576 = vunpack.c.l.b16 %v531
      %v577 = vunpack.c.h.b16 %v531
      %v578 = vunpack.c.l.b16 %v532
      %v579 = vunpack.c.h.b16 %v532
      %v580 = vunpack.c.l.b16 %v533
      %v581 = vunpack.c.h.b16 %v533
      %v582 = vunpack.c.l.b16 %v534
      %v583 = vunpack.c.h.b16 %v534
      %v584 = vunpack.c.l.b16 %v535
      %v585 = vunpack.c.h.b16 %v535
      %v586 = vunpack.c.l.b16 %v536
      %v587 = vunpack.c.h.b16 %v536
      %v588 = vunpack.c.l.b16 %v537
      %v589 = vunpack.c.h.b16 %v537
      %v590 = vunpack.c.l.b16 %v538
      %v591 = vunpack.c.h.b16 %v538
      %v592 = vunpack.c.l.b16 %v539
      %v593 = vunpack.c.h.b16 %v539
      %v594 = vunpack.c.l.b16 %v540
      %v595 = vunpack.c.h.b16 %v540
      %v596 = vunpack.c.l.b16 %v541
      %v597 = vunpack.c.h.b16 %v541
      %v598 = vunpack.c.l.b16 %v542
      %v599 = vunpack.c.h.b16 %v542
      %v600 = vunpack.c.l.b16 %v543
      %v601 = vunpack.c.h.b16 %v543
      %v602 = vunpack.c.l.b16 %v544
      %v603 = vunpack.c.h.b16 %v544
      %v604 = vunpack.c.l.b16 %v545
      %v605 = vunpack.c.h.b16 %v545
      %v606 = vpack.c.b16 %v576, %v574
      %v607 = vpack.c.b16 %v577, %v575
      %v608 = vpack.c.b16 %v580, %v578
      %v609 = vpack.c.b16 %v581, %v579
      %v610 = vpack.c.b16 %v584, %v582
      %v611 = vpack.c.b16 %v585, %v583
      %v612 = vpack.c.b16 %v588, %v586
      %v613 = vpack.c.b16 %v589, %v587
      %v614 = vpack.c.b16 %v592, %v590
      %v615 = vpack.c.b16 %v593, %v591
      %v616 = vpack.c.b16 %v596, %v594
      %v617 = vpack.c.b16 %v597, %v595
      %v618 = vpack.c.b16 %v600, %v598
      %v619 = vpack.c.b16 %v601, %v599
      %v620 = vpack.c.b16 %v604, %v602
      %v621 = vpack.c.b16 %v605, %v603
      %638 = vmatprep.subr.bf16.mxu0 %v607
      %639 = vmatpush1.bf16.msra.mxu0 %v606
      %640 = vmatprep.subr.bf16.mxu0 %v609
      %641 = vmatpush1.bf16.msra.mxu0 %v608
      %642 = vmatprep.subr.bf16.mxu0 %v611
      %643 = vmatpush1.bf16.msra.mxu0 %v610
      %644 = vmatprep.subr.bf16.mxu0 %v613
      %645 = vmatpush1.bf16.msra.mxu0 %v612
      %646 = vmatprep.subr.bf16.mxu0 %v615
      %647 = vmatpush1.bf16.msra.mxu0 %v614
      %648 = vmatprep.subr.bf16.mxu0 %v617
      %649 = vmatpush1.bf16.msra.mxu0 %v616
      %650 = vmatprep.subr.bf16.mxu0 %v619
      %651 = vmatpush1.bf16.msra.mxu0 %v618
      %652 = vmatprep.subr.bf16.mxu0 %v621
      %653 = vmatpush1.bf16.msra.mxu0 %v620
      %654 = vmatprep.subr.bf16.mxu0 0
      %655 = vmatpush1.bf16.msra.mxu0 0
      %656 = vmatprep.subr.bf16.mxu0 0
      %657 = vmatpush1.bf16.msra.mxu0 0
      %658 = vmatprep.subr.bf16.mxu0 0
      %659 = vmatpush1.bf16.msra.mxu0 0
      %660 = vmatprep.subr.bf16.mxu0 0
      %661 = vmatpush1.bf16.msra.mxu0 0
      %662 = vmatprep.subr.bf16.mxu0 0
      %663 = vmatpush1.bf16.msra.mxu0 0
      %664 = vmatprep.subr.bf16.mxu0 0
      %665 = vmatpush1.bf16.msra.mxu0 0
      %666 = vmatprep.subr.bf16.mxu0 0
      %667 = vmatpush1.bf16.msra.mxu0 0
      %668 = vmatprep.subr.bf16.mxu0 0
      %669 = vmatpush1.bf16.msra.mxu0 0
      %670 = vmatprep.mubr.bf16.mxu0 0
      %671 = vmatmul.mubr.bf16.gmra.mrb[0].mxu0 %v522
      %v672 = vpop.f32.mrb[0].mxu0
      %v673 = vadd.f32 %v551, %v672
      %v674 = vpop.f32.mrb[0].mxu0
      %v675 = vadd.f32 %v555, %v674
      %v676 = vpop.f32.mrb[0].mxu0
      %v677 = vadd.f32 %v551, %v676
      %v678 = vpop.f32.mrb[0].mxu0
      %v679 = vadd.f32 %v555, %v678
      %680 = vmatprep.mubr.bf16.mxu0 0
      %681 = vmatmul.mubr.bf16.gmra.mrb[0].mxu0 %v523
      %v682 = vpop.f32.mrb[0].mxu0
      %v683 = vadd.f32 %v551, %v682
      %v684 = vpop.f32.mrb[0].mxu0
      %v685 = vadd.f32 %v555, %v684
      %v686 = vpop.f32.mrb[0].mxu0
      %v687 = vadd.f32 %v551, %v686
      %v688 = vpop.f32.mrb[0].mxu0
      %v689 = vadd.f32 %v555, %v688
      %690 = vmatprep.mubr.bf16.mxu0 0
      %691 = vmatmul.mubr.bf16.gmra.mrb[0].mxu0 %v524
      %v692 = vpop.f32.mrb[0].mxu0
      %v693 = vadd.f32 %v551, %v692
      %v694 = vpop.f32.mrb[0].mxu0
      %v695 = vadd.f32 %v555, %v694
      %v696 = vpop.f32.mrb[0].mxu0
      %v697 = vadd.f32 %v551, %v696
      %v698 = vpop.f32.mrb[0].mxu0
      %v699 = vadd.f32 %v555, %v698
      %700 = vmatprep.mubr.bf16.mxu0 0
      %701 = vmatmul.mubr.bf16.gmra.mrb[0].mxu0 %v525
      %v702 = vpop.f32.mrb[0].mxu0
      %v703 = vadd.f32 %v551, %v702
      %v704 = vpop.f32.mrb[0].mxu0
      %v705 = vadd.f32 %v555, %v704
      %v706 = vpop.f32.mrb[0].mxu0
      %v707 = vadd.f32 %v551, %v706
      %v708 = vpop.f32.mrb[0].mxu0
      %v709 = vadd.f32 %v555, %v708
      %710 = vmatprep.mubr.bf16.mxu0 0
      %711 = vmatmul.mubr.bf16.gmra.mrb[0].mxu0 %v526
      %v712 = vpop.f32.mrb[0].mxu0
      %v713 = vadd.f32 %v551, %v712
      %v714 = vpop.f32.mrb[0].mxu0
      %v715 = vadd.f32 %v555, %v714
      %v716 = vpop.f32.mrb[0].mxu0
      %v717 = vadd.f32 %v551, %v716
      %v718 = vpop.f32.mrb[0].mxu0
      %v719 = vadd.f32 %v555, %v718
      %720 = vmatprep.mubr.bf16.mxu0 0
      %721 = vmatmul.mubr.bf16.gmra.mrb[0].mxu0 %v527
      %v722 = vpop.f32.mrb[0].mxu0
      %v723 = vadd.f32 %v551, %v722
      %v724 = vpop.f32.mrb[0].mxu0
      %v725 = vadd.f32 %v555, %v724
      %v726 = vpop.f32.mrb[0].mxu0
      %v727 = vadd.f32 %v551, %v726
      %v728 = vpop.f32.mrb[0].mxu0
      %v729 = vadd.f32 %v555, %v728
      %730 = vmatprep.mubr.bf16.mxu0 0
      %731 = vmatmul.mubr.bf16.gmra.mrb[0].mxu0 %v528
      %v732 = vpop.f32.mrb[0].mxu0
      %v733 = vadd.f32 %v551, %v732
      %v734 = vpop.f32.mrb[0].mxu0
      %v735 = vadd.f32 %v555, %v734
      %v736 = vpop.f32.mrb[0].mxu0
      %v737 = vadd.f32 %v551, %v736
      %v738 = vpop.f32.mrb[0].mxu0
      %v739 = vadd.f32 %v555, %v738
      %740 = vmatprep.mubr.bf16.mxu0 0
      %741 = vmatmul.mubr.bf16.gmra.mrb[0].mxu0 %v529
      %v742 = vpop.f32.mrb[0].mxu0
      %v743 = vadd.f32 %v551, %v742
      %v744 = vpop.f32.mrb[0].mxu0
      %v745 = vadd.f32 %v555, %v744
      %v746 = vpop.f32.mrb[0].mxu0
      %v747 = vadd.f32 %v551, %v746
      %v748 = vpop.f32.mrb[0].mxu0
      %v749 = vadd.f32 %v555, %v748
      %750 = vdwg.mxu0
      %v751 = vmul.f32 %v673, 0.5
      %v752 = vmul.f32 %v675, 0.5
      %v753 = vmul.f32 %v677, 0.5
      %v754 = vmul.f32 %v679, 0.5
      %v755 = vmul.f32 %v683, 0.5
      %v756 = vmul.f32 %v685, 0.5
      %v757 = vmul.f32 %v687, 0.5
      %v758 = vmul.f32 %v689, 0.5
      %v759 = vmul.f32 %v693, 0.5
      %v760 = vmul.f32 %v695, 0.5
      %v761 = vmul.f32 %v697, 0.5
      %v762 = vmul.f32 %v699, 0.5
      %v763 = vmul.f32 %v703, 0.5
      %v764 = vmul.f32 %v705, 0.5
      %v765 = vmul.f32 %v707, 0.5
      %v766 = vmul.f32 %v709, 0.5
      %v767 = vmul.f32 %v713, 0.5
      %v768 = vmul.f32 %v715, 0.5
      %v769 = vmul.f32 %v717, 0.5
      %v770 = vmul.f32 %v719, 0.5
      %v771 = vmul.f32 %v723, 0.5
      %v772 = vmul.f32 %v725, 0.5
      %v773 = vmul.f32 %v727, 0.5
      %v774 = vmul.f32 %v729, 0.5
      %v775 = vmul.f32 %v733, 0.5
      %v776 = vmul.f32 %v735, 0.5
      %v777 = vmul.f32 %v737, 0.5
      %v778 = vmul.f32 %v739, 0.5
      %v779 = vmul.f32 %v743, 0.5
      %v780 = vmul.f32 %v745, 0.5
      %v781 = vmul.f32 %v747, 0.5
      %v782 = vmul.f32 %v749, 0.5
      %v783 = vmul.f32 %v673, 0.044715
      %v784 = vmul.f32 %v675, 0.044715
      %v785 = vmul.f32 %v677, 0.044715
      %v786 = vmul.f32 %v679, 0.044715
      %v787 = vmul.f32 %v683, 0.044715
      %v788 = vmul.f32 %v685, 0.044715
      %v789 = vmul.f32 %v687, 0.044715
      %v790 = vmul.f32 %v689, 0.044715
      %v791 = vmul.f32 %v693, 0.044715
      %v792 = vmul.f32 %v695, 0.044715
      %v793 = vmul.f32 %v697, 0.044715
      %v794 = vmul.f32 %v699, 0.044715
      %v795 = vmul.f32 %v703, 0.044715
      %v796 = vmul.f32 %v705, 0.044715
      %v797 = vmul.f32 %v707, 0.044715
      %v798 = vmul.f32 %v709, 0.044715
      %v799 = vmul.f32 %v713, 0.044715
      %v800 = vmul.f32 %v715, 0.044715
      %v801 = vmul.f32 %v717, 0.044715
      %v802 = vmul.f32 %v719, 0.044715
      %v803 = vmul.f32 %v723, 0.044715
      %v804 = vmul.f32 %v725, 0.044715
      %v805 = vmul.f32 %v727, 0.044715
      %v806 = vmul.f32 %v729, 0.044715
      %v807 = vmul.f32 %v733, 0.044715
      %v808 = vmul.f32 %v735, 0.044715
      %v809 = vmul.f32 %v737, 0.044715
      %v810 = vmul.f32 %v739, 0.044715
      %v811 = vmul.f32 %v743, 0.044715
      %v812 = vmul.f32 %v745, 0.044715
      %v813 = vmul.f32 %v747, 0.044715
      %v814 = vmul.f32 %v749, 0.044715
      %v815 = vmul.f32 %v783, %v673
      %v816 = vmul.f32 %v784, %v675
      %v817 = vmul.f32 %v785, %v677
      %v818 = vmul.f32 %v786, %v679
      %v819 = vmul.f32 %v787, %v683
      %v820 = vmul.f32 %v788, %v685
      %v821 = vmul.f32 %v789, %v687
      %v822 = vmul.f32 %v790, %v689
      %v823 = vmul.f32 %v791, %v693
      %v824 = vmul.f32 %v792, %v695
      %v825 = vmul.f32 %v793, %v697
      %v826 = vmul.f32 %v794, %v699
      %v827 = vmul.f32 %v795, %v703
      %v828 = vmul.f32 %v796, %v705
      %v829 = vmul.f32 %v797, %v707
      %v830 = vmul.f32 %v798, %v709
      %v831 = vmul.f32 %v799, %v713
      %v832 = vmul.f32 %v800, %v715
      %v833 = vmul.f32 %v801, %v717
      %v834 = vmul.f32 %v802, %v719
      %v835 = vmul.f32 %v803, %v723
      %v836 = vmul.f32 %v804, %v725
      %v837 = vmul.f32 %v805, %v727
      %v838 = vmul.f32 %v806, %v729
      %v839 = vmul.f32 %v807, %v733
      %v840 = vmul.f32 %v808, %v735
      %v841 = vmul.f32 %v809, %v737
      %v842 = vmul.f32 %v810, %v739
      %v843 = vmul.f32 %v811, %v743
      %v844 = vmul.f32 %v812, %v745
      %v845 = vmul.f32 %v813, %v747
      %v846 = vmul.f32 %v814, %v749
      %v847 = vmul.f32 %v815, %v673
      %v848 = vmul.f32 %v816, %v675
      %v849 = vmul.f32 %v817, %v677
      %v850 = vmul.f32 %v818, %v679
      %v851 = vmul.f32 %v819, %v683
      %v852 = vmul.f32 %v820, %v685
      %v853 = vmul.f32 %v821, %v687
      %v854 = vmul.f32 %v822, %v689
      %v855 = vmul.f32 %v823, %v693
      %v856 = vmul.f32 %v824, %v695
      %v857 = vmul.f32 %v825, %v697
      %v858 = vmul.f32 %v826, %v699
      %v859 = vmul.f32 %v827, %v703
      %v860 = vmul.f32 %v828, %v705
      %v861 = vmul.f32 %v829, %v707
      %v862 = vmul.f32 %v830, %v709
      %v863 = vmul.f32 %v831, %v713
      %v864 = vmul.f32 %v832, %v715
      %v865 = vmul.f32 %v833, %v717
      %v866 = vmul.f32 %v834, %v719
      %v867 = vmul.f32 %v835, %v723
      %v868 = vmul.f32 %v836, %v725
      %v869 = vmul.f32 %v837, %v727
      %v870 = vmul.f32 %v838, %v729
      %v871 = vmul.f32 %v839, %v733
      %v872 = vmul.f32 %v840, %v735
      %v873 = vmul.f32 %v841, %v737
      %v874 = vmul.f32 %v842, %v739
      %v875 = vmul.f32 %v843, %v743
      %v876 = vmul.f32 %v844, %v745
      %v877 = vmul.f32 %v845, %v747
      %v878 = vmul.f32 %v846, %v749
      %v879 = vadd.f32 %v673, %v847
      %v880 = vadd.f32 %v675, %v848
      %v881 = vadd.f32 %v677, %v849
      %v882 = vadd.f32 %v679, %v850
      %v883 = vadd.f32 %v683, %v851
      %v884 = vadd.f32 %v685, %v852
      %v885 = vadd.f32 %v687, %v853
      %v886 = vadd.f32 %v689, %v854
      %v887 = vadd.f32 %v693, %v855
      %v888 = vadd.f32 %v695, %v856
      %v889 = vadd.f32 %v697, %v857
      %v890 = vadd.f32 %v699, %v858
      %v891 = vadd.f32 %v703, %v859
      %v892 = vadd.f32 %v705, %v860
      %v893 = vadd.f32 %v707, %v861
      %v894 = vadd.f32 %v709, %v862
      %v895 = vadd.f32 %v713, %v863
      %v896 = vadd.f32 %v715, %v864
      %v897 = vadd.f32 %v717, %v865
      %v898 = vadd.f32 %v719, %v866
      %v899 = vadd.f32 %v723, %v867
      %v900 = vadd.f32 %v725, %v868
      %v901 = vadd.f32 %v727, %v869
      %v902 = vadd.f32 %v729, %v870
      %v903 = vadd.f32 %v733, %v871
      %v904 = vadd.f32 %v735, %v872
      %v905 = vadd.f32 %v737, %v873
      %v906 = vadd.f32 %v739, %v874
      %v907 = vadd.f32 %v743, %v875
      %v908 = vadd.f32 %v745, %v876
      %v909 = vadd.f32 %v747, %v877
      %v910 = vadd.f32 %v749, %v878
      %v911 = vmul.f32 %v879, 0.7978846
      %v912 = vmul.f32 %v880, 0.7978846
      %v913 = vmul.f32 %v881, 0.7978846
      %v914 = vmul.f32 %v882, 0.7978846
      %v915 = vmul.f32 %v883, 0.7978846
      %v916 = vmul.f32 %v884, 0.7978846
      %v917 = vmul.f32 %v885, 0.7978846
      %v918 = vmul.f32 %v886, 0.7978846
      %v919 = vmul.f32 %v887, 0.7978846
      %v920 = vmul.f32 %v888, 0.7978846
      %v921 = vmul.f32 %v889, 0.7978846
      %v922 = vmul.f32 %v890, 0.7978846
      %v923 = vmul.f32 %v891, 0.7978846
      %v924 = vmul.f32 %v892, 0.7978846
      %v925 = vmul.f32 %v893, 0.7978846
      %v926 = vmul.f32 %v894, 0.7978846
      %v927 = vmul.f32 %v895, 0.7978846
      %v928 = vmul.f32 %v896, 0.7978846
      %v929 = vmul.f32 %v897, 0.7978846
      %v930 = vmul.f32 %v898, 0.7978846
      %v931 = vmul.f32 %v899, 0.7978846
      %v932 = vmul.f32 %v900, 0.7978846
      %v933 = vmul.f32 %v901, 0.7978846
      %v934 = vmul.f32 %v902, 0.7978846
      %v935 = vmul.f32 %v903, 0.7978846
      %v936 = vmul.f32 %v904, 0.7978846
      %v937 = vmul.f32 %v905, 0.7978846
      %v938 = vmul.f32 %v906, 0.7978846
      %v939 = vmul.f32 %v907, 0.7978846
      %v940 = vmul.f32 %v908, 0.7978846
      %v941 = vmul.f32 %v909, 0.7978846
      %v942 = vmul.f32 %v910, 0.7978846
      %v943 = vtanh.pop %v911
      %v944 = vtanh.pop %v912
      %v945 = vtanh.pop %v913
      %v946 = vtanh.pop %v914
      %v947 = vtanh.pop %v915
      %v948 = vtanh.pop %v916
      %v949 = vtanh.pop %v917
      %v950 = vtanh.pop %v918
      %v951 = vtanh.pop %v919
      %v952 = vtanh.pop %v920
      %v953 = vtanh.pop %v921
      %v954 = vtanh.pop %v922
      %v955 = vtanh.pop %v923
      %v956 = vtanh.pop %v924
      %v957 = vtanh.pop %v925
      %v958 = vtanh.pop %v926
      %v959 = vtanh.pop %v927
      %v960 = vtanh.pop %v928
      %v961 = vtanh.pop %v929
      %v962 = vtanh.pop %v930
      %v963 = vtanh.pop %v931
      %v964 = vtanh.pop %v932
      %v965 = vtanh.pop %v933
      %v966 = vtanh.pop %v934
      %v967 = vtanh.pop %v935
      %v968 = vtanh.pop %v936
      %v969 = vtanh.pop %v937
      %v970 = vtanh.pop %v938
      %v971 = vtanh.pop %v939
      %v972 = vtanh.pop %v940
      %v973 = vtanh.pop %v941
      %v974 = vtanh.pop %v942
      %v975 = vadd.f32 %v943, 1.0
      %v976 = vadd.f32 %v944, 1.0
      %v977 = vadd.f32 %v945, 1.0
      %v978 = vadd.f32 %v946, 1.0
      %v979 = vadd.f32 %v947, 1.0
      %v980 = vadd.f32 %v948, 1.0
      %v981 = vadd.f32 %v949, 1.0
      %v982 = vadd.f32 %v950, 1.0
      %v983 = vadd.f32 %v951, 1.0
      %v984 = vadd.f32 %v952, 1.0
      %v985 = vadd.f32 %v953, 1.0
      %v986 = vadd.f32 %v954, 1.0
      %v987 = vadd.f32 %v955, 1.0
      %v988 = vadd.f32 %v956, 1.0
      %v989 = vadd.f32 %v957, 1.0
      %v990 = vadd.f32 %v958, 1.0
      %v991 = vadd.f32 %v959, 1.0
      %v992 = vadd.f32 %v960, 1.0
      %v993 = vadd.f32 %v961, 1.0
      %v994 = vadd.f32 %v962, 1.0
      %v995 = vadd.f32 %v963, 1.0
      %v996 = vadd.f32 %v964, 1.0
      %v997 = vadd.f32 %v965, 1.0
      %v998 = vadd.f32 %v966, 1.0
      %v999 = vadd.f32 %v967, 1.0
      %v1000 = vadd.f32 %v968, 1.0
      %v1001 = vadd.f32 %v969, 1.0
      %v1002 = vadd.f32 %v970, 1.0
      %v1003 = vadd.f32 %v971, 1.0
      %v1004 = vadd.f32 %v972, 1.0
      %v1005 = vadd.f32 %v973, 1.0
      %v1006 = vadd.f32 %v974, 1.0
      %v1007 = vmul.f32 %v751, %v975
      %v1008 = vmul.f32 %v752, %v976
      %v1009 = vmul.f32 %v753, %v977
      %v1010 = vmul.f32 %v754, %v978
      %v1011 = vmul.f32 %v755, %v979
      %v1012 = vmul.f32 %v756, %v980
      %v1013 = vmul.f32 %v757, %v981
      %v1014 = vmul.f32 %v758, %v982
      %v1015 = vmul.f32 %v759, %v983
      %v1016 = vmul.f32 %v760, %v984
      %v1017 = vmul.f32 %v761, %v985
      %v1018 = vmul.f32 %v762, %v986
      %v1019 = vmul.f32 %v763, %v987
      %v1020 = vmul.f32 %v764, %v988
      %v1021 = vmul.f32 %v765, %v989
      %v1022 = vmul.f32 %v766, %v990
      %v1023 = vmul.f32 %v767, %v991
      %v1024 = vmul.f32 %v768, %v992
      %v1025 = vmul.f32 %v769, %v993
      %v1026 = vmul.f32 %v770, %v994
      %v1027 = vmul.f32 %v771, %v995
      %v1028 = vmul.f32 %v772, %v996
      %v1029 = vmul.f32 %v773, %v997
      %v1030 = vmul.f32 %v774, %v998
      %v1031 = vmul.f32 %v775, %v999
      %v1032 = vmul.f32 %v776, %v1000
      %v1033 = vmul.f32 %v777, %v1001
      %v1034 = vmul.f32 %v778, %v1002
      %v1035 = vmul.f32 %v779, %v1003
      %v1036 = vmul.f32 %v780, %v1004
      %v1037 = vmul.f32 %v781, %v1005
      %v1038 = vmul.f32 %v782, %v1006
      %v1039 = vpack.c.bf16 %v1009, %v1007
      %v1040 = vpack.c.bf16 %v1010, %v1008
      %v1041 = vpack.c.bf16 %v1013, %v1011
      %v1042 = vpack.c.bf16 %v1014, %v1012
      %v1043 = vpack.c.bf16 %v1017, %v1015
      %v1044 = vpack.c.bf16 %v1018, %v1016
      %v1045 = vpack.c.bf16 %v1021, %v1019
      %v1046 = vpack.c.bf16 %v1022, %v1020
      %v1047 = vpack.c.bf16 %v1025, %v1023
      %v1048 = vpack.c.bf16 %v1026, %v1024
      %v1049 = vpack.c.bf16 %v1029, %v1027
      %v1050 = vpack.c.bf16 %v1030, %v1028
      %v1051 = vpack.c.bf16 %v1033, %v1031
      %v1052 = vpack.c.bf16 %v1034, %v1032
      %v1053 = vpack.c.bf16 %v1037, %v1035
      %v1054 = vpack.c.bf16 %v1038, %v1036
      %v1055 = vld [vmem:[%s5] sm:$0xf]
      %v1056 = vld [vmem:[%s5 + $0x4] sm:$0xf]
      %v1057 = vld [vmem:[%s5 + $0x8] sm:$0xf]
      %v1058 = vld [vmem:[%s5 + $0xc] sm:$0xf]
      %v1059 = vld [vmem:[%s5 + $0x10] sm:$0xf]
      %v1060 = vld [vmem:[%s5 + $0x14] sm:$0xf]
      %v1061 = vld [vmem:[%s5 + $0x18] sm:$0xf]
      %v1062 = vld [vmem:[%s5 + $0x1c] sm:$0xf]
      %v1063 = vld [vmem:[%s5 + $0x20] sm:$0xf]
      %v1064 = vld [vmem:[%s5 + $0x24] sm:$0xf]
      %v1065 = vld [vmem:[%s5 + $0x28] sm:$0xf]
      %v1066 = vld [vmem:[%s5 + $0x2c] sm:$0xf]
      %v1067 = vld [vmem:[%s5 + $0x30] sm:$0xf]
      %v1068 = vld [vmem:[%s5 + $0x34] sm:$0xf]
      %v1069 = vld [vmem:[%s5 + $0x38] sm:$0xf]
      %v1070 = vld [vmem:[%s5 + $0x3c] sm:$0xf]
      %v1071 = vld [vmem:[%s5 + $0x40] sm:$0xf]
      %v1072 = vld [vmem:[%s5 + $0x44] sm:$0xf]
      %v1073 = vld [vmem:[%s5 + $0x48] sm:$0xf]
      %v1074 = vld [vmem:[%s5 + $0x4c] sm:$0xf]
      %v1075 = vld [vmem:[%s5 + $0x50] sm:$0xf]
      %v1076 = vld [vmem:[%s5 + $0x54] sm:$0xf]
      %v1077 = vld [vmem:[%s5 + $0x58] sm:$0xf]
      %v1078 = vld [vmem:[%s5 + $0x5c] sm:$0xf]
      %v1079 = vld [vmem:[%s5 + $0x60] sm:$0xf]
      %v1080 = vld [vmem:[%s5 + $0x64] sm:$0xf]
      %v1081 = vld [vmem:[%s5 + $0x68] sm:$0xf]
      %v1082 = vld [vmem:[%s5 + $0x6c] sm:$0xf]
      %v1083 = vld [vmem:[%s5 + $0x70] sm:$0xf]
      %v1084 = vld [vmem:[%s5 + $0x74] sm:$0xf]
      %v1085 = vld [vmem:[%s5 + $0x78] sm:$0xf]
      %v1086 = vld [vmem:[%s5 + $0x7c] sm:$0xf]
      %v1087 = vld [vmem:[%s6] sm:$0x1]
      %v1089 = vlaneseq
      %v1090 = vshrl.u32 %v1089, 7
      %v1091 = vsub.s32 0, %v1090
      %v1092 = vrot.slane %v1087, %v1091
      %v1126 = vunpack.c.l.b16 %v1055
      %v1127 = vunpack.c.l.b16 %v1056
      %v1128 = vunpack.c.l.b16 %v1057
      %v1129 = vunpack.c.l.b16 %v1058
      %v1130 = vunpack.c.l.b16 %v1059
      %v1131 = vunpack.c.l.b16 %v1060
      %v1132 = vunpack.c.l.b16 %v1061
      %v1133 = vunpack.c.l.b16 %v1062
      %v1134 = vunpack.c.l.b16 %v1063
      %v1135 = vunpack.c.l.b16 %v1064
      %v1136 = vunpack.c.l.b16 %v1065
      %v1137 = vunpack.c.l.b16 %v1066
      %v1138 = vunpack.c.l.b16 %v1067
      %v1139 = vunpack.c.l.b16 %v1068
      %v1140 = vunpack.c.l.b16 %v1069
      %v1141 = vunpack.c.l.b16 %v1070
      %v1142 = vunpack.c.l.b16 %v1071
      %v1143 = vunpack.c.l.b16 %v1072
      %v1144 = vunpack.c.l.b16 %v1073
      %v1145 = vunpack.c.l.b16 %v1074
      %v1146 = vunpack.c.l.b16 %v1075
      %v1147 = vunpack.c.l.b16 %v1076
      %v1148 = vunpack.c.l.b16 %v1077
      %v1149 = vunpack.c.l.b16 %v1078
      %v1150 = vunpack.c.l.b16 %v1079
      %v1151 = vunpack.c.l.b16 %v1080
      %v1152 = vunpack.c.l.b16 %v1081
      %v1153 = vunpack.c.l.b16 %v1082
      %v1154 = vunpack.c.l.b16 %v1083
      %v1155 = vunpack.c.l.b16 %v1084
      %v1156 = vunpack.c.l.b16 %v1085
      %v1157 = vunpack.c.l.b16 %v1086
      %v1158 = vpack.c.b16 %v1127, %v1126
      %v1159 = vpack.c.b16 %v1129, %v1128
      %v1160 = vpack.c.b16 %v1131, %v1130
      %v1161 = vpack.c.b16 %v1133, %v1132
      %v1162 = vpack.c.b16 %v1135, %v1134
      %v1163 = vpack.c.b16 %v1137, %v1136
      %v1164 = vpack.c.b16 %v1139, %v1138
      %v1165 = vpack.c.b16 %v1141, %v1140
      %v1166 = vpack.c.b16 %v1143, %v1142
      %v1167 = vpack.c.b16 %v1145, %v1144
      %v1168 = vpack.c.b16 %v1147, %v1146
      %v1169 = vpack.c.b16 %v1149, %v1148
      %v1170 = vpack.c.b16 %v1151, %v1150
      %v1171 = vpack.c.b16 %v1153, %v1152
      %v1172 = vpack.c.b16 %v1155, %v1154
      %v1173 = vpack.c.b16 %v1157, %v1156
      %1190 = vmatprep.subr.bf16.mxu0 0
      %1191 = vmatpush1.bf16.msra.mxu0 %v1158
      %1192 = vmatprep.subr.bf16.mxu0 0
      %1193 = vmatpush1.bf16.msra.mxu0 %v1159
      %1194 = vmatprep.subr.bf16.mxu0 0
      %1195 = vmatpush1.bf16.msra.mxu0 %v1160
      %1196 = vmatprep.subr.bf16.mxu0 0
      %1197 = vmatpush1.bf16.msra.mxu0 %v1161
      %1198 = vmatprep.subr.bf16.mxu0 0
      %1199 = vmatpush1.bf16.msra.mxu0 %v1162
      %1200 = vmatprep.subr.bf16.mxu0 0
      %1201 = vmatpush1.bf16.msra.mxu0 %v1163
      %1202 = vmatprep.subr.bf16.mxu0 0
      %1203 = vmatpush1.bf16.msra.mxu0 %v1164
      %1204 = vmatprep.subr.bf16.mxu0 0
      %1205 = vmatpush1.bf16.msra.mxu0 %v1165
      %1206 = vmatprep.subr.bf16.mxu0 0
      %1207 = vmatpush1.bf16.msra.mxu0 %v1166
      %1208 = vmatprep.subr.bf16.mxu0 0
      %1209 = vmatpush1.bf16.msra.mxu0 %v1167
      %1210 = vmatprep.subr.bf16.mxu0 0
      %1211 = vmatpush1.bf16.msra.mxu0 %v1168
      %1212 = vmatprep.subr.bf16.mxu0 0
      %1213 = vmatpush1.bf16.msra.mxu0 %v1169
      %1214 = vmatprep.subr.bf16.mxu0 0
      %1215 = vmatpush1.bf16.msra.mxu0 %v1170
      %1216 = vmatprep.subr.bf16.mxu0 0
      %1217 = vmatpush1.bf16.msra.mxu0 %v1171
      %1218 = vmatprep.subr.bf16.mxu0 0
      %1219 = vmatpush1.bf16.msra.mxu0 %v1172
      %1220 = vmatprep.subr.bf16.mxu0 0
      %1221 = vmatpush1.bf16.msra.mxu0 %v1173
      %1222 = vmatprep.mubr.bf16.mxu0 %v1040
      %1223 = vmatmul.mubr.bf16.gmra.mrb[0].mxu0 %v1039
      %v1224 = vpop.f32.mrb[0].mxu0
      %v1225 = vadd.f32 %v1092, %v1224
      %v1226 = vpop.f32.mrb[0].mxu0
      %v1227 = vpop.f32.mrb[0].mxu0
      %v1228 = vadd.f32 %v1092, %v1227
      %v1229 = vpop.f32.mrb[0].mxu0
      %1230 = vmatprep.mubr.bf16.mxu0 %v1042
      %1231 = vmatmul.mubr.bf16.gmra.mrb[0].mxu0 %v1041
      %v1232 = vpop.f32.mrb[0].mxu0
      %v1233 = vadd.f32 %v1092, %v1232
      %v1234 = vpop.f32.mrb[0].mxu0
      %v1235 = vpop.f32.mrb[0].mxu0
      %v1236 = vadd.f32 %v1092, %v1235
      %v1237 = vpop.f32.mrb[0].mxu0
      %1238 = vmatprep.mubr.bf16.mxu0 %v1044
      %1239 = vmatmul.mubr.bf16.gmra.mrb[0].mxu0 %v1043
      %v1240 = vpop.f32.mrb[0].mxu0
      %v1241 = vadd.f32 %v1092, %v1240
      %v1242 = vpop.f32.mrb[0].mxu0
      %v1243 = vpop.f32.mrb[0].mxu0
      %v1244 = vadd.f32 %v1092, %v1243
      %v1245 = vpop.f32.mrb[0].mxu0
      %1246 = vmatprep.mubr.bf16.mxu0 %v1046
      %1247 = vmatmul.mubr.bf16.gmra.mrb[0].mxu0 %v1045
      %v1248 = vpop.f32.mrb[0].mxu0
      %v1249 = vadd.f32 %v1092, %v1248
      %v1250 = vpop.f32.mrb[0].mxu0
      %v1251 = vpop.f32.mrb[0].mxu0
      %v1252 = vadd.f32 %v1092, %v1251
      %v1253 = vpop.f32.mrb[0].mxu0
      %1254 = vmatprep.mubr.bf16.mxu0 %v1048
      %1255 = vmatmul.mubr.bf16.gmra.mrb[0].mxu0 %v1047
      %v1256 = vpop.f32.mrb[0].mxu0
      %v1257 = vadd.f32 %v1092, %v1256
      %v1258 = vpop.f32.mrb[0].mxu0
      %v1259 = vpop.f32.mrb[0].mxu0
      %v1260 = vadd.f32 %v1092, %v1259
      %v1261 = vpop.f32.mrb[0].mxu0
      %1262 = vmatprep.mubr.bf16.mxu0 %v1050
      %1263 = vmatmul.mubr.bf16.gmra.mrb[0].mxu0 %v1049
      %v1264 = vpop.f32.mrb[0].mxu0
      %v1265 = vadd.f32 %v1092, %v1264
      %v1266 = vpop.f32.mrb[0].mxu0
      %v1267 = vpop.f32.mrb[0].mxu0
      %v1268 = vadd.f32 %v1092, %v1267
      %v1269 = vpop.f32.mrb[0].mxu0
      %1270 = vmatprep.mubr.bf16.mxu0 %v1052
      %1271 = vmatmul.mubr.bf16.gmra.mrb[0].mxu0 %v1051
      %v1272 = vpop.f32.mrb[0].mxu0
      %v1273 = vadd.f32 %v1092, %v1272
      %v1274 = vpop.f32.mrb[0].mxu0
      %v1275 = vpop.f32.mrb[0].mxu0
      %v1276 = vadd.f32 %v1092, %v1275
      %v1277 = vpop.f32.mrb[0].mxu0
      %1278 = vmatprep.mubr.bf16.mxu0 %v1054
      %1279 = vmatmul.mubr.bf16.gmra.mrb[0].mxu0 %v1053
      %v1280 = vpop.f32.mrb[0].mxu0
      %v1281 = vadd.f32 %v1092, %v1280
      %v1282 = vpop.f32.mrb[0].mxu0
      %v1283 = vpop.f32.mrb[0].mxu0
      %v1284 = vadd.f32 %v1092, %v1283
      %v1285 = vpop.f32.mrb[0].mxu0
      %1286 = vdwg.mxu0
      %v1287 = vadd.f32 %v1225, %v283
      %v1288 = vadd.f32 %v1228, %v284
      %v1289 = vadd.f32 %v1233, %v285
      %v1290 = vadd.f32 %v1236, %v286
      %v1291 = vadd.f32 %v1241, %v287
      %v1292 = vadd.f32 %v1244, %v288
      %v1293 = vadd.f32 %v1249, %v289
      %v1294 = vadd.f32 %v1252, %v290
      %v1295 = vadd.f32 %v1257, %v291
      %v1296 = vadd.f32 %v1260, %v292
      %v1297 = vadd.f32 %v1265, %v293
      %v1298 = vadd.f32 %v1268, %v294
      %v1299 = vadd.f32 %v1273, %v295
      %v1300 = vadd.f32 %v1276, %v296
      %v1301 = vadd.f32 %v1281, %v297
      %v1302 = vadd.f32 %v1284, %v298
      %1303 = vst [vmem:[%s280] sm:$0xff] %v1287
      %1304 = vst [vmem:[%s280 + $0x8] sm:$0xff] %v1288
      %1305 = vst [vmem:[%s280 + $0x10] sm:$0xff] %v1289
      %1306 = vst [vmem:[%s280 + $0x18] sm:$0xff] %v1290
      %1307 = vst [vmem:[%s280 + $0x20] sm:$0xff] %v1291
      %1308 = vst [vmem:[%s280 + $0x28] sm:$0xff] %v1292
      %1309 = vst [vmem:[%s280 + $0x30] sm:$0xff] %v1293
      %1310 = vst [vmem:[%s280 + $0x38] sm:$0xff] %v1294
      %1311 = vst [vmem:[%s280 + $0x40] sm:$0xff] %v1295
      %1312 = vst [vmem:[%s280 + $0x48] sm:$0xff] %v1296
      %1313 = vst [vmem:[%s280 + $0x50] sm:$0xff] %v1297
      %1314 = vst [vmem:[%s280 + $0x58] sm:$0xff] %v1298
      %1315 = vst [vmem:[%s280 + $0x60] sm:$0xff] %v1299
      %1316 = vst [vmem:[%s280 + $0x68] sm:$0xff] %v1300
      %1317 = vst [vmem:[%s280 + $0x70] sm:$0xff] %v1301
      %1318 = vst [vmem:[%s280 + $0x78] sm:$0xff] %v1302
      %s1319 = smul.u32 16, %s18
      %p1320 = scmp.lt.s32.totalorder %s1319, 63
      %s1321 = scalar_select %p1320, %s1319, 63
      %s1322 = smul.addr %s1321, 8
      %s1323 = scalar_lea.vmem %s7, %s1322
      // Predicated region
      $region49: #{transformer_forward.8} parent=47 // pred_check
        %p1324 = pneg %p188
      $region50: #{transformer_forward.8} parent=47 // pred_check_branch
        %1326 = sbr.rel (%p1324) target = $region52
      $region51: #{transformer_forward.8} parent=47 // pred_region
        %s1327 = smul.u32 16, %s18
      $region52: #{transformer_forward.8} parent=47 // pred_fallthru
        _
    $region48: #{transformer_forward.8} parent=5 // pred_fallthru
      _
    %p1328 = scmp.le.s32.totalorder 2, %s13
    // Predicated region
    $region53: #{transformer_forward.8} parent=5 // pred_check
      %p1329 = pneg %p1328
    $region54: #{transformer_forward.8} parent=5 // pred_check_branch
      %1331 = sbr.rel (%p1329) target = $region56
    $region55: #{transformer_forward.8} parent=5 // pred_region
      %s1332 = ssub.s32 %s13, 2
      // Predicated region
      $region57: #{transformer_forward.8} parent=55 // pred_check
        %p1333 = pneg %p194
      $region58: #{transformer_forward.8} parent=55 // pred_check_branch
        %1335 = sbr.rel (%p1333) target = $region60
      $region59: #{transformer_forward.8} parent=55 // pred_region
        %s1336 = smul.u32 16, %s19
        %p1337 = scmp.lt.s32.totalorder %s1336, 63
        %s1338 = scalar_select %p1337, %s1336, 63
        %s1339 = smul.addr %s1338, 8
        %s1340 = scalar_lea.vmem %s7, %s1339
      $region60: #{transformer_forward.8} parent=55 // pred_fallthru
        _
    $region56: #{transformer_forward.8} parent=5 // pred_fallthru
      _
  $region6: #{transformer_forward.8} parent=0 // loop_footer
    %s17 = sadd.s32 1, %s13
  $region7: #{transformer_forward.8} parent=0 // loop_footer_branch
    %12 = sbr.rel target = $region3
  $region8: #{transformer_forward.8} parent=0 // loop_exit
    _

// kernel: transformer_forward.6
$region0: #{transformer_forward.6}
  #allocation0 [shape = 'u32[]', space=smem, size = 0x4, offset = 0x4, fixed_abs, tag = 'smem constant byte address 0x4 - core index']
  #allocation1 [shape = 'u32[144,128]{1,0:T(1,128)}', space=vmem, size = 0x12000, scoped, tag = 'internal scratch']
  %s0 = inlined_call_operand.vmem [shape: f32[512,128], index: 0, kind: input, shape index: {}]
  %s1 = inlined_call_operand.vmem [shape: f32[1,128], index: 1, kind: input, shape index: {}]
  %s2 = inlined_call_operand.vmem [shape: f32[1,128], index: 2, kind: input, shape index: {}]
  %s3 = inlined_call_operand.vmem [shape: bf16[128,384], index: 3, kind: input, shape index: {}]
  %s4 = inlined_call_operand.vmem [shape: bf16[512,384], index: 4, kind: output, shape index: {}]
  %s5 = sld [smem:[#allocation0]]
  $region49: #{transformer_forward.6} parent=0
    _
  %s7 = ssub.s32 1, %s5
  %s8 = scalar_select 0, %s7, %s5
  loop: start=0, step=1, limit=6
  $region2: #{transformer_forward.6} parent=0 // loop_pre_header
    _
  $region3: #{transformer_forward.6} parent=0 // loop_header
    %s10 = sphi 0, %s14
    %p11 = scmp.ge.s32.totalorder %s10, 6
    %s20 = sphi 0, %s22
    %s23 = sphi 0, %s20
    %s24 = sphi 0, %s23
    %s40 = sphi 0, %s24
    %s44 = sphi 0, %s44
    %s46 = sphi 0, %s44
    %s47 = sphi 0, %s46
    %s61 = sphi 0, %s47
    %s65 = sphi 0, %s65
    %s67 = sphi 0, %s65
    %s68 = sphi 0, %s67
    %s82 = sphi 0, %s68
    %s86 = sphi 0, %s86
    %s88 = sphi 0, %s86
    %s89 = sphi 0, %s88
    %s103 = sphi 0, %s89
    %s109 = sphi 0, %s111
    %s112 = sphi 0, %s109
    %s113 = sphi 0, %s112
    %s129 = sphi 0, %s113
  $region4: #{transformer_forward.6} parent=0 // loop_header_branch
    %13 = sbr.rel (%p11) target = $region8
  $region5: #{transformer_forward.6} parent=0 // loop_body
    %s15 = ssub.s32 %s10, 1
    %s16 = ssub.s32 %s10, 2
    %s17 = sadd.s32 %s10, 1
    %s18 = ssub.s32 %s10, %s17
    %p19 = scmp.eq.s32.totalorder %s18, 0
    %s21 = sadd.s32 %s20, 1
    %s22 = scalar_select %p19, %s20, %s21
    %p25 = pneg %p19
    %p26 = scmp.eq.s32.totalorder %s10, 3
    %p27 = por %p25, %p26
    %p28 = scmp.ne.s32.totalorder %s20, %s23
    %p29 = scmp.eq.s32.totalorder %s10, 0
    %p30 = por %p28, %p29
    %p31 = scmp.ne.s32.totalorder %s20, %s23
    %p32 = scmp.eq.s32.totalorder %s15, 3
    %p33 = por %p31, %p32
    %p34 = scmp.ne.s32.totalorder %s23, %s24
    %p35 = scmp.eq.s32.totalorder %s15, 0
    %p36 = por %p34, %p35
    %p37 = scmp.ne.s32.totalorder %s23, %s24
    %p38 = scmp.eq.s32.totalorder %s16, 3
    %p39 = por %p37, %p38
    %p41 = scmp.ne.s32.totalorder %s24, %s40
    %p42 = scmp.eq.s32.totalorder %s16, 0
    %p43 = por %p41, %p42
    %s45 = sadd.s32 %s44, 1
    %p48 = scmp.eq.s32.totalorder %s10, 3
    %p49 = scmp.ne.s32.totalorder %s44, %s46
    %p50 = scmp.eq.s32.totalorder %s10, 0
    %p51 = por %p49, %p50
    %p52 = scmp.ne.s32.totalorder %s44, %s46
    %p53 = scmp.eq.s32.totalorder %s15, 3
    %p54 = por %p52, %p53
    %p55 = scmp.ne.s32.totalorder %s46, %s47
    %p56 = scmp.eq.s32.totalorder %s15, 0
    %p57 = por %p55, %p56
    %p58 = scmp.ne.s32.totalorder %s46, %s47
    %p59 = scmp.eq.s32.totalorder %s16, 3
    %p60 = por %p58, %p59
    %p62 = scmp.ne.s32.totalorder %s47, %s61
    %p63 = scmp.eq.s32.totalorder %s16, 0
    %p64 = por %p62, %p63
    %s66 = sadd.s32 %s65, 1
    %p69 = scmp.eq.s32.totalorder %s10, 3
    %p70 = scmp.ne.s32.totalorder %s65, %s67
    %p71 = scmp.eq.s32.totalorder %s10, 0
    %p72 = por %p70, %p71
    %p73 = scmp.ne.s32.totalorder %s65, %s67
    %p74 = scmp.eq.s32.totalorder %s15, 3
    %p75 = por %p73, %p74
    %p76 = scmp.ne.s32.totalorder %s67, %s68
    %p77 = scmp.eq.s32.totalorder %s15, 0
    %p78 = por %p76, %p77
    %p79 = scmp.ne.s32.totalorder %s67, %s68
    %p80 = scmp.eq.s32.totalorder %s16, 3
    %p81 = por %p79, %p80
    %p83 = scmp.ne.s32.totalorder %s68, %s82
    %p84 = scmp.eq.s32.totalorder %s16, 0
    %p85 = por %p83, %p84
    %s87 = sadd.s32 %s86, 1
    %p90 = scmp.eq.s32.totalorder %s10, 3
    %p91 = scmp.ne.s32.totalorder %s86, %s88
    %p92 = scmp.eq.s32.totalorder %s10, 0
    %p93 = por %p91, %p92
    %p94 = scmp.ne.s32.totalorder %s86, %s88
    %p95 = scmp.eq.s32.totalorder %s15, 3
    %p96 = por %p94, %p95
    %p97 = scmp.ne.s32.totalorder %s88, %s89
    %p98 = scmp.eq.s32.totalorder %s15, 0
    %p99 = por %p97, %p98
    %p100 = scmp.ne.s32.totalorder %s88, %s89
    %p101 = scmp.eq.s32.totalorder %s16, 3
    %p102 = por %p100, %p101
    %p104 = scmp.ne.s32.totalorder %s89, %s103
    %p105 = scmp.eq.s32.totalorder %s16, 0
    %p106 = por %p104, %p105
    %s107 = ssub.s32 %s10, %s17
    %p108 = scmp.eq.s32.totalorder %s107, 0
    %s110 = sadd.s32 %s109, 1
    %s111 = scalar_select %p108, %s109, %s110
    %p114 = pneg %p108
    %p115 = scmp.eq.s32.totalorder %s10, 3
    %p116 = por %p114, %p115
    %p117 = scmp.ne.s32.totalorder %s109, %s112
    %p118 = scmp.eq.s32.totalorder %s10, 0
    %p119 = por %p117, %p118
    %p120 = scmp.ne.s32.totalorder %s109, %s112
    %p121 = scmp.eq.s32.totalorder %s15, 3
    %p122 = por %p120, %p121
    %p123 = scmp.ne.s32.totalorder %s112, %s113
    %p124 = scmp.eq.s32.totalorder %s15, 0
    %p125 = por %p123, %p124
    %p126 = scmp.ne.s32.totalorder %s112, %s113
    %p127 = scmp.eq.s32.totalorder %s16, 3
    %p128 = por %p126, %p127
    %p130 = scmp.ne.s32.totalorder %s113, %s129
    %p131 = scmp.eq.s32.totalorder %s16, 0
    %p132 = por %p130, %p131
    %p133 = scmp.le.s32.totalorder 1, %s10
    %p134 = scmp.lt.s32.totalorder %s10, 5
    %p135 = pnand %p133, %p134
    %p136 = pneg %p135
    // Predicated region
    $region9: #{transformer_forward.6} parent=5 // pred_check
      _
    $region10: #{transformer_forward.6} parent=5 // pred_check_branch
      %138 = sbr.rel (%p135) target = $region12
    $region11: #{transformer_forward.6} parent=5 // pred_region
      %s139 = ssub.s32 %s10, 1
      // Predicated region
      $region13: #{transformer_forward.6} parent=11 // pred_check
        %p140 = pneg %p57
      $region14: #{transformer_forward.6} parent=11 // pred_check_branch
        %142 = sbr.rel (%p140) target = $region16
      $region15: #{transformer_forward.6} parent=11 // pred_region
        _
      $region16: #{transformer_forward.6} parent=11 // pred_fallthru
        _
      // Predicated region
      $region17: #{transformer_forward.6} parent=11 // pred_check
        %p143 = pneg %p78
      $region18: #{transformer_forward.6} parent=11 // pred_check_branch
        %145 = sbr.rel (%p143) target = $region20
      $region19: #{transformer_forward.6} parent=11 // pred_region
        _
      $region20: #{transformer_forward.6} parent=11 // pred_fallthru
        _
      // Predicated region
      $region21: #{transformer_forward.6} parent=11 // pred_check
        %p146 = pneg %p99
      $region22: #{transformer_forward.6} parent=11 // pred_check_branch
        %148 = sbr.rel (%p146) target = $region24
      $region23: #{transformer_forward.6} parent=11 // pred_region
        _
      $region24: #{transformer_forward.6} parent=11 // pred_fallthru
        _
    $region12: #{transformer_forward.6} parent=5 // pred_fallthru
      _
    %p149 = scmp.lt.s32.totalorder %s10, 4
    // Predicated region
    $region25: #{transformer_forward.6} parent=5 // pred_check
      %p150 = pneg %p149
    $region26: #{transformer_forward.6} parent=5 // pred_check_branch
      %152 = sbr.rel (%p150) target = $region28
    $region27: #{transformer_forward.6} parent=5 // pred_region
      // Predicated region
      $region29: #{transformer_forward.6} parent=27 // pred_check
        %p153 = pneg %p30
      $region30: #{transformer_forward.6} parent=27 // pred_check_branch
        %155 = sbr.rel (%p153) target = $region32
      $region31: #{transformer_forward.6} parent=27 // pred_region
        %s156 = smul.u32 16, %s10
        %p157 = scmp.lt.s32.totalorder %s156, 63
        %s158 = scalar_select %p157, %s156, 63
        %s159 = smul.addr %s158, 8
        %s160 = scalar_lea.vmem %s0, %s159
        %s161 = smul.u32 16, %s10
      $region32: #{transformer_forward.6} parent=27 // pred_fallthru
        _
    $region28: #{transformer_forward.6} parent=5 // pred_fallthru
      _
    %p162 = scmp.le.s32.totalorder 1, %s10
    %p163 = scmp.lt.s32.totalorder %s10, 5
    %p164 = pnand %p162, %p163
    %p165 = pneg %p164
    // Predicated region
    $region33: #{transformer_forward.6} parent=5 // pred_check
      _
    $region34: #{transformer_forward.6} parent=5 // pred_check_branch
      %167 = sbr.rel (%p164) target = $region36
    $region35: #{transformer_forward.6} parent=5 // pred_region
      %s168 = ssub.s32 %s10, 1
      %s169 = smul.u32 16, %s15
      %p170 = scmp.lt.s32.totalorder %s169, 63
      %s171 = scalar_select %p170, %s169, 63
      %s172 = smul.addr %s171, 8
      %s173 = scalar_lea.vmem %s0, %s172
      %p174 = pneg %p36
      %p175 = pneg %p33
      %p176 = pneg %p57
      %p177 = pneg %p54
      %p178 = pneg %p78
      %p179 = pneg %p75
      %p180 = pneg %p99
      %p181 = pneg %p96
      %p182 = pneg %p125
      %p183 = pneg %p122
      %s184 = smul.u32 16, %s15
      %p185 = scmp.lt.s32.totalorder %s184, 63
      %s186 = scalar_select %p185, %s184, 63
      %s187 = smul.addr %s186, 3
      %s188 = smul.addr %s187, 4
      %s189 = scalar_lea.vmem %s4, %s188
      %s190 = smul.u32 16, %s15
      %p191 = scmp.lt.s32.totalorder %s190, 63
      %s192 = scalar_select %p191, %s190, 63
      %s193 = smul.addr %s192, 8
      %s194 = scalar_lea.vmem %s0, %s193
      %s195 = smul.u32 16, %s15
      %s196 = smul.u32 16, %s15
      %p197 = scmp.lt.s32.totalorder %s196, 63
      %s198 = scalar_select %p197, %s196, 63
      %s199 = smul.addr %s198, 3
      %s200 = smul.addr %s199, 4
      %s201 = scalar_lea.vmem %s4, %s200
      %s202 = smul.u32 16, %s15
      %v204 = vld [vmem:[%s194] sm:$0xff]
      %v205 = vld [vmem:[%s194 + $0x8] sm:$0xff]
      %v206 = vld [vmem:[%s194 + $0x10] sm:$0xff]
      %v207 = vld [vmem:[%s194 + $0x18] sm:$0xff]
      %v208 = vld [vmem:[%s194 + $0x20] sm:$0xff]
      %v209 = vld [vmem:[%s194 + $0x28] sm:$0xff]
      %v210 = vld [vmem:[%s194 + $0x30] sm:$0xff]
      %v211 = vld [vmem:[%s194 + $0x38] sm:$0xff]
      %v212 = vld [vmem:[%s194 + $0x40] sm:$0xff]
      %v213 = vld [vmem:[%s194 + $0x48] sm:$0xff]
      %v214 = vld [vmem:[%s194 + $0x50] sm:$0xff]
      %v215 = vld [vmem:[%s194 + $0x58] sm:$0xff]
      %v216 = vld [vmem:[%s194 + $0x60] sm:$0xff]
      %v217 = vld [vmem:[%s194 + $0x68] sm:$0xff]
      %v218 = vld [vmem:[%s194 + $0x70] sm:$0xff]
      %v219 = vld [vmem:[%s194 + $0x78] sm:$0xff]
      %v220 = vld [vmem:[%s1] sm:$0x1]
      %v221 = vld [vmem:[%s2] sm:$0x1]
      %222 = vadd.xlane.f32.xlu0 %v204
      %v223 = vpop.xlane.xlu0 %222
      %224 = vadd.xlane.f32.xlu0 %v205
      %v225 = vpop.xlane.xlu0 %224
      %226 = vadd.xlane.f32.xlu0 %v206
      %v227 = vpop.xlane.xlu0 %226
      %228 = vadd.xlane.f32.xlu0 %v207
      %v229 = vpop.xlane.xlu0 %228
      %230 = vadd.xlane.f32.xlu0 %v208
      %v231 = vpop.xlane.xlu0 %230
      %232 = vadd.xlane.f32.xlu0 %v209
      %v233 = vpop.xlane.xlu0 %232
      %234 = vadd.xlane.f32.xlu0 %v210
      %v235 = vpop.xlane.xlu0 %234
      %236 = vadd.xlane.f32.xlu0 %v211
      %v237 = vpop.xlane.xlu0 %236
      %238 = vadd.xlane.f32.xlu0 %v212
      %v239 = vpop.xlane.xlu0 %238
      %240 = vadd.xlane.f32.xlu0 %v213
      %v241 = vpop.xlane.xlu0 %240
      %242 = vadd.xlane.f32.xlu0 %v214
      %v243 = vpop.xlane.xlu0 %242
      %244 = vadd.xlane.f32.xlu0 %v215
      %v245 = vpop.xlane.xlu0 %244
      %246 = vadd.xlane.f32.xlu0 %v216
      %v247 = vpop.xlane.xlu0 %246
      %248 = vadd.xlane.f32.xlu0 %v217
      %v249 = vpop.xlane.xlu0 %248
      %250 = vadd.xlane.f32.xlu0 %v218
      %v251 = vpop.xlane.xlu0 %250
      %252 = vadd.xlane.f32.xlu0 %v219
      %v253 = vpop.xlane.xlu0 %252
      %v254 = vrcp.pop 128.0
      %v255 = vmul.f32 %v223, %v254
      %v256 = vmul.f32 %v225, %v254
      %v257 = vmul.f32 %v227, %v254
      %v258 = vmul.f32 %v229, %v254
      %v259 = vmul.f32 %v231, %v254
      %v260 = vmul.f32 %v233, %v254
      %v261 = vmul.f32 %v235, %v254
      %v262 = vmul.f32 %v237, %v254
      %v263 = vmul.f32 %v239, %v254
      %v264 = vmul.f32 %v241, %v254
      %v265 = vmul.f32 %v243, %v254
      %v266 = vmul.f32 %v245, %v254
      %v267 = vmul.f32 %v247, %v254
      %v268 = vmul.f32 %v249, %v254
      %v269 = vmul.f32 %v251, %v254
      %v270 = vmul.f32 %v253, %v254
      %v271 = vsub.f32 %v204, %v255
      %v272 = vsub.f32 %v205, %v256
      %v273 = vsub.f32 %v206, %v257
      %v274 = vsub.f32 %v207, %v258
      %v275 = vsub.f32 %v208, %v259
      %v276 = vsub.f32 %v209, %v260
      %v277 = vsub.f32 %v210, %v261
      %v278 = vsub.f32 %v211, %v262
      %v279 = vsub.f32 %v212, %v263
      %v280 = vsub.f32 %v213, %v264
      %v281 = vsub.f32 %v214, %v265
      %v282 = vsub.f32 %v215, %v266
      %v283 = vsub.f32 %v216, %v267
      %v284 = vsub.f32 %v217, %v268
      %v285 = vsub.f32 %v218, %v269
      %v286 = vsub.f32 %v219, %v270
      %v287 = vmul.f32 %v271, %v271
      %v288 = vmul.f32 %v272, %v272
      %v289 = vmul.f32 %v273, %v273
      %v290 = vmul.f32 %v274, %v274
      %v291 = vmul.f32 %v275, %v275
      %v292 = vmul.f32 %v276, %v276
      %v293 = vmul.f32 %v277, %v277
      %v294 = vmul.f32 %v278, %v278
      %v295 = vmul.f32 %v279, %v279
      %v296 = vmul.f32 %v280, %v280
      %v297 = vmul.f32 %v281, %v281
      %v298 = vmul.f32 %v282, %v282
      %v299 = vmul.f32 %v283, %v283
      %v300 = vmul.f32 %v284, %v284
      %v301 = vmul.f32 %v285, %v285
      %v302 = vmul.f32 %v286, %v286
      %303 = vadd.xlane.f32.xlu0 %v287
      %v304 = vpop.xlane.xlu0 %303
      %305 = vadd.xlane.f32.xlu0 %v288
      %v306 = vpop.xlane.xlu0 %305
      %307 = vadd.xlane.f32.xlu0 %v289
      %v308 = vpop.xlane.xlu0 %307
      %309 = vadd.xlane.f32.xlu0 %v290
      %v310 = vpop.xlane.xlu0 %309
      %311 = vadd.xlane.f32.xlu0 %v291
      %v312 = vpop.xlane.xlu0 %311
      %313 = vadd.xlane.f32.xlu0 %v292
      %v314 = vpop.xlane.xlu0 %313
      %315 = vadd.xlane.f32.xlu0 %v293
      %v316 = vpop.xlane.xlu0 %315
      %317 = vadd.xlane.f32.xlu0 %v294
      %v318 = vpop.xlane.xlu0 %317
      %319 = vadd.xlane.f32.xlu0 %v295
      %v320 = vpop.xlane.xlu0 %319
      %321 = vadd.xlane.f32.xlu0 %v296
      %v322 = vpop.xlane.xlu0 %321
      %323 = vadd.xlane.f32.xlu0 %v297
      %v324 = vpop.xlane.xlu0 %323
      %325 = vadd.xlane.f32.xlu0 %v298
      %v326 = vpop.xlane.xlu0 %325
      %327 = vadd.xlane.f32.xlu0 %v299
      %v328 = vpop.xlane.xlu0 %327
      %329 = vadd.xlane.f32.xlu0 %v300
      %v330 = vpop.xlane.xlu0 %329
      %331 = vadd.xlane.f32.xlu0 %v301
      %v332 = vpop.xlane.xlu0 %331
      %333 = vadd.xlane.f32.xlu0 %v302
      %v334 = vpop.xlane.xlu0 %333
      %v335 = vmul.f32 %v304, %v254
      %v336 = vmul.f32 %v306, %v254
      %v337 = vmul.f32 %v308, %v254
      %v338 = vmul.f32 %v310, %v254
      %v339 = vmul.f32 %v312, %v254
      %v340 = vmul.f32 %v314, %v254
      %v341 = vmul.f32 %v316, %v254
      %v342 = vmul.f32 %v318, %v254
      %v343 = vmul.f32 %v320, %v254
      %v344 = vmul.f32 %v322, %v254
      %v345 = vmul.f32 %v324, %v254
      %v346 = vmul.f32 %v326, %v254
      %v347 = vmul.f32 %v328, %v254
      %v348 = vmul.f32 %v330, %v254
      %v349 = vmul.f32 %v332, %v254
      %v350 = vmul.f32 %v334, %v254
      %v351 = vadd.f32 %v335, 1e-05
      %v352 = vadd.f32 %v336, 1e-05
      %v353 = vadd.f32 %v337, 1e-05
      %v354 = vadd.f32 %v338, 1e-05
      %v355 = vadd.f32 %v339, 1e-05
      %v356 = vadd.f32 %v340, 1e-05
      %v357 = vadd.f32 %v341, 1e-05
      %v358 = vadd.f32 %v342, 1e-05
      %v359 = vadd.f32 %v343, 1e-05
      %v360 = vadd.f32 %v344, 1e-05
      %v361 = vadd.f32 %v345, 1e-05
      %v362 = vadd.f32 %v346, 1e-05
      %v363 = vadd.f32 %v347, 1e-05
      %v364 = vadd.f32 %v348, 1e-05
      %v365 = vadd.f32 %v349, 1e-05
      %v366 = vadd.f32 %v350, 1e-05
      %v367 = vrsqrt.pop %v351
      %v368 = vrsqrt.pop %v352
      %v369 = vrsqrt.pop %v353
      %v370 = vrsqrt.pop %v354
      %v371 = vrsqrt.pop %v355
      %v372 = vrsqrt.pop %v356
      %v373 = vrsqrt.pop %v357
      %v374 = vrsqrt.pop %v358
      %v375 = vrsqrt.pop %v359
      %v376 = vrsqrt.pop %v360
      %v377 = vrsqrt.pop %v361
      %v378 = vrsqrt.pop %v362
      %v379 = vrsqrt.pop %v363
      %v380 = vrsqrt.pop %v364
      %v381 = vrsqrt.pop %v365
      %v382 = vrsqrt.pop %v366
      %v383 = vmul.f32 %v271, %v367
      %v384 = vmul.f32 %v272, %v368
      %v385 = vmul.f32 %v273, %v369
      %v386 = vmul.f32 %v274, %v370
      %v387 = vmul.f32 %v275, %v371
      %v388 = vmul.f32 %v276, %v372
      %v389 = vmul.f32 %v277, %v373
      %v390 = vmul.f32 %v278, %v374
      %v391 = vmul.f32 %v279, %v375
      %v392 = vmul.f32 %v280, %v376
      %v393 = vmul.f32 %v281, %v377
      %v394 = vmul.f32 %v282, %v378
      %v395 = vmul.f32 %v283, %v379
      %v396 = vmul.f32 %v284, %v380
      %v397 = vmul.f32 %v285, %v381
      %v398 = vmul.f32 %v286, %v382
      %v400 = vlaneseq
      %v401 = vshrl.u32 %v400, 7
      %v402 = vsub.s32 0, %v401
      %v403 = vrot.slane %v220, %v402
      %v405 = vmul.f32 %v383, %v403
      %v406 = vmul.f32 %v384, %v403
      %v407 = vmul.f32 %v385, %v403
      %v408 = vmul.f32 %v386, %v403
      %v409 = vmul.f32 %v387, %v403
      %v410 = vmul.f32 %v388, %v403
      %v411 = vmul.f32 %v389, %v403
      %v412 = vmul.f32 %v390, %v403
      %v413 = vmul.f32 %v391, %v403
      %v414 = vmul.f32 %v392, %v403
      %v415 = vmul.f32 %v393, %v403
      %v416 = vmul.f32 %v394, %v403
      %v417 = vmul.f32 %v395, %v403
      %v418 = vmul.f32 %v396, %v403
      %v419 = vmul.f32 %v397, %v403
      %v420 = vmul.f32 %v398, %v403
      %v422 = vlaneseq
      %v423 = vshrl.u32 %v422, 7
      %v424 = vsub.s32 0, %v423
      %v425 = vrot.slane %v221, %v424
      %v427 = vadd.f32 %v405, %v425
      %v428 = vadd.f32 %v406, %v425
      %v429 = vadd.f32 %v407, %v425
      %v430 = vadd.f32 %v408, %v425
      %v431 = vadd.f32 %v409, %v425
      %v432 = vadd.f32 %v410, %v425
      %v433 = vadd.f32 %v411, %v425
      %v434 = vadd.f32 %v412, %v425
      %v435 = vadd.f32 %v413, %v425
      %v436 = vadd.f32 %v414, %v425
      %v437 = vadd.f32 %v415, %v425
      %v438 = vadd.f32 %v416, %v425
      %v439 = vadd.f32 %v417, %v425
      %v440 = vadd.f32 %v418, %v425
      %v441 = vadd.f32 %v419, %v425
      %v442 = vadd.f32 %v420, %v425
      %v443 = vpack.c.bf16 %v428, %v427
      %v444 = vpack.c.bf16 %v430, %v429
      %v445 = vpack.c.bf16 %v432, %v431
      %v446 = vpack.c.bf16 %v434, %v433
      %v447 = vpack.c.bf16 %v436, %v435
      %v448 = vpack.c.bf16 %v438, %v437
      %v449 = vpack.c.bf16 %v440, %v439
      %v450 = vpack.c.bf16 %v442, %v441
      %v451 = vld [vmem:[%s3] sm:$0xff]
      %v452 = vld [vmem:[%s3 + $0x8] sm:$0xf]
      %v453 = vld [vmem:[%s3 + $0xc] sm:$0xff]
      %v454 = vld [vmem:[%s3 + $0x14] sm:$0xf]
      %v455 = vld [vmem:[%s3 + $0x18] sm:$0xff]
      %v456 = vld [vmem:[%s3 + $0x20] sm:$0xf]
      %v457 = vld [vmem:[%s3 + $0x24] sm:$0xff]
      %v458 = vld [vmem:[%s3 + $0x2c] sm:$0xf]
      %v459 = vld [vmem:[%s3 + $0x30] sm:$0xff]
      %v460 = vld [vmem:[%s3 + $0x38] sm:$0xf]
      %v461 = vld [vmem:[%s3 + $0x3c] sm:$0xff]
      %v462 = vld [vmem:[%s3 + $0x44] sm:$0xf]
      %v463 = vld [vmem:[%s3 + $0x48] sm:$0xff]
      %v464 = vld [vmem:[%s3 + $0x50] sm:$0xf]
      %v465 = vld [vmem:[%s3 + $0x54] sm:$0xff]
      %v466 = vld [vmem:[%s3 + $0x5c] sm:$0xf]
      %v467 = vld [vmem:[%s3 + $0x60] sm:$0xff]
      %v468 = vld [vmem:[%s3 + $0x68] sm:$0xf]
      %v469 = vld [vmem:[%s3 + $0x6c] sm:$0xff]
      %v470 = vld [vmem:[%s3 + $0x74] sm:$0xf]
      %v471 = vld [vmem:[%s3 + $0x78] sm:$0xff]
      %v472 = vld [vmem:[%s3 + $0x80] sm:$0xf]
      %v473 = vld [vmem:[%s3 + $0x84] sm:$0xff]
      %v474 = vld [vmem:[%s3 + $0x8c] sm:$0xf]
      %v475 = vld [vmem:[%s3 + $0x90] sm:$0xff]
      %v476 = vld [vmem:[%s3 + $0x98] sm:$0xf]
      %v477 = vld [vmem:[%s3 + $0x9c] sm:$0xff]
      %v478 = vld [vmem:[%s3 + $0xa4] sm:$0xf]
      %v479 = vld [vmem:[%s3 + $0xa8] sm:$0xff]
      %v480 = vld [vmem:[%s3 + $0xb0] sm:$0xf]
      %v481 = vld [vmem:[%s3 + $0xb4] sm:$0xff]
      %v482 = vld [vmem:[%s3 + $0xbc] sm:$0xf]
      %v515 = vunpack.c.l.b16 %v451
      %v516 = vunpack.c.h.b16 %v451
      %v517 = vunpack.c.l.b16 %v452
      %v518 = vunpack.c.l.b16 %v453
      %v519 = vunpack.c.h.b16 %v453
      %v520 = vunpack.c.l.b16 %v454
      %v521 = vunpack.c.l.b16 %v455
      %v522 = vunpack.c.h.b16 %v455
      %v523 = vunpack.c.l.b16 %v456
      %v524 = vunpack.c.l.b16 %v457
      %v525 = vunpack.c.h.b16 %v457
      %v526 = vunpack.c.l.b16 %v458
      %v527 = vunpack.c.l.b16 %v459
      %v528 = vunpack.c.h.b16 %v459
      %v529 = vunpack.c.l.b16 %v460
      %v530 = vunpack.c.l.b16 %v461
      %v531 = vunpack.c.h.b16 %v461
      %v532 = vunpack.c.l.b16 %v462
      %v533 = vunpack.c.l.b16 %v463
      %v534 = vunpack.c.h.b16 %v463
      %v535 = vunpack.c.l.b16 %v464
      %v536 = vunpack.c.l.b16 %v465
      %v537 = vunpack.c.h.b16 %v465
      %v538 = vunpack.c.l.b16 %v466
      %v539 = vunpack.c.l.b16 %v467
      %v540 = vunpack.c.h.b16 %v467
      %v541 = vunpack.c.l.b16 %v468
      %v542 = vunpack.c.l.b16 %v469
      %v543 = vunpack.c.h.b16 %v469
      %v544 = vunpack.c.l.b16 %v470
      %v545 = vunpack.c.l.b16 %v471
      %v546 = vunpack.c.h.b16 %v471
      %v547 = vunpack.c.l.b16 %v472
      %v548 = vunpack.c.l.b16 %v473
      %v549 = vunpack.c.h.b16 %v473
      %v550 = vunpack.c.l.b16 %v474
      %v551 = vunpack.c.l.b16 %v475
      %v552 = vunpack.c.h.b16 %v475
      %v553 = vunpack.c.l.b16 %v476
      %v554 = vunpack.c.l.b16 %v477
      %v555 = vunpack.c.h.b16 %v477
      %v556 = vunpack.c.l.b16 %v478
      %v557 = vunpack.c.l.b16 %v479
      %v558 = vunpack.c.h.b16 %v479
      %v559 = vunpack.c.l.b16 %v480
      %v560 = vunpack.c.l.b16 %v481
      %v561 = vunpack.c.h.b16 %v481
      %v562 = vunpack.c.l.b16 %v482
      %v563 = vpack.c.b16 %v518, %v515
      %v564 = vpack.c.b16 %v519, %v516
      %v565 = vpack.c.b16 %v520, %v517
      %v566 = vpack.c.b16 %v524, %v521
      %v567 = vpack.c.b16 %v525, %v522
      %v568 = vpack.c.b16 %v526, %v523
      %v569 = vpack.c.b16 %v530, %v527
      %v570 = vpack.c.b16 %v531, %v528
      %v571 = vpack.c.b16 %v532, %v529
      %v572 = vpack.c.b16 %v536, %v533
      %v573 = vpack.c.b16 %v537, %v534
      %v574 = vpack.c.b16 %v538, %v535
      %v575 = vpack.c.b16 %v542, %v539
      %v576 = vpack.c.b16 %v543, %v540
      %v577 = vpack.c.b16 %v544, %v541
      %v578 = vpack.c.b16 %v548, %v545
      %v579 = vpack.c.b16 %v549, %v546
      %v580 = vpack.c.b16 %v550, %v547
      %v581 = vpack.c.b16 %v554, %v551
      %v582 = vpack.c.b16 %v555, %v552
      %v583 = vpack.c.b16 %v556, %v553
      %v584 = vpack.c.b16 %v560, %v557
      %v585 = vpack.c.b16 %v561, %v558
      %v586 = vpack.c.b16 %v562, %v559
      %611 = vmatprep.subr.bf16.mxu0 %v564
      %612 = vmatpush1.bf16.msra.mxu0 %v563
      %613 = vmatprep.subr.bf16.mxu0 %v567
      %614 = vmatpush1.bf16.msra.mxu0 %v566
      %615 = vmatprep.subr.bf16.mxu0 %v570
      %616 = vmatpush1.bf16.msra.mxu0 %v569
      %617 = vmatprep.subr.bf16.mxu0 %v573
      %618 = vmatpush1.bf16.msra.mxu0 %v572
      %619 = vmatprep.subr.bf16.mxu0 %v576
      %620 = vmatpush1.bf16.msra.mxu0 %v575
      %621 = vmatprep.subr.bf16.mxu0 %v579
      %622 = vmatpush1.bf16.msra.mxu0 %v578
      %623 = vmatprep.subr.bf16.mxu0 %v582
      %624 = vmatpush1.bf16.msra.mxu0 %v581
      %625 = vmatprep.subr.bf16.mxu0 %v585
      %626 = vmatpush1.bf16.msra.mxu0 %v584
      %627 = vmatprep.subr.bf16.mxu0 0
      %628 = vmatpush1.bf16.msra.mxu0 0
      %629 = vmatprep.subr.bf16.mxu0 0
      %630 = vmatpush1.bf16.msra.mxu0 0
      %631 = vmatprep.subr.bf16.mxu0 0
      %632 = vmatpush1.bf16.msra.mxu0 0
      %633 = vmatprep.subr.bf16.mxu0 0
      %634 = vmatpush1.bf16.msra.mxu0 0
      %635 = vmatprep.subr.bf16.mxu0 0
      %636 = vmatpush1.bf16.msra.mxu0 0
      %637 = vmatprep.subr.bf16.mxu0 0
      %638 = vmatpush1.bf16.msra.mxu0 0
      %639 = vmatprep.subr.bf16.mxu0 0
      %640 = vmatpush1.bf16.msra.mxu0 0
      %641 = vmatprep.subr.bf16.mxu0 0
      %642 = vmatpush1.bf16.msra.mxu0 0
      %643 = vmatprep.mubr.bf16.mxu0 0
      %644 = vmatmul.mubr.bf16.gmra.mrb[0].mxu0 %v443
      %v645 = vpop.f32.mrb[0].mxu0
      %v646 = vadd.f32 0.0, %v645
      %v647 = vpop.f32.mrb[0].mxu0
      %v648 = vadd.f32 0.0, %v647
      %v649 = vpop.f32.mrb[0].mxu0
      %v650 = vadd.f32 0.0, %v649
      %v651 = vpop.f32.mrb[0].mxu0
      %v652 = vadd.f32 0.0, %v651
      %653 = vmatprep.mubr.bf16.mxu0 0
      %654 = vmatmul.mubr.bf16.gmra.mrb[0].mxu0 %v444
      %v655 = vpop.f32.mrb[0].mxu0
      %v656 = vadd.f32 0.0, %v655
      %v657 = vpop.f32.mrb[0].mxu0
      %v658 = vadd.f32 0.0, %v657
      %v659 = vpop.f32.mrb[0].mxu0
      %v660 = vadd.f32 0.0, %v659
      %v661 = vpop.f32.mrb[0].mxu0
      %v662 = vadd.f32 0.0, %v661
      %663 = vmatprep.mubr.bf16.mxu0 0
      %664 = vmatmul.mubr.bf16.gmra.mrb[0].mxu0 %v445
      %v665 = vpop.f32.mrb[0].mxu0
      %v666 = vadd.f32 0.0, %v665
      %v667 = vpop.f32.mrb[0].mxu0
      %v668 = vadd.f32 0.0, %v667
      %v669 = vpop.f32.mrb[0].mxu0
      %v670 = vadd.f32 0.0, %v669
      %v671 = vpop.f32.mrb[0].mxu0
      %v672 = vadd.f32 0.0, %v671
      %673 = vmatprep.mubr.bf16.mxu0 0
      %674 = vmatmul.mubr.bf16.gmra.mrb[0].mxu0 %v446
      %v675 = vpop.f32.mrb[0].mxu0
      %v676 = vadd.f32 0.0, %v675
      %v677 = vpop.f32.mrb[0].mxu0
      %v678 = vadd.f32 0.0, %v677
      %v679 = vpop.f32.mrb[0].mxu0
      %v680 = vadd.f32 0.0, %v679
      %v681 = vpop.f32.mrb[0].mxu0
      %v682 = vadd.f32 0.0, %v681
      %683 = vmatprep.mubr.bf16.mxu0 0
      %684 = vmatmul.mubr.bf16.gmra.mrb[0].mxu0 %v447
      %v685 = vpop.f32.mrb[0].mxu0
      %v686 = vadd.f32 0.0, %v685
      %v687 = vpop.f32.mrb[0].mxu0
      %v688 = vadd.f32 0.0, %v687
      %v689 = vpop.f32.mrb[0].mxu0
      %v690 = vadd.f32 0.0, %v689
      %v691 = vpop.f32.mrb[0].mxu0
      %v692 = vadd.f32 0.0, %v691
      %693 = vmatprep.mubr.bf16.mxu0 0
      %694 = vmatmul.mubr.bf16.gmra.mrb[0].mxu0 %v448
      %v695 = vpop.f32.mrb[0].mxu0
      %v696 = vadd.f32 0.0, %v695
      %v697 = vpop.f32.mrb[0].mxu0
      %v698 = vadd.f32 0.0, %v697
      %v699 = vpop.f32.mrb[0].mxu0
      %v700 = vadd.f32 0.0, %v699
      %v701 = vpop.f32.mrb[0].mxu0
      %v702 = vadd.f32 0.0, %v701
      %703 = vmatprep.mubr.bf16.mxu0 0
      %704 = vmatmul.mubr.bf16.gmra.mrb[0].mxu0 %v449
      %v705 = vpop.f32.mrb[0].mxu0
      %v706 = vadd.f32 0.0, %v705
      %v707 = vpop.f32.mrb[0].mxu0
      %v708 = vadd.f32 0.0, %v707
      %v709 = vpop.f32.mrb[0].mxu0
      %v710 = vadd.f32 0.0, %v709
      %v711 = vpop.f32.mrb[0].mxu0
      %v712 = vadd.f32 0.0, %v711
      %713 = vmatprep.mubr.bf16.mxu0 0
      %714 = vmatmul.mubr.bf16.gmra.mrb[0].mxu0 %v450
      %v715 = vpop.f32.mrb[0].mxu0
      %v716 = vadd.f32 0.0, %v715
      %v717 = vpop.f32.mrb[0].mxu0
      %v718 = vadd.f32 0.0, %v717
      %v719 = vpop.f32.mrb[0].mxu0
      %v720 = vadd.f32 0.0, %v719
      %v721 = vpop.f32.mrb[0].mxu0
      %v722 = vadd.f32 0.0, %v721
      %723 = vdwg.mxu0
      %724 = vmatprep.subr.bf16.mxu0 0
      %725 = vmatpush1.bf16.msra.mxu0 %v565
      %726 = vmatprep.subr.bf16.mxu0 0
      %727 = vmatpush1.bf16.msra.mxu0 %v568
      %728 = vmatprep.subr.bf16.mxu0 0
      %729 = vmatpush1.bf16.msra.mxu0 %v571
      %730 = vmatprep.subr.bf16.mxu0 0
      %731 = vmatpush1.bf16.msra.mxu0 %v574
      %732 = vmatprep.subr.bf16.mxu0 0
      %733 = vmatpush1.bf16.msra.mxu0 %v577
      %734 = vmatprep.subr.bf16.mxu0 0
      %735 = vmatpush1.bf16.msra.mxu0 %v580
      %736 = vmatprep.subr.bf16.mxu0 0
      %737 = vmatpush1.bf16.msra.mxu0 %v583
      %738 = vmatprep.subr.bf16.mxu0 0
      %739 = vmatpush1.bf16.msra.mxu0 %v586
      %740 = vmatprep.subr.bf16.mxu0 0
      %741 = vmatpush1.bf16.msra.mxu0 0
      %742 = vmatprep.subr.bf16.mxu0 0
      %743 = vmatpush1.bf16.msra.mxu0 0
      %744 = vmatprep.subr.bf16.mxu0 0
      %745 = vmatpush1.bf16.msra.mxu0 0
      %746 = vmatprep.subr.bf16.mxu0 0
      %747 = vmatpush1.bf16.msra.mxu0 0
      %748 = vmatprep.subr.bf16.mxu0 0
      %749 = vmatpush1.bf16.msra.mxu0 0
      %750 = vmatprep.subr.bf16.mxu0 0
      %751 = vmatpush1.bf16.msra.mxu0 0
      %752 = vmatprep.subr.bf16.mxu0 0
      %753 = vmatpush1.bf16.msra.mxu0 0
      %754 = vmatprep.subr.bf16.mxu0 0
      %755 = vmatpush1.bf16.msra.mxu0 0
      %756 = vmatprep.mubr.bf16.mxu0 0
      %757 = vmatmul.mubr.bf16.gmra.mrb[0].mxu0 %v443
      %v758 = vpop.f32.mrb[0].mxu0
      %v759 = vadd.f32 0.0, %v758
      %v760 = vpop.f32.mrb[0].mxu0
      %v761 = vpop.f32.mrb[0].mxu0
      %v762 = vadd.f32 0.0, %v761
      %v763 = vpop.f32.mrb[0].mxu0
      %764 = vmatprep.mubr.bf16.mxu0 0
      %765 = vmatmul.mubr.bf16.gmra.mrb[0].mxu0 %v444
      %v766 = vpop.f32.mrb[0].mxu0
      %v767 = vadd.f32 0.0, %v766
      %v768 = vpop.f32.mrb[0].mxu0
      %v769 = vpop.f32.mrb[0].mxu0
      %v770 = vadd.f32 0.0, %v769
      %v771 = vpop.f32.mrb[0].mxu0
      %772 = vmatprep.mubr.bf16.mxu0 0
      %773 = vmatmul.mubr.bf16.gmra.mrb[0].mxu0 %v445
      %v774 = vpop.f32.mrb[0].mxu0
      %v775 = vadd.f32 0.0, %v774
      %v776 = vpop.f32.mrb[0].mxu0
      %v777 = vpop.f32.mrb[0].mxu0
      %v778 = vadd.f32 0.0, %v777
      %v779 = vpop.f32.mrb[0].mxu0
      %780 = vmatprep.mubr.bf16.mxu0 0
      %781 = vmatmul.mubr.bf16.gmra.mrb[0].mxu0 %v446
      %v782 = vpop.f32.mrb[0].mxu0
      %v783 = vadd.f32 0.0, %v782
      %v784 = vpop.f32.mrb[0].mxu0
      %v785 = vpop.f32.mrb[0].mxu0
      %v786 = vadd.f32 0.0, %v785
      %v787 = vpop.f32.mrb[0].mxu0
      %788 = vmatprep.mubr.bf16.mxu0 0
      %789 = vmatmul.mubr.bf16.gmra.mrb[0].mxu0 %v447
      %v790 = vpop.f32.mrb[0].mxu0
      %v791 = vadd.f32 0.0, %v790
      %v792 = vpop.f32.mrb[0].mxu0
      %v793 = vpop.f32.mrb[0].mxu0
      %v794 = vadd.f32 0.0, %v793
      %v795 = vpop.f32.mrb[0].mxu0
      %796 = vmatprep.mubr.bf16.mxu0 0
      %797 = vmatmul.mubr.bf16.gmra.mrb[0].mxu0 %v448
      %v798 = vpop.f32.mrb[0].mxu0
      %v799 = vadd.f32 0.0, %v798
      %v800 = vpop.f32.mrb[0].mxu0
      %v801 = vpop.f32.mrb[0].mxu0
      %v802 = vadd.f32 0.0, %v801
      %v803 = vpop.f32.mrb[0].mxu0
      %804 = vmatprep.mubr.bf16.mxu0 0
      %805 = vmatmul.mubr.bf16.gmra.mrb[0].mxu0 %v449
      %v806 = vpop.f32.mrb[0].mxu0
      %v807 = vadd.f32 0.0, %v806
      %v808 = vpop.f32.mrb[0].mxu0
      %v809 = vpop.f32.mrb[0].mxu0
      %v810 = vadd.f32 0.0, %v809
      %v811 = vpop.f32.mrb[0].mxu0
      %812 = vmatprep.mubr.bf16.mxu0 0
      %813 = vmatmul.mubr.bf16.gmra.mrb[0].mxu0 %v450
      %v814 = vpop.f32.mrb[0].mxu0
      %v815 = vadd.f32 0.0, %v814
      %v816 = vpop.f32.mrb[0].mxu0
      %v817 = vpop.f32.mrb[0].mxu0
      %v818 = vadd.f32 0.0, %v817
      %v819 = vpop.f32.mrb[0].mxu0
      %820 = vdwg.mxu0
      %v821 = vpack.c.bf16 %v650, %v646
      %v822 = vpack.c.bf16 %v652, %v648
      %v823 = vpack.c.bf16 %v762, %v759
      %v824 = vpack.c.bf16 %v660, %v656
      %v825 = vpack.c.bf16 %v662, %v658
      %v826 = vpack.c.bf16 %v770, %v767
      %v827 = vpack.c.bf16 %v670, %v666
      %v828 = vpack.c.bf16 %v672, %v668
      %v829 = vpack.c.bf16 %v778, %v775
      %v830 = vpack.c.bf16 %v680, %v676
      %v831 = vpack.c.bf16 %v682, %v678
      %v832 = vpack.c.bf16 %v786, %v783
      %v833 = vpack.c.bf16 %v690, %v686
      %v834 = vpack.c.bf16 %v692, %v688
      %v835 = vpack.c.bf16 %v794, %v791
      %v836 = vpack.c.bf16 %v700, %v696
      %v837 = vpack.c.bf16 %v702, %v698
      %v838 = vpack.c.bf16 %v802, %v799
      %v839 = vpack.c.bf16 %v710, %v706
      %v840 = vpack.c.bf16 %v712, %v708
      %v841 = vpack.c.bf16 %v810, %v807
      %v842 = vpack.c.bf16 %v720, %v716
      %v843 = vpack.c.bf16 %v722, %v718
      %v844 = vpack.c.bf16 %v818, %v815
      %v869 = vunpack.c.l.b16 %v821
      %v870 = vunpack.c.l.b16 %v822
      %v871 = vunpack.c.l.b16 %v823
      %v872 = vunpack.c.h.b16 %v821
      %v873 = vunpack.c.h.b16 %v822
      %v874 = vunpack.c.h.b16 %v823
      %v875 = vunpack.c.l.b16 %v824
      %v876 = vunpack.c.l.b16 %v825
      %v877 = vunpack.c.l.b16 %v826
      %v878 = vunpack.c.h.b16 %v824
      %v879 = vunpack.c.h.b16 %v825
      %v880 = vunpack.c.h.b16 %v826
      %v881 = vunpack.c.l.b16 %v827
      %v882 = vunpack.c.l.b16 %v828
      %v883 = vunpack.c.l.b16 %v829
      %v884 = vunpack.c.h.b16 %v827
      %v885 = vunpack.c.h.b16 %v828
      %v886 = vunpack.c.h.b16 %v829
      %v887 = vunpack.c.l.b16 %v830
      %v888 = vunpack.c.l.b16 %v831
      %v889 = vunpack.c.l.b16 %v832
      %v890 = vunpack.c.h.b16 %v830
      %v891 = vunpack.c.h.b16 %v831
      %v892 = vunpack.c.h.b16 %v832
      %v893 = vunpack.c.l.b16 %v833
      %v894 = vunpack.c.l.b16 %v834
      %v895 = vunpack.c.l.b16 %v835
      %v896 = vunpack.c.h.b16 %v833
      %v897 = vunpack.c.h.b16 %v834
      %v898 = vunpack.c.h.b16 %v835
      %v899 = vunpack.c.l.b16 %v836
      %v900 = vunpack.c.l.b16 %v837
      %v901 = vunpack.c.l.b16 %v838
      %v902 = vunpack.c.h.b16 %v836
      %v903 = vunpack.c.h.b16 %v837
      %v904 = vunpack.c.h.b16 %v838
      %v905 = vunpack.c.l.b16 %v839
      %v906 = vunpack.c.l.b16 %v840
      %v907 = vunpack.c.l.b16 %v841
      %v908 = vunpack.c.h.b16 %v839
      %v909 = vunpack.c.h.b16 %v840
      %v910 = vunpack.c.h.b16 %v841
      %v911 = vunpack.c.l.b16 %v842
      %v912 = vunpack.c.l.b16 %v843
      %v913 = vunpack.c.l.b16 %v844
      %v914 = vunpack.c.h.b16 %v842
      %v915 = vunpack.c.h.b16 %v843
      %v916 = vunpack.c.h.b16 %v844
      %v917 = vpack.c.b16 %v870, %v869
      %v918 = vpack.c.b16 %v871, %v871
      %v919 = vpack.c.b16 %v873, %v872
      %v920 = vpack.c.b16 %v874, %v874
      %v921 = vpack.c.b16 %v876, %v875
      %v922 = vpack.c.b16 %v877, %v877
      %v923 = vpack.c.b16 %v879, %v878
      %v924 = vpack.c.b16 %v880, %v880
      %v925 = vpack.c.b16 %v882, %v881
      %v926 = vpack.c.b16 %v883, %v883
      %v927 = vpack.c.b16 %v885, %v884
      %v928 = vpack.c.b16 %v886, %v886
      %v929 = vpack.c.b16 %v888, %v887
      %v930 = vpack.c.b16 %v889, %v889
      %v931 = vpack.c.b16 %v891, %v890
      %v932 = vpack.c.b16 %v892, %v892
      %v933 = vpack.c.b16 %v894, %v893
      %v934 = vpack.c.b16 %v895, %v895
      %v935 = vpack.c.b16 %v897, %v896
      %v936 = vpack.c.b16 %v898, %v898
      %v937 = vpack.c.b16 %v900, %v899
      %v938 = vpack.c.b16 %v901, %v901
      %v939 = vpack.c.b16 %v903, %v902
      %v940 = vpack.c.b16 %v904, %v904
      %v941 = vpack.c.b16 %v906, %v905
      %v942 = vpack.c.b16 %v907, %v907
      %v943 = vpack.c.b16 %v909, %v908
      %v944 = vpack.c.b16 %v910, %v910
      %v945 = vpack.c.b16 %v912, %v911
      %v946 = vpack.c.b16 %v913, %v913
      %v947 = vpack.c.b16 %v915, %v914
      %v948 = vpack.c.b16 %v916, %v916
      %981 = vst [vmem:[%s201] sm:$0xff] %v917
      %982 = vst [vmem:[%s201 + $0x8] sm:$0xf] %v918
      %983 = vst [vmem:[%s201 + $0xc] sm:$0xff] %v919
      %984 = vst [vmem:[%s201 + $0x14] sm:$0xf] %v920
      %985 = vst [vmem:[%s201 + $0x18] sm:$0xff] %v921
      %986 = vst [vmem:[%s201 + $0x20] sm:$0xf] %v922
      %987 = vst [vmem:[%s201 + $0x24] sm:$0xff] %v923
      %988 = vst [vmem:[%s201 + $0x2c] sm:$0xf] %v924
      %989 = vst [vmem:[%s201 + $0x30] sm:$0xff] %v925
      %990 = vst [vmem:[%s201 + $0x38] sm:$0xf] %v926
      %991 = vst [vmem:[%s201 + $0x3c] sm:$0xff] %v927
      %992 = vst [vmem:[%s201 + $0x44] sm:$0xf] %v928
      %993 = vst [vmem:[%s201 + $0x48] sm:$0xff] %v929
      %994 = vst [vmem:[%s201 + $0x50] sm:$0xf] %v930
      %995 = vst [vmem:[%s201 + $0x54] sm:$0xff] %v931
      %996 = vst [vmem:[%s201 + $0x5c] sm:$0xf] %v932
      %997 = vst [vmem:[%s201 + $0x60] sm:$0xff] %v933
      %998 = vst [vmem:[%s201 + $0x68] sm:$0xf] %v934
      %999 = vst [vmem:[%s201 + $0x6c] sm:$0xff] %v935
      %1000 = vst [vmem:[%s201 + $0x74] sm:$0xf] %v936
      %1001 = vst [vmem:[%s201 + $0x78] sm:$0xff] %v937
      %1002 = vst [vmem:[%s201 + $0x80] sm:$0xf] %v938
      %1003 = vst [vmem:[%s201 + $0x84] sm:$0xff] %v939
      %1004 = vst [vmem:[%s201 + $0x8c] sm:$0xf] %v940
      %1005 = vst [vmem:[%s201 + $0x90] sm:$0xff] %v941
      %1006 = vst [vmem:[%s201 + $0x98] sm:$0xf] %v942
      %1007 = vst [vmem:[%s201 + $0x9c] sm:$0xff] %v943
      %1008 = vst [vmem:[%s201 + $0xa4] sm:$0xf] %v944
      %1009 = vst [vmem:[%s201 + $0xa8] sm:$0xff] %v945
      %1010 = vst [vmem:[%s201 + $0xb0] sm:$0xf] %v946
      %1011 = vst [vmem:[%s201 + $0xb4] sm:$0xff] %v947
      %1012 = vst [vmem:[%s201 + $0xbc] sm:$0xf] %v948
      %s1013 = smul.u32 16, %s15
      %p1014 = scmp.lt.s32.totalorder %s1013, 63
      %s1015 = scalar_select %p1014, %s1013, 63
      %s1016 = smul.addr %s1015, 3
      %s1017 = smul.addr %s1016, 4
      %s1018 = scalar_lea.vmem %s4, %s1017
      // Predicated region
      $region37: #{transformer_forward.6} parent=35 // pred_check
        %p1019 = pneg %p122
      $region38: #{transformer_forward.6} parent=35 // pred_check_branch
        %1021 = sbr.rel (%p1019) target = $region40
      $region39: #{transformer_forward.6} parent=35 // pred_region
        %s1022 = smul.u32 16, %s15
      $region40: #{transformer_forward.6} parent=35 // pred_fallthru
        _
    $region36: #{transformer_forward.6} parent=5 // pred_fallthru
      _
    %p1023 = scmp.le.s32.totalorder 2, %s10
    // Predicated region
    $region41: #{transformer_forward.6} parent=5 // pred_check
      %p1024 = pneg %p1023
    $region42: #{transformer_forward.6} parent=5 // pred_check_branch
      %1026 = sbr.rel (%p1024) target = $region44
    $region43: #{transformer_forward.6} parent=5 // pred_region
      %s1027 = ssub.s32 %s10, 2
      // Predicated region
      $region45: #{transformer_forward.6} parent=43 // pred_check
        %p1028 = pneg %p128
      $region46: #{transformer_forward.6} parent=43 // pred_check_branch
        %1030 = sbr.rel (%p1028) target = $region48
      $region47: #{transformer_forward.6} parent=43 // pred_region
        %s1031 = smul.u32 16, %s16
        %p1032 = scmp.lt.s32.totalorder %s1031, 63
        %s1033 = scalar_select %p1032, %s1031, 63
        %s1034 = smul.addr %s1033, 3
        %s1035 = smul.addr %s1034, 4
        %s1036 = scalar_lea.vmem %s4, %s1035
      $region48: #{transformer_forward.6} parent=43 // pred_fallthru
        _
    $region44: #{transformer_forward.6} parent=5 // pred_fallthru
      _
  $region6: #{transformer_forward.6} parent=0 // loop_footer
    %s14 = sadd.s32 1, %s10
  $region7: #{transformer_forward.6} parent=0 // loop_footer_branch
    %9 = sbr.rel target = $region3
  $region8: #{transformer_forward.6} parent=0 // loop_exit
    _

// kernel: transformer_forward.11
$region0: #{transformer_forward.11}
  #allocation0 [shape = 'u32[]', space=smem, size = 0x4, offset = 0x4, fixed_abs, tag = 'smem constant byte address 0x4 - core index']
  #allocation1 [shape = 'u32[144,128]{1,0:T(1,128)}', space=vmem, size = 0x12000, scoped, tag = 'internal scratch']
  %s0 = inlined_call_operand.vmem [shape: f32[512,128], index: 0, kind: input, shape index: {}]
  %s1 = inlined_call_operand.vmem [shape: f32[1,128], index: 1, kind: input, shape index: {}]
  %s2 = inlined_call_operand.vmem [shape: f32[1,128], index: 2, kind: input, shape index: {}]
  %s3 = inlined_call_operand.vmem [shape: bf16[128,256], index: 3, kind: input, shape index: {}]
  %s4 = inlined_call_operand.vmem [shape: f32[1,256], index: 4, kind: input, shape index: {}]
  %s5 = inlined_call_operand.vmem [shape: bf16[256,128], index: 5, kind: input, shape index: {}]
  %s6 = inlined_call_operand.vmem [shape: f32[1,128], index: 6, kind: input, shape index: {}]
  %s7 = inlined_call_operand.hbm [shape: f32[512,128], index: 7, kind: output, shape index: {}]
  %s8 = sld [smem:[#allocation0]]
  $region61: #{transformer_forward.11} parent=0
    _
  %s10 = ssub.s32 1, %s8
  %s11 = scalar_select 0, %s10, %s8
  $region1: #{transformer_forward.11} parent=0
    #allocation2 [shape = 'u8[131072]{0}', space=vmem, size = 0x20000, scoped, tag = 'output window, operand 0']
    #allocation3 [shape = 's32[2]{0}', space=sflag, size = 0x8, scoped, tag = 'scoped memory for transformer_forward.11']
    %12 = vsyncpa [#allocation3], 0
    %s13 = scalar_lea.sflag [#allocation3], 1
    %14 = vsyncpa %s13, 0
    loop: start=0, step=1, limit=6
    $region2: #{transformer_forward.11} parent=1 // loop_pre_header
      _
    $region3: #{transformer_forward.11} parent=1 // loop_header
      %s16 = sphi 0, %s20
      %p17 = scmp.ge.s32.totalorder %s16, 6
      %s26 = sphi 0, %s28
      %s29 = sphi 0, %s26
      %s30 = sphi 0, %s29
      %s46 = sphi 0, %s30
      %s50 = sphi 0, %s50
      %s52 = sphi 0, %s50
      %s53 = sphi 0, %s52
      %s67 = sphi 0, %s53
      %s71 = sphi 0, %s71
      %s73 = sphi 0, %s71
      %s74 = sphi 0, %s73
      %s88 = sphi 0, %s74
      %s92 = sphi 0, %s92
      %s94 = sphi 0, %s92
      %s95 = sphi 0, %s94
      %s109 = sphi 0, %s95
      %s113 = sphi 0, %s113
      %s115 = sphi 0, %s113
      %s116 = sphi 0, %s115
      %s130 = sphi 0, %s116
      %s134 = sphi 0, %s134
      %s136 = sphi 0, %s134
      %s137 = sphi 0, %s136
      %s151 = sphi 0, %s137
      %s155 = sphi 0, %s155
      %s157 = sphi 0, %s155
      %s158 = sphi 0, %s157
      %s172 = sphi 0, %s158
      %s178 = sphi 0, %s180
      %s181 = sphi 0, %s178
      %s182 = sphi 0, %s181
      %s198 = sphi 0, %s182
    $region4: #{transformer_forward.11} parent=1 // loop_header_branch
      %19 = sbr.rel (%p17) target = $region8
    $region5: #{transformer_forward.11} parent=1 // loop_body
      %s21 = ssub.s32 %s16, 1
      %s22 = ssub.s32 %s16, 2
      %s23 = sadd.s32 %s16, 1
      %s24 = ssub.s32 %s16, %s23
      %p25 = scmp.eq.s32.totalorder %s24, 0
      %s27 = sadd.s32 %s26, 1
      %s28 = scalar_select %p25, %s26, %s27
      %p31 = pneg %p25
      %p32 = scmp.eq.s32.totalorder %s16, 3
      %p33 = por %p31, %p32
      %p34 = scmp.ne.s32.totalorder %s26, %s29
      %p35 = scmp.eq.s32.totalorder %s16, 0
      %p36 = por %p34, %p35
      %p37 = scmp.ne.s32.totalorder %s26, %s29
      %p38 = scmp.eq.s32.totalorder %s21, 3
      %p39 = por %p37, %p38
      %p40 = scmp.ne.s32.totalorder %s29, %s30
      %p41 = scmp.eq.s32.totalorder %s21, 0
      %p42 = por %p40, %p41
      %p43 = scmp.ne.s32.totalorder %s29, %s30
      %p44 = scmp.eq.s32.totalorder %s22, 3
      %p45 = por %p43, %p44
      %p47 = scmp.ne.s32.totalorder %s30, %s46
      %p48 = scmp.eq.s32.totalorder %s22, 0
      %p49 = por %p47, %p48
      %s51 = sadd.s32 %s50, 1
      %p54 = scmp.eq.s32.totalorder %s16, 3
      %p55 = scmp.ne.s32.totalorder %s50, %s52
      %p56 = scmp.eq.s32.totalorder %s16, 0
      %p57 = por %p55, %p56
      %p58 = scmp.ne.s32.totalorder %s50, %s52
      %p59 = scmp.eq.s32.totalorder %s21, 3
      %p60 = por %p58, %p59
      %p61 = scmp.ne.s32.totalorder %s52, %s53
      %p62 = scmp.eq.s32.totalorder %s21, 0
      %p63 = por %p61, %p62
      %p64 = scmp.ne.s32.totalorder %s52, %s53
      %p65 = scmp.eq.s32.totalorder %s22, 3
      %p66 = por %p64, %p65
      %p68 = scmp.ne.s32.totalorder %s53, %s67
      %p69 = scmp.eq.s32.totalorder %s22, 0
      %p70 = por %p68, %p69
      %s72 = sadd.s32 %s71, 1
      %p75 = scmp.eq.s32.totalorder %s16, 3
      %p76 = scmp.ne.s32.totalorder %s71, %s73
      %p77 = scmp.eq.s32.totalorder %s16, 0
      %p78 = por %p76, %p77
      %p79 = scmp.ne.s32.totalorder %s71, %s73
      %p80 = scmp.eq.s32.totalorder %s21, 3
      %p81 = por %p79, %p80
      %p82 = scmp.ne.s32.totalorder %s73, %s74
      %p83 = scmp.eq.s32.totalorder %s21, 0
      %p84 = por %p82, %p83
      %p85 = scmp.ne.s32.totalorder %s73, %s74
      %p86 = scmp.eq.s32.totalorder %s22, 3
      %p87 = por %p85, %p86
      %p89 = scmp.ne.s32.totalorder %s74, %s88
      %p90 = scmp.eq.s32.totalorder %s22, 0
      %p91 = por %p89, %p90
      %s93 = sadd.s32 %s92, 1
      %p96 = scmp.eq.s32.totalorder %s16, 3
      %p97 = scmp.ne.s32.totalorder %s92, %s94
      %p98 = scmp.eq.s32.totalorder %s16, 0
      %p99 = por %p97, %p98
      %p100 = scmp.ne.s32.totalorder %s92, %s94
      %p101 = scmp.eq.s32.totalorder %s21, 3
      %p102 = por %p100, %p101
      %p103 = scmp.ne.s32.totalorder %s94, %s95
      %p104 = scmp.eq.s32.totalorder %s21, 0
      %p105 = por %p103, %p104
      %p106 = scmp.ne.s32.totalorder %s94, %s95
      %p107 = scmp.eq.s32.totalorder %s22, 3
      %p108 = por %p106, %p107
      %p110 = scmp.ne.s32.totalorder %s95, %s109
      %p111 = scmp.eq.s32.totalorder %s22, 0
      %p112 = por %p110, %p111
      %s114 = sadd.s32 %s113, 1
      %p117 = scmp.eq.s32.totalorder %s16, 3
      %p118 = scmp.ne.s32.totalorder %s113, %s115
      %p119 = scmp.eq.s32.totalorder %s16, 0
      %p120 = por %p118, %p119
      %p121 = scmp.ne.s32.totalorder %s113, %s115
      %p122 = scmp.eq.s32.totalorder %s21, 3
      %p123 = por %p121, %p122
      %p124 = scmp.ne.s32.totalorder %s115, %s116
      %p125 = scmp.eq.s32.totalorder %s21, 0
      %p126 = por %p124, %p125
      %p127 = scmp.ne.s32.totalorder %s115, %s116
      %p128 = scmp.eq.s32.totalorder %s22, 3
      %p129 = por %p127, %p128
      %p131 = scmp.ne.s32.totalorder %s116, %s130
      %p132 = scmp.eq.s32.totalorder %s22, 0
      %p133 = por %p131, %p132
      %s135 = sadd.s32 %s134, 1
      %p138 = scmp.eq.s32.totalorder %s16, 3
      %p139 = scmp.ne.s32.totalorder %s134, %s136
      %p140 = scmp.eq.s32.totalorder %s16, 0
      %p141 = por %p139, %p140
      %p142 = scmp.ne.s32.totalorder %s134, %s136
      %p143 = scmp.eq.s32.totalorder %s21, 3
      %p144 = por %p142, %p143
      %p145 = scmp.ne.s32.totalorder %s136, %s137
      %p146 = scmp.eq.s32.totalorder %s21, 0
      %p147 = por %p145, %p146
      %p148 = scmp.ne.s32.totalorder %s136, %s137
      %p149 = scmp.eq.s32.totalorder %s22, 3
      %p150 = por %p148, %p149
      %p152 = scmp.ne.s32.totalorder %s137, %s151
      %p153 = scmp.eq.s32.totalorder %s22, 0
      %p154 = por %p152, %p153
      %s156 = sadd.s32 %s155, 1
      %p159 = scmp.eq.s32.totalorder %s16, 3
      %p160 = scmp.ne.s32.totalorder %s155, %s157
      %p161 = scmp.eq.s32.totalorder %s16, 0
      %p162 = por %p160, %p161
      %p163 = scmp.ne.s32.totalorder %s155, %s157
      %p164 = scmp.eq.s32.totalorder %s21, 3
      %p165 = por %p163, %p164
      %p166 = scmp.ne.s32.totalorder %s157, %s158
      %p167 = scmp.eq.s32.totalorder %s21, 0
      %p168 = por %p166, %p167
      %p169 = scmp.ne.s32.totalorder %s157, %s158
      %p170 = scmp.eq.s32.totalorder %s22, 3
      %p171 = por %p169, %p170
      %p173 = scmp.ne.s32.totalorder %s158, %s172
      %p174 = scmp.eq.s32.totalorder %s22, 0
      %p175 = por %p173, %p174
      %s176 = ssub.s32 %s16, %s23
      %p177 = scmp.eq.s32.totalorder %s176, 0
      %s179 = sadd.s32 %s178, 1
      %s180 = scalar_select %p177, %s178, %s179
      %p183 = pneg %p177
      %p184 = scmp.eq.s32.totalorder %s16, 3
      %p185 = por %p183, %p184
      %p186 = scmp.ne.s32.totalorder %s178, %s181
      %p187 = scmp.eq.s32.totalorder %s16, 0
      %p188 = por %p186, %p187
      %p189 = scmp.ne.s32.totalorder %s178, %s181
      %p190 = scmp.eq.s32.totalorder %s21, 3
      %p191 = por %p189, %p190
      %p192 = scmp.ne.s32.totalorder %s181, %s182
      %p193 = scmp.eq.s32.totalorder %s21, 0
      %p194 = por %p192, %p193
      %p195 = scmp.ne.s32.totalorder %s181, %s182
      %p196 = scmp.eq.s32.totalorder %s22, 3
      %p197 = por %p195, %p196
      %p199 = scmp.ne.s32.totalorder %s182, %s198
      %p200 = scmp.eq.s32.totalorder %s22, 0
      %p201 = por %p199, %p200
      %p202 = scmp.le.s32.totalorder 1, %s16
      %p203 = scmp.lt.s32.totalorder %s16, 5
      %p204 = pnand %p202, %p203
      %p205 = pneg %p204
      // Predicated region
      $region9: #{transformer_forward.11} parent=5 // pred_check
        _
      $region10: #{transformer_forward.11} parent=5 // pred_check_branch
        %207 = sbr.rel (%p204) target = $region12
      $region11: #{transformer_forward.11} parent=5 // pred_region
        %s208 = ssub.s32 %s16, 1
        // Predicated region
        $region13: #{transformer_forward.11} parent=11 // pred_check
          %p209 = pneg %p63
        $region14: #{transformer_forward.11} parent=11 // pred_check_branch
          %211 = sbr.rel (%p209) target = $region16
        $region15: #{transformer_forward.11} parent=11 // pred_region
          _
        $region16: #{transformer_forward.11} parent=11 // pred_fallthru
          _
        // Predicated region
        $region17: #{transformer_forward.11} parent=11 // pred_check
          %p212 = pneg %p84
        $region18: #{transformer_forward.11} parent=11 // pred_check_branch
          %214 = sbr.rel (%p212) target = $region20
        $region19: #{transformer_forward.11} parent=11 // pred_region
          _
        $region20: #{transformer_forward.11} parent=11 // pred_fallthru
          _
        // Predicated region
        $region21: #{transformer_forward.11} parent=11 // pred_check
          %p215 = pneg %p105
        $region22: #{transformer_forward.11} parent=11 // pred_check_branch
          %217 = sbr.rel (%p215) target = $region24
        $region23: #{transformer_forward.11} parent=11 // pred_region
          _
        $region24: #{transformer_forward.11} parent=11 // pred_fallthru
          _
        // Predicated region
        $region25: #{transformer_forward.11} parent=11 // pred_check
          %p218 = pneg %p126
        $region26: #{transformer_forward.11} parent=11 // pred_check_branch
          %220 = sbr.rel (%p218) target = $region28
        $region27: #{transformer_forward.11} parent=11 // pred_region
          _
        $region28: #{transformer_forward.11} parent=11 // pred_fallthru
          _
        // Predicated region
        $region29: #{transformer_forward.11} parent=11 // pred_check
          %p221 = pneg %p147
        $region30: #{transformer_forward.11} parent=11 // pred_check_branch
          %223 = sbr.rel (%p221) target = $region32
        $region31: #{transformer_forward.11} parent=11 // pred_region
          _
        $region32: #{transformer_forward.11} parent=11 // pred_fallthru
          _
        // Predicated region
        $region33: #{transformer_forward.11} parent=11 // pred_check
          %p224 = pneg %p168
        $region34: #{transformer_forward.11} parent=11 // pred_check_branch
          %226 = sbr.rel (%p224) target = $region36
        $region35: #{transformer_forward.11} parent=11 // pred_region
          _
        $region36: #{transformer_forward.11} parent=11 // pred_fallthru
          _
      $region12: #{transformer_forward.11} parent=5 // pred_fallthru
        _
      %p227 = scmp.lt.s32.totalorder %s16, 4
      // Predicated region
      $region37: #{transformer_forward.11} parent=5 // pred_check
        %p228 = pneg %p227
      $region38: #{transformer_forward.11} parent=5 // pred_check_branch
        %230 = sbr.rel (%p228) target = $region40
      $region39: #{transformer_forward.11} parent=5 // pred_region
        // Predicated region
        $region41: #{transformer_forward.11} parent=39 // pred_check
          %p231 = pneg %p36
        $region42: #{transformer_forward.11} parent=39 // pred_check_branch
          %233 = sbr.rel (%p231) target = $region44
        $region43: #{transformer_forward.11} parent=39 // pred_region
          %s234 = smul.u32 16, %s16
          %p235 = scmp.lt.s32.totalorder %s234, 63
          %s236 = scalar_select %p235, %s234, 63
          %s237 = smul.addr %s236, 8
          %s238 = scalar_lea.vmem %s0, %s237
          %s239 = smul.u32 16, %s16
        $region44: #{transformer_forward.11} parent=39 // pred_fallthru
          _
      $region40: #{transformer_forward.11} parent=5 // pred_fallthru
        _
      %p240 = scmp.le.s32.totalorder 1, %s16
      %p241 = scmp.lt.s32.totalorder %s16, 5
      %p242 = pnand %p240, %p241
      %p243 = pneg %p242
      // Predicated region
      $region45: #{transformer_forward.11} parent=5 // pred_check
        _
      $region46: #{transformer_forward.11} parent=5 // pred_check_branch
        %245 = sbr.rel (%p242) target = $region48
      $region47: #{transformer_forward.11} parent=5 // pred_region
        %s246 = ssub.s32 %s16, 1
        %s247 = smul.u32 16, %s21
        %p248 = scmp.lt.s32.totalorder %s247, 63
        %s249 = scalar_select %p248, %s247, 63
        %s250 = smul.addr %s249, 8
        %s251 = scalar_lea.vmem %s0, %s250
        %p252 = pneg %p42
        %p253 = pneg %p39
        %p254 = pneg %p63
        %p255 = pneg %p60
        %p256 = pneg %p84
        %p257 = pneg %p81
        %p258 = pneg %p105
        %p259 = pneg %p102
        %p260 = pneg %p126
        %p261 = pneg %p123
        %p262 = pneg %p147
        %p263 = pneg %p144
        %p264 = pneg %p168
        %p265 = pneg %p165
        %p266 = pneg %p194
        %p267 = pneg %p191
        %s268 = sand.u32 %s181, 1
        %s269 = scalar_lea.sflag [#allocation3], %s268
        %s270 = sand.u32 %s181, 1
        %s271 = smul.addr %s270, 128
        %s272 = scalar_lea.vmem [#allocation2], %s271
        %s273 = smul.u32 16, %s21
        %p274 = scmp.lt.s32.totalorder %s273, 63
        %s275 = scalar_select %p274, %s273, 63
        %s276 = smul.addr %s275, 8
        %s277 = scalar_lea.vmem %s0, %s276
        %s278 = smul.u32 16, %s21
        %s279 = smul.u32 16, %s21
        %v281 = vld [vmem:[%s277] sm:$0xff]
        %v282 = vld [vmem:[%s277 + $0x8] sm:$0xff]
        %v283 = vld [vmem:[%s277 + $0x10] sm:$0xff]
        %v284 = vld [vmem:[%s277 + $0x18] sm:$0xff]
        %v285 = vld [vmem:[%s277 + $0x20] sm:$0xff]
        %v286 = vld [vmem:[%s277 + $0x28] sm:$0xff]
        %v287 = vld [vmem:[%s277 + $0x30] sm:$0xff]
        %v288 = vld [vmem:[%s277 + $0x38] sm:$0xff]
        %v289 = vld [vmem:[%s277 + $0x40] sm:$0xff]
        %v290 = vld [vmem:[%s277 + $0x48] sm:$0xff]
        %v291 = vld [vmem:[%s277 + $0x50] sm:$0xff]
        %v292 = vld [vmem:[%s277 + $0x58] sm:$0xff]
        %v293 = vld [vmem:[%s277 + $0x60] sm:$0xff]
        %v294 = vld [vmem:[%s277 + $0x68] sm:$0xff]
        %v295 = vld [vmem:[%s277 + $0x70] sm:$0xff]
        %v296 = vld [vmem:[%s277 + $0x78] sm:$0xff]
        %v297 = vld [vmem:[%s1] sm:$0x1]
        %v298 = vld [vmem:[%s2] sm:$0x1]
        %299 = vadd.xlane.f32.xlu0 %v281
        %v300 = vpop.xlane.xlu0 %299
        %301 = vadd.xlane.f32.xlu0 %v282
        %v302 = vpop.xlane.xlu0 %301
        %303 = vadd.xlane.f32.xlu0 %v283
        %v304 = vpop.xlane.xlu0 %303
        %305 = vadd.xlane.f32.xlu0 %v284
        %v306 = vpop.xlane.xlu0 %305
        %307 = vadd.xlane.f32.xlu0 %v285
        %v308 = vpop.xlane.xlu0 %307
        %309 = vadd.xlane.f32.xlu0 %v286
        %v310 = vpop.xlane.xlu0 %309
        %311 = vadd.xlane.f32.xlu0 %v287
        %v312 = vpop.xlane.xlu0 %311
        %313 = vadd.xlane.f32.xlu0 %v288
        %v314 = vpop.xlane.xlu0 %313
        %315 = vadd.xlane.f32.xlu0 %v289
        %v316 = vpop.xlane.xlu0 %315
        %317 = vadd.xlane.f32.xlu0 %v290
        %v318 = vpop.xlane.xlu0 %317
        %319 = vadd.xlane.f32.xlu0 %v291
        %v320 = vpop.xlane.xlu0 %319
        %321 = vadd.xlane.f32.xlu0 %v292
        %v322 = vpop.xlane.xlu0 %321
        %323 = vadd.xlane.f32.xlu0 %v293
        %v324 = vpop.xlane.xlu0 %323
        %325 = vadd.xlane.f32.xlu0 %v294
        %v326 = vpop.xlane.xlu0 %325
        %327 = vadd.xlane.f32.xlu0 %v295
        %v328 = vpop.xlane.xlu0 %327
        %329 = vadd.xlane.f32.xlu0 %v296
        %v330 = vpop.xlane.xlu0 %329
        %v331 = vrcp.pop 128.0
        %v332 = vmul.f32 %v300, %v331
        %v333 = vmul.f32 %v302, %v331
        %v334 = vmul.f32 %v304, %v331
        %v335 = vmul.f32 %v306, %v331
        %v336 = vmul.f32 %v308, %v331
        %v337 = vmul.f32 %v310, %v331
        %v338 = vmul.f32 %v312, %v331
        %v339 = vmul.f32 %v314, %v331
        %v340 = vmul.f32 %v316, %v331
        %v341 = vmul.f32 %v318, %v331
        %v342 = vmul.f32 %v320, %v331
        %v343 = vmul.f32 %v322, %v331
        %v344 = vmul.f32 %v324, %v331
        %v345 = vmul.f32 %v326, %v331
        %v346 = vmul.f32 %v328, %v331
        %v347 = vmul.f32 %v330, %v331
        %v348 = vsub.f32 %v281, %v332
        %v349 = vsub.f32 %v282, %v333
        %v350 = vsub.f32 %v283, %v334
        %v351 = vsub.f32 %v284, %v335
        %v352 = vsub.f32 %v285, %v336
        %v353 = vsub.f32 %v286, %v337
        %v354 = vsub.f32 %v287, %v338
        %v355 = vsub.f32 %v288, %v339
        %v356 = vsub.f32 %v289, %v340
        %v357 = vsub.f32 %v290, %v341
        %v358 = vsub.f32 %v291, %v342
        %v359 = vsub.f32 %v292, %v343
        %v360 = vsub.f32 %v293, %v344
        %v361 = vsub.f32 %v294, %v345
        %v362 = vsub.f32 %v295, %v346
        %v363 = vsub.f32 %v296, %v347
        %v364 = vmul.f32 %v348, %v348
        %v365 = vmul.f32 %v349, %v349
        %v366 = vmul.f32 %v350, %v350
        %v367 = vmul.f32 %v351, %v351
        %v368 = vmul.f32 %v352, %v352
        %v369 = vmul.f32 %v353, %v353
        %v370 = vmul.f32 %v354, %v354
        %v371 = vmul.f32 %v355, %v355
        %v372 = vmul.f32 %v356, %v356
        %v373 = vmul.f32 %v357, %v357
        %v374 = vmul.f32 %v358, %v358
        %v375 = vmul.f32 %v359, %v359
        %v376 = vmul.f32 %v360, %v360
        %v377 = vmul.f32 %v361, %v361
        %v378 = vmul.f32 %v362, %v362
        %v379 = vmul.f32 %v363, %v363
        %380 = vadd.xlane.f32.xlu0 %v364
        %v381 = vpop.xlane.xlu0 %380
        %382 = vadd.xlane.f32.xlu0 %v365
        %v383 = vpop.xlane.xlu0 %382
        %384 = vadd.xlane.f32.xlu0 %v366
        %v385 = vpop.xlane.xlu0 %384
        %386 = vadd.xlane.f32.xlu0 %v367
        %v387 = vpop.xlane.xlu0 %386
        %388 = vadd.xlane.f32.xlu0 %v368
        %v389 = vpop.xlane.xlu0 %388
        %390 = vadd.xlane.f32.xlu0 %v369
        %v391 = vpop.xlane.xlu0 %390
        %392 = vadd.xlane.f32.xlu0 %v370
        %v393 = vpop.xlane.xlu0 %392
        %394 = vadd.xlane.f32.xlu0 %v371
        %v395 = vpop.xlane.xlu0 %394
        %396 = vadd.xlane.f32.xlu0 %v372
        %v397 = vpop.xlane.xlu0 %396
        %398 = vadd.xlane.f32.xlu0 %v373
        %v399 = vpop.xlane.xlu0 %398
        %400 = vadd.xlane.f32.xlu0 %v374
        %v401 = vpop.xlane.xlu0 %400
        %402 = vadd.xlane.f32.xlu0 %v375
        %v403 = vpop.xlane.xlu0 %402
        %404 = vadd.xlane.f32.xlu0 %v376
        %v405 = vpop.xlane.xlu0 %404
        %406 = vadd.xlane.f32.xlu0 %v377
        %v407 = vpop.xlane.xlu0 %406
        %408 = vadd.xlane.f32.xlu0 %v378
        %v409 = vpop.xlane.xlu0 %408
        %410 = vadd.xlane.f32.xlu0 %v379
        %v411 = vpop.xlane.xlu0 %410
        %v412 = vmul.f32 %v381, %v331
        %v413 = vmul.f32 %v383, %v331
        %v414 = vmul.f32 %v385, %v331
        %v415 = vmul.f32 %v387, %v331
        %v416 = vmul.f32 %v389, %v331
        %v417 = vmul.f32 %v391, %v331
        %v418 = vmul.f32 %v393, %v331
        %v419 = vmul.f32 %v395, %v331
        %v420 = vmul.f32 %v397, %v331
        %v421 = vmul.f32 %v399, %v331
        %v422 = vmul.f32 %v401, %v331
        %v423 = vmul.f32 %v403, %v331
        %v424 = vmul.f32 %v405, %v331
        %v425 = vmul.f32 %v407, %v331
        %v426 = vmul.f32 %v409, %v331
        %v427 = vmul.f32 %v411, %v331
        %v428 = vadd.f32 %v412, 1e-05
        %v429 = vadd.f32 %v413, 1e-05
        %v430 = vadd.f32 %v414, 1e-05
        %v431 = vadd.f32 %v415, 1e-05
        %v432 = vadd.f32 %v416, 1e-05
        %v433 = vadd.f32 %v417, 1e-05
        %v434 = vadd.f32 %v418, 1e-05
        %v435 = vadd.f32 %v419, 1e-05
        %v436 = vadd.f32 %v420, 1e-05
        %v437 = vadd.f32 %v421, 1e-05
        %v438 = vadd.f32 %v422, 1e-05
        %v439 = vadd.f32 %v423, 1e-05
        %v440 = vadd.f32 %v424, 1e-05
        %v441 = vadd.f32 %v425, 1e-05
        %v442 = vadd.f32 %v426, 1e-05
        %v443 = vadd.f32 %v427, 1e-05
        %v444 = vrsqrt.pop %v428
        %v445 = vrsqrt.pop %v429
        %v446 = vrsqrt.pop %v430
        %v447 = vrsqrt.pop %v431
        %v448 = vrsqrt.pop %v432
        %v449 = vrsqrt.pop %v433
        %v450 = vrsqrt.pop %v434
        %v451 = vrsqrt.pop %v435
        %v452 = vrsqrt.pop %v436
        %v453 = vrsqrt.pop %v437
        %v454 = vrsqrt.pop %v438
        %v455 = vrsqrt.pop %v439
        %v456 = vrsqrt.pop %v440
        %v457 = vrsqrt.pop %v441
        %v458 = vrsqrt.pop %v442
        %v459 = vrsqrt.pop %v443
        %v460 = vmul.f32 %v348, %v444
        %v461 = vmul.f32 %v349, %v445
        %v462 = vmul.f32 %v350, %v446
        %v463 = vmul.f32 %v351, %v447
        %v464 = vmul.f32 %v352, %v448
        %v465 = vmul.f32 %v353, %v449
        %v466 = vmul.f32 %v354, %v450
        %v467 = vmul.f32 %v355, %v451
        %v468 = vmul.f32 %v356, %v452
        %v469 = vmul.f32 %v357, %v453
        %v470 = vmul.f32 %v358, %v454
        %v471 = vmul.f32 %v359, %v455
        %v472 = vmul.f32 %v360, %v456
        %v473 = vmul.f32 %v361, %v457
        %v474 = vmul.f32 %v362, %v458
        %v475 = vmul.f32 %v363, %v459
        %v477 = vlaneseq
        %v478 = vshrl.u32 %v477, 7
        %v479 = vsub.s32 0, %v478
        %v480 = vrot.slane %v297, %v479
        %v482 = vmul.f32 %v460, %v480
        %v483 = vmul.f32 %v461, %v480
        %v484 = vmul.f32 %v462, %v480
        %v485 = vmul.f32 %v463, %v480
        %v486 = vmul.f32 %v464, %v480
        %v487 = vmul.f32 %v465, %v480
        %v488 = vmul.f32 %v466, %v480
        %v489 = vmul.f32 %v467, %v480
        %v490 = vmul.f32 %v468, %v480
        %v491 = vmul.f32 %v469, %v480
        %v492 = vmul.f32 %v470, %v480
        %v493 = vmul.f32 %v471, %v480
        %v494 = vmul.f32 %v472, %v480
        %v495 = vmul.f32 %v473, %v480
        %v496 = vmul.f32 %v474, %v480
        %v497 = vmul.f32 %v475, %v480
        %v499 = vlaneseq
        %v500 = vshrl.u32 %v499, 7
        %v501 = vsub.s32 0, %v500
        %v502 = vrot.slane %v298, %v501
        %v504 = vadd.f32 %v482, %v502
        %v505 = vadd.f32 %v483, %v502
        %v506 = vadd.f32 %v484, %v502
        %v507 = vadd.f32 %v485, %v502
        %v508 = vadd.f32 %v486, %v502
        %v509 = vadd.f32 %v487, %v502
        %v510 = vadd.f32 %v488, %v502
        %v511 = vadd.f32 %v489, %v502
        %v512 = vadd.f32 %v490, %v502
        %v513 = vadd.f32 %v491, %v502
        %v514 = vadd.f32 %v492, %v502
        %v515 = vadd.f32 %v493, %v502
        %v516 = vadd.f32 %v494, %v502
        %v517 = vadd.f32 %v495, %v502
        %v518 = vadd.f32 %v496, %v502
        %v519 = vadd.f32 %v497, %v502
        %v520 = vpack.c.bf16 %v505, %v504
        %v521 = vpack.c.bf16 %v507, %v506
        %v522 = vpack.c.bf16 %v509, %v508
        %v523 = vpack.c.bf16 %v511, %v510
        %v524 = vpack.c.bf16 %v513, %v512
        %v525 = vpack.c.bf16 %v515, %v514
        %v526 = vpack.c.bf16 %v517, %v516
        %v527 = vpack.c.bf16 %v519, %v518
        %v528 = vld [vmem:[%s3] sm:$0xff]
        %v529 = vld [vmem:[%s3 + $0x8] sm:$0xff]
        %v530 = vld [vmem:[%s3 + $0x10] sm:$0xff]
        %v531 = vld [vmem:[%s3 + $0x18] sm:$0xff]
        %v532 = vld [vmem:[%s3 + $0x20] sm:$0xff]
        %v533 = vld [vmem:[%s3 + $0x28] sm:$0xff]
        %v534 = vld [vmem:[%s3 + $0x30] sm:$0xff]
        %v535 = vld [vmem:[%s3 + $0x38] sm:$0xff]
        %v536 = vld [vmem:[%s3 + $0x40] sm:$0xff]
        %v537 = vld [vmem:[%s3 + $0x48] sm:$0xff]
        %v538 = vld [vmem:[%s3 + $0x50] sm:$0xff]
        %v539 = vld [vmem:[%s3 + $0x58] sm:$0xff]
        %v540 = vld [vmem:[%s3 + $0x60] sm:$0xff]
        %v541 = vld [vmem:[%s3 + $0x68] sm:$0xff]
        %v542 = vld [vmem:[%s3 + $0x70] sm:$0xff]
        %v543 = vld [vmem:[%s3 + $0x78] sm:$0xff]
        %v544 = vld [vmem:[%s4] sm:$0x3]
        %v546 = vlaneseq
        %v547 = vshrl.u32 %v546, 7
        %v548 = vsub.s32 0, %v547
        %v549 = vrot.slane %v544, %v548
        %v550 = vlaneseq
        %v551 = vshrl.u32 %v550, 7
        %v552 = vsub.s32 1, %v551
        %v553 = vrot.slane %v544, %v552
        %v572 = vunpack.c.l.b16 %v528
        %v573 = vunpack.c.h.b16 %v528
        %v574 = vunpack.c.l.b16 %v529
        %v575 = vunpack.c.h.b16 %v529
        %v576 = vunpack.c.l.b16 %v530
        %v577 = vunpack.c.h.b16 %v530
        %v578 = vunpack.c.l.b16 %v531
        %v579 = vunpack.c.h.b16 %v531
        %v580 = vunpack.c.l.b16 %v532
        %v581 = vunpack.c.h.b16 %v532
        %v582 = vunpack.c.l.b16 %v533
        %v583 = vunpack.c.h.b16 %v533
        %v584 = vunpack.c.l.b16 %v534
        %v585 = vunpack.c.h.b16 %v534
        %v586 = vunpack.c.l.b16 %v535
        %v587 = vunpack.c.h.b16 %v535
        %v588 = vunpack.c.l.b16 %v536
        %v589 = vunpack.c.h.b16 %v536
        %v590 = vunpack.c.l.b16 %v537
        %v591 = vunpack.c.h.b16 %v537
        %v592 = vunpack.c.l.b16 %v538
        %v593 = vunpack.c.h.b16 %v538
        %v594 = vunpack.c.l.b16 %v539
        %v595 = vunpack.c.h.b16 %v539
        %v596 = vunpack.c.l.b16 %v540
        %v597 = vunpack.c.h.b16 %v540
        %v598 = vunpack.c.l.b16 %v541
        %v599 = vunpack.c.h.b16 %v541
        %v600 = vunpack.c.l.b16 %v542
        %v601 = vunpack.c.h.b16 %v542
        %v602 = vunpack.c.l.b16 %v543
        %v603 = vunpack.c.h.b16 %v543
        %v604 = vpack.c.b16 %v574, %v572
        %v605 = vpack.c.b16 %v575, %v573
        %v606 = vpack.c.b16 %v578, %v576
        %v607 = vpack.c.b16 %v579, %v577
        %v608 = vpack.c.b16 %v582, %v580
        %v609 = vpack.c.b16 %v583, %v581
        %v610 = vpack.c.b16 %v586, %v584
        %v611 = vpack.c.b16 %v587, %v585
        %v612 = vpack.c.b16 %v590, %v588
        %v613 = vpack.c.b16 %v591, %v589
        %v614 = vpack.c.b16 %v594, %v592
        %v615 = vpack.c.b16 %v595, %v593
        %v616 = vpack.c.b16 %v598, %v596
        %v617 = vpack.c.b16 %v599, %v597
        %v618 = vpack.c.b16 %v602, %v600
        %v619 = vpack.c.b16 %v603, %v601
        %636 = vmatprep.subr.bf16.mxu0 %v605
        %637 = vmatpush1.bf16.msra.mxu0 %v604
        %638 = vmatprep.subr.bf16.mxu0 %v607
        %639 = vmatpush1.bf16.msra.mxu0 %v606
        %640 = vmatprep.subr.bf16.mxu0 %v609
        %641 = vmatpush1.bf16.msra.mxu0 %v608
        %642 = vmatprep.subr.bf16.mxu0 %v611
        %643 = vmatpush1.bf16.msra.mxu0 %v610
        %644 = vmatprep.subr.bf16.mxu0 %v613
        %645 = vmatpush1.bf16.msra.mxu0 %v612
        %646 = vmatprep.subr.bf16.mxu0 %v615
        %647 = vmatpush1.bf16.msra.mxu0 %v614
        %648 = vmatprep.subr.bf16.mxu0 %v617
        %649 = vmatpush1.bf16.msra.mxu0 %v616
        %650 = vmatprep.subr.bf16.mxu0 %v619
        %651 = vmatpush1.bf16.msra.mxu0 %v618
        %652 = vmatprep.subr.bf16.mxu0 0
        %653 = vmatpush1.bf16.msra.mxu0 0
        %654 = vmatprep.subr.bf16.mxu0 0
        %655 = vmatpush1.bf16.msra.mxu0 0
        %656 = vmatprep.subr.bf16.mxu0 0
        %657 = vmatpush1.bf16.msra.mxu0 0
        %658 = vmatprep.subr.bf16.mxu0 0
        %659 = vmatpush1.bf16.msra.mxu0 0
        %660 = vmatprep.subr.bf16.mxu0 0
        %661 = vmatpush1.bf16.msra.mxu0 0
        %662 = vmatprep.subr.bf16.mxu0 0
        %663 = vmatpush1.bf16.msra.mxu0 0
        %664 = vmatprep.subr.bf16.mxu0 0
        %665 = vmatpush1.bf16.msra.mxu0 0
        %666 = vmatprep.subr.bf16.mxu0 0
        %667 = vmatpush1.bf16.msra.mxu0 0
        %668 = vmatprep.mubr.bf16.mxu0 0
        %669 = vmatmul.mubr.bf16.gmra.mrb[0].mxu0 %v520
        %v670 = vpop.f32.mrb[0].mxu0
        %v671 = vadd.f32 %v549, %v670
        %v672 = vpop.f32.mrb[0].mxu0
        %v673 = vadd.f32 %v553, %v672
        %v674 = vpop.f32.mrb[0].mxu0
        %v675 = vadd.f32 %v549, %v674
        %v676 = vpop.f32.mrb[0].mxu0
        %v677 = vadd.f32 %v553, %v676
        %678 = vmatprep.mubr.bf16.mxu0 0
        %679 = vmatmul.mubr.bf16.gmra.mrb[0].mxu0 %v521
        %v680 = vpop.f32.mrb[0].mxu0
        %v681 = vadd.f32 %v549, %v680
        %v682 = vpop.f32.mrb[0].mxu0
        %v683 = vadd.f32 %v553, %v682
        %v684 = vpop.f32.mrb[0].mxu0
        %v685 = vadd.f32 %v549, %v684
        %v686 = vpop.f32.mrb[0].mxu0
        %v687 = vadd.f32 %v553, %v686
        %688 = vmatprep.mubr.bf16.mxu0 0
        %689 = vmatmul.mubr.bf16.gmra.mrb[0].mxu0 %v522
        %v690 = vpop.f32.mrb[0].mxu0
        %v691 = vadd.f32 %v549, %v690
        %v692 = vpop.f32.mrb[0].mxu0
        %v693 = vadd.f32 %v553, %v692
        %v694 = vpop.f32.mrb[0].mxu0
        %v695 = vadd.f32 %v549, %v694
        %v696 = vpop.f32.mrb[0].mxu0
        %v697 = vadd.f32 %v553, %v696
        %698 = vmatprep.mubr.bf16.mxu0 0
        %699 = vmatmul.mubr.bf16.gmra.mrb[0].mxu0 %v523
        %v700 = vpop.f32.mrb[0].mxu0
        %v701 = vadd.f32 %v549, %v700
        %v702 = vpop.f32.mrb[0].mxu0
        %v703 = vadd.f32 %v553, %v702
        %v704 = vpop.f32.mrb[0].mxu0
        %v705 = vadd.f32 %v549, %v704
        %v706 = vpop.f32.mrb[0].mxu0
        %v707 = vadd.f32 %v553, %v706
        %708 = vmatprep.mubr.bf16.mxu0 0
        %709 = vmatmul.mubr.bf16.gmra.mrb[0].mxu0 %v524
        %v710 = vpop.f32.mrb[0].mxu0
        %v711 = vadd.f32 %v549, %v710
        %v712 = vpop.f32.mrb[0].mxu0
        %v713 = vadd.f32 %v553, %v712
        %v714 = vpop.f32.mrb[0].mxu0
        %v715 = vadd.f32 %v549, %v714
        %v716 = vpop.f32.mrb[0].mxu0
        %v717 = vadd.f32 %v553, %v716
        %718 = vmatprep.mubr.bf16.mxu0 0
        %719 = vmatmul.mubr.bf16.gmra.mrb[0].mxu0 %v525
        %v720 = vpop.f32.mrb[0].mxu0
        %v721 = vadd.f32 %v549, %v720
        %v722 = vpop.f32.mrb[0].mxu0
        %v723 = vadd.f32 %v553, %v722
        %v724 = vpop.f32.mrb[0].mxu0
        %v725 = vadd.f32 %v549, %v724
        %v726 = vpop.f32.mrb[0].mxu0
        %v727 = vadd.f32 %v553, %v726
        %728 = vmatprep.mubr.bf16.mxu0 0
        %729 = vmatmul.mubr.bf16.gmra.mrb[0].mxu0 %v526
        %v730 = vpop.f32.mrb[0].mxu0
        %v731 = vadd.f32 %v549, %v730
        %v732 = vpop.f32.mrb[0].mxu0
        %v733 = vadd.f32 %v553, %v732
        %v734 = vpop.f32.mrb[0].mxu0
        %v735 = vadd.f32 %v549, %v734
        %v736 = vpop.f32.mrb[0].mxu0
        %v737 = vadd.f32 %v553, %v736
        %738 = vmatprep.mubr.bf16.mxu0 0
        %739 = vmatmul.mubr.bf16.gmra.mrb[0].mxu0 %v527
        %v740 = vpop.f32.mrb[0].mxu0
        %v741 = vadd.f32 %v549, %v740
        %v742 = vpop.f32.mrb[0].mxu0
        %v743 = vadd.f32 %v553, %v742
        %v744 = vpop.f32.mrb[0].mxu0
        %v745 = vadd.f32 %v549, %v744
        %v746 = vpop.f32.mrb[0].mxu0
        %v747 = vadd.f32 %v553, %v746
        %748 = vdwg.mxu0
        %v749 = vmul.f32 %v671, 0.5
        %v750 = vmul.f32 %v673, 0.5
        %v751 = vmul.f32 %v675, 0.5
        %v752 = vmul.f32 %v677, 0.5
        %v753 = vmul.f32 %v681, 0.5
        %v754 = vmul.f32 %v683, 0.5
        %v755 = vmul.f32 %v685, 0.5
        %v756 = vmul.f32 %v687, 0.5
        %v757 = vmul.f32 %v691, 0.5
        %v758 = vmul.f32 %v693, 0.5
        %v759 = vmul.f32 %v695, 0.5
        %v760 = vmul.f32 %v697, 0.5
        %v761 = vmul.f32 %v701, 0.5
        %v762 = vmul.f32 %v703, 0.5
        %v763 = vmul.f32 %v705, 0.5
        %v764 = vmul.f32 %v707, 0.5
        %v765 = vmul.f32 %v711, 0.5
        %v766 = vmul.f32 %v713, 0.5
        %v767 = vmul.f32 %v715, 0.5
        %v768 = vmul.f32 %v717, 0.5
        %v769 = vmul.f32 %v721, 0.5
        %v770 = vmul.f32 %v723, 0.5
        %v771 = vmul.f32 %v725, 0.5
        %v772 = vmul.f32 %v727, 0.5
        %v773 = vmul.f32 %v731, 0.5
        %v774 = vmul.f32 %v733, 0.5
        %v775 = vmul.f32 %v735, 0.5
        %v776 = vmul.f32 %v737, 0.5
        %v777 = vmul.f32 %v741, 0.5
        %v778 = vmul.f32 %v743, 0.5
        %v779 = vmul.f32 %v745, 0.5
        %v780 = vmul.f32 %v747, 0.5
        %v781 = vmul.f32 %v671, 0.044715
        %v782 = vmul.f32 %v673, 0.044715
        %v783 = vmul.f32 %v675, 0.044715
        %v784 = vmul.f32 %v677, 0.044715
        %v785 = vmul.f32 %v681, 0.044715
        %v786 = vmul.f32 %v683, 0.044715
        %v787 = vmul.f32 %v685, 0.044715
        %v788 = vmul.f32 %v687, 0.044715
        %v789 = vmul.f32 %v691, 0.044715
        %v790 = vmul.f32 %v693, 0.044715
        %v791 = vmul.f32 %v695, 0.044715
        %v792 = vmul.f32 %v697, 0.044715
        %v793 = vmul.f32 %v701, 0.044715
        %v794 = vmul.f32 %v703, 0.044715
        %v795 = vmul.f32 %v705, 0.044715
        %v796 = vmul.f32 %v707, 0.044715
        %v797 = vmul.f32 %v711, 0.044715
        %v798 = vmul.f32 %v713, 0.044715
        %v799 = vmul.f32 %v715, 0.044715
        %v800 = vmul.f32 %v717, 0.044715
        %v801 = vmul.f32 %v721, 0.044715
        %v802 = vmul.f32 %v723, 0.044715
        %v803 = vmul.f32 %v725, 0.044715
        %v804 = vmul.f32 %v727, 0.044715
        %v805 = vmul.f32 %v731, 0.044715
        %v806 = vmul.f32 %v733, 0.044715
        %v807 = vmul.f32 %v735, 0.044715
        %v808 = vmul.f32 %v737, 0.044715
        %v809 = vmul.f32 %v741, 0.044715
        %v810 = vmul.f32 %v743, 0.044715
        %v811 = vmul.f32 %v745, 0.044715
        %v812 = vmul.f32 %v747, 0.044715
        %v813 = vmul.f32 %v781, %v671
        %v814 = vmul.f32 %v782, %v673
        %v815 = vmul.f32 %v783, %v675
        %v816 = vmul.f32 %v784, %v677
        %v817 = vmul.f32 %v785, %v681
        %v818 = vmul.f32 %v786, %v683
        %v819 = vmul.f32 %v787, %v685
        %v820 = vmul.f32 %v788, %v687
        %v821 = vmul.f32 %v789, %v691
        %v822 = vmul.f32 %v790, %v693
        %v823 = vmul.f32 %v791, %v695
        %v824 = vmul.f32 %v792, %v697
        %v825 = vmul.f32 %v793, %v701
        %v826 = vmul.f32 %v794, %v703
        %v827 = vmul.f32 %v795, %v705
        %v828 = vmul.f32 %v796, %v707
        %v829 = vmul.f32 %v797, %v711
        %v830 = vmul.f32 %v798, %v713
        %v831 = vmul.f32 %v799, %v715
        %v832 = vmul.f32 %v800, %v717
        %v833 = vmul.f32 %v801, %v721
        %v834 = vmul.f32 %v802, %v723
        %v835 = vmul.f32 %v803, %v725
        %v836 = vmul.f32 %v804, %v727
        %v837 = vmul.f32 %v805, %v731
        %v838 = vmul.f32 %v806, %v733
        %v839 = vmul.f32 %v807, %v735
        %v840 = vmul.f32 %v808, %v737
        %v841 = vmul.f32 %v809, %v741
        %v842 = vmul.f32 %v810, %v743
        %v843 = vmul.f32 %v811, %v745
        %v844 = vmul.f32 %v812, %v747
        %v845 = vmul.f32 %v813, %v671
        %v846 = vmul.f32 %v814, %v673
        %v847 = vmul.f32 %v815, %v675
        %v848 = vmul.f32 %v816, %v677
        %v849 = vmul.f32 %v817, %v681
        %v850 = vmul.f32 %v818, %v683
        %v851 = vmul.f32 %v819, %v685
        %v852 = vmul.f32 %v820, %v687
        %v853 = vmul.f32 %v821, %v691
        %v854 = vmul.f32 %v822, %v693
        %v855 = vmul.f32 %v823, %v695
        %v856 = vmul.f32 %v824, %v697
        %v857 = vmul.f32 %v825, %v701
        %v858 = vmul.f32 %v826, %v703
        %v859 = vmul.f32 %v827, %v705
        %v860 = vmul.f32 %v828, %v707
        %v861 = vmul.f32 %v829, %v711
        %v862 = vmul.f32 %v830, %v713
        %v863 = vmul.f32 %v831, %v715
        %v864 = vmul.f32 %v832, %v717
        %v865 = vmul.f32 %v833, %v721
        %v866 = vmul.f32 %v834, %v723
        %v867 = vmul.f32 %v835, %v725
        %v868 = vmul.f32 %v836, %v727
        %v869 = vmul.f32 %v837, %v731
        %v870 = vmul.f32 %v838, %v733
        %v871 = vmul.f32 %v839, %v735
        %v872 = vmul.f32 %v840, %v737
        %v873 = vmul.f32 %v841, %v741
        %v874 = vmul.f32 %v842, %v743
        %v875 = vmul.f32 %v843, %v745
        %v876 = vmul.f32 %v844, %v747
        %v877 = vadd.f32 %v671, %v845
        %v878 = vadd.f32 %v673, %v846
        %v879 = vadd.f32 %v675, %v847
        %v880 = vadd.f32 %v677, %v848
        %v881 = vadd.f32 %v681, %v849
        %v882 = vadd.f32 %v683, %v850
        %v883 = vadd.f32 %v685, %v851
        %v884 = vadd.f32 %v687, %v852
        %v885 = vadd.f32 %v691, %v853
        %v886 = vadd.f32 %v693, %v854
        %v887 = vadd.f32 %v695, %v855
        %v888 = vadd.f32 %v697, %v856
        %v889 = vadd.f32 %v701, %v857
        %v890 = vadd.f32 %v703, %v858
        %v891 = vadd.f32 %v705, %v859
        %v892 = vadd.f32 %v707, %v860
        %v893 = vadd.f32 %v711, %v861
        %v894 = vadd.f32 %v713, %v862
        %v895 = vadd.f32 %v715, %v863
        %v896 = vadd.f32 %v717, %v864
        %v897 = vadd.f32 %v721, %v865
        %v898 = vadd.f32 %v723, %v866
        %v899 = vadd.f32 %v725, %v867
        %v900 = vadd.f32 %v727, %v868
        %v901 = vadd.f32 %v731, %v869
        %v902 = vadd.f32 %v733, %v870
        %v903 = vadd.f32 %v735, %v871
        %v904 = vadd.f32 %v737, %v872
        %v905 = vadd.f32 %v741, %v873
        %v906 = vadd.f32 %v743, %v874
        %v907 = vadd.f32 %v745, %v875
        %v908 = vadd.f32 %v747, %v876
        %v909 = vmul.f32 %v877, 0.7978846
        %v910 = vmul.f32 %v878, 0.7978846
        %v911 = vmul.f32 %v879, 0.7978846
        %v912 = vmul.f32 %v880, 0.7978846
        %v913 = vmul.f32 %v881, 0.7978846
        %v914 = vmul.f32 %v882, 0.7978846
        %v915 = vmul.f32 %v883, 0.7978846
        %v916 = vmul.f32 %v884, 0.7978846
        %v917 = vmul.f32 %v885, 0.7978846
        %v918 = vmul.f32 %v886, 0.7978846
        %v919 = vmul.f32 %v887, 0.7978846
        %v920 = vmul.f32 %v888, 0.7978846
        %v921 = vmul.f32 %v889, 0.7978846
        %v922 = vmul.f32 %v890, 0.7978846
        %v923 = vmul.f32 %v891, 0.7978846
        %v924 = vmul.f32 %v892, 0.7978846
        %v925 = vmul.f32 %v893, 0.7978846
        %v926 = vmul.f32 %v894, 0.7978846
        %v927 = vmul.f32 %v895, 0.7978846
        %v928 = vmul.f32 %v896, 0.7978846
        %v929 = vmul.f32 %v897, 0.7978846
        %v930 = vmul.f32 %v898, 0.7978846
        %v931 = vmul.f32 %v899, 0.7978846
        %v932 = vmul.f32 %v900, 0.7978846
        %v933 = vmul.f32 %v901, 0.7978846
        %v934 = vmul.f32 %v902, 0.7978846
        %v935 = vmul.f32 %v903, 0.7978846
        %v936 = vmul.f32 %v904, 0.7978846
        %v937 = vmul.f32 %v905, 0.7978846
        %v938 = vmul.f32 %v906, 0.7978846
        %v939 = vmul.f32 %v907, 0.7978846
        %v940 = vmul.f32 %v908, 0.7978846
        %v941 = vtanh.pop %v909
        %v942 = vtanh.pop %v910
        %v943 = vtanh.pop %v911
        %v944 = vtanh.pop %v912
        %v945 = vtanh.pop %v913
        %v946 = vtanh.pop %v914
        %v947 = vtanh.pop %v915
        %v948 = vtanh.pop %v916
        %v949 = vtanh.pop %v917
        %v950 = vtanh.pop %v918
        %v951 = vtanh.pop %v919
        %v952 = vtanh.pop %v920
        %v953 = vtanh.pop %v921
        %v954 = vtanh.pop %v922
        %v955 = vtanh.pop %v923
        %v956 = vtanh.pop %v924
        %v957 = vtanh.pop %v925
        %v958 = vtanh.pop %v926
        %v959 = vtanh.pop %v927
        %v960 = vtanh.pop %v928
        %v961 = vtanh.pop %v929
        %v962 = vtanh.pop %v930
        %v963 = vtanh.pop %v931
        %v964 = vtanh.pop %v932
        %v965 = vtanh.pop %v933
        %v966 = vtanh.pop %v934
        %v967 = vtanh.pop %v935
        %v968 = vtanh.pop %v936
        %v969 = vtanh.pop %v937
        %v970 = vtanh.pop %v938
        %v971 = vtanh.pop %v939
        %v972 = vtanh.pop %v940
        %v973 = vadd.f32 %v941, 1.0
        %v974 = vadd.f32 %v942, 1.0
        %v975 = vadd.f32 %v943, 1.0
        %v976 = vadd.f32 %v944, 1.0
        %v977 = vadd.f32 %v945, 1.0
        %v978 = vadd.f32 %v946, 1.0
        %v979 = vadd.f32 %v947, 1.0
        %v980 = vadd.f32 %v948, 1.0
        %v981 = vadd.f32 %v949, 1.0
        %v982 = vadd.f32 %v950, 1.0
        %v983 = vadd.f32 %v951, 1.0
        %v984 = vadd.f32 %v952, 1.0
        %v985 = vadd.f32 %v953, 1.0
        %v986 = vadd.f32 %v954, 1.0
        %v987 = vadd.f32 %v955, 1.0
        %v988 = vadd.f32 %v956, 1.0
        %v989 = vadd.f32 %v957, 1.0
        %v990 = vadd.f32 %v958, 1.0
        %v991 = vadd.f32 %v959, 1.0
        %v992 = vadd.f32 %v960, 1.0
        %v993 = vadd.f32 %v961, 1.0
        %v994 = vadd.f32 %v962, 1.0
        %v995 = vadd.f32 %v963, 1.0
        %v996 = vadd.f32 %v964, 1.0
        %v997 = vadd.f32 %v965, 1.0
        %v998 = vadd.f32 %v966, 1.0
        %v999 = vadd.f32 %v967, 1.0
        %v1000 = vadd.f32 %v968, 1.0
        %v1001 = vadd.f32 %v969, 1.0
        %v1002 = vadd.f32 %v970, 1.0
        %v1003 = vadd.f32 %v971, 1.0
        %v1004 = vadd.f32 %v972, 1.0
        %v1005 = vmul.f32 %v749, %v973
        %v1006 = vmul.f32 %v750, %v974
        %v1007 = vmul.f32 %v751, %v975
        %v1008 = vmul.f32 %v752, %v976
        %v1009 = vmul.f32 %v753, %v977
        %v1010 = vmul.f32 %v754, %v978
        %v1011 = vmul.f32 %v755, %v979
        %v1012 = vmul.f32 %v756, %v980
        %v1013 = vmul.f32 %v757, %v981
        %v1014 = vmul.f32 %v758, %v982
        %v1015 = vmul.f32 %v759, %v983
        %v1016 = vmul.f32 %v760, %v984
        %v1017 = vmul.f32 %v761, %v985
        %v1018 = vmul.f32 %v762, %v986
        %v1019 = vmul.f32 %v763, %v987
        %v1020 = vmul.f32 %v764, %v988
        %v1021 = vmul.f32 %v765, %v989
        %v1022 = vmul.f32 %v766, %v990
        %v1023 = vmul.f32 %v767, %v991
        %v1024 = vmul.f32 %v768, %v992
        %v1025 = vmul.f32 %v769, %v993
        %v1026 = vmul.f32 %v770, %v994
        %v1027 = vmul.f32 %v771, %v995
        %v1028 = vmul.f32 %v772, %v996
        %v1029 = vmul.f32 %v773, %v997
        %v1030 = vmul.f32 %v774, %v998
        %v1031 = vmul.f32 %v775, %v999
        %v1032 = vmul.f32 %v776, %v1000
        %v1033 = vmul.f32 %v777, %v1001
        %v1034 = vmul.f32 %v778, %v1002
        %v1035 = vmul.f32 %v779, %v1003
        %v1036 = vmul.f32 %v780, %v1004
        %v1037 = vpack.c.bf16 %v1007, %v1005
        %v1038 = vpack.c.bf16 %v1008, %v1006
        %v1039 = vpack.c.bf16 %v1011, %v1009
        %v1040 = vpack.c.bf16 %v1012, %v1010
        %v1041 = vpack.c.bf16 %v1015, %v1013
        %v1042 = vpack.c.bf16 %v1016, %v1014
        %v1043 = vpack.c.bf16 %v1019, %v1017
        %v1044 = vpack.c.bf16 %v1020, %v1018
        %v1045 = vpack.c.bf16 %v1023, %v1021
        %v1046 = vpack.c.bf16 %v1024, %v1022
        %v1047 = vpack.c.bf16 %v1027, %v1025
        %v1048 = vpack.c.bf16 %v1028, %v1026
        %v1049 = vpack.c.bf16 %v1031, %v1029
        %v1050 = vpack.c.bf16 %v1032, %v1030
        %v1051 = vpack.c.bf16 %v1035, %v1033
        %v1052 = vpack.c.bf16 %v1036, %v1034
        %v1053 = vld [vmem:[%s5] sm:$0xf]
        %v1054 = vld [vmem:[%s5 + $0x4] sm:$0xf]
        %v1055 = vld [vmem:[%s5 + $0x8] sm:$0xf]
        %v1056 = vld [vmem:[%s5 + $0xc] sm:$0xf]
        %v1057 = vld [vmem:[%s5 + $0x10] sm:$0xf]
        %v1058 = vld [vmem:[%s5 + $0x14] sm:$0xf]
        %v1059 = vld [vmem:[%s5 + $0x18] sm:$0xf]
        %v1060 = vld [vmem:[%s5 + $0x1c] sm:$0xf]
        %v1061 = vld [vmem:[%s5 + $0x20] sm:$0xf]
        %v1062 = vld [vmem:[%s5 + $0x24] sm:$0xf]
        %v1063 = vld [vmem:[%s5 + $0x28] sm:$0xf]
        %v1064 = vld [vmem:[%s5 + $0x2c] sm:$0xf]
        %v1065 = vld [vmem:[%s5 + $0x30] sm:$0xf]
        %v1066 = vld [vmem:[%s5 + $0x34] sm:$0xf]
        %v1067 = vld [vmem:[%s5 + $0x38] sm:$0xf]
        %v1068 = vld [vmem:[%s5 + $0x3c] sm:$0xf]
        %v1069 = vld [vmem:[%s5 + $0x40] sm:$0xf]
        %v1070 = vld [vmem:[%s5 + $0x44] sm:$0xf]
        %v1071 = vld [vmem:[%s5 + $0x48] sm:$0xf]
        %v1072 = vld [vmem:[%s5 + $0x4c] sm:$0xf]
        %v1073 = vld [vmem:[%s5 + $0x50] sm:$0xf]
        %v1074 = vld [vmem:[%s5 + $0x54] sm:$0xf]
        %v1075 = vld [vmem:[%s5 + $0x58] sm:$0xf]
        %v1076 = vld [vmem:[%s5 + $0x5c] sm:$0xf]
        %v1077 = vld [vmem:[%s5 + $0x60] sm:$0xf]
        %v1078 = vld [vmem:[%s5 + $0x64] sm:$0xf]
        %v1079 = vld [vmem:[%s5 + $0x68] sm:$0xf]
        %v1080 = vld [vmem:[%s5 + $0x6c] sm:$0xf]
        %v1081 = vld [vmem:[%s5 + $0x70] sm:$0xf]
        %v1082 = vld [vmem:[%s5 + $0x74] sm:$0xf]
        %v1083 = vld [vmem:[%s5 + $0x78] sm:$0xf]
        %v1084 = vld [vmem:[%s5 + $0x7c] sm:$0xf]
        %v1085 = vld [vmem:[%s6] sm:$0x1]
        %v1087 = vlaneseq
        %v1088 = vshrl.u32 %v1087, 7
        %v1089 = vsub.s32 0, %v1088
        %v1090 = vrot.slane %v1085, %v1089
        %v1124 = vunpack.c.l.b16 %v1053
        %v1125 = vunpack.c.l.b16 %v1054
        %v1126 = vunpack.c.l.b16 %v1055
        %v1127 = vunpack.c.l.b16 %v1056
        %v1128 = vunpack.c.l.b16 %v1057
        %v1129 = vunpack.c.l.b16 %v1058
        %v1130 = vunpack.c.l.b16 %v1059
        %v1131 = vunpack.c.l.b16 %v1060
        %v1132 = vunpack.c.l.b16 %v1061
        %v1133 = vunpack.c.l.b16 %v1062
        %v1134 = vunpack.c.l.b16 %v1063
        %v1135 = vunpack.c.l.b16 %v1064
        %v1136 = vunpack.c.l.b16 %v1065
        %v1137 = vunpack.c.l.b16 %v1066
        %v1138 = vunpack.c.l.b16 %v1067
        %v1139 = vunpack.c.l.b16 %v1068
        %v1140 = vunpack.c.l.b16 %v1069
        %v1141 = vunpack.c.l.b16 %v1070
        %v1142 = vunpack.c.l.b16 %v1071
        %v1143 = vunpack.c.l.b16 %v1072
        %v1144 = vunpack.c.l.b16 %v1073
        %v1145 = vunpack.c.l.b16 %v1074
        %v1146 = vunpack.c.l.b16 %v1075
        %v1147 = vunpack.c.l.b16 %v1076
        %v1148 = vunpack.c.l.b16 %v1077
        %v1149 = vunpack.c.l.b16 %v1078
        %v1150 = vunpack.c.l.b16 %v1079
        %v1151 = vunpack.c.l.b16 %v1080
        %v1152 = vunpack.c.l.b16 %v1081
        %v1153 = vunpack.c.l.b16 %v1082
        %v1154 = vunpack.c.l.b16 %v1083
        %v1155 = vunpack.c.l.b16 %v1084
        %v1156 = vpack.c.b16 %v1125, %v1124
        %v1157 = vpack.c.b16 %v1127, %v1126
        %v1158 = vpack.c.b16 %v1129, %v1128
        %v1159 = vpack.c.b16 %v1131, %v1130
        %v1160 = vpack.c.b16 %v1133, %v1132
        %v1161 = vpack.c.b16 %v1135, %v1134
        %v1162 = vpack.c.b16 %v1137, %v1136
        %v1163 = vpack.c.b16 %v1139, %v1138
        %v1164 = vpack.c.b16 %v1141, %v1140
        %v1165 = vpack.c.b16 %v1143, %v1142
        %v1166 = vpack.c.b16 %v1145, %v1144
        %v1167 = vpack.c.b16 %v1147, %v1146
        %v1168 = vpack.c.b16 %v1149, %v1148
        %v1169 = vpack.c.b16 %v1151, %v1150
        %v1170 = vpack.c.b16 %v1153, %v1152
        %v1171 = vpack.c.b16 %v1155, %v1154
        %1188 = vmatprep.subr.bf16.mxu0 0
        %1189 = vmatpush1.bf16.msra.mxu0 %v1156
        %1190 = vmatprep.subr.bf16.mxu0 0
        %1191 = vmatpush1.bf16.msra.mxu0 %v1157
        %1192 = vmatprep.subr.bf16.mxu0 0
        %1193 = vmatpush1.bf16.msra.mxu0 %v1158
        %1194 = vmatprep.subr.bf16.mxu0 0
        %1195 = vmatpush1.bf16.msra.mxu0 %v1159
        %1196 = vmatprep.subr.bf16.mxu0 0
        %1197 = vmatpush1.bf16.msra.mxu0 %v1160
        %1198 = vmatprep.subr.bf16.mxu0 0
        %1199 = vmatpush1.bf16.msra.mxu0 %v1161
        %1200 = vmatprep.subr.bf16.mxu0 0
        %1201 = vmatpush1.bf16.msra.mxu0 %v1162
        %1202 = vmatprep.subr.bf16.mxu0 0
        %1203 = vmatpush1.bf16.msra.mxu0 %v1163
        %1204 = vmatprep.subr.bf16.mxu0 0
        %1205 = vmatpush1.bf16.msra.mxu0 %v1164
        %1206 = vmatprep.subr.bf16.mxu0 0
        %1207 = vmatpush1.bf16.msra.mxu0 %v1165
        %1208 = vmatprep.subr.bf16.mxu0 0
        %1209 = vmatpush1.bf16.msra.mxu0 %v1166
        %1210 = vmatprep.subr.bf16.mxu0 0
        %1211 = vmatpush1.bf16.msra.mxu0 %v1167
        %1212 = vmatprep.subr.bf16.mxu0 0
        %1213 = vmatpush1.bf16.msra.mxu0 %v1168
        %1214 = vmatprep.subr.bf16.mxu0 0
        %1215 = vmatpush1.bf16.msra.mxu0 %v1169
        %1216 = vmatprep.subr.bf16.mxu0 0
        %1217 = vmatpush1.bf16.msra.mxu0 %v1170
        %1218 = vmatprep.subr.bf16.mxu0 0
        %1219 = vmatpush1.bf16.msra.mxu0 %v1171
        %1220 = vmatprep.mubr.bf16.mxu0 %v1038
        %1221 = vmatmul.mubr.bf16.gmra.mrb[0].mxu0 %v1037
        %v1222 = vpop.f32.mrb[0].mxu0
        %v1223 = vadd.f32 %v1090, %v1222
        %v1224 = vpop.f32.mrb[0].mxu0
        %v1225 = vpop.f32.mrb[0].mxu0
        %v1226 = vadd.f32 %v1090, %v1225
        %v1227 = vpop.f32.mrb[0].mxu0
        %1228 = vmatprep.mubr.bf16.mxu0 %v1040
        %1229 = vmatmul.mubr.bf16.gmra.mrb[0].mxu0 %v1039
        %v1230 = vpop.f32.mrb[0].mxu0
        %v1231 = vadd.f32 %v1090, %v1230
        %v1232 = vpop.f32.mrb[0].mxu0
        %v1233 = vpop.f32.mrb[0].mxu0
        %v1234 = vadd.f32 %v1090, %v1233
        %v1235 = vpop.f32.mrb[0].mxu0
        %1236 = vmatprep.mubr.bf16.mxu0 %v1042
        %1237 = vmatmul.mubr.bf16.gmra.mrb[0].mxu0 %v1041
        %v1238 = vpop.f32.mrb[0].mxu0
        %v1239 = vadd.f32 %v1090, %v1238
        %v1240 = vpop.f32.mrb[0].mxu0
        %v1241 = vpop.f32.mrb[0].mxu0
        %v1242 = vadd.f32 %v1090, %v1241
        %v1243 = vpop.f32.mrb[0].mxu0
        %1244 = vmatprep.mubr.bf16.mxu0 %v1044
        %1245 = vmatmul.mubr.bf16.gmra.mrb[0].mxu0 %v1043
        %v1246 = vpop.f32.mrb[0].mxu0
        %v1247 = vadd.f32 %v1090, %v1246
        %v1248 = vpop.f32.mrb[0].mxu0
        %v1249 = vpop.f32.mrb[0].mxu0
        %v1250 = vadd.f32 %v1090, %v1249
        %v1251 = vpop.f32.mrb[0].mxu0
        %1252 = vmatprep.mubr.bf16.mxu0 %v1046
        %1253 = vmatmul.mubr.bf16.gmra.mrb[0].mxu0 %v1045
        %v1254 = vpop.f32.mrb[0].mxu0
        %v1255 = vadd.f32 %v1090, %v1254
        %v1256 = vpop.f32.mrb[0].mxu0
        %v1257 = vpop.f32.mrb[0].mxu0
        %v1258 = vadd.f32 %v1090, %v1257
        %v1259 = vpop.f32.mrb[0].mxu0
        %1260 = vmatprep.mubr.bf16.mxu0 %v1048
        %1261 = vmatmul.mubr.bf16.gmra.mrb[0].mxu0 %v1047
        %v1262 = vpop.f32.mrb[0].mxu0
        %v1263 = vadd.f32 %v1090, %v1262
        %v1264 = vpop.f32.mrb[0].mxu0
        %v1265 = vpop.f32.mrb[0].mxu0
        %v1266 = vadd.f32 %v1090, %v1265
        %v1267 = vpop.f32.mrb[0].mxu0
        %1268 = vmatprep.mubr.bf16.mxu0 %v1050
        %1269 = vmatmul.mubr.bf16.gmra.mrb[0].mxu0 %v1049
        %v1270 = vpop.f32.mrb[0].mxu0
        %v1271 = vadd.f32 %v1090, %v1270
        %v1272 = vpop.f32.mrb[0].mxu0
        %v1273 = vpop.f32.mrb[0].mxu0
        %v1274 = vadd.f32 %v1090, %v1273
        %v1275 = vpop.f32.mrb[0].mxu0
        %1276 = vmatprep.mubr.bf16.mxu0 %v1052
        %1277 = vmatmul.mubr.bf16.gmra.mrb[0].mxu0 %v1051
        %v1278 = vpop.f32.mrb[0].mxu0
        %v1279 = vadd.f32 %v1090, %v1278
        %v1280 = vpop.f32.mrb[0].mxu0
        %v1281 = vpop.f32.mrb[0].mxu0
        %v1282 = vadd.f32 %v1090, %v1281
        %v1283 = vpop.f32.mrb[0].mxu0
        %1284 = vdwg.mxu0
        %v1285 = vadd.f32 %v1223, %v281
        %v1286 = vadd.f32 %v1226, %v282
        %v1287 = vadd.f32 %v1231, %v283
        %v1288 = vadd.f32 %v1234, %v284
        %v1289 = vadd.f32 %v1239, %v285
        %v1290 = vadd.f32 %v1242, %v286
        %v1291 = vadd.f32 %v1247, %v287
        %v1292 = vadd.f32 %v1250, %v288
        %v1293 = vadd.f32 %v1255, %v289
        %v1294 = vadd.f32 %v1258, %v290
        %v1295 = vadd.f32 %v1263, %v291
        %v1296 = vadd.f32 %v1266, %v292
        %v1297 = vadd.f32 %v1271, %v293
        %v1298 = vadd.f32 %v1274, %v294
        %v1299 = vadd.f32 %v1279, %v295
        %v1300 = vadd.f32 %v1282, %v296
        %1301 = vst [vmem:[%s272] sm:$0xff] %v1285
        %1302 = vst [vmem:[%s272 + $0x8] sm:$0xff] %v1286
        %1303 = vst [vmem:[%s272 + $0x10] sm:$0xff] %v1287
        %1304 = vst [vmem:[%s272 + $0x18] sm:$0xff] %v1288
        %1305 = vst [vmem:[%s272 + $0x20] sm:$0xff] %v1289
        %1306 = vst [vmem:[%s272 + $0x28] sm:$0xff] %v1290
        %1307 = vst [vmem:[%s272 + $0x30] sm:$0xff] %v1291
        %1308 = vst [vmem:[%s272 + $0x38] sm:$0xff] %v1292
        %1309 = vst [vmem:[%s272 + $0x40] sm:$0xff] %v1293
        %1310 = vst [vmem:[%s272 + $0x48] sm:$0xff] %v1294
        %1311 = vst [vmem:[%s272 + $0x50] sm:$0xff] %v1295
        %1312 = vst [vmem:[%s272 + $0x58] sm:$0xff] %v1296
        %1313 = vst [vmem:[%s272 + $0x60] sm:$0xff] %v1297
        %1314 = vst [vmem:[%s272 + $0x68] sm:$0xff] %v1298
        %1315 = vst [vmem:[%s272 + $0x70] sm:$0xff] %v1299
        %1316 = vst [vmem:[%s272 + $0x78] sm:$0xff] %v1300
        %s1317 = sand.u32 %s181, 1
        %s1318 = scalar_lea.sflag [#allocation3], %s1317
        %s1319 = sand.u32 %s181, 1
        %s1320 = smul.addr %s1319, 128
        %s1321 = scalar_lea.vmem [#allocation2], %s1320
        // Predicated region
        $region49: #{transformer_forward.11} parent=47 // pred_check
          %p1322 = pneg %p191
        $region50: #{transformer_forward.11} parent=47 // pred_check_branch
          %1324 = sbr.rel (%p1322) target = $region52
        $region51: #{transformer_forward.11} parent=47 // pred_region
          %s1325 = smul.u32 16, %s21
          %s1327 = ssub.s32 2048, 2048
          %1328 = vsyncadd %s1318, %s1327
          %s1329 = smul.addr %s1325, 128
          %s1330 = scalar_lea.hbm %s7, %s1329
          %s1331 = sshll.u32 %s1321, 4
          %s1332 = int_to_ptr.vmem [resolvable:$true] %s1331
          %1337 = dma.vmem_to_hbm [thread:$0]  %s1332, 2048, %s1330, %s1318, 128, 128, 8
        $region52: #{transformer_forward.11} parent=47 // pred_fallthru
          _
      $region48: #{transformer_forward.11} parent=5 // pred_fallthru
        _
      %p1338 = scmp.le.s32.totalorder 2, %s16
      // Predicated region
      $region53: #{transformer_forward.11} parent=5 // pred_check
        %p1339 = pneg %p1338
      $region54: #{transformer_forward.11} parent=5 // pred_check_branch
        %1341 = sbr.rel (%p1339) target = $region56
      $region55: #{transformer_forward.11} parent=5 // pred_region
        %s1342 = ssub.s32 %s16, 2
        // Predicated region
        $region57: #{transformer_forward.11} parent=55 // pred_check
          %p1343 = pneg %p197
        $region58: #{transformer_forward.11} parent=55 // pred_check_branch
          %1345 = sbr.rel (%p1343) target = $region60
        $region59: #{transformer_forward.11} parent=55 // pred_region
          %s1346 = sand.u32 %s182, 1
          %s1347 = scalar_lea.sflag [#allocation3], %s1346
          %s1348 = sand.u32 %s182, 1
          %s1349 = smul.addr %s1348, 128
          %s1350 = scalar_lea.vmem [#allocation2], %s1349
          %1351 = dma.done %s1347, 2048
        $region60: #{transformer_forward.11} parent=55 // pred_fallthru
          _
      $region56: #{transformer_forward.11} parent=5 // pred_fallthru
        _
    $region6: #{transformer_forward.11} parent=1 // loop_footer
      %s20 = sadd.s32 1, %s16
    $region7: #{transformer_forward.11} parent=1 // loop_footer_branch
      %15 = sbr.rel target = $region3
    $region8: #{transformer_forward.11} parent=1 // loop_exit
      _
    %1352 = vsyncpa [#allocation3], 1
    %s1353 = scalar_lea.sflag [#allocation3], 1
    %1354 = vsyncpa %s1353, 1

// kernel: transformer_forward.7
$region0: #{transformer_forward.7}
  #allocation0 [shape = 'u32[]', space=smem, size = 0x4, offset = 0x4, fixed_abs, tag = 'smem constant byte address 0x4 - core index']
  #allocation1 [shape = 'u32[144,128]{1,0:T(1,128)}', space=vmem, size = 0x12000, scoped, tag = 'internal scratch']
  %s0 = inlined_call_operand.vmem [shape: bf16[2,256,384], index: 0, kind: input, shape index: {}, may-alias: {0,1,2}]
  %s1 = inlined_call_operand.vmem [shape: bf16[2,256,384], index: 1, kind: input, shape index: {}, may-alias: {0,1,2}]
  %s2 = inlined_call_operand.vmem [shape: bf16[2,256,384], index: 2, kind: input, shape index: {}, may-alias: {0,1,2}]
  %s3 = inlined_call_operand.vmem [shape: bf16[128,128], index: 3, kind: input, shape index: {}]
  %s4 = inlined_call_operand.vmem [shape: f32[1,128], index: 4, kind: input, shape index: {}]
  %s5 = inlined_call_operand.vmem [shape: f32[2,256,128], index: 5, kind: input, shape index: {}]
  %s6 = inlined_call_operand.vmem [shape: f32[2,256,128], index: 6, kind: output, shape index: {}]
  %s7 = sld [smem:[#allocation0]]
  $region180: #{transformer_forward.7} parent=0
    _
  %s9 = ssub.s32 1, %s7
  %s10 = scalar_select 0, %s9, %s7
  $region1: #{transformer_forward.7} parent=0
    #allocation2 [shape = 'u8[65536]{0}', space=vmem, size = 0x10000, scoped, tag = 'input window, operand 0']
    #allocation3 [shape = 'u8[131072]{0}', space=vmem, size = 0x20000, scoped, tag = 'input window, operand 1']
    #allocation4 [shape = 'u8[131072]{0}', space=vmem, size = 0x20000, scoped, tag = 'input window, operand 2']
    loop: start=0, step=1, limit=6
    $region2: #{transformer_forward.7} parent=1 // loop_pre_header
      _
    $region3: #{transformer_forward.7} parent=1 // loop_header
      %s12 = sphi 0, %s16
      %p13 = scmp.ge.s32.totalorder %s12, 6
      %s19 = sphi 0, %s31
      %s20 = sphi 0, %s27
      %s21 = sphi 0, %s19
      %s22 = sphi 0, %s20
      %s23 = sphi 0, %s21
      %s24 = sphi 0, %s22
      %s36 = sphi 0, %s38
      %s39 = sphi 0, %s36
      %s40 = sphi 0, %s39
      %s56 = sphi 0, %s40
      %s62 = sphi 0, %s64
      %s65 = sphi 0, %s62
      %s66 = sphi 0, %s65
      %s82 = sphi 0, %s66
      %s88 = sphi 0, %s90
      %s91 = sphi 0, %s88
      %s92 = sphi 0, %s91
      %s108 = sphi 0, %s92
      %s112 = sphi 0, %s112
      %s114 = sphi 0, %s112
      %s115 = sphi 0, %s114
      %s129 = sphi 0, %s115
      %s133 = sphi 0, %s133
      %s135 = sphi 0, %s133
      %s136 = sphi 0, %s135
      %s150 = sphi 0, %s136
      %s158 = sphi 0, %s160
      %s161 = sphi 0, %s158
      %s162 = sphi 0, %s161
      %s178 = sphi 0, %s162
      %s186 = sphi 0, %s188
      %s189 = sphi 0, %s186
      %s190 = sphi 0, %s189
      %s206 = sphi 0, %s190
    $region4: #{transformer_forward.7} parent=1 // loop_header_branch
      %15 = sbr.rel (%p13) target = $region8
    $region5: #{transformer_forward.7} parent=1 // loop_body
      %s17 = ssub.s32 %s12, 1
      %s18 = ssub.s32 %s12, 2
      %s25 = sadd.s32 1, %s20
      %p26 = scmp.ge.s32.totalorder %s25, 2
      %s27 = scalar_select %p26, 0, %s25
      %s28 = sadd.s32 1, %s19
      %s29 = scalar_select %p26, %s28, %s19
      %p30 = scmp.ge.s32.totalorder %s29, 2
      %s31 = scalar_select %p30, 0, %s29
      %s32 = ssub.s32 %s19, %s31
      %s33 = ssub.s32 %s20, %s27
      %s34 = sor.u32 %s32, %s33
      %p35 = scmp.eq.s32.totalorder %s34, 0
      %s37 = sadd.s32 %s36, 1
      %s38 = scalar_select %p35, %s36, %s37
      %p41 = pneg %p35
      %p42 = scmp.eq.s32.totalorder %s12, 3
      %p43 = por %p41, %p42
      %p44 = scmp.ne.s32.totalorder %s36, %s39
      %p45 = scmp.eq.s32.totalorder %s12, 0
      %p46 = por %p44, %p45
      %p47 = scmp.ne.s32.totalorder %s36, %s39
      %p48 = scmp.eq.s32.totalorder %s17, 3
      %p49 = por %p47, %p48
      %p50 = scmp.ne.s32.totalorder %s39, %s40
      %p51 = scmp.eq.s32.totalorder %s17, 0
      %p52 = por %p50, %p51
      %p53 = scmp.ne.s32.totalorder %s39, %s40
      %p54 = scmp.eq.s32.totalorder %s18, 3
      %p55 = por %p53, %p54
      %p57 = scmp.ne.s32.totalorder %s40, %s56
      %p58 = scmp.eq.s32.totalorder %s18, 0
      %p59 = por %p57, %p58
      %s60 = ssub.s32 %s19, %s31
      %p61 = scmp.eq.s32.totalorder %s60, 0
      %s63 = sadd.s32 %s62, 1
      %s64 = scalar_select %p61, %s62, %s63
      %p67 = pneg %p61
      %p68 = scmp.eq.s32.totalorder %s12, 3
      %p69 = por %p67, %p68
      %p70 = scmp.ne.s32.totalorder %s62, %s65
      %p71 = scmp.eq.s32.totalorder %s12, 0
      %p72 = por %p70, %p71
      %p73 = scmp.ne.s32.totalorder %s62, %s65
      %p74 = scmp.eq.s32.totalorder %s17, 3
      %p75 = por %p73, %p74
      %p76 = scmp.ne.s32.totalorder %s65, %s66
      %p77 = scmp.eq.s32.totalorder %s17, 0
      %p78 = por %p76, %p77
      %p79 = scmp.ne.s32.totalorder %s65, %s66
      %p80 = scmp.eq.s32.totalorder %s18, 3
      %p81 = por %p79, %p80
      %p83 = scmp.ne.s32.totalorder %s66, %s82
      %p84 = scmp.eq.s32.totalorder %s18, 0
      %p85 = por %p83, %p84
      %s86 = ssub.s32 %s19, %s31
      %p87 = scmp.eq.s32.totalorder %s86, 0
      %s89 = sadd.s32 %s88, 1
      %s90 = scalar_select %p87, %s88, %s89
      %p93 = pneg %p87
      %p94 = scmp.eq.s32.totalorder %s12, 3
      %p95 = por %p93, %p94
      %p96 = scmp.ne.s32.totalorder %s88, %s91
      %p97 = scmp.eq.s32.totalorder %s12, 0
      %p98 = por %p96, %p97
      %p99 = scmp.ne.s32.totalorder %s88, %s91
      %p100 = scmp.eq.s32.totalorder %s17, 3
      %p101 = por %p99, %p100
      %p102 = scmp.ne.s32.totalorder %s91, %s92
      %p103 = scmp.eq.s32.totalorder %s17, 0
      %p104 = por %p102, %p103
      %p105 = scmp.ne.s32.totalorder %s91, %s92
      %p106 = scmp.eq.s32.totalorder %s18, 3
      %p107 = por %p105, %p106
      %p109 = scmp.ne.s32.totalorder %s92, %s108
      %p110 = scmp.eq.s32.totalorder %s18, 0
      %p111 = por %p109, %p110
      %s113 = sadd.s32 %s112, 1
      %p116 = scmp.eq.s32.totalorder %s12, 3
      %p117 = scmp.ne.s32.totalorder %s112, %s114
      %p118 = scmp.eq.s32.totalorder %s12, 0
      %p119 = por %p117, %p118
      %p120 = scmp.ne.s32.totalorder %s112, %s114
      %p121 = scmp.eq.s32.totalorder %s17, 3
      %p122 = por %p120, %p121
      %p123 = scmp.ne.s32.totalorder %s114, %s115
      %p124 = scmp.eq.s32.totalorder %s17, 0
      %p125 = por %p123, %p124
      %p126 = scmp.ne.s32.totalorder %s114, %s115
      %p127 = scmp.eq.s32.totalorder %s18, 3
      %p128 = por %p126, %p127
      %p130 = scmp.ne.s32.totalorder %s115, %s129
      %p131 = scmp.eq.s32.totalorder %s18, 0
      %p132 = por %p130, %p131
      %s134 = sadd.s32 %s133, 1
      %p137 = scmp.eq.s32.totalorder %s12, 3
      %p138 = scmp.ne.s32.totalorder %s133, %s135
      %p139 = scmp.eq.s32.totalorder %s12, 0
      %p140 = por %p138, %p139
      %p141 = scmp.ne.s32.totalorder %s133, %s135
      %p142 = scmp.eq.s32.totalorder %s17, 3
      %p143 = por %p141, %p142
      %p144 = scmp.ne.s32.totalorder %s135, %s136
      %p145 = scmp.eq.s32.totalorder %s17, 0
      %p146 = por %p144, %p145
      %p147 = scmp.ne.s32.totalorder %s135, %s136
      %p148 = scmp.eq.s32.totalorder %s18, 3
      %p149 = por %p147, %p148
      %p151 = scmp.ne.s32.totalorder %s136, %s150
      %p152 = scmp.eq.s32.totalorder %s18, 0
      %p153 = por %p151, %p152
      %s154 = ssub.s32 %s19, %s31
      %s155 = ssub.s32 %s20, %s27
      %s156 = sor.u32 %s154, %s155
      %p157 = scmp.eq.s32.totalorder %s156, 0
      %s159 = sadd.s32 %s158, 1
      %s160 = scalar_select %p157, %s158, %s159
      %p163 = pneg %p157
      %p164 = scmp.eq.s32.totalorder %s12, 3
      %p165 = por %p163, %p164
      %p166 = scmp.ne.s32.totalorder %s158, %s161
      %p167 = scmp.eq.s32.totalorder %s12, 0
      %p168 = por %p166, %p167
      %p169 = scmp.ne.s32.totalorder %s158, %s161
      %p170 = scmp.eq.s32.totalorder %s17, 3
      %p171 = por %p169, %p170
      %p172 = scmp.ne.s32.totalorder %s161, %s162
      %p173 = scmp.eq.s32.totalorder %s17, 0
      %p174 = por %p172, %p173
      %p175 = scmp.ne.s32.totalorder %s161, %s162
      %p176 = scmp.eq.s32.totalorder %s18, 3
      %p177 = por %p175, %p176
      %p179 = scmp.ne.s32.totalorder %s162, %s178
      %p180 = scmp.eq.s32.totalorder %s18, 0
      %p181 = por %p179, %p180
      %s182 = ssub.s32 %s19, %s31
      %s183 = ssub.s32 %s20, %s27
      %s184 = sor.u32 %s182, %s183
      %p185 = scmp.eq.s32.totalorder %s184, 0
      %s187 = sadd.s32 %s186, 1
      %s188 = scalar_select %p185, %s186, %s187
      %p191 = pneg %p185
      %p192 = scmp.eq.s32.totalorder %s12, 3
      %p193 = por %p191, %p192
      %p194 = scmp.ne.s32.totalorder %s186, %s189
      %p195 = scmp.eq.s32.totalorder %s12, 0
      %p196 = por %p194, %p195
      %p197 = scmp.ne.s32.totalorder %s186, %s189
      %p198 = scmp.eq.s32.totalorder %s17, 3
      %p199 = por %p197, %p198
      %p200 = scmp.ne.s32.totalorder %s189, %s190
      %p201 = scmp.eq.s32.totalorder %s17, 0
      %p202 = por %p200, %p201
      %p203 = scmp.ne.s32.totalorder %s189, %s190
      %p204 = scmp.eq.s32.totalorder %s18, 3
      %p205 = por %p203, %p204
      %p207 = scmp.ne.s32.totalorder %s190, %s206
      %p208 = scmp.eq.s32.totalorder %s18, 0
      %p209 = por %p207, %p208
      %p210 = scmp.le.s32.totalorder 1, %s12
      %p211 = scmp.lt.s32.totalorder %s12, 5
      %p212 = pnand %p210, %p211
      %p213 = pneg %p212
      // Predicated region
      $region9: #{transformer_forward.7} parent=5 // pred_check
        _
      $region10: #{transformer_forward.7} parent=5 // pred_check_branch
        %215 = sbr.rel (%p212) target = $region12
      $region11: #{transformer_forward.7} parent=5 // pred_region
        %s216 = ssub.s32 %s12, 1
        // Predicated region
        $region13: #{transformer_forward.7} parent=11 // pred_check
          %p217 = pneg %p125
        $region14: #{transformer_forward.7} parent=11 // pred_check_branch
          %219 = sbr.rel (%p217) target = $region16
        $region15: #{transformer_forward.7} parent=11 // pred_region
          _
        $region16: #{transformer_forward.7} parent=11 // pred_fallthru
          _
        // Predicated region
        $region17: #{transformer_forward.7} parent=11 // pred_check
          %p220 = pneg %p146
        $region18: #{transformer_forward.7} parent=11 // pred_check_branch
          %222 = sbr.rel (%p220) target = $region20
        $region19: #{transformer_forward.7} parent=11 // pred_region
          _
        $region20: #{transformer_forward.7} parent=11 // pred_fallthru
          _
      $region12: #{transformer_forward.7} parent=5 // pred_fallthru
        _
      %p223 = scmp.lt.s32.totalorder %s12, 4
      // Predicated region
      $region21: #{transformer_forward.7} parent=5 // pred_check
        %p224 = pneg %p223
      $region22: #{transformer_forward.7} parent=5 // pred_check_branch
        %226 = sbr.rel (%p224) target = $region24
      $region23: #{transformer_forward.7} parent=5 // pred_region
        // Predicated region
        $region25: #{transformer_forward.7} parent=23 // pred_check
          %p227 = pneg %p46
        $region26: #{transformer_forward.7} parent=23 // pred_check_branch
          %229 = sbr.rel (%p227) target = $region28
        $region27: #{transformer_forward.7} parent=23 // pred_region
          %s230 = sand.u32 %s36, 1
          %s231 = sand.u32 %s36, 1
          %s232 = smul.addr %s231, 64
          %s233 = scalar_lea.vmem [#allocation2], %s232
          %s234 = smul.u32 16, %s20
          %s235 = smul.addr %s234, 3
          %s236 = smul.addr %s19, 96
          %s237 = sadd.s32 %s235, %s236
          %s238 = smul.addr %s237, 4
          %s239 = scalar_lea.vmem %s0, %s238
          // Predicated region
          $region29: #{transformer_forward.7} parent=27 // pred_check
            _
          $region30: #{transformer_forward.7} parent=27 // pred_check_branch
            %241 = sbr.rel (0) target = $region32
          $region31: #{transformer_forward.7} parent=27 // pred_region
            // Predicated region
            $region33: #{transformer_forward.7} parent=31 // pred_check
              _
            $region34: #{transformer_forward.7} parent=31 // pred_check_branch
              %243 = sbr.rel target = $region36
            $region35: #{transformer_forward.7} parent=31 // pred_region
              // Predicated region
              $region48: #{transformer_forward.7} parent=35 // pred_check
                _
              $region49: #{transformer_forward.7} parent=35 // pred_check_branch
                %288 = sbr.rel (0) target = $region51
              $region50: #{transformer_forward.7} parent=35 // pred_region
                loop: start=0, step=1, limit=1
                $region52: #{transformer_forward.7} parent=50 // loop_pre_header
                  _
                $region53: #{transformer_forward.7} parent=50 // loop_header
                  %s290 = sphi 0, %s294
                  %p291 = scmp.ge.s32.totalorder %s290, 1
                  %s295 = sphi %s239, %s239
                  %s296 = sphi %s233, %s233
                $region54: #{transformer_forward.7} parent=50 // loop_header_branch
                  %293 = sbr.rel (%p291) target = $region58
                $region55: #{transformer_forward.7} parent=50 // loop_body
                  _
                $region56: #{transformer_forward.7} parent=50 // loop_footer
                  %s294 = sadd.s32 1, %s290
                $region57: #{transformer_forward.7} parent=50 // loop_footer_branch
                  %289 = sbr.rel target = $region53
                $region58: #{transformer_forward.7} parent=50 // loop_exit
                  _
                loop: start=0, step=1, limit=1
                $region59: #{transformer_forward.7} parent=50 // loop_pre_header
                  _
                $region60: #{transformer_forward.7} parent=50 // loop_header
                  %s299 = sphi 0, %s303
                  %p300 = scmp.ge.s32.totalorder %s299, 1
                  %s304 = sphi %s239, %s239
                  %s305 = sphi %s233, %s233
                $region61: #{transformer_forward.7} parent=50 // loop_header_branch
                  %302 = sbr.rel (%p300) target = $region65
                $region62: #{transformer_forward.7} parent=50 // loop_body
                  %v306 = vld [vmem:[%s304] sm:$0xf]
                  %307 = vst [vmem:[%s305] sm:$0xf] %v306
                  %v308 = vld [vmem:[%s304 + $0xc] sm:$0xf]
                  %309 = vst [vmem:[%s305 + $0x4] sm:$0xf] %v308
                  %v310 = vld [vmem:[%s304 + $0x18] sm:$0xf]
                  %311 = vst [vmem:[%s305 + $0x8] sm:$0xf] %v310
                  %v312 = vld [vmem:[%s304 + $0x24] sm:$0xf]
                  %313 = vst [vmem:[%s305 + $0xc] sm:$0xf] %v312
                  %v314 = vld [vmem:[%s304 + $0x30] sm:$0xf]
                  %315 = vst [vmem:[%s305 + $0x10] sm:$0xf] %v314
                  %v316 = vld [vmem:[%s304 + $0x3c] sm:$0xf]
                  %317 = vst [vmem:[%s305 + $0x14] sm:$0xf] %v316
                  %v318 = vld [vmem:[%s304 + $0x48] sm:$0xf]
                  %319 = vst [vmem:[%s305 + $0x18] sm:$0xf] %v318
                  %v320 = vld [vmem:[%s304 + $0x54] sm:$0xf]
                  %321 = vst [vmem:[%s305 + $0x1c] sm:$0xf] %v320
                  %v322 = vld [vmem:[%s304 + $0x60] sm:$0xf]
                  %323 = vst [vmem:[%s305 + $0x20] sm:$0xf] %v322
                  %v324 = vld [vmem:[%s304 + $0x6c] sm:$0xf]
                  %325 = vst [vmem:[%s305 + $0x24] sm:$0xf] %v324
                  %v326 = vld [vmem:[%s304 + $0x78] sm:$0xf]
                  %327 = vst [vmem:[%s305 + $0x28] sm:$0xf] %v326
                  %v328 = vld [vmem:[%s304 + $0x84] sm:$0xf]
                  %329 = vst [vmem:[%s305 + $0x2c] sm:$0xf] %v328
                  %v330 = vld [vmem:[%s304 + $0x90] sm:$0xf]
                  %331 = vst [vmem:[%s305 + $0x30] sm:$0xf] %v330
                  %v332 = vld [vmem:[%s304 + $0x9c] sm:$0xf]
                  %333 = vst [vmem:[%s305 + $0x34] sm:$0xf] %v332
                  %v334 = vld [vmem:[%s304 + $0xa8] sm:$0xf]
                  %335 = vst [vmem:[%s305 + $0x38] sm:$0xf] %v334
                  %v336 = vld [vmem:[%s304 + $0xb4] sm:$0xf]
                  %337 = vst [vmem:[%s305 + $0x3c] sm:$0xf] %v336
                $region63: #{transformer_forward.7} parent=50 // loop_footer
                  %s303 = sadd.s32 1, %s299
                $region64: #{transformer_forward.7} parent=50 // loop_footer_branch
                  %298 = sbr.rel target = $region60
                $region65: #{transformer_forward.7} parent=50 // loop_exit
                  _
              $region51: #{transformer_forward.7} parent=35 // pred_fallthru
                _
            $region36: #{transformer_forward.7} parent=31 // pred_fallthru
              _
            // Predicated region
            $region37: #{transformer_forward.7} parent=31 // pred_check
              _
            $region38: #{transformer_forward.7} parent=31 // pred_check_branch
              %245 = sbr.rel (0) target = $region40
            $region39: #{transformer_forward.7} parent=31 // pred_region
              loop: start=0, step=1, limit=1
              $region41: #{transformer_forward.7} parent=39 // loop_pre_header
                _
              $region42: #{transformer_forward.7} parent=39 // loop_header
                %s248 = sphi 0, %s252
                %p249 = scmp.ge.s32.totalorder %s248, 1
                %s253 = sphi %s239, %s239
                %s254 = sphi %s233, %s233
              $region43: #{transformer_forward.7} parent=39 // loop_header_branch
                %251 = sbr.rel (%p249) target = $region47
              $region44: #{transformer_forward.7} parent=39 // loop_body
                %v255 = vld [vmem:[%s253] sm:$0xf]
                %256 = vst [vmem:[%s254] sm:$0xf] %v255
                %v257 = vld [vmem:[%s253 + $0xc] sm:$0xf]
                %258 = vst [vmem:[%s254 + $0x4] sm:$0xf] %v257
                %v259 = vld [vmem:[%s253 + $0x18] sm:$0xf]
                %260 = vst [vmem:[%s254 + $0x8] sm:$0xf] %v259
                %v261 = vld [vmem:[%s253 + $0x24] sm:$0xf]
                %262 = vst [vmem:[%s254 + $0xc] sm:$0xf] %v261
                %v263 = vld [vmem:[%s253 + $0x30] sm:$0xf]
                %264 = vst [vmem:[%s254 + $0x10] sm:$0xf] %v263
                %v265 = vld [vmem:[%s253 + $0x3c] sm:$0xf]
                %266 = vst [vmem:[%s254 + $0x14] sm:$0xf] %v265
                %v267 = vld [vmem:[%s253 + $0x48] sm:$0xf]
                %268 = vst [vmem:[%s254 + $0x18] sm:$0xf] %v267
                %v269 = vld [vmem:[%s253 + $0x54] sm:$0xf]
                %270 = vst [vmem:[%s254 + $0x1c] sm:$0xf] %v269
                %v271 = vld [vmem:[%s253 + $0x60] sm:$0xf]
                %272 = vst [vmem:[%s254 + $0x20] sm:$0xf] %v271
                %v273 = vld [vmem:[%s253 + $0x6c] sm:$0xf]
                %274 = vst [vmem:[%s254 + $0x24] sm:$0xf] %v273
                %v275 = vld [vmem:[%s253 + $0x78] sm:$0xf]
                %276 = vst [vmem:[%s254 + $0x28] sm:$0xf] %v275
                %v277 = vld [vmem:[%s253 + $0x84] sm:$0xf]
                %278 = vst [vmem:[%s254 + $0x2c] sm:$0xf] %v277
                %v279 = vld [vmem:[%s253 + $0x90] sm:$0xf]
                %280 = vst [vmem:[%s254 + $0x30] sm:$0xf] %v279
                %v281 = vld [vmem:[%s253 + $0x9c] sm:$0xf]
                %282 = vst [vmem:[%s254 + $0x34] sm:$0xf] %v281
                %v283 = vld [vmem:[%s253 + $0xa8] sm:$0xf]
                %284 = vst [vmem:[%s254 + $0x38] sm:$0xf] %v283
                %v285 = vld [vmem:[%s253 + $0xb4] sm:$0xf]
                %286 = vst [vmem:[%s254 + $0x3c] sm:$0xf] %v285
              $region45: #{transformer_forward.7} parent=39 // loop_footer
                %s252 = sadd.s32 1, %s248
              $region46: #{transformer_forward.7} parent=39 // loop_footer_branch
                %247 = sbr.rel target = $region42
              $region47: #{transformer_forward.7} parent=39 // loop_exit
                _
            $region40: #{transformer_forward.7} parent=31 // pred_fallthru
              _
          $region32: #{transformer_forward.7} parent=27 // pred_fallthru
            _
          %338 = vnop
        $region28: #{transformer_forward.7} parent=23 // pred_fallthru
          _
        // Predicated region
        $region66: #{transformer_forward.7} parent=23 // pred_check
          %p339 = pneg %p72
        $region67: #{transformer_forward.7} parent=23 // pred_check_branch
          %341 = sbr.rel (%p339) target = $region69
        $region68: #{transformer_forward.7} parent=23 // pred_region
          %s342 = sand.u32 %s62, 1
          %s343 = sand.u32 %s62, 1
          %s344 = smul.addr %s343, 128
          %s345 = scalar_lea.vmem [#allocation3], %s344
          %s346 = smul.addr %s19, 96
          %s347 = sadd.s32 1, %s346
          %s348 = smul.addr %s347, 4
          %s349 = scalar_lea.vmem %s1, %s348
          // Predicated region
          $region70: #{transformer_forward.7} parent=68 // pred_check
            _
          $region71: #{transformer_forward.7} parent=68 // pred_check_branch
            %351 = sbr.rel (0) target = $region73
          $region72: #{transformer_forward.7} parent=68 // pred_region
            // Predicated region
            $region74: #{transformer_forward.7} parent=72 // pred_check
              _
            $region75: #{transformer_forward.7} parent=72 // pred_check_branch
              %353 = sbr.rel target = $region77
            $region76: #{transformer_forward.7} parent=72 // pred_region
              // Predicated region
              $region89: #{transformer_forward.7} parent=76 // pred_check
                _
              $region90: #{transformer_forward.7} parent=76 // pred_check_branch
                %430 = sbr.rel (0) target = $region92
              $region91: #{transformer_forward.7} parent=76 // pred_region
                loop: start=0, step=1, limit=1
                $region93: #{transformer_forward.7} parent=91 // loop_pre_header
                  _
                $region94: #{transformer_forward.7} parent=91 // loop_header
                  %s432 = sphi 0, %s436
                  %p433 = scmp.ge.s32.totalorder %s432, 1
                  %s437 = sphi %s349, %s349
                  %s438 = sphi %s345, %s345
                $region95: #{transformer_forward.7} parent=91 // loop_header_branch
                  %435 = sbr.rel (%p433) target = $region99
                $region96: #{transformer_forward.7} parent=91 // loop_body
                  _
                $region97: #{transformer_forward.7} parent=91 // loop_footer
                  %s436 = sadd.s32 1, %s432
                $region98: #{transformer_forward.7} parent=91 // loop_footer_branch
                  %431 = sbr.rel target = $region94
                $region99: #{transformer_forward.7} parent=91 // loop_exit
                  _
                loop: start=0, step=1, limit=1
                $region100: #{transformer_forward.7} parent=91 // loop_pre_header
                  _
                $region101: #{transformer_forward.7} parent=91 // loop_header
                  %s441 = sphi 0, %s445
                  %p442 = scmp.ge.s32.totalorder %s441, 1
                  %s446 = sphi %s349, %s349
                  %s447 = sphi %s345, %s345
                $region102: #{transformer_forward.7} parent=91 // loop_header_branch
                  %444 = sbr.rel (%p442) target = $region106
                $region103: #{transformer_forward.7} parent=91 // loop_body
                  %v448 = vld [vmem:[%s446] sm:$0xf]
                  %449 = vst [vmem:[%s447] sm:$0xf] %v448
                  %v450 = vld [vmem:[%s446 + $0xc] sm:$0xf]
                  %451 = vst [vmem:[%s447 + $0x4] sm:$0xf] %v450
                  %v452 = vld [vmem:[%s446 + $0x18] sm:$0xf]
                  %453 = vst [vmem:[%s447 + $0x8] sm:$0xf] %v452
                  %v454 = vld [vmem:[%s446 + $0x24] sm:$0xf]
                  %455 = vst [vmem:[%s447 + $0xc] sm:$0xf] %v454
                  %v456 = vld [vmem:[%s446 + $0x30] sm:$0xf]
                  %457 = vst [vmem:[%s447 + $0x10] sm:$0xf] %v456
                  %v458 = vld [vmem:[%s446 + $0x3c] sm:$0xf]
                  %459 = vst [vmem:[%s447 + $0x14] sm:$0xf] %v458
                  %v460 = vld [vmem:[%s446 + $0x48] sm:$0xf]
                  %461 = vst [vmem:[%s447 + $0x18] sm:$0xf] %v460
                  %v462 = vld [vmem:[%s446 + $0x54] sm:$0xf]
                  %463 = vst [vmem:[%s447 + $0x1c] sm:$0xf] %v462
                  %v464 = vld [vmem:[%s446 + $0x60] sm:$0xf]
                  %465 = vst [vmem:[%s447 + $0x20] sm:$0xf] %v464
                  %v466 = vld [vmem:[%s446 + $0x6c] sm:$0xf]
                  %467 = vst [vmem:[%s447 + $0x24] sm:$0xf] %v466
                  %v468 = vld [vmem:[%s446 + $0x78] sm:$0xf]
                  %469 = vst [vmem:[%s447 + $0x28] sm:$0xf] %v468
                  %v470 = vld [vmem:[%s446 + $0x84] sm:$0xf]
                  %471 = vst [vmem:[%s447 + $0x2c] sm:$0xf] %v470
                  %v472 = vld [vmem:[%s446 + $0x90] sm:$0xf]
                  %473 = vst [vmem:[%s447 + $0x30] sm:$0xf] %v472
                  %v474 = vld [vmem:[%s446 + $0x9c] sm:$0xf]
                  %475 = vst [vmem:[%s447 + $0x34] sm:$0xf] %v474
                  %v476 = vld [vmem:[%s446 + $0xa8] sm:$0xf]
                  %477 = vst [vmem:[%s447 + $0x38] sm:$0xf] %v476
                  %v478 = vld [vmem:[%s446 + $0xb4] sm:$0xf]
                  %479 = vst [vmem:[%s447 + $0x3c] sm:$0xf] %v478
                  %v480 = vld [vmem:[%s446 + $0xc0] sm:$0xf]
                  %481 = vst [vmem:[%s447 + $0x40] sm:$0xf] %v480
                  %v482 = vld [vmem:[%s446 + $0xcc] sm:$0xf]
                  %483 = vst [vmem:[%s447 + $0x44] sm:$0xf] %v482
                  %v484 = vld [vmem:[%s446 + $0xd8] sm:$0xf]
                  %485 = vst [vmem:[%s447 + $0x48] sm:$0xf] %v484
                  %v486 = vld [vmem:[%s446 + $0xe4] sm:$0xf]
                  %487 = vst [vmem:[%s447 + $0x4c] sm:$0xf] %v486
                  %v488 = vld [vmem:[%s446 + $0xf0] sm:$0xf]
                  %489 = vst [vmem:[%s447 + $0x50] sm:$0xf] %v488
                  %v490 = vld [vmem:[%s446 + $0xfc] sm:$0xf]
                  %491 = vst [vmem:[%s447 + $0x54] sm:$0xf] %v490
                  %v492 = vld [vmem:[%s446 + $0x108] sm:$0xf]
                  %493 = vst [vmem:[%s447 + $0x58] sm:$0xf] %v492
                  %v494 = vld [vmem:[%s446 + $0x114] sm:$0xf]
                  %495 = vst [vmem:[%s447 + $0x5c] sm:$0xf] %v494
                  %v496 = vld [vmem:[%s446 + $0x120] sm:$0xf]
                  %497 = vst [vmem:[%s447 + $0x60] sm:$0xf] %v496
                  %v498 = vld [vmem:[%s446 + $0x12c] sm:$0xf]
                  %499 = vst [vmem:[%s447 + $0x64] sm:$0xf] %v498
                  %v500 = vld [vmem:[%s446 + $0x138] sm:$0xf]
                  %501 = vst [vmem:[%s447 + $0x68] sm:$0xf] %v500
                  %v502 = vld [vmem:[%s446 + $0x144] sm:$0xf]
                  %503 = vst [vmem:[%s447 + $0x6c] sm:$0xf] %v502
                  %v504 = vld [vmem:[%s446 + $0x150] sm:$0xf]
                  %505 = vst [vmem:[%s447 + $0x70] sm:$0xf] %v504
                  %v506 = vld [vmem:[%s446 + $0x15c] sm:$0xf]
                  %507 = vst [vmem:[%s447 + $0x74] sm:$0xf] %v506
                  %v508 = vld [vmem:[%s446 + $0x168] sm:$0xf]
                  %509 = vst [vmem:[%s447 + $0x78] sm:$0xf] %v508
                  %v510 = vld [vmem:[%s446 + $0x174] sm:$0xf]
                  %511 = vst [vmem:[%s447 + $0x7c] sm:$0xf] %v510
                $region104: #{transformer_forward.7} parent=91 // loop_footer
                  %s445 = sadd.s32 1, %s441
                $region105: #{transformer_forward.7} parent=91 // loop_footer_branch
                  %440 = sbr.rel target = $region101
                $region106: #{transformer_forward.7} parent=91 // loop_exit
                  _
              $region92: #{transformer_forward.7} parent=76 // pred_fallthru
                _
            $region77: #{transformer_forward.7} parent=72 // pred_fallthru
              _
            // Predicated region
            $region78: #{transformer_forward.7} parent=72 // pred_check
              _
            $region79: #{transformer_forward.7} parent=72 // pred_check_branch
              %355 = sbr.rel (0) target = $region81
            $region80: #{transformer_forward.7} parent=72 // pred_region
              loop: start=0, step=1, limit=1
              $region82: #{transformer_forward.7} parent=80 // loop_pre_header
                _
              $region83: #{transformer_forward.7} parent=80 // loop_header
                %s358 = sphi 0, %s362
                %p359 = scmp.ge.s32.totalorder %s358, 1
                %s363 = sphi %s349, %s349
                %s364 = sphi %s345, %s345
              $region84: #{transformer_forward.7} parent=80 // loop_header_branch
                %361 = sbr.rel (%p359) target = $region88
              $region85: #{transformer_forward.7} parent=80 // loop_body
                %v365 = vld [vmem:[%s363] sm:$0xf]
                %366 = vst [vmem:[%s364] sm:$0xf] %v365
                %v367 = vld [vmem:[%s363 + $0xc] sm:$0xf]
                %368 = vst [vmem:[%s364 + $0x4] sm:$0xf] %v367
                %v369 = vld [vmem:[%s363 + $0x18] sm:$0xf]
                %370 = vst [vmem:[%s364 + $0x8] sm:$0xf] %v369
                %v371 = vld [vmem:[%s363 + $0x24] sm:$0xf]
                %372 = vst [vmem:[%s364 + $0xc] sm:$0xf] %v371
                %v373 = vld [vmem:[%s363 + $0x30] sm:$0xf]
                %374 = vst [vmem:[%s364 + $0x10] sm:$0xf] %v373
                %v375 = vld [vmem:[%s363 + $0x3c] sm:$0xf]
                %376 = vst [vmem:[%s364 + $0x14] sm:$0xf] %v375
                %v377 = vld [vmem:[%s363 + $0x48] sm:$0xf]
                %378 = vst [vmem:[%s364 + $0x18] sm:$0xf] %v377
                %v379 = vld [vmem:[%s363 + $0x54] sm:$0xf]
                %380 = vst [vmem:[%s364 + $0x1c] sm:$0xf] %v379
                %v381 = vld [vmem:[%s363 + $0x60] sm:$0xf]
                %382 = vst [vmem:[%s364 + $0x20] sm:$0xf] %v381
                %v383 = vld [vmem:[%s363 + $0x6c] sm:$0xf]
                %384 = vst [vmem:[%s364 + $0x24] sm:$0xf] %v383
                %v385 = vld [vmem:[%s363 + $0x78] sm:$0xf]
                %386 = vst [vmem:[%s364 + $0x28] sm:$0xf] %v385
                %v387 = vld [vmem:[%s363 + $0x84] sm:$0xf]
                %388 = vst [vmem:[%s364 + $0x2c] sm:$0xf] %v387
                %v389 = vld [vmem:[%s363 + $0x90] sm:$0xf]
                %390 = vst [vmem:[%s364 + $0x30] sm:$0xf] %v389
                %v391 = vld [vmem:[%s363 + $0x9c] sm:$0xf]
                %392 = vst [vmem:[%s364 + $0x34] sm:$0xf] %v391
                %v393 = vld [vmem:[%s363 + $0xa8] sm:$0xf]
                %394 = vst [vmem:[%s364 + $0x38] sm:$0xf] %v393
                %v395 = vld [vmem:[%s363 + $0xb4] sm:$0xf]
                %396 = vst [vmem:[%s364 + $0x3c] sm:$0xf] %v395
                %v397 = vld [vmem:[%s363 + $0xc0] sm:$0xf]
                %398 = vst [vmem:[%s364 + $0x40] sm:$0xf] %v397
                %v399 = vld [vmem:[%s363 + $0xcc] sm:$0xf]
                %400 = vst [vmem:[%s364 + $0x44] sm:$0xf] %v399
                %v401 = vld [vmem:[%s363 + $0xd8] sm:$0xf]
                %402 = vst [vmem:[%s364 + $0x48] sm:$0xf] %v401
                %v403 = vld [vmem:[%s363 + $0xe4] sm:$0xf]
                %404 = vst [vmem:[%s364 + $0x4c] sm:$0xf] %v403
                %v405 = vld [vmem:[%s363 + $0xf0] sm:$0xf]
                %406 = vst [vmem:[%s364 + $0x50] sm:$0xf] %v405
                %v407 = vld [vmem:[%s363 + $0xfc] sm:$0xf]
                %408 = vst [vmem:[%s364 + $0x54] sm:$0xf] %v407
                %v409 = vld [vmem:[%s363 + $0x108] sm:$0xf]
                %410 = vst [vmem:[%s364 + $0x58] sm:$0xf] %v409
                %v411 = vld [vmem:[%s363 + $0x114] sm:$0xf]
                %412 = vst [vmem:[%s364 + $0x5c] sm:$0xf] %v411
                %v413 = vld [vmem:[%s363 + $0x120] sm:$0xf]
                %414 = vst [vmem:[%s364 + $0x60] sm:$0xf] %v413
                %v415 = vld [vmem:[%s363 + $0x12c] sm:$0xf]
                %416 = vst [vmem:[%s364 + $0x64] sm:$0xf] %v415
                %v417 = vld [vmem:[%s363 + $0x138] sm:$0xf]
                %418 = vst [vmem:[%s364 + $0x68] sm:$0xf] %v417
                %v419 = vld [vmem:[%s363 + $0x144] sm:$0xf]
                %420 = vst [vmem:[%s364 + $0x6c] sm:$0xf] %v419
                %v421 = vld [vmem:[%s363 + $0x150] sm:$0xf]
                %422 = vst [vmem:[%s364 + $0x70] sm:$0xf] %v421
                %v423 = vld [vmem:[%s363 + $0x15c] sm:$0xf]
                %424 = vst [vmem:[%s364 + $0x74] sm:$0xf] %v423
                %v425 = vld [vmem:[%s363 + $0x168] sm:$0xf]
                %426 = vst [vmem:[%s364 + $0x78] sm:$0xf] %v425
                %v427 = vld [vmem:[%s363 + $0x174] sm:$0xf]
                %428 = vst [vmem:[%s364 + $0x7c] sm:$0xf] %v427
              $region86: #{transformer_forward.7} parent=80 // loop_footer
                %s362 = sadd.s32 1, %s358
              $region87: #{transformer_forward.7} parent=80 // loop_footer_branch
                %357 = sbr.rel target = $region83
              $region88: #{transformer_forward.7} parent=80 // loop_exit
                _
            $region81: #{transformer_forward.7} parent=72 // pred_fallthru
              _
          $region73: #{transformer_forward.7} parent=68 // pred_fallthru
            _
          %512 = vnop
        $region69: #{transformer_forward.7} parent=23 // pred_fallthru
          _
        // Predicated region
        $region107: #{transformer_forward.7} parent=23 // pred_check
          %p513 = pneg %p98
        $region108: #{transformer_forward.7} parent=23 // pred_check_branch
          %515 = sbr.rel (%p513) target = $region110
        $region109: #{transformer_forward.7} parent=23 // pred_region
          %s516 = sand.u32 %s88, 1
          %s517 = sand.u32 %s88, 1
          %s518 = smul.addr %s517, 128
          %s519 = scalar_lea.vmem [#allocation4], %s518
          %s520 = smul.addr %s19, 96
          %s521 = sadd.s32 2, %s520
          %s522 = smul.addr %s521, 4
          %s523 = scalar_lea.vmem %s2, %s522
          // Predicated region
          $region111: #{transformer_forward.7} parent=109 // pred_check
            _
          $region112: #{transformer_forward.7} parent=109 // pred_check_branch
            %525 = sbr.rel (0) target = $region114
          $region113: #{transformer_forward.7} parent=109 // pred_region
            // Predicated region
            $region115: #{transformer_forward.7} parent=113 // pred_check
              _
            $region116: #{transformer_forward.7} parent=113 // pred_check_branch
              %527 = sbr.rel target = $region118
            $region117: #{transformer_forward.7} parent=113 // pred_region
              // Predicated region
              $region130: #{transformer_forward.7} parent=117 // pred_check
                _
              $region131: #{transformer_forward.7} parent=117 // pred_check_branch
                %604 = sbr.rel (0) target = $region133
              $region132: #{transformer_forward.7} parent=117 // pred_region
                loop: start=0, step=1, limit=1
                $region134: #{transformer_forward.7} parent=132 // loop_pre_header
                  _
                $region135: #{transformer_forward.7} parent=132 // loop_header
                  %s606 = sphi 0, %s610
                  %p607 = scmp.ge.s32.totalorder %s606, 1
                  %s611 = sphi %s523, %s523
                  %s612 = sphi %s519, %s519
                $region136: #{transformer_forward.7} parent=132 // loop_header_branch
                  %609 = sbr.rel (%p607) target = $region140
                $region137: #{transformer_forward.7} parent=132 // loop_body
                  _
                $region138: #{transformer_forward.7} parent=132 // loop_footer
                  %s610 = sadd.s32 1, %s606
                $region139: #{transformer_forward.7} parent=132 // loop_footer_branch
                  %605 = sbr.rel target = $region135
                $region140: #{transformer_forward.7} parent=132 // loop_exit
                  _
                loop: start=0, step=1, limit=1
                $region141: #{transformer_forward.7} parent=132 // loop_pre_header
                  _
                $region142: #{transformer_forward.7} parent=132 // loop_header
                  %s615 = sphi 0, %s619
                  %p616 = scmp.ge.s32.totalorder %s615, 1
                  %s620 = sphi %s523, %s523
                  %s621 = sphi %s519, %s519
                $region143: #{transformer_forward.7} parent=132 // loop_header_branch
                  %618 = sbr.rel (%p616) target = $region147
                $region144: #{transformer_forward.7} parent=132 // loop_body
                  %v622 = vld [vmem:[%s620] sm:$0xf]
                  %623 = vst [vmem:[%s621] sm:$0xf] %v622
                  %v624 = vld [vmem:[%s620 + $0xc] sm:$0xf]
                  %625 = vst [vmem:[%s621 + $0x4] sm:$0xf] %v624
                  %v626 = vld [vmem:[%s620 + $0x18] sm:$0xf]
                  %627 = vst [vmem:[%s621 + $0x8] sm:$0xf] %v626
                  %v628 = vld [vmem:[%s620 + $0x24] sm:$0xf]
                  %629 = vst [vmem:[%s621 + $0xc] sm:$0xf] %v628
                  %v630 = vld [vmem:[%s620 + $0x30] sm:$0xf]
                  %631 = vst [vmem:[%s621 + $0x10] sm:$0xf] %v630
                  %v632 = vld [vmem:[%s620 + $0x3c] sm:$0xf]
                  %633 = vst [vmem:[%s621 + $0x14] sm:$0xf] %v632
                  %v634 = vld [vmem:[%s620 + $0x48] sm:$0xf]
                  %635 = vst [vmem:[%s621 + $0x18] sm:$0xf] %v634
                  %v636 = vld [vmem:[%s620 + $0x54] sm:$0xf]
                  %637 = vst [vmem:[%s621 + $0x1c] sm:$0xf] %v636
                  %v638 = vld [vmem:[%s620 + $0x60] sm:$0xf]
                  %639 = vst [vmem:[%s621 + $0x20] sm:$0xf] %v638
                  %v640 = vld [vmem:[%s620 + $0x6c] sm:$0xf]
                  %641 = vst [vmem:[%s621 + $0x24] sm:$0xf] %v640
                  %v642 = vld [vmem:[%s620 + $0x78] sm:$0xf]
                  %643 = vst [vmem:[%s621 + $0x28] sm:$0xf] %v642
                  %v644 = vld [vmem:[%s620 + $0x84] sm:$0xf]
                  %645 = vst [vmem:[%s621 + $0x2c] sm:$0xf] %v644
                  %v646 = vld [vmem:[%s620 + $0x90] sm:$0xf]
                  %647 = vst [vmem:[%s621 + $0x30] sm:$0xf] %v646
                  %v648 = vld [vmem:[%s620 + $0x9c] sm:$0xf]
                  %649 = vst [vmem:[%s621 + $0x34] sm:$0xf] %v648
                  %v650 = vld [vmem:[%s620 + $0xa8] sm:$0xf]
                  %651 = vst [vmem:[%s621 + $0x38] sm:$0xf] %v650
                  %v652 = vld [vmem:[%s620 + $0xb4] sm:$0xf]
                  %653 = vst [vmem:[%s621 + $0x3c] sm:$0xf] %v652
                  %v654 = vld [vmem:[%s620 + $0xc0] sm:$0xf]
                  %655 = vst [vmem:[%s621 + $0x40] sm:$0xf] %v654
                  %v656 = vld [vmem:[%s620 + $0xcc] sm:$0xf]
                  %657 = vst [vmem:[%s621 + $0x44] sm:$0xf] %v656
                  %v658 = vld [vmem:[%s620 + $0xd8] sm:$0xf]
                  %659 = vst [vmem:[%s621 + $0x48] sm:$0xf] %v658
                  %v660 = vld [vmem:[%s620 + $0xe4] sm:$0xf]
                  %661 = vst [vmem:[%s621 + $0x4c] sm:$0xf] %v660
                  %v662 = vld [vmem:[%s620 + $0xf0] sm:$0xf]
                  %663 = vst [vmem:[%s621 + $0x50] sm:$0xf] %v662
                  %v664 = vld [vmem:[%s620 + $0xfc] sm:$0xf]
                  %665 = vst [vmem:[%s621 + $0x54] sm:$0xf] %v664
                  %v666 = vld [vmem:[%s620 + $0x108] sm:$0xf]
                  %667 = vst [vmem:[%s621 + $0x58] sm:$0xf] %v666
                  %v668 = vld [vmem:[%s620 + $0x114] sm:$0xf]
                  %669 = vst [vmem:[%s621 + $0x5c] sm:$0xf] %v668
                  %v670 = vld [vmem:[%s620 + $0x120] sm:$0xf]
                  %671 = vst [vmem:[%s621 + $0x60] sm:$0xf] %v670
                  %v672 = vld [vmem:[%s620 + $0x12c] sm:$0xf]
                  %673 = vst [vmem:[%s621 + $0x64] sm:$0xf] %v672
                  %v674 = vld [vmem:[%s620 + $0x138] sm:$0xf]
                  %675 = vst [vmem:[%s621 + $0x68] sm:$0xf] %v674
                  %v676 = vld [vmem:[%s620 + $0x144] sm:$0xf]
                  %677 = vst [vmem:[%s621 + $0x6c] sm:$0xf] %v676
                  %v678 = vld [vmem:[%s620 + $0x150] sm:$0xf]
                  %679 = vst [vmem:[%s621 + $0x70] sm:$0xf] %v678
                  %v680 = vld [vmem:[%s620 + $0x15c] sm:$0xf]
                  %681 = vst [vmem:[%s621 + $0x74] sm:$0xf] %v680
                  %v682 = vld [vmem:[%s620 + $0x168] sm:$0xf]
                  %683 = vst [vmem:[%s621 + $0x78] sm:$0xf] %v682
                  %v684 = vld [vmem:[%s620 + $0x174] sm:$0xf]
                  %685 = vst [vmem:[%s621 + $0x7c] sm:$0xf] %v684
                $region145: #{transformer_forward.7} parent=132 // loop_footer
                  %s619 = sadd.s32 1, %s615
                $region146: #{transformer_forward.7} parent=132 // loop_footer_branch
                  %614 = sbr.rel target = $region142
                $region147: #{transformer_forward.7} parent=132 // loop_exit
                  _
              $region133: #{transformer_forward.7} parent=117 // pred_fallthru
                _
            $region118: #{transformer_forward.7} parent=113 // pred_fallthru
              _
            // Predicated region
            $region119: #{transformer_forward.7} parent=113 // pred_check
              _
            $region120: #{transformer_forward.7} parent=113 // pred_check_branch
              %529 = sbr.rel (0) target = $region122
            $region121: #{transformer_forward.7} parent=113 // pred_region
              loop: start=0, step=1, limit=1
              $region123: #{transformer_forward.7} parent=121 // loop_pre_header
                _
              $region124: #{transformer_forward.7} parent=121 // loop_header
                %s532 = sphi 0, %s536
                %p533 = scmp.ge.s32.totalorder %s532, 1
                %s537 = sphi %s523, %s523
                %s538 = sphi %s519, %s519
              $region125: #{transformer_forward.7} parent=121 // loop_header_branch
                %535 = sbr.rel (%p533) target = $region129
              $region126: #{transformer_forward.7} parent=121 // loop_body
                %v539 = vld [vmem:[%s537] sm:$0xf]
                %540 = vst [vmem:[%s538] sm:$0xf] %v539
                %v541 = vld [vmem:[%s537 + $0xc] sm:$0xf]
                %542 = vst [vmem:[%s538 + $0x4] sm:$0xf] %v541
                %v543 = vld [vmem:[%s537 + $0x18] sm:$0xf]
                %544 = vst [vmem:[%s538 + $0x8] sm:$0xf] %v543
                %v545 = vld [vmem:[%s537 + $0x24] sm:$0xf]
                %546 = vst [vmem:[%s538 + $0xc] sm:$0xf] %v545
                %v547 = vld [vmem:[%s537 + $0x30] sm:$0xf]
                %548 = vst [vmem:[%s538 + $0x10] sm:$0xf] %v547
                %v549 = vld [vmem:[%s537 + $0x3c] sm:$0xf]
                %550 = vst [vmem:[%s538 + $0x14] sm:$0xf] %v549
                %v551 = vld [vmem:[%s537 + $0x48] sm:$0xf]
                %552 = vst [vmem:[%s538 + $0x18] sm:$0xf] %v551
                %v553 = vld [vmem:[%s537 + $0x54] sm:$0xf]
                %554 = vst [vmem:[%s538 + $0x1c] sm:$0xf] %v553
                %v555 = vld [vmem:[%s537 + $0x60] sm:$0xf]
                %556 = vst [vmem:[%s538 + $0x20] sm:$0xf] %v555
                %v557 = vld [vmem:[%s537 + $0x6c] sm:$0xf]
                %558 = vst [vmem:[%s538 + $0x24] sm:$0xf] %v557
                %v559 = vld [vmem:[%s537 + $0x78] sm:$0xf]
                %560 = vst [vmem:[%s538 + $0x28] sm:$0xf] %v559
                %v561 = vld [vmem:[%s537 + $0x84] sm:$0xf]
                %562 = vst [vmem:[%s538 + $0x2c] sm:$0xf] %v561
                %v563 = vld [vmem:[%s537 + $0x90] sm:$0xf]
                %564 = vst [vmem:[%s538 + $0x30] sm:$0xf] %v563
                %v565 = vld [vmem:[%s537 + $0x9c] sm:$0xf]
                %566 = vst [vmem:[%s538 + $0x34] sm:$0xf] %v565
                %v567 = vld [vmem:[%s537 + $0xa8] sm:$0xf]
                %568 = vst [vmem:[%s538 + $0x38] sm:$0xf] %v567
                %v569 = vld [vmem:[%s537 + $0xb4] sm:$0xf]
                %570 = vst [vmem:[%s538 + $0x3c] sm:$0xf] %v569
                %v571 = vld [vmem:[%s537 + $0xc0] sm:$0xf]
                %572 = vst [vmem:[%s538 + $0x40] sm:$0xf] %v571
                %v573 = vld [vmem:[%s537 + $0xcc] sm:$0xf]
                %574 = vst [vmem:[%s538 + $0x44] sm:$0xf] %v573
                %v575 = vld [vmem:[%s537 + $0xd8] sm:$0xf]
                %576 = vst [vmem:[%s538 + $0x48] sm:$0xf] %v575
                %v577 = vld [vmem:[%s537 + $0xe4] sm:$0xf]
                %578 = vst [vmem:[%s538 + $0x4c] sm:$0xf] %v577
                %v579 = vld [vmem:[%s537 + $0xf0] sm:$0xf]
                %580 = vst [vmem:[%s538 + $0x50] sm:$0xf] %v579
                %v581 = vld [vmem:[%s537 + $0xfc] sm:$0xf]
                %582 = vst [vmem:[%s538 + $0x54] sm:$0xf] %v581
                %v583 = vld [vmem:[%s537 + $0x108] sm:$0xf]
                %584 = vst [vmem:[%s538 + $0x58] sm:$0xf] %v583
                %v585 = vld [vmem:[%s537 + $0x114] sm:$0xf]
                %586 = vst [vmem:[%s538 + $0x5c] sm:$0xf] %v585
                %v587 = vld [vmem:[%s537 + $0x120] sm:$0xf]
                %588 = vst [vmem:[%s538 + $0x60] sm:$0xf] %v587
                %v589 = vld [vmem:[%s537 + $0x12c] sm:$0xf]
                %590 = vst [vmem:[%s538 + $0x64] sm:$0xf] %v589
                %v591 = vld [vmem:[%s537 + $0x138] sm:$0xf]
                %592 = vst [vmem:[%s538 + $0x68] sm:$0xf] %v591
                %v593 = vld [vmem:[%s537 + $0x144] sm:$0xf]
                %594 = vst [vmem:[%s538 + $0x6c] sm:$0xf] %v593
                %v595 = vld [vmem:[%s537 + $0x150] sm:$0xf]
                %596 = vst [vmem:[%s538 + $0x70] sm:$0xf] %v595
                %v597 = vld [vmem:[%s537 + $0x15c] sm:$0xf]
                %598 = vst [vmem:[%s538 + $0x74] sm:$0xf] %v597
                %v599 = vld [vmem:[%s537 + $0x168] sm:$0xf]
                %600 = vst [vmem:[%s538 + $0x78] sm:$0xf] %v599
                %v601 = vld [vmem:[%s537 + $0x174] sm:$0xf]
                %602 = vst [vmem:[%s538 + $0x7c] sm:$0xf] %v601
              $region127: #{transformer_forward.7} parent=121 // loop_footer
                %s536 = sadd.s32 1, %s532
              $region128: #{transformer_forward.7} parent=121 // loop_footer_branch
                %531 = sbr.rel target = $region124
              $region129: #{transformer_forward.7} parent=121 // loop_exit
                _
            $region122: #{transformer_forward.7} parent=113 // pred_fallthru
              _
          $region114: #{transformer_forward.7} parent=109 // pred_fallthru
            _
          %686 = vnop
        $region110: #{transformer_forward.7} parent=23 // pred_fallthru
          _
        // Predicated region
        $region148: #{transformer_forward.7} parent=23 // pred_check
          %p687 = pneg %p168
        $region149: #{transformer_forward.7} parent=23 // pred_check_branch
          %689 = sbr.rel (%p687) target = $region151
        $region150: #{transformer_forward.7} parent=23 // pred_region
          %s690 = smul.u32 16, %s20
          %p691 = scmp.lt.s32.totalorder %s19, 1
          %s692 = scalar_select %p691, %s19, 1
          %p693 = scmp.lt.s32.totalorder %s690, 31
          %s694 = scalar_select %p693, %s690, 31
          %s695 = smul.addr %s692, 32
          %s696 = sadd.s32 %s694, %s695
          %s697 = smul.addr %s696, 8
          %s698 = scalar_lea.vmem %s5, %s697
          %s699 = smul.u32 16, %s20
        $region151: #{transformer_forward.7} parent=23 // pred_fallthru
          _
      $region24: #{transformer_forward.7} parent=5 // pred_fallthru
        _
      %p700 = scmp.le.s32.totalorder 1, %s12
      %p701 = scmp.lt.s32.totalorder %s12, 5
      %p702 = pnand %p700, %p701
      %p703 = pneg %p702
      // Predicated region
      $region152: #{transformer_forward.7} parent=5 // pred_check
        _
      $region153: #{transformer_forward.7} parent=5 // pred_check_branch
        %705 = sbr.rel (%p702) target = $region155
      $region154: #{transformer_forward.7} parent=5 // pred_region
        %s706 = ssub.s32 %s12, 1
        %s707 = sand.u32 %s39, 1
        %s708 = sand.u32 %s39, 1
        %s709 = smul.addr %s708, 64
        %s710 = scalar_lea.vmem [#allocation2], %s709
        // Predicated region
        $region156: #{transformer_forward.7} parent=154 // pred_check
          %p711 = pneg %p52
        $region157: #{transformer_forward.7} parent=154 // pred_check_branch
          %713 = sbr.rel (%p711) target = $region159
        $region158: #{transformer_forward.7} parent=154 // pred_region
          _
        $region159: #{transformer_forward.7} parent=154 // pred_fallthru
          _
        %s714 = sand.u32 %s65, 1
        %s715 = sand.u32 %s65, 1
        %s716 = smul.addr %s715, 128
        %s717 = scalar_lea.vmem [#allocation3], %s716
        // Predicated region
        $region160: #{transformer_forward.7} parent=154 // pred_check
          %p718 = pneg %p78
        $region161: #{transformer_forward.7} parent=154 // pred_check_branch
          %720 = sbr.rel (%p718) target = $region163
        $region162: #{transformer_forward.7} parent=154 // pred_region
          _
        $region163: #{transformer_forward.7} parent=154 // pred_fallthru
          _
        %s721 = sand.u32 %s91, 1
        %s722 = sand.u32 %s91, 1
        %s723 = smul.addr %s722, 128
        %s724 = scalar_lea.vmem [#allocation4], %s723
        // Predicated region
        $region164: #{transformer_forward.7} parent=154 // pred_check
          %p725 = pneg %p104
        $region165: #{transformer_forward.7} parent=154 // pred_check_branch
          %727 = sbr.rel (%p725) target = $region167
        $region166: #{transformer_forward.7} parent=154 // pred_region
          _
        $region167: #{transformer_forward.7} parent=154 // pred_fallthru
          _
        %s728 = sand.u32 %s39, 1
        %s729 = sand.u32 %s39, 1
        %s730 = smul.addr %s729, 64
        %s731 = scalar_lea.vmem [#allocation2], %s730
        %p732 = pneg %p52
        %p733 = pneg %p49
        %s734 = sand.u32 %s65, 1
        %s735 = sand.u32 %s65, 1
        %s736 = smul.addr %s735, 128
        %s737 = scalar_lea.vmem [#allocation3], %s736
        %p738 = pneg %p78
        %p739 = pneg %p75
        %s740 = sand.u32 %s91, 1
        %s741 = sand.u32 %s91, 1
        %s742 = smul.addr %s741, 128
        %s743 = scalar_lea.vmem [#allocation4], %s742
        %p744 = pneg %p104
        %p745 = pneg %p101
        %p746 = pneg %p125
        %p747 = pneg %p122
        %p748 = pneg %p146
        %p749 = pneg %p143
        %s750 = smul.u32 16, %s22
        %p751 = scmp.lt.s32.totalorder %s21, 1
        %s752 = scalar_select %p751, %s21, 1
        %p753 = scmp.lt.s32.totalorder %s750, 31
        %s754 = scalar_select %p753, %s750, 31
        %s755 = smul.addr %s752, 32
        %s756 = sadd.s32 %s754, %s755
        %s757 = smul.addr %s756, 8
        %s758 = scalar_lea.vmem %s5, %s757
        %p759 = pneg %p174
        %p760 = pneg %p171
        %p761 = pneg %p202
        %p762 = pneg %p199
        %s763 = smul.u32 16, %s22
        %p764 = scmp.lt.s32.totalorder %s21, 1
        %s765 = scalar_select %p764, %s21, 1
        %p766 = scmp.lt.s32.totalorder %s763, 31
        %s767 = scalar_select %p766, %s763, 31
        %s768 = smul.addr %s765, 32
        %s769 = sadd.s32 %s767, %s768
        %s770 = smul.addr %s769, 8
        %s771 = scalar_lea.vmem %s6, %s770
        %s772 = smul.u32 16, %s22
        %s773 = smul.u32 16, %s22
        %p774 = scmp.lt.s32.totalorder %s21, 1
        %s775 = scalar_select %p774, %s21, 1
        %p776 = scmp.lt.s32.totalorder %s773, 31
        %s777 = scalar_select %p776, %s773, 31
        %s778 = smul.addr %s775, 32
        %s779 = sadd.s32 %s777, %s778
        %s780 = smul.addr %s779, 8
        %s781 = scalar_lea.vmem %s5, %s780
        %s782 = smul.u32 16, %s22
        %s783 = smul.u32 16, %s22
        %p784 = scmp.lt.s32.totalorder %s21, 1
        %s785 = scalar_select %p784, %s21, 1
        %p786 = scmp.lt.s32.totalorder %s783, 31
        %s787 = scalar_select %p786, %s783, 31
        %s788 = smul.addr %s785, 32
        %s789 = sadd.s32 %s787, %s788
        %s790 = smul.addr %s789, 8
        %s791 = scalar_lea.vmem %s6, %s790
        %s792 = smul.u32 16, %s22
        %v794 = vld [vmem:[%s710] sm:$0xf]
        %v795 = vld [vmem:[%s710 + $0x4] sm:$0xf]
        %v796 = vld [vmem:[%s710 + $0x8] sm:$0xf]
        %v797 = vld [vmem:[%s710 + $0xc] sm:$0xf]
        %v798 = vld [vmem:[%s710 + $0x10] sm:$0xf]
        %v799 = vld [vmem:[%s710 + $0x14] sm:$0xf]
        %v800 = vld [vmem:[%s710 + $0x18] sm:$0xf]
        %v801 = vld [vmem:[%s710 + $0x1c] sm:$0xf]
        %v802 = vld [vmem:[%s710 + $0x20] sm:$0xf]
        %v803 = vld [vmem:[%s710 + $0x24] sm:$0xf]
        %v804 = vld [vmem:[%s710 + $0x28] sm:$0xf]
        %v805 = vld [vmem:[%s710 + $0x2c] sm:$0xf]
        %v806 = vld [vmem:[%s710 + $0x30] sm:$0xf]
        %v807 = vld [vmem:[%s710 + $0x34] sm:$0xf]
        %v808 = vld [vmem:[%s710 + $0x38] sm:$0xf]
        %v809 = vld [vmem:[%s710 + $0x3c] sm:$0xf]
        %v810 = vld [vmem:[%s717] sm:$0xf]
        %v811 = vld [vmem:[%s717 + $0x4] sm:$0xf]
        %v812 = vld [vmem:[%s717 + $0x8] sm:$0xf]
        %v813 = vld [vmem:[%s717 + $0xc] sm:$0xf]
        %v814 = vld [vmem:[%s717 + $0x10] sm:$0xf]
        %v815 = vld [vmem:[%s717 + $0x14] sm:$0xf]
        %v816 = vld [vmem:[%s717 + $0x18] sm:$0xf]
        %v817 = vld [vmem:[%s717 + $0x1c] sm:$0xf]
        %v818 = vld [vmem:[%s717 + $0x20] sm:$0xf]
        %v819 = vld [vmem:[%s717 + $0x24] sm:$0xf]
        %v820 = vld [vmem:[%s717 + $0x28] sm:$0xf]
        %v821 = vld [vmem:[%s717 + $0x2c] sm:$0xf]
        %v822 = vld [vmem:[%s717 + $0x30] sm:$0xf]
        %v823 = vld [vmem:[%s717 + $0x34] sm:$0xf]
        %v824 = vld [vmem:[%s717 + $0x38] sm:$0xf]
        %v825 = vld [vmem:[%s717 + $0x3c] sm:$0xf]
        %v826 = vld [vmem:[%s717 + $0x40] sm:$0xf]
        %v827 = vld [vmem:[%s717 + $0x44] sm:$0xf]
        %v828 = vld [vmem:[%s717 + $0x48] sm:$0xf]
        %v829 = vld [vmem:[%s717 + $0x4c] sm:$0xf]
        %v830 = vld [vmem:[%s717 + $0x50] sm:$0xf]
        %v831 = vld [vmem:[%s717 + $0x54] sm:$0xf]
        %v832 = vld [vmem:[%s717 + $0x58] sm:$0xf]
        %v833 = vld [vmem:[%s717 + $0x5c] sm:$0xf]
        %v834 = vld [vmem:[%s717 + $0x60] sm:$0xf]
        %v835 = vld [vmem:[%s717 + $0x64] sm:$0xf]
        %v836 = vld [vmem:[%s717 + $0x68] sm:$0xf]
        %v837 = vld [vmem:[%s717 + $0x6c] sm:$0xf]
        %v838 = vld [vmem:[%s717 + $0x70] sm:$0xf]
        %v839 = vld [vmem:[%s717 + $0x74] sm:$0xf]
        %v840 = vld [vmem:[%s717 + $0x78] sm:$0xf]
        %v841 = vld [vmem:[%s717 + $0x7c] sm:$0xf]
        %v842 = vld [vmem:[%s724] sm:$0xf]
        %v843 = vld [vmem:[%s724 + $0x4] sm:$0xf]
        %v844 = vld [vmem:[%s724 + $0x8] sm:$0xf]
        %v845 = vld [vmem:[%s724 + $0xc] sm:$0xf]
        %v846 = vld [vmem:[%s724 + $0x10] sm:$0xf]
        %v847 = vld [vmem:[%s724 + $0x14] sm:$0xf]
        %v848 = vld [vmem:[%s724 + $0x18] sm:$0xf]
        %v849 = vld [vmem:[%s724 + $0x1c] sm:$0xf]
        %v850 = vld [vmem:[%s724 + $0x20] sm:$0xf]
        %v851 = vld [vmem:[%s724 + $0x24] sm:$0xf]
        %v852 = vld [vmem:[%s724 + $0x28] sm:$0xf]
        %v853 = vld [vmem:[%s724 + $0x2c] sm:$0xf]
        %v854 = vld [vmem:[%s724 + $0x30] sm:$0xf]
        %v855 = vld [vmem:[%s724 + $0x34] sm:$0xf]
        %v856 = vld [vmem:[%s724 + $0x38] sm:$0xf]
        %v857 = vld [vmem:[%s724 + $0x3c] sm:$0xf]
        %v858 = vld [vmem:[%s724 + $0x40] sm:$0xf]
        %v859 = vld [vmem:[%s724 + $0x44] sm:$0xf]
        %v860 = vld [vmem:[%s724 + $0x48] sm:$0xf]
        %v861 = vld [vmem:[%s724 + $0x4c] sm:$0xf]
        %v862 = vld [vmem:[%s724 + $0x50] sm:$0xf]
        %v863 = vld [vmem:[%s724 + $0x54] sm:$0xf]
        %v864 = vld [vmem:[%s724 + $0x58] sm:$0xf]
        %v865 = vld [vmem:[%s724 + $0x5c] sm:$0xf]
        %v866 = vld [vmem:[%s724 + $0x60] sm:$0xf]
        %v867 = vld [vmem:[%s724 + $0x64] sm:$0xf]
        %v868 = vld [vmem:[%s724 + $0x68] sm:$0xf]
        %v869 = vld [vmem:[%s724 + $0x6c] sm:$0xf]
        %v870 = vld [vmem:[%s724 + $0x70] sm:$0xf]
        %v871 = vld [vmem:[%s724 + $0x74] sm:$0xf]
        %v872 = vld [vmem:[%s724 + $0x78] sm:$0xf]
        %v873 = vld [vmem:[%s724 + $0x7c] sm:$0xf]
        %v874 = vld [vmem:[%s781] sm:$0xff]
        %v875 = vld [vmem:[%s781 + $0x8] sm:$0xff]
        %v876 = vld [vmem:[%s781 + $0x10] sm:$0xff]
        %v877 = vld [vmem:[%s781 + $0x18] sm:$0xff]
        %v878 = vld [vmem:[%s781 + $0x20] sm:$0xff]
        %v879 = vld [vmem:[%s781 + $0x28] sm:$0xff]
        %v880 = vld [vmem:[%s781 + $0x30] sm:$0xff]
        %v881 = vld [vmem:[%s781 + $0x38] sm:$0xff]
        %v882 = vld [vmem:[%s781 + $0x40] sm:$0xff]
        %v883 = vld [vmem:[%s781 + $0x48] sm:$0xff]
        %v884 = vld [vmem:[%s781 + $0x50] sm:$0xff]
        %v885 = vld [vmem:[%s781 + $0x58] sm:$0xff]
        %v886 = vld [vmem:[%s781 + $0x60] sm:$0xff]
        %v887 = vld [vmem:[%s781 + $0x68] sm:$0xff]
        %v888 = vld [vmem:[%s781 + $0x70] sm:$0xff]
        %v889 = vld [vmem:[%s781 + $0x78] sm:$0xff]
        %v890 = vld [vmem:[%s3] sm:$0xf]
        %v891 = vld [vmem:[%s3 + $0x4] sm:$0xf]
        %v892 = vld [vmem:[%s3 + $0x8] sm:$0xf]
        %v893 = vld [vmem:[%s3 + $0xc] sm:$0xf]
        %v894 = vld [vmem:[%s3 + $0x10] sm:$0xf]
        %v895 = vld [vmem:[%s3 + $0x14] sm:$0xf]
        %v896 = vld [vmem:[%s3 + $0x18] sm:$0xf]
        %v897 = vld [vmem:[%s3 + $0x1c] sm:$0xf]
        %v898 = vld [vmem:[%s3 + $0x20] sm:$0xf]
        %v899 = vld [vmem:[%s3 + $0x24] sm:$0xf]
        %v900 = vld [vmem:[%s3 + $0x28] sm:$0xf]
        %v901 = vld [vmem:[%s3 + $0x2c] sm:$0xf]
        %v902 = vld [vmem:[%s3 + $0x30] sm:$0xf]
        %v903 = vld [vmem:[%s3 + $0x34] sm:$0xf]
        %v904 = vld [vmem:[%s3 + $0x38] sm:$0xf]
        %v905 = vld [vmem:[%s3 + $0x3c] sm:$0xf]
        %v906 = vld [vmem:[%s4] sm:$0x1]
        %v908 = vlaneseq
        %v909 = vshrl.u32 %v908, 7
        %v910 = vsub.s32 0, %v909
        %v911 = vrot.slane %v906, %v910
        %v913 = vadd.f32 %v874, %v911
        %v914 = vadd.f32 %v875, %v911
        %v915 = vadd.f32 %v876, %v911
        %v916 = vadd.f32 %v877, %v911
        %v917 = vadd.f32 %v878, %v911
        %v918 = vadd.f32 %v879, %v911
        %v919 = vadd.f32 %v880, %v911
        %v920 = vadd.f32 %v881, %v911
        %v921 = vadd.f32 %v882, %v911
        %v922 = vadd.f32 %v883, %v911
        %v923 = vadd.f32 %v884, %v911
        %v924 = vadd.f32 %v885, %v911
        %v925 = vadd.f32 %v886, %v911
        %v926 = vadd.f32 %v887, %v911
        %v927 = vadd.f32 %v888, %v911
        %v928 = vadd.f32 %v889, %v911
        %v945 = vunpack.c.l.b16 %v794
        %v946 = vunpack.c.l.b16 %v795
        %v947 = vunpack.c.l.b16 %v796
        %v948 = vunpack.c.l.b16 %v797
        %v949 = vunpack.c.l.b16 %v798
        %v950 = vunpack.c.l.b16 %v799
        %v951 = vunpack.c.l.b16 %v800
        %v952 = vunpack.c.l.b16 %v801
        %v953 = vunpack.c.l.b16 %v802
        %v954 = vunpack.c.l.b16 %v803
        %v955 = vunpack.c.l.b16 %v804
        %v956 = vunpack.c.l.b16 %v805
        %v957 = vunpack.c.l.b16 %v806
        %v958 = vunpack.c.l.b16 %v807
        %v959 = vunpack.c.l.b16 %v808
        %v960 = vunpack.c.l.b16 %v809
        %v961 = vpack.c.b16 %v946, %v945
        %v962 = vpack.c.b16 %v948, %v947
        %v963 = vpack.c.b16 %v950, %v949
        %v964 = vpack.c.b16 %v952, %v951
        %v965 = vpack.c.b16 %v954, %v953
        %v966 = vpack.c.b16 %v956, %v955
        %v967 = vpack.c.b16 %v958, %v957
        %v968 = vpack.c.b16 %v960, %v959
        %v1001 = vunpack.c.l.b16 %v810
        %v1002 = vunpack.c.l.b16 %v811
        %v1003 = vunpack.c.l.b16 %v812
        %v1004 = vunpack.c.l.b16 %v813
        %v1005 = vunpack.c.l.b16 %v814
        %v1006 = vunpack.c.l.b16 %v815
        %v1007 = vunpack.c.l.b16 %v816
        %v1008 = vunpack.c.l.b16 %v817
        %v1009 = vunpack.c.l.b16 %v818
        %v1010 = vunpack.c.l.b16 %v819
        %v1011 = vunpack.c.l.b16 %v820
        %v1012 = vunpack.c.l.b16 %v821
        %v1013 = vunpack.c.l.b16 %v822
        %v1014 = vunpack.c.l.b16 %v823
        %v1015 = vunpack.c.l.b16 %v824
        %v1016 = vunpack.c.l.b16 %v825
        %v1017 = vunpack.c.l.b16 %v826
        %v1018 = vunpack.c.l.b16 %v827
        %v1019 = vunpack.c.l.b16 %v828
        %v1020 = vunpack.c.l.b16 %v829
        %v1021 = vunpack.c.l.b16 %v830
        %v1022 = vunpack.c.l.b16 %v831
        %v1023 = vunpack.c.l.b16 %v832
        %v1024 = vunpack.c.l.b16 %v833
        %v1025 = vunpack.c.l.b16 %v834
        %v1026 = vunpack.c.l.b16 %v835
        %v1027 = vunpack.c.l.b16 %v836
        %v1028 = vunpack.c.l.b16 %v837
        %v1029 = vunpack.c.l.b16 %v838
        %v1030 = vunpack.c.l.b16 %v839
        %v1031 = vunpack.c.l.b16 %v840
        %v1032 = vunpack.c.l.b16 %v841
        %v1033 = vpack.c.b16 %v1002, %v1001
        %v1034 = vpack.c.b16 %v1004, %v1003
        %v1035 = vpack.c.b16 %v1006, %v1005
        %v1036 = vpack.c.b16 %v1008, %v1007
        %v1037 = vpack.c.b16 %v1010, %v1009
        %v1038 = vpack.c.b16 %v1012, %v1011
        %v1039 = vpack.c.b16 %v1014, %v1013
        %v1040 = vpack.c.b16 %v1016, %v1015
        %v1041 = vpack.c.b16 %v1018, %v1017
        %v1042 = vpack.c.b16 %v1020, %v1019
        %v1043 = vpack.c.b16 %v1022, %v1021
        %v1044 = vpack.c.b16 %v1024, %v1023
        %v1045 = vpack.c.b16 %v1026, %v1025
        %v1046 = vpack.c.b16 %v1028, %v1027
        %v1047 = vpack.c.b16 %v1030, %v1029
        %v1048 = vpack.c.b16 %v1032, %v1031
        %vm1049 = vcmask 261120
        %v1051 = vsel %vm1049, %v961, 0
        %v1054 = vsel %vm1049, %v962, 0
        %v1057 = vsel %vm1049, %v963, 0
        %v1060 = vsel %vm1049, %v964, 0
        %v1063 = vsel %vm1049, %v965, 0
        %v1066 = vsel %vm1049, %v966, 0
        %v1069 = vsel %vm1049, %v967, 0
        %v1072 = vsel %vm1049, %v968, 0
        %v1075 = vsel %vm1049, %v1033, 0
        %v1078 = vsel %vm1049, %v1034, 0
        %v1081 = vsel %vm1049, %v1035, 0
        %v1084 = vsel %vm1049, %v1036, 0
        %v1087 = vsel %vm1049, %v1037, 0
        %v1090 = vsel %vm1049, %v1038, 0
        %v1093 = vsel %vm1049, %v1039, 0
        %v1096 = vsel %vm1049, %v1040, 0
        %v1099 = vsel %vm1049, %v1041, 0
        %v1102 = vsel %vm1049, %v1042, 0
        %v1105 = vsel %vm1049, %v1043, 0
        %v1108 = vsel %vm1049, %v1044, 0
        %v1111 = vsel %vm1049, %v1045, 0
        %v1114 = vsel %vm1049, %v1046, 0
        %v1117 = vsel %vm1049, %v1047, 0
        %v1120 = vsel %vm1049, %v1048, 0
        %1122 = vmatprep.subr.bf16.mxu0 0
        %1123 = vmatpush1.bf16.xpose.msra.mxu0 %v1075
        %1124 = vmatprep.subr.bf16.mxu0 0
        %1125 = vmatpush1.bf16.xpose.msra.mxu0 %v1078
        %1126 = vmatprep.subr.bf16.mxu0 0
        %1127 = vmatpush1.bf16.xpose.msra.mxu0 %v1081
        %1128 = vmatprep.subr.bf16.mxu0 0
        %1129 = vmatpush1.bf16.xpose.msra.mxu0 %v1084
        %1130 = vmatprep.subr.bf16.mxu0 0
        %1131 = vmatpush1.bf16.xpose.msra.mxu0 %v1087
        %1132 = vmatprep.subr.bf16.mxu0 0
        %1133 = vmatpush1.bf16.xpose.msra.mxu0 %v1090
        %1134 = vmatprep.subr.bf16.mxu0 0
        %1135 = vmatpush1.bf16.xpose.msra.mxu0 %v1093
        %1136 = vmatprep.subr.bf16.mxu0 0
        %1137 = vmatpush1.bf16.xpose.msra.mxu0 %v1096
        %1138 = vmatprep.subr.bf16.mxu0 0
        %1139 = vmatpush1.bf16.xpose.msra.mxu0 %v1099
        %1140 = vmatprep.subr.bf16.mxu0 0
        %1141 = vmatpush1.bf16.xpose.msra.mxu0 %v1102
        %1142 = vmatprep.subr.bf16.mxu0 0
        %1143 = vmatpush1.bf16.xpose.msra.mxu0 %v1105
        %1144 = vmatprep.subr.bf16.mxu0 0
        %1145 = vmatpush1.bf16.xpose.msra.mxu0 %v1108
        %1146 = vmatprep.subr.bf16.mxu0 0
        %1147 = vmatpush1.bf16.xpose.msra.mxu0 %v1111
        %1148 = vmatprep.subr.bf16.mxu0 0
        %1149 = vmatpush1.bf16.xpose.msra.mxu0 %v1114
        %1150 = vmatprep.subr.bf16.mxu0 0
        %1151 = vmatpush1.bf16.xpose.msra.mxu0 %v1117
        %1152 = vmatprep.subr.bf16.mxu0 0
        %1153 = vmatpush1.bf16.xpose.msra.mxu0 %v1120
        %1154 = vmatprep.mubr.bf16.mxu0 0
        %1155 = vmatmul.mubr.bf16.gmra.mrb[0].mxu0 %v1051
        %v1156 = vpop.f32.mrb[0].mxu0
        %v1157 = vadd.f32 0.0, %v1156
        %v1158 = vpop.f32.mrb[0].mxu0
        %v1159 = vadd.f32 0.0, %v1158
        %v1160 = vpop.f32.mrb[0].mxu0
        %v1161 = vadd.f32 0.0, %v1160
        %v1162 = vpop.f32.mrb[0].mxu0
        %v1163 = vadd.f32 0.0, %v1162
        %1164 = vmatprep.mubr.bf16.mxu0 0
        %1165 = vmatmul.mubr.bf16.gmra.mrb[0].mxu0 %v1054
        %v1166 = vpop.f32.mrb[0].mxu0
        %v1167 = vadd.f32 0.0, %v1166
        %v1168 = vpop.f32.mrb[0].mxu0
        %v1169 = vadd.f32 0.0, %v1168
        %v1170 = vpop.f32.mrb[0].mxu0
        %v1171 = vadd.f32 0.0, %v1170
        %v1172 = vpop.f32.mrb[0].mxu0
        %v1173 = vadd.f32 0.0, %v1172
        %1174 = vmatprep.mubr.bf16.mxu0 0
        %1175 = vmatmul.mubr.bf16.gmra.mrb[0].mxu0 %v1057
        %v1176 = vpop.f32.mrb[0].mxu0
        %v1177 = vadd.f32 0.0, %v1176
        %v1178 = vpop.f32.mrb[0].mxu0
        %v1179 = vadd.f32 0.0, %v1178
        %v1180 = vpop.f32.mrb[0].mxu0
        %v1181 = vadd.f32 0.0, %v1180
        %v1182 = vpop.f32.mrb[0].mxu0
        %v1183 = vadd.f32 0.0, %v1182
        %1184 = vmatprep.mubr.bf16.mxu0 0
        %1185 = vmatmul.mubr.bf16.gmra.mrb[0].mxu0 %v1060
        %v1186 = vpop.f32.mrb[0].mxu0
        %v1187 = vadd.f32 0.0, %v1186
        %v1188 = vpop.f32.mrb[0].mxu0
        %v1189 = vadd.f32 0.0, %v1188
        %v1190 = vpop.f32.mrb[0].mxu0
        %v1191 = vadd.f32 0.0, %v1190
        %v1192 = vpop.f32.mrb[0].mxu0
        %v1193 = vadd.f32 0.0, %v1192
        %1194 = vmatprep.mubr.bf16.mxu0 0
        %1195 = vmatmul.mubr.bf16.gmra.mrb[0].mxu0 %v1063
        %v1196 = vpop.f32.mrb[0].mxu0
        %v1197 = vadd.f32 0.0, %v1196
        %v1198 = vpop.f32.mrb[0].mxu0
        %v1199 = vadd.f32 0.0, %v1198
        %v1200 = vpop.f32.mrb[0].mxu0
        %v1201 = vadd.f32 0.0, %v1200
        %v1202 = vpop.f32.mrb[0].mxu0
        %v1203 = vadd.f32 0.0, %v1202
        %1204 = vmatprep.mubr.bf16.mxu0 0
        %1205 = vmatmul.mubr.bf16.gmra.mrb[0].mxu0 %v1066
        %v1206 = vpop.f32.mrb[0].mxu0
        %v1207 = vadd.f32 0.0, %v1206
        %v1208 = vpop.f32.mrb[0].mxu0
        %v1209 = vadd.f32 0.0, %v1208
        %v1210 = vpop.f32.mrb[0].mxu0
        %v1211 = vadd.f32 0.0, %v1210
        %v1212 = vpop.f32.mrb[0].mxu0
        %v1213 = vadd.f32 0.0, %v1212
        %1214 = vmatprep.mubr.bf16.mxu0 0
        %1215 = vmatmul.mubr.bf16.gmra.mrb[0].mxu0 %v1069
        %v1216 = vpop.f32.mrb[0].mxu0
        %v1217 = vadd.f32 0.0, %v1216
        %v1218 = vpop.f32.mrb[0].mxu0
        %v1219 = vadd.f32 0.0, %v1218
        %v1220 = vpop.f32.mrb[0].mxu0
        %v1221 = vadd.f32 0.0, %v1220
        %v1222 = vpop.f32.mrb[0].mxu0
        %v1223 = vadd.f32 0.0, %v1222
        %1224 = vmatprep.mubr.bf16.mxu0 0
        %1225 = vmatmul.mubr.bf16.gmra.mrb[0].mxu0 %v1072
        %v1226 = vpop.f32.mrb[0].mxu0
        %v1227 = vadd.f32 0.0, %v1226
        %v1228 = vpop.f32.mrb[0].mxu0
        %v1229 = vadd.f32 0.0, %v1228
        %v1230 = vpop.f32.mrb[0].mxu0
        %v1231 = vadd.f32 0.0, %v1230
        %v1232 = vpop.f32.mrb[0].mxu0
        %v1233 = vadd.f32 0.0, %v1232
        %1234 = vdwg.mxu0
        %v1235 = vmax.f32 %v1157, %v1159
        %1236 = vmax.xlane.f32.xlu0 %v1235
        %v1237 = vpop.xlane.xlu0 %1236
        %v1238 = vmax.f32 %v1161, %v1163
        %1239 = vmax.xlane.f32.xlu0 %v1238
        %v1240 = vpop.xlane.xlu0 %1239
        %v1241 = vmax.f32 %v1167, %v1169
        %1242 = vmax.xlane.f32.xlu0 %v1241
        %v1243 = vpop.xlane.xlu0 %1242
        %v1244 = vmax.f32 %v1171, %v1173
        %1245 = vmax.xlane.f32.xlu0 %v1244
        %v1246 = vpop.xlane.xlu0 %1245
        %v1247 = vmax.f32 %v1177, %v1179
        %1248 = vmax.xlane.f32.xlu0 %v1247
        %v1249 = vpop.xlane.xlu0 %1248
        %v1250 = vmax.f32 %v1181, %v1183
        %1251 = vmax.xlane.f32.xlu0 %v1250
        %v1252 = vpop.xlane.xlu0 %1251
        %v1253 = vmax.f32 %v1187, %v1189
        %1254 = vmax.xlane.f32.xlu0 %v1253
        %v1255 = vpop.xlane.xlu0 %1254
        %v1256 = vmax.f32 %v1191, %v1193
        %1257 = vmax.xlane.f32.xlu0 %v1256
        %v1258 = vpop.xlane.xlu0 %1257
        %v1259 = vmax.f32 %v1197, %v1199
        %1260 = vmax.xlane.f32.xlu0 %v1259
        %v1261 = vpop.xlane.xlu0 %1260
        %v1262 = vmax.f32 %v1201, %v1203
        %1263 = vmax.xlane.f32.xlu0 %v1262
        %v1264 = vpop.xlane.xlu0 %1263
        %v1265 = vmax.f32 %v1207, %v1209
        %1266 = vmax.xlane.f32.xlu0 %v1265
        %v1267 = vpop.xlane.xlu0 %1266
        %v1268 = vmax.f32 %v1211, %v1213
        %1269 = vmax.xlane.f32.xlu0 %v1268
        %v1270 = vpop.xlane.xlu0 %1269
        %v1271 = vmax.f32 %v1217, %v1219
        %1272 = vmax.xlane.f32.xlu0 %v1271
        %v1273 = vpop.xlane.xlu0 %1272
        %v1274 = vmax.f32 %v1221, %v1223
        %1275 = vmax.xlane.f32.xlu0 %v1274
        %v1276 = vpop.xlane.xlu0 %1275
        %v1277 = vmax.f32 %v1227, %v1229
        %1278 = vmax.xlane.f32.xlu0 %v1277
        %v1279 = vpop.xlane.xlu0 %1278
        %v1280 = vmax.f32 %v1231, %v1233
        %1281 = vmax.xlane.f32.xlu0 %v1280
        %v1282 = vpop.xlane.xlu0 %1281
        %v1283 = vsub.f32 %v1157, %v1237
        %v1284 = vsub.f32 %v1159, %v1237
        %v1285 = vsub.f32 %v1161, %v1240
        %v1286 = vsub.f32 %v1163, %v1240
        %v1287 = vsub.f32 %v1167, %v1243
        %v1288 = vsub.f32 %v1169, %v1243
        %v1289 = vsub.f32 %v1171, %v1246
        %v1290 = vsub.f32 %v1173, %v1246
        %v1291 = vsub.f32 %v1177, %v1249
        %v1292 = vsub.f32 %v1179, %v1249
        %v1293 = vsub.f32 %v1181, %v1252
        %v1294 = vsub.f32 %v1183, %v1252
        %v1295 = vsub.f32 %v1187, %v1255
        %v1296 = vsub.f32 %v1189, %v1255
        %v1297 = vsub.f32 %v1191, %v1258
        %v1298 = vsub.f32 %v1193, %v1258
        %v1299 = vsub.f32 %v1197, %v1261
        %v1300 = vsub.f32 %v1199, %v1261
        %v1301 = vsub.f32 %v1201, %v1264
        %v1302 = vsub.f32 %v1203, %v1264
        %v1303 = vsub.f32 %v1207, %v1267
        %v1304 = vsub.f32 %v1209, %v1267
        %v1305 = vsub.f32 %v1211, %v1270
        %v1306 = vsub.f32 %v1213, %v1270
        %v1307 = vsub.f32 %v1217, %v1273
        %v1308 = vsub.f32 %v1219, %v1273
        %v1309 = vsub.f32 %v1221, %v1276
        %v1310 = vsub.f32 %v1223, %v1276
        %v1311 = vsub.f32 %v1227, %v1279
        %v1312 = vsub.f32 %v1229, %v1279
        %v1313 = vsub.f32 %v1231, %v1282
        %v1314 = vsub.f32 %v1233, %v1282
        %v1315 = vmul.f32 %v1283, 1.442695
        %v1316 = vpow.pop %v1315
        %v1317 = vmul.f32 %v1284, 1.442695
        %v1318 = vpow.pop %v1317
        %v1319 = vmul.f32 %v1285, 1.442695
        %v1320 = vpow.pop %v1319
        %v1321 = vmul.f32 %v1286, 1.442695
        %v1322 = vpow.pop %v1321
        %v1323 = vmul.f32 %v1287, 1.442695
        %v1324 = vpow.pop %v1323
        %v1325 = vmul.f32 %v1288, 1.442695
        %v1326 = vpow.pop %v1325
        %v1327 = vmul.f32 %v1289, 1.442695
        %v1328 = vpow.pop %v1327
        %v1329 = vmul.f32 %v1290, 1.442695
        %v1330 = vpow.pop %v1329
        %v1331 = vmul.f32 %v1291, 1.442695
        %v1332 = vpow.pop %v1331
        %v1333 = vmul.f32 %v1292, 1.442695
        %v1334 = vpow.pop %v1333
        %v1335 = vmul.f32 %v1293, 1.442695
        %v1336 = vpow.pop %v1335
        %v1337 = vmul.f32 %v1294, 1.442695
        %v1338 = vpow.pop %v1337
        %v1339 = vmul.f32 %v1295, 1.442695
        %v1340 = vpow.pop %v1339
        %v1341 = vmul.f32 %v1296, 1.442695
        %v1342 = vpow.pop %v1341
        %v1343 = vmul.f32 %v1297, 1.442695
        %v1344 = vpow.pop %v1343
        %v1345 = vmul.f32 %v1298, 1.442695
        %v1346 = vpow.pop %v1345
        %v1347 = vmul.f32 %v1299, 1.442695
        %v1348 = vpow.pop %v1347
        %v1349 = vmul.f32 %v1300, 1.442695
        %v1350 = vpow.pop %v1349
        %v1351 = vmul.f32 %v1301, 1.442695
        %v1352 = vpow.pop %v1351
        %v1353 = vmul.f32 %v1302, 1.442695
        %v1354 = vpow.pop %v1353
        %v1355 = vmul.f32 %v1303, 1.442695
        %v1356 = vpow.pop %v1355
        %v1357 = vmul.f32 %v1304, 1.442695
        %v1358 = vpow.pop %v1357
        %v1359 = vmul.f32 %v1305, 1.442695
        %v1360 = vpow.pop %v1359
        %v1361 = vmul.f32 %v1306, 1.442695
        %v1362 = vpow.pop %v1361
        %v1363 = vmul.f32 %v1307, 1.442695
        %v1364 = vpow.pop %v1363
        %v1365 = vmul.f32 %v1308, 1.442695
        %v1366 = vpow.pop %v1365
        %v1367 = vmul.f32 %v1309, 1.442695
        %v1368 = vpow.pop %v1367
        %v1369 = vmul.f32 %v1310, 1.442695
        %v1370 = vpow.pop %v1369
        %v1371 = vmul.f32 %v1311, 1.442695
        %v1372 = vpow.pop %v1371
        %v1373 = vmul.f32 %v1312, 1.442695
        %v1374 = vpow.pop %v1373
        %v1375 = vmul.f32 %v1313, 1.442695
        %v1376 = vpow.pop %v1375
        %v1377 = vmul.f32 %v1314, 1.442695
        %v1378 = vpow.pop %v1377
        %v1379 = vadd.f32 %v1316, %v1318
        %1380 = vadd.xlane.f32.xlu0 %v1379
        %v1381 = vpop.xlane.xlu0 %1380
        %v1382 = vadd.f32 %v1320, %v1322
        %1383 = vadd.xlane.f32.xlu0 %v1382
        %v1384 = vpop.xlane.xlu0 %1383
        %v1385 = vadd.f32 %v1324, %v1326
        %1386 = vadd.xlane.f32.xlu0 %v1385
        %v1387 = vpop.xlane.xlu0 %1386
        %v1388 = vadd.f32 %v1328, %v1330
        %1389 = vadd.xlane.f32.xlu0 %v1388
        %v1390 = vpop.xlane.xlu0 %1389
        %v1391 = vadd.f32 %v1332, %v1334
        %1392 = vadd.xlane.f32.xlu0 %v1391
        %v1393 = vpop.xlane.xlu0 %1392
        %v1394 = vadd.f32 %v1336, %v1338
        %1395 = vadd.xlane.f32.xlu0 %v1394
        %v1396 = vpop.xlane.xlu0 %1395
        %v1397 = vadd.f32 %v1340, %v1342
        %1398 = vadd.xlane.f32.xlu0 %v1397
        %v1399 = vpop.xlane.xlu0 %1398
        %v1400 = vadd.f32 %v1344, %v1346
        %1401 = vadd.xlane.f32.xlu0 %v1400
        %v1402 = vpop.xlane.xlu0 %1401
        %v1403 = vadd.f32 %v1348, %v1350
        %1404 = vadd.xlane.f32.xlu0 %v1403
        %v1405 = vpop.xlane.xlu0 %1404
        %v1406 = vadd.f32 %v1352, %v1354
        %1407 = vadd.xlane.f32.xlu0 %v1406
        %v1408 = vpop.xlane.xlu0 %1407
        %v1409 = vadd.f32 %v1356, %v1358
        %1410 = vadd.xlane.f32.xlu0 %v1409
        %v1411 = vpop.xlane.xlu0 %1410
        %v1412 = vadd.f32 %v1360, %v1362
        %1413 = vadd.xlane.f32.xlu0 %v1412
        %v1414 = vpop.xlane.xlu0 %1413
        %v1415 = vadd.f32 %v1364, %v1366
        %1416 = vadd.xlane.f32.xlu0 %v1415
        %v1417 = vpop.xlane.xlu0 %1416
        %v1418 = vadd.f32 %v1368, %v1370
        %1419 = vadd.xlane.f32.xlu0 %v1418
        %v1420 = vpop.xlane.xlu0 %1419
        %v1421 = vadd.f32 %v1372, %v1374
        %1422 = vadd.xlane.f32.xlu0 %v1421
        %v1423 = vpop.xlane.xlu0 %1422
        %v1424 = vadd.f32 %v1376, %v1378
        %1425 = vadd.xlane.f32.xlu0 %v1424
        %v1426 = vpop.xlane.xlu0 %1425
        %v1427 = vpack.c.bf16 %v1320, %v1316
        %v1428 = vpack.c.bf16 %v1322, %v1318
        %v1429 = vpack.c.bf16 %v1328, %v1324
        %v1430 = vpack.c.bf16 %v1330, %v1326
        %v1431 = vpack.c.bf16 %v1336, %v1332
        %v1432 = vpack.c.bf16 %v1338, %v1334
        %v1433 = vpack.c.bf16 %v1344, %v1340
        %v1434 = vpack.c.bf16 %v1346, %v1342
        %v1435 = vpack.c.bf16 %v1352, %v1348
        %v1436 = vpack.c.bf16 %v1354, %v1350
        %v1437 = vpack.c.bf16 %v1360, %v1356
        %v1438 = vpack.c.bf16 %v1362, %v1358
        %v1439 = vpack.c.bf16 %v1368, %v1364
        %v1440 = vpack.c.bf16 %v1370, %v1366
        %v1441 = vpack.c.bf16 %v1376, %v1372
        %v1442 = vpack.c.bf16 %v1378, %v1374
        %v1475 = vunpack.c.l.b16 %v842
        %v1476 = vunpack.c.l.b16 %v843
        %v1477 = vunpack.c.l.b16 %v844
        %v1478 = vunpack.c.l.b16 %v845
        %v1479 = vunpack.c.l.b16 %v846
        %v1480 = vunpack.c.l.b16 %v847
        %v1481 = vunpack.c.l.b16 %v848
        %v1482 = vunpack.c.l.b16 %v849
        %v1483 = vunpack.c.l.b16 %v850
        %v1484 = vunpack.c.l.b16 %v851
        %v1485 = vunpack.c.l.b16 %v852
        %v1486 = vunpack.c.l.b16 %v853
        %v1487 = vunpack.c.l.b16 %v854
        %v1488 = vunpack.c.l.b16 %v855
        %v1489 = vunpack.c.l.b16 %v856
        %v1490 = vunpack.c.l.b16 %v857
        %v1491 = vunpack.c.l.b16 %v858
        %v1492 = vunpack.c.l.b16 %v859
        %v1493 = vunpack.c.l.b16 %v860
        %v1494 = vunpack.c.l.b16 %v861
        %v1495 = vunpack.c.l.b16 %v862
        %v1496 = vunpack.c.l.b16 %v863
        %v1497 = vunpack.c.l.b16 %v864
        %v1498 = vunpack.c.l.b16 %v865
        %v1499 = vunpack.c.l.b16 %v866
        %v1500 = vunpack.c.l.b16 %v867
        %v1501 = vunpack.c.l.b16 %v868
        %v1502 = vunpack.c.l.b16 %v869
        %v1503 = vunpack.c.l.b16 %v870
        %v1504 = vunpack.c.l.b16 %v871
        %v1505 = vunpack.c.l.b16 %v872
        %v1506 = vunpack.c.l.b16 %v873
        %v1507 = vpack.c.b16 %v1476, %v1475
        %v1508 = vpack.c.b16 %v1478, %v1477
        %v1509 = vpack.c.b16 %v1480, %v1479
        %v1510 = vpack.c.b16 %v1482, %v1481
        %v1511 = vpack.c.b16 %v1484, %v1483
        %v1512 = vpack.c.b16 %v1486, %v1485
        %v1513 = vpack.c.b16 %v1488, %v1487
        %v1514 = vpack.c.b16 %v1490, %v1489
        %v1515 = vpack.c.b16 %v1492, %v1491
        %v1516 = vpack.c.b16 %v1494, %v1493
        %v1517 = vpack.c.b16 %v1496, %v1495
        %v1518 = vpack.c.b16 %v1498, %v1497
        %v1519 = vpack.c.b16 %v1500, %v1499
        %v1520 = vpack.c.b16 %v1502, %v1501
        %v1521 = vpack.c.b16 %v1504, %v1503
        %v1522 = vpack.c.b16 %v1506, %v1505
        %1539 = vmatprep.subr.bf16.mxu0 0
        %1540 = vmatpush1.bf16.msra.mxu0 %v1507
        %1541 = vmatprep.subr.bf16.mxu0 0
        %1542 = vmatpush1.bf16.msra.mxu0 %v1508
        %1543 = vmatprep.subr.bf16.mxu0 0
        %1544 = vmatpush1.bf16.msra.mxu0 %v1509
        %1545 = vmatprep.subr.bf16.mxu0 0
        %1546 = vmatpush1.bf16.msra.mxu0 %v1510
        %1547 = vmatprep.subr.bf16.mxu0 0
        %1548 = vmatpush1.bf16.msra.mxu0 %v1511
        %1549 = vmatprep.subr.bf16.mxu0 0
        %1550 = vmatpush1.bf16.msra.mxu0 %v1512
        %1551 = vmatprep.subr.bf16.mxu0 0
        %1552 = vmatpush1.bf16.msra.mxu0 %v1513
        %1553 = vmatprep.subr.bf16.mxu0 0
        %1554 = vmatpush1.bf16.msra.mxu0 %v1514
        %1555 = vmatprep.subr.bf16.mxu0 0
        %1556 = vmatpush1.bf16.msra.mxu0 %v1515
        %1557 = vmatprep.subr.bf16.mxu0 0
        %1558 = vmatpush1.bf16.msra.mxu0 %v1516
        %1559 = vmatprep.subr.bf16.mxu0 0
        %1560 = vmatpush1.bf16.msra.mxu0 %v1517
        %1561 = vmatprep.subr.bf16.mxu0 0
        %1562 = vmatpush1.bf16.msra.mxu0 %v1518
        %1563 = vmatprep.subr.bf16.mxu0 0
        %1564 = vmatpush1.bf16.msra.mxu0 %v1519
        %1565 = vmatprep.subr.bf16.mxu0 0
        %1566 = vmatpush1.bf16.msra.mxu0 %v1520
        %1567 = vmatprep.subr.bf16.mxu0 0
        %1568 = vmatpush1.bf16.msra.mxu0 %v1521
        %1569 = vmatprep.subr.bf16.mxu0 0
        %1570 = vmatpush1.bf16.msra.mxu0 %v1522
        %1571 = vmatprep.mubr.bf16.mxu0 %v1428
        %1572 = vmatmul.mubr.bf16.gmra.mrb[0].mxu0 %v1427
        %v1573 = vpop.f32.mrb[0].mxu0
        %v1574 = vadd.f32 0.0, %v1573
        %v1575 = vpop.f32.mrb[0].mxu0
        %v1576 = vpop.f32.mrb[0].mxu0
        %v1577 = vadd.f32 0.0, %v1576
        %v1578 = vpop.f32.mrb[0].mxu0
        %1579 = vmatprep.mubr.bf16.mxu0 %v1430
        %1580 = vmatmul.mubr.bf16.gmra.mrb[0].mxu0 %v1429
        %v1581 = vpop.f32.mrb[0].mxu0
        %v1582 = vadd.f32 0.0, %v1581
        %v1583 = vpop.f32.mrb[0].mxu0
        %v1584 = vpop.f32.mrb[0].mxu0
        %v1585 = vadd.f32 0.0, %v1584
        %v1586 = vpop.f32.mrb[0].mxu0
        %1587 = vmatprep.mubr.bf16.mxu0 %v1432
        %1588 = vmatmul.mubr.bf16.gmra.mrb[0].mxu0 %v1431
        %v1589 = vpop.f32.mrb[0].mxu0
        %v1590 = vadd.f32 0.0, %v1589
        %v1591 = vpop.f32.mrb[0].mxu0
        %v1592 = vpop.f32.mrb[0].mxu0
        %v1593 = vadd.f32 0.0, %v1592
        %v1594 = vpop.f32.mrb[0].mxu0
        %1595 = vmatprep.mubr.bf16.mxu0 %v1434
        %1596 = vmatmul.mubr.bf16.gmra.mrb[0].mxu0 %v1433
        %v1597 = vpop.f32.mrb[0].mxu0
        %v1598 = vadd.f32 0.0, %v1597
        %v1599 = vpop.f32.mrb[0].mxu0
        %v1600 = vpop.f32.mrb[0].mxu0
        %v1601 = vadd.f32 0.0, %v1600
        %v1602 = vpop.f32.mrb[0].mxu0
        %1603 = vmatprep.mubr.bf16.mxu0 %v1436
        %1604 = vmatmul.mubr.bf16.gmra.mrb[0].mxu0 %v1435
        %v1605 = vpop.f32.mrb[0].mxu0
        %v1606 = vadd.f32 0.0, %v1605
        %v1607 = vpop.f32.mrb[0].mxu0
        %v1608 = vpop.f32.mrb[0].mxu0
        %v1609 = vadd.f32 0.0, %v1608
        %v1610 = vpop.f32.mrb[0].mxu0
        %1611 = vmatprep.mubr.bf16.mxu0 %v1438
        %1612 = vmatmul.mubr.bf16.gmra.mrb[0].mxu0 %v1437
        %v1613 = vpop.f32.mrb[0].mxu0
        %v1614 = vadd.f32 0.0, %v1613
        %v1615 = vpop.f32.mrb[0].mxu0
        %v1616 = vpop.f32.mrb[0].mxu0
        %v1617 = vadd.f32 0.0, %v1616
        %v1618 = vpop.f32.mrb[0].mxu0
        %1619 = vmatprep.mubr.bf16.mxu0 %v1440
        %1620 = vmatmul.mubr.bf16.gmra.mrb[0].mxu0 %v1439
        %v1621 = vpop.f32.mrb[0].mxu0
        %v1622 = vadd.f32 0.0, %v1621
        %v1623 = vpop.f32.mrb[0].mxu0
        %v1624 = vpop.f32.mrb[0].mxu0
        %v1625 = vadd.f32 0.0, %v1624
        %v1626 = vpop.f32.mrb[0].mxu0
        %1627 = vmatprep.mubr.bf16.mxu0 %v1442
        %1628 = vmatmul.mubr.bf16.gmra.mrb[0].mxu0 %v1441
        %v1629 = vpop.f32.mrb[0].mxu0
        %v1630 = vadd.f32 0.0, %v1629
        %v1631 = vpop.f32.mrb[0].mxu0
        %v1632 = vpop.f32.mrb[0].mxu0
        %v1633 = vadd.f32 0.0, %v1632
        %v1634 = vpop.f32.mrb[0].mxu0
        %1635 = vdwg.mxu0
        %v1636 = vrcp.pop %v1381
        %v1637 = vrcp.pop %v1384
        %v1638 = vrcp.pop %v1387
        %v1639 = vrcp.pop %v1390
        %v1640 = vrcp.pop %v1393
        %v1641 = vrcp.pop %v1396
        %v1642 = vrcp.pop %v1399
        %v1643 = vrcp.pop %v1402
        %v1644 = vrcp.pop %v1405
        %v1645 = vrcp.pop %v1408
        %v1646 = vrcp.pop %v1411
        %v1647 = vrcp.pop %v1414
        %v1648 = vrcp.pop %v1417
        %v1649 = vrcp.pop %v1420
        %v1650 = vrcp.pop %v1423
        %v1651 = vrcp.pop %v1426
        %v1652 = vmul.f32 %v1574, %v1636
        %v1653 = vmul.f32 %v1577, %v1637
        %v1654 = vmul.f32 %v1582, %v1638
        %v1655 = vmul.f32 %v1585, %v1639
        %v1656 = vmul.f32 %v1590, %v1640
        %v1657 = vmul.f32 %v1593, %v1641
        %v1658 = vmul.f32 %v1598, %v1642
        %v1659 = vmul.f32 %v1601, %v1643
        %v1660 = vmul.f32 %v1606, %v1644
        %v1661 = vmul.f32 %v1609, %v1645
        %v1662 = vmul.f32 %v1614, %v1646
        %v1663 = vmul.f32 %v1617, %v1647
        %v1664 = vmul.f32 %v1622, %v1648
        %v1665 = vmul.f32 %v1625, %v1649
        %v1666 = vmul.f32 %v1630, %v1650
        %v1667 = vmul.f32 %v1633, %v1651
        %v1668 = vpack.c.bf16 %v1653, %v1652
        %v1669 = vpack.c.bf16 %v1655, %v1654
        %v1670 = vpack.c.bf16 %v1657, %v1656
        %v1671 = vpack.c.bf16 %v1659, %v1658
        %v1672 = vpack.c.bf16 %v1661, %v1660
        %v1673 = vpack.c.bf16 %v1663, %v1662
        %v1674 = vpack.c.bf16 %v1665, %v1664
        %v1675 = vpack.c.bf16 %v1667, %v1666
        %v1680 = vunpack.c.l.b16 %v890
        %v1681 = vunpack.c.l.b16 %v891
        %v1682 = vunpack.c.l.b16 %v892
        %v1683 = vunpack.c.l.b16 %v893
        %v1684 = vpack.c.b16 %v1681, %v1680
        %v1685 = vpack.c.b16 %v1683, %v1682
        %v1689 = vsel %vm1049, %v1668, 0
        %v1692 = vsel %vm1049, %v1669, 0
        %v1695 = vsel %vm1049, %v1670, 0
        %v1698 = vsel %vm1049, %v1671, 0
        %v1701 = vsel %vm1049, %v1672, 0
        %v1704 = vsel %vm1049, %v1673, 0
        %v1707 = vsel %vm1049, %v1674, 0
        %v1710 = vsel %vm1049, %v1675, 0
        %1712 = vmatprep.subr.bf16.mxu0 0
        %1713 = vmatpush1.bf16.msra.mxu0 %v1684
        %1714 = vmatprep.subr.bf16.mxu0 0
        %1715 = vmatpush1.bf16.msra.mxu0 %v1685
        %1716 = vmatprep.subr.bf16.mxu0 0
        %1717 = vmatpush1.bf16.msra.mxu0 0
        %1718 = vmatprep.subr.bf16.mxu0 0
        %1719 = vmatpush1.bf16.msra.mxu0 0
        %1720 = vmatprep.subr.bf16.mxu0 0
        %1721 = vmatpush1.bf16.msra.mxu0 0
        %1722 = vmatprep.subr.bf16.mxu0 0
        %1723 = vmatpush1.bf16.msra.mxu0 0
        %1724 = vmatprep.subr.bf16.mxu0 0
        %1725 = vmatpush1.bf16.msra.mxu0 0
        %1726 = vmatprep.subr.bf16.mxu0 0
        %1727 = vmatpush1.bf16.msra.mxu0 0
        %1728 = vmatprep.subr.bf16.mxu0 0
        %1729 = vmatpush1.bf16.msra.mxu0 0
        %1730 = vmatprep.subr.bf16.mxu0 0
        %1731 = vmatpush1.bf16.msra.mxu0 0
        %1732 = vmatprep.subr.bf16.mxu0 0
        %1733 = vmatpush1.bf16.msra.mxu0 0
        %1734 = vmatprep.subr.bf16.mxu0 0
        %1735 = vmatpush1.bf16.msra.mxu0 0
        %1736 = vmatprep.subr.bf16.mxu0 0
        %1737 = vmatpush1.bf16.msra.mxu0 0
        %1738 = vmatprep.subr.bf16.mxu0 0
        %1739 = vmatpush1.bf16.msra.mxu0 0
        %1740 = vmatprep.subr.bf16.mxu0 0
        %1741 = vmatpush1.bf16.msra.mxu0 0
        %1742 = vmatprep.subr.bf16.mxu0 0
        %1743 = vmatpush1.bf16.msra.mxu0 0
        %1744 = vmatprep.mubr.bf16.mxu0 0
        %1745 = vmatmul.mubr.bf16.gmra.mrb[0].mxu0 %v1689
        %v1746 = vpop.f32.mrb[0].mxu0
        %v1747 = vadd.f32 0.0, %v1746
        %v1748 = vpop.f32.mrb[0].mxu0
        %v1749 = vpop.f32.mrb[0].mxu0
        %v1750 = vadd.f32 0.0, %v1749
        %v1751 = vpop.f32.mrb[0].mxu0
        %1752 = vmatprep.mubr.bf16.mxu0 0
        %1753 = vmatmul.mubr.bf16.gmra.mrb[0].mxu0 %v1692
        %v1754 = vpop.f32.mrb[0].mxu0
        %v1755 = vadd.f32 0.0, %v1754
        %v1756 = vpop.f32.mrb[0].mxu0
        %v1757 = vpop.f32.mrb[0].mxu0
        %v1758 = vadd.f32 0.0, %v1757
        %v1759 = vpop.f32.mrb[0].mxu0
        %1760 = vmatprep.mubr.bf16.mxu0 0
        %1761 = vmatmul.mubr.bf16.gmra.mrb[0].mxu0 %v1695
        %v1762 = vpop.f32.mrb[0].mxu0
        %v1763 = vadd.f32 0.0, %v1762
        %v1764 = vpop.f32.mrb[0].mxu0
        %v1765 = vpop.f32.mrb[0].mxu0
        %v1766 = vadd.f32 0.0, %v1765
        %v1767 = vpop.f32.mrb[0].mxu0
        %1768 = vmatprep.mubr.bf16.mxu0 0
        %1769 = vmatmul.mubr.bf16.gmra.mrb[0].mxu0 %v1698
        %v1770 = vpop.f32.mrb[0].mxu0
        %v1771 = vadd.f32 0.0, %v1770
        %v1772 = vpop.f32.mrb[0].mxu0
        %v1773 = vpop.f32.mrb[0].mxu0
        %v1774 = vadd.f32 0.0, %v1773
        %v1775 = vpop.f32.mrb[0].mxu0
        %1776 = vmatprep.mubr.bf16.mxu0 0
        %1777 = vmatmul.mubr.bf16.gmra.mrb[0].mxu0 %v1701
        %v1778 = vpop.f32.mrb[0].mxu0
        %v1779 = vadd.f32 0.0, %v1778
        %v1780 = vpop.f32.mrb[0].mxu0
        %v1781 = vpop.f32.mrb[0].mxu0
        %v1782 = vadd.f32 0.0, %v1781
        %v1783 = vpop.f32.mrb[0].mxu0
        %1784 = vmatprep.mubr.bf16.mxu0 0
        %1785 = vmatmul.mubr.bf16.gmra.mrb[0].mxu0 %v1704
        %v1786 = vpop.f32.mrb[0].mxu0
        %v1787 = vadd.f32 0.0, %v1786
        %v1788 = vpop.f32.mrb[0].mxu0
        %v1789 = vpop.f32.mrb[0].mxu0
        %v1790 = vadd.f32 0.0, %v1789
        %v1791 = vpop.f32.mrb[0].mxu0
        %1792 = vmatprep.mubr.bf16.mxu0 0
        %1793 = vmatmul.mubr.bf16.gmra.mrb[0].mxu0 %v1707
        %v1794 = vpop.f32.mrb[0].mxu0
        %v1795 = vadd.f32 0.0, %v1794
        %v1796 = vpop.f32.mrb[0].mxu0
        %v1797 = vpop.f32.mrb[0].mxu0
        %v1798 = vadd.f32 0.0, %v1797
        %v1799 = vpop.f32.mrb[0].mxu0
        %1800 = vmatprep.mubr.bf16.mxu0 0
        %1801 = vmatmul.mubr.bf16.gmra.mrb[0].mxu0 %v1710
        %v1802 = vpop.f32.mrb[0].mxu0
        %v1803 = vadd.f32 0.0, %v1802
        %v1804 = vpop.f32.mrb[0].mxu0
        %v1805 = vpop.f32.mrb[0].mxu0
        %v1806 = vadd.f32 0.0, %v1805
        %v1807 = vpop.f32.mrb[0].mxu0
        %1808 = vdwg.mxu0
        %v1809 = vadd.f32 %v913, %v1747
        %v1810 = vadd.f32 %v914, %v1750
        %v1811 = vadd.f32 %v915, %v1755
        %v1812 = vadd.f32 %v916, %v1758
        %v1813 = vadd.f32 %v917, %v1763
        %v1814 = vadd.f32 %v918, %v1766
        %v1815 = vadd.f32 %v919, %v1771
        %v1816 = vadd.f32 %v920, %v1774
        %v1817 = vadd.f32 %v921, %v1779
        %v1818 = vadd.f32 %v922, %v1782
        %v1819 = vadd.f32 %v923, %v1787
        %v1820 = vadd.f32 %v924, %v1790
        %v1821 = vadd.f32 %v925, %v1795
        %v1822 = vadd.f32 %v926, %v1798
        %v1823 = vadd.f32 %v927, %v1803
        %v1824 = vadd.f32 %v928, %v1806
        %1825 = vrot.lane.b32.xlu0 %v961, 96
        %v1826 = vpop.permute.xlu0 %1825
        %1827 = vrot.lane.b32.xlu0 %v962, 96
        %v1828 = vpop.permute.xlu0 %1827
        %1829 = vrot.lane.b32.xlu0 %v963, 96
        %v1830 = vpop.permute.xlu0 %1829
        %1831 = vrot.lane.b32.xlu0 %v964, 96
        %v1832 = vpop.permute.xlu0 %1831
        %1833 = vrot.lane.b32.xlu0 %v965, 96
        %v1834 = vpop.permute.xlu0 %1833
        %1835 = vrot.lane.b32.xlu0 %v966, 96
        %v1836 = vpop.permute.xlu0 %1835
        %1837 = vrot.lane.b32.xlu0 %v967, 96
        %v1838 = vpop.permute.xlu0 %1837
        %1839 = vrot.lane.b32.xlu0 %v968, 96
        %v1840 = vpop.permute.xlu0 %1839
        %1841 = vrot.lane.b32.xlu0 %v1033, 96
        %v1842 = vpop.permute.xlu0 %1841
        %1843 = vrot.lane.b32.xlu0 %v1034, 96
        %v1844 = vpop.permute.xlu0 %1843
        %1845 = vrot.lane.b32.xlu0 %v1035, 96
        %v1846 = vpop.permute.xlu0 %1845
        %1847 = vrot.lane.b32.xlu0 %v1036, 96
        %v1848 = vpop.permute.xlu0 %1847
        %1849 = vrot.lane.b32.xlu0 %v1037, 96
        %v1850 = vpop.permute.xlu0 %1849
        %1851 = vrot.lane.b32.xlu0 %v1038, 96
        %v1852 = vpop.permute.xlu0 %1851
        %1853 = vrot.lane.b32.xlu0 %v1039, 96
        %v1854 = vpop.permute.xlu0 %1853
        %1855 = vrot.lane.b32.xlu0 %v1040, 96
        %v1856 = vpop.permute.xlu0 %1855
        %1857 = vrot.lane.b32.xlu0 %v1041, 96
        %v1858 = vpop.permute.xlu0 %1857
        %1859 = vrot.lane.b32.xlu0 %v1042, 96
        %v1860 = vpop.permute.xlu0 %1859
        %1861 = vrot.lane.b32.xlu0 %v1043, 96
        %v1862 = vpop.permute.xlu0 %1861
        %1863 = vrot.lane.b32.xlu0 %v1044, 96
        %v1864 = vpop.permute.xlu0 %1863
        %1865 = vrot.lane.b32.xlu0 %v1045, 96
        %v1866 = vpop.permute.xlu0 %1865
        %1867 = vrot.lane.b32.xlu0 %v1046, 96
        %v1868 = vpop.permute.xlu0 %1867
        %1869 = vrot.lane.b32.xlu0 %v1047, 96
        %v1870 = vpop.permute.xlu0 %1869
        %1871 = vrot.lane.b32.xlu0 %v1048, 96
        %v1872 = vpop.permute.xlu0 %1871
        %v1874 = vsel %vm1049, %v1826, 0
        %v1877 = vsel %vm1049, %v1828, 0
        %v1880 = vsel %vm1049, %v1830, 0
        %v1883 = vsel %vm1049, %v1832, 0
        %v1886 = vsel %vm1049, %v1834, 0
        %v1889 = vsel %vm1049, %v1836, 0
        %v1892 = vsel %vm1049, %v1838, 0
        %v1895 = vsel %vm1049, %v1840, 0
        %v1898 = vsel %vm1049, %v1842, 0
        %v1901 = vsel %vm1049, %v1844, 0
        %v1904 = vsel %vm1049, %v1846, 0
        %v1907 = vsel %vm1049, %v1848, 0
        %v1910 = vsel %vm1049, %v1850, 0
        %v1913 = vsel %vm1049, %v1852, 0
        %v1916 = vsel %vm1049, %v1854, 0
        %v1919 = vsel %vm1049, %v1856, 0
        %v1922 = vsel %vm1049, %v1858, 0
        %v1925 = vsel %vm1049, %v1860, 0
        %v1928 = vsel %vm1049, %v1862, 0
        %v1931 = vsel %vm1049, %v1864, 0
        %v1934 = vsel %vm1049, %v1866, 0
        %v1937 = vsel %vm1049, %v1868, 0
        %v1940 = vsel %vm1049, %v1870, 0
        %v1943 = vsel %vm1049, %v1872, 0
        %1945 = vmatprep.subr.bf16.mxu0 0
        %1946 = vmatpush1.bf16.xpose.msra.mxu0 %v1898
        %1947 = vmatprep.subr.bf16.mxu0 0
        %1948 = vmatpush1.bf16.xpose.msra.mxu0 %v1901
        %1949 = vmatprep.subr.bf16.mxu0 0
        %1950 = vmatpush1.bf16.xpose.msra.mxu0 %v1904
        %1951 = vmatprep.subr.bf16.mxu0 0
        %1952 = vmatpush1.bf16.xpose.msra.mxu0 %v1907
        %1953 = vmatprep.subr.bf16.mxu0 0
        %1954 = vmatpush1.bf16.xpose.msra.mxu0 %v1910
        %1955 = vmatprep.subr.bf16.mxu0 0
        %1956 = vmatpush1.bf16.xpose.msra.mxu0 %v1913
        %1957 = vmatprep.subr.bf16.mxu0 0
        %1958 = vmatpush1.bf16.xpose.msra.mxu0 %v1916
        %1959 = vmatprep.subr.bf16.mxu0 0
        %1960 = vmatpush1.bf16.xpose.msra.mxu0 %v1919
        %1961 = vmatprep.subr.bf16.mxu0 0
        %1962 = vmatpush1.bf16.xpose.msra.mxu0 %v1922
        %1963 = vmatprep.subr.bf16.mxu0 0
        %1964 = vmatpush1.bf16.xpose.msra.mxu0 %v1925
        %1965 = vmatprep.subr.bf16.mxu0 0
        %1966 = vmatpush1.bf16.xpose.msra.mxu0 %v1928
        %1967 = vmatprep.subr.bf16.mxu0 0
        %1968 = vmatpush1.bf16.xpose.msra.mxu0 %v1931
        %1969 = vmatprep.subr.bf16.mxu0 0
        %1970 = vmatpush1.bf16.xpose.msra.mxu0 %v1934
        %1971 = vmatprep.subr.bf16.mxu0 0
        %1972 = vmatpush1.bf16.xpose.msra.mxu0 %v1937
        %1973 = vmatprep.subr.bf16.mxu0 0
        %1974 = vmatpush1.bf16.xpose.msra.mxu0 %v1940
        %1975 = vmatprep.subr.bf16.mxu0 0
        %1976 = vmatpush1.bf16.xpose.msra.mxu0 %v1943
        %1977 = vmatprep.mubr.bf16.mxu0 0
        %1978 = vmatmul.mubr.bf16.gmra.mrb[0].mxu0 %v1874
        %v1979 = vpop.f32.mrb[0].mxu0
        %v1980 = vadd.f32 0.0, %v1979
        %v1981 = vpop.f32.mrb[0].mxu0
        %v1982 = vadd.f32 0.0, %v1981
        %v1983 = vpop.f32.mrb[0].mxu0
        %v1984 = vadd.f32 0.0, %v1983
        %v1985 = vpop.f32.mrb[0].mxu0
        %v1986 = vadd.f32 0.0, %v1985
        %1987 = vmatprep.mubr.bf16.mxu0 0
        %1988 = vmatmul.mubr.bf16.gmra.mrb[0].mxu0 %v1877
        %v1989 = vpop.f32.mrb[0].mxu0
        %v1990 = vadd.f32 0.0, %v1989
        %v1991 = vpop.f32.mrb[0].mxu0
        %v1992 = vadd.f32 0.0, %v1991
        %v1993 = vpop.f32.mrb[0].mxu0
        %v1994 = vadd.f32 0.0, %v1993
        %v1995 = vpop.f32.mrb[0].mxu0
        %v1996 = vadd.f32 0.0, %v1995
        %1997 = vmatprep.mubr.bf16.mxu0 0
        %1998 = vmatmul.mubr.bf16.gmra.mrb[0].mxu0 %v1880
        %v1999 = vpop.f32.mrb[0].mxu0
        %v2000 = vadd.f32 0.0, %v1999
        %v2001 = vpop.f32.mrb[0].mxu0
        %v2002 = vadd.f32 0.0, %v2001
        %v2003 = vpop.f32.mrb[0].mxu0
        %v2004 = vadd.f32 0.0, %v2003
        %v2005 = vpop.f32.mrb[0].mxu0
        %v2006 = vadd.f32 0.0, %v2005
        %2007 = vmatprep.mubr.bf16.mxu0 0
        %2008 = vmatmul.mubr.bf16.gmra.mrb[0].mxu0 %v1883
        %v2009 = vpop.f32.mrb[0].mxu0
        %v2010 = vadd.f32 0.0, %v2009
        %v2011 = vpop.f32.mrb[0].mxu0
        %v2012 = vadd.f32 0.0, %v2011
        %v2013 = vpop.f32.mrb[0].mxu0
        %v2014 = vadd.f32 0.0, %v2013
        %v2015 = vpop.f32.mrb[0].mxu0
        %v2016 = vadd.f32 0.0, %v2015
        %2017 = vmatprep.mubr.bf16.mxu0 0
        %2018 = vmatmul.mubr.bf16.gmra.mrb[0].mxu0 %v1886
        %v2019 = vpop.f32.mrb[0].mxu0
        %v2020 = vadd.f32 0.0, %v2019
        %v2021 = vpop.f32.mrb[0].mxu0
        %v2022 = vadd.f32 0.0, %v2021
        %v2023 = vpop.f32.mrb[0].mxu0
        %v2024 = vadd.f32 0.0, %v2023
        %v2025 = vpop.f32.mrb[0].mxu0
        %v2026 = vadd.f32 0.0, %v2025
        %2027 = vmatprep.mubr.bf16.mxu0 0
        %2028 = vmatmul.mubr.bf16.gmra.mrb[0].mxu0 %v1889
        %v2029 = vpop.f32.mrb[0].mxu0
        %v2030 = vadd.f32 0.0, %v2029
        %v2031 = vpop.f32.mrb[0].mxu0
        %v2032 = vadd.f32 0.0, %v2031
        %v2033 = vpop.f32.mrb[0].mxu0
        %v2034 = vadd.f32 0.0, %v2033
        %v2035 = vpop.f32.mrb[0].mxu0
        %v2036 = vadd.f32 0.0, %v2035
        %2037 = vmatprep.mubr.bf16.mxu0 0
        %2038 = vmatmul.mubr.bf16.gmra.mrb[0].mxu0 %v1892
        %v2039 = vpop.f32.mrb[0].mxu0
        %v2040 = vadd.f32 0.0, %v2039
        %v2041 = vpop.f32.mrb[0].mxu0
        %v2042 = vadd.f32 0.0, %v2041
        %v2043 = vpop.f32.mrb[0].mxu0
        %v2044 = vadd.f32 0.0, %v2043
        %v2045 = vpop.f32.mrb[0].mxu0
        %v2046 = vadd.f32 0.0, %v2045
        %2047 = vmatprep.mubr.bf16.mxu0 0
        %2048 = vmatmul.mubr.bf16.gmra.mrb[0].mxu0 %v1895
        %v2049 = vpop.f32.mrb[0].mxu0
        %v2050 = vadd.f32 0.0, %v2049
        %v2051 = vpop.f32.mrb[0].mxu0
        %v2052 = vadd.f32 0.0, %v2051
        %v2053 = vpop.f32.mrb[0].mxu0
        %v2054 = vadd.f32 0.0, %v2053
        %v2055 = vpop.f32.mrb[0].mxu0
        %v2056 = vadd.f32 0.0, %v2055
        %2057 = vdwg.mxu0
        %v2058 = vmax.f32 %v1980, %v1982
        %2059 = vmax.xlane.f32.xlu0 %v2058
        %v2060 = vpop.xlane.xlu0 %2059
        %v2061 = vmax.f32 %v1984, %v1986
        %2062 = vmax.xlane.f32.xlu0 %v2061
        %v2063 = vpop.xlane.xlu0 %2062
        %v2064 = vmax.f32 %v1990, %v1992
        %2065 = vmax.xlane.f32.xlu0 %v2064
        %v2066 = vpop.xlane.xlu0 %2065
        %v2067 = vmax.f32 %v1994, %v1996
        %2068 = vmax.xlane.f32.xlu0 %v2067
        %v2069 = vpop.xlane.xlu0 %2068
        %v2070 = vmax.f32 %v2000, %v2002
        %2071 = vmax.xlane.f32.xlu0 %v2070
        %v2072 = vpop.xlane.xlu0 %2071
        %v2073 = vmax.f32 %v2004, %v2006
        %2074 = vmax.xlane.f32.xlu0 %v2073
        %v2075 = vpop.xlane.xlu0 %2074
        %v2076 = vmax.f32 %v2010, %v2012
        %2077 = vmax.xlane.f32.xlu0 %v2076
        %v2078 = vpop.xlane.xlu0 %2077
        %v2079 = vmax.f32 %v2014, %v2016
        %2080 = vmax.xlane.f32.xlu0 %v2079
        %v2081 = vpop.xlane.xlu0 %2080
        %v2082 = vmax.f32 %v2020, %v2022
        %2083 = vmax.xlane.f32.xlu0 %v2082
        %v2084 = vpop.xlane.xlu0 %2083
        %v2085 = vmax.f32 %v2024, %v2026
        %2086 = vmax.xlane.f32.xlu0 %v2085
        %v2087 = vpop.xlane.xlu0 %2086
        %v2088 = vmax.f32 %v2030, %v2032
        %2089 = vmax.xlane.f32.xlu0 %v2088
        %v2090 = vpop.xlane.xlu0 %2089
        %v2091 = vmax.f32 %v2034, %v2036
        %2092 = vmax.xlane.f32.xlu0 %v2091
        %v2093 = vpop.xlane.xlu0 %2092
        %v2094 = vmax.f32 %v2040, %v2042
        %2095 = vmax.xlane.f32.xlu0 %v2094
        %v2096 = vpop.xlane.xlu0 %2095
        %v2097 = vmax.f32 %v2044, %v2046
        %2098 = vmax.xlane.f32.xlu0 %v2097
        %v2099 = vpop.xlane.xlu0 %2098
        %v2100 = vmax.f32 %v2050, %v2052
        %2101 = vmax.xlane.f32.xlu0 %v2100
        %v2102 = vpop.xlane.xlu0 %2101
        %v2103 = vmax.f32 %v2054, %v2056
        %2104 = vmax.xlane.f32.xlu0 %v2103
        %v2105 = vpop.xlane.xlu0 %2104
        %v2106 = vsub.f32 %v1980, %v2060
        %v2107 = vsub.f32 %v1982, %v2060
        %v2108 = vsub.f32 %v1984, %v2063
        %v2109 = vsub.f32 %v1986, %v2063
        %v2110 = vsub.f32 %v1990, %v2066
        %v2111 = vsub.f32 %v1992, %v2066
        %v2112 = vsub.f32 %v1994, %v2069
        %v2113 = vsub.f32 %v1996, %v2069
        %v2114 = vsub.f32 %v2000, %v2072
        %v2115 = vsub.f32 %v2002, %v2072
        %v2116 = vsub.f32 %v2004, %v2075
        %v2117 = vsub.f32 %v2006, %v2075
        %v2118 = vsub.f32 %v2010, %v2078
        %v2119 = vsub.f32 %v2012, %v2078
        %v2120 = vsub.f32 %v2014, %v2081
        %v2121 = vsub.f32 %v2016, %v2081
        %v2122 = vsub.f32 %v2020, %v2084
        %v2123 = vsub.f32 %v2022, %v2084
        %v2124 = vsub.f32 %v2024, %v2087
        %v2125 = vsub.f32 %v2026, %v2087
        %v2126 = vsub.f32 %v2030, %v2090
        %v2127 = vsub.f32 %v2032, %v2090
        %v2128 = vsub.f32 %v2034, %v2093
        %v2129 = vsub.f32 %v2036, %v2093
        %v2130 = vsub.f32 %v2040, %v2096
        %v2131 = vsub.f32 %v2042, %v2096
        %v2132 = vsub.f32 %v2044, %v2099
        %v2133 = vsub.f32 %v2046, %v2099
        %v2134 = vsub.f32 %v2050, %v2102
        %v2135 = vsub.f32 %v2052, %v2102
        %v2136 = vsub.f32 %v2054, %v2105
        %v2137 = vsub.f32 %v2056, %v2105
        %v2138 = vmul.f32 %v2106, 1.442695
        %v2139 = vpow.pop %v2138
        %v2140 = vmul.f32 %v2107, 1.442695
        %v2141 = vpow.pop %v2140
        %v2142 = vmul.f32 %v2108, 1.442695
        %v2143 = vpow.pop %v2142
        %v2144 = vmul.f32 %v2109, 1.442695
        %v2145 = vpow.pop %v2144
        %v2146 = vmul.f32 %v2110, 1.442695
        %v2147 = vpow.pop %v2146
        %v2148 = vmul.f32 %v2111, 1.442695
        %v2149 = vpow.pop %v2148
        %v2150 = vmul.f32 %v2112, 1.442695
        %v2151 = vpow.pop %v2150
        %v2152 = vmul.f32 %v2113, 1.442695
        %v2153 = vpow.pop %v2152
        %v2154 = vmul.f32 %v2114, 1.442695
        %v2155 = vpow.pop %v2154
        %v2156 = vmul.f32 %v2115, 1.442695
        %v2157 = vpow.pop %v2156
        %v2158 = vmul.f32 %v2116, 1.442695
        %v2159 = vpow.pop %v2158
        %v2160 = vmul.f32 %v2117, 1.442695
        %v2161 = vpow.pop %v2160
        %v2162 = vmul.f32 %v2118, 1.442695
        %v2163 = vpow.pop %v2162
        %v2164 = vmul.f32 %v2119, 1.442695
        %v2165 = vpow.pop %v2164
        %v2166 = vmul.f32 %v2120, 1.442695
        %v2167 = vpow.pop %v2166
        %v2168 = vmul.f32 %v2121, 1.442695
        %v2169 = vpow.pop %v2168
        %v2170 = vmul.f32 %v2122, 1.442695
        %v2171 = vpow.pop %v2170
        %v2172 = vmul.f32 %v2123, 1.442695
        %v2173 = vpow.pop %v2172
        %v2174 = vmul.f32 %v2124, 1.442695
        %v2175 = vpow.pop %v2174
        %v2176 = vmul.f32 %v2125, 1.442695
        %v2177 = vpow.pop %v2176
        %v2178 = vmul.f32 %v2126, 1.442695
        %v2179 = vpow.pop %v2178
        %v2180 = vmul.f32 %v2127, 1.442695
        %v2181 = vpow.pop %v2180
        %v2182 = vmul.f32 %v2128, 1.442695
        %v2183 = vpow.pop %v2182
        %v2184 = vmul.f32 %v2129, 1.442695
        %v2185 = vpow.pop %v2184
        %v2186 = vmul.f32 %v2130, 1.442695
        %v2187 = vpow.pop %v2186
        %v2188 = vmul.f32 %v2131, 1.442695
        %v2189 = vpow.pop %v2188
        %v2190 = vmul.f32 %v2132, 1.442695
        %v2191 = vpow.pop %v2190
        %v2192 = vmul.f32 %v2133, 1.442695
        %v2193 = vpow.pop %v2192
        %v2194 = vmul.f32 %v2134, 1.442695
        %v2195 = vpow.pop %v2194
        %v2196 = vmul.f32 %v2135, 1.442695
        %v2197 = vpow.pop %v2196
        %v2198 = vmul.f32 %v2136, 1.442695
        %v2199 = vpow.pop %v2198
        %v2200 = vmul.f32 %v2137, 1.442695
        %v2201 = vpow.pop %v2200
        %v2202 = vadd.f32 %v2139, %v2141
        %2203 = vadd.xlane.f32.xlu0 %v2202
        %v2204 = vpop.xlane.xlu0 %2203
        %v2205 = vadd.f32 %v2143, %v2145
        %2206 = vadd.xlane.f32.xlu0 %v2205
        %v2207 = vpop.xlane.xlu0 %2206
        %v2208 = vadd.f32 %v2147, %v2149
        %2209 = vadd.xlane.f32.xlu0 %v2208
        %v2210 = vpop.xlane.xlu0 %2209
        %v2211 = vadd.f32 %v2151, %v2153
        %2212 = vadd.xlane.f32.xlu0 %v2211
        %v2213 = vpop.xlane.xlu0 %2212
        %v2214 = vadd.f32 %v2155, %v2157
        %2215 = vadd.xlane.f32.xlu0 %v2214
        %v2216 = vpop.xlane.xlu0 %2215
        %v2217 = vadd.f32 %v2159, %v2161
        %2218 = vadd.xlane.f32.xlu0 %v2217
        %v2219 = vpop.xlane.xlu0 %2218
        %v2220 = vadd.f32 %v2163, %v2165
        %2221 = vadd.xlane.f32.xlu0 %v2220
        %v2222 = vpop.xlane.xlu0 %2221
        %v2223 = vadd.f32 %v2167, %v2169
        %2224 = vadd.xlane.f32.xlu0 %v2223
        %v2225 = vpop.xlane.xlu0 %2224
        %v2226 = vadd.f32 %v2171, %v2173
        %2227 = vadd.xlane.f32.xlu0 %v2226
        %v2228 = vpop.xlane.xlu0 %2227
        %v2229 = vadd.f32 %v2175, %v2177
        %2230 = vadd.xlane.f32.xlu0 %v2229
        %v2231 = vpop.xlane.xlu0 %2230
        %v2232 = vadd.f32 %v2179, %v2181
        %2233 = vadd.xlane.f32.xlu0 %v2232
        %v2234 = vpop.xlane.xlu0 %2233
        %v2235 = vadd.f32 %v2183, %v2185
        %2236 = vadd.xlane.f32.xlu0 %v2235
        %v2237 = vpop.xlane.xlu0 %2236
        %v2238 = vadd.f32 %v2187, %v2189
        %2239 = vadd.xlane.f32.xlu0 %v2238
        %v2240 = vpop.xlane.xlu0 %2239
        %v2241 = vadd.f32 %v2191, %v2193
        %2242 = vadd.xlane.f32.xlu0 %v2241
        %v2243 = vpop.xlane.xlu0 %2242
        %v2244 = vadd.f32 %v2195, %v2197
        %2245 = vadd.xlane.f32.xlu0 %v2244
        %v2246 = vpop.xlane.xlu0 %2245
        %v2247 = vadd.f32 %v2199, %v2201
        %2248 = vadd.xlane.f32.xlu0 %v2247
        %v2249 = vpop.xlane.xlu0 %2248
        %v2250 = vpack.c.bf16 %v2143, %v2139
        %v2251 = vpack.c.bf16 %v2145, %v2141
        %v2252 = vpack.c.bf16 %v2151, %v2147
        %v2253 = vpack.c.bf16 %v2153, %v2149
        %v2254 = vpack.c.bf16 %v2159, %v2155
        %v2255 = vpack.c.bf16 %v2161, %v2157
        %v2256 = vpack.c.bf16 %v2167, %v2163
        %v2257 = vpack.c.bf16 %v2169, %v2165
        %v2258 = vpack.c.bf16 %v2175, %v2171
        %v2259 = vpack.c.bf16 %v2177, %v2173
        %v2260 = vpack.c.bf16 %v2183, %v2179
        %v2261 = vpack.c.bf16 %v2185, %v2181
        %v2262 = vpack.c.bf16 %v2191, %v2187
        %v2263 = vpack.c.bf16 %v2193, %v2189
        %v2264 = vpack.c.bf16 %v2199, %v2195
        %v2265 = vpack.c.bf16 %v2201, %v2197
        %2266 = vrot.lane.b32.xlu0 %v1507, 96
        %v2267 = vpop.permute.xlu0 %2266
        %2268 = vrot.lane.b32.xlu0 %v1508, 96
        %v2269 = vpop.permute.xlu0 %2268
        %2270 = vrot.lane.b32.xlu0 %v1509, 96
        %v2271 = vpop.permute.xlu0 %2270
        %2272 = vrot.lane.b32.xlu0 %v1510, 96
        %v2273 = vpop.permute.xlu0 %2272
        %2274 = vrot.lane.b32.xlu0 %v1511, 96
        %v2275 = vpop.permute.xlu0 %2274
        %2276 = vrot.lane.b32.xlu0 %v1512, 96
        %v2277 = vpop.permute.xlu0 %2276
        %2278 = vrot.lane.b32.xlu0 %v1513, 96
        %v2279 = vpop.permute.xlu0 %2278
        %2280 = vrot.lane.b32.xlu0 %v1514, 96
        %v2281 = vpop.permute.xlu0 %2280
        %2282 = vrot.lane.b32.xlu0 %v1515, 96
        %v2283 = vpop.permute.xlu0 %2282
        %2284 = vrot.lane.b32.xlu0 %v1516, 96
        %v2285 = vpop.permute.xlu0 %2284
        %2286 = vrot.lane.b32.xlu0 %v1517, 96
        %v2287 = vpop.permute.xlu0 %2286
        %2288 = vrot.lane.b32.xlu0 %v1518, 96
        %v2289 = vpop.permute.xlu0 %2288
        %2290 = vrot.lane.b32.xlu0 %v1519, 96
        %v2291 = vpop.permute.xlu0 %2290
        %2292 = vrot.lane.b32.xlu0 %v1520, 96
        %v2293 = vpop.permute.xlu0 %2292
        %2294 = vrot.lane.b32.xlu0 %v1521, 96
        %v2295 = vpop.permute.xlu0 %2294
        %2296 = vrot.lane.b32.xlu0 %v1522, 96
        %v2297 = vpop.permute.xlu0 %2296
        %2314 = vmatprep.subr.bf16.mxu0 0
        %2315 = vmatpush1.bf16.msra.mxu0 %v2267
        %2316 = vmatprep.subr.bf16.mxu0 0
        %2317 = vmatpush1.bf16.msra.mxu0 %v2269
        %2318 = vmatprep.subr.bf16.mxu0 0
        %2319 = vmatpush1.bf16.msra.mxu0 %v2271
        %2320 = vmatprep.subr.bf16.mxu0 0
        %2321 = vmatpush1.bf16.msra.mxu0 %v2273
        %2322 = vmatprep.subr.bf16.mxu0 0
        %2323 = vmatpush1.bf16.msra.mxu0 %v2275
        %2324 = vmatprep.subr.bf16.mxu0 0
        %2325 = vmatpush1.bf16.msra.mxu0 %v2277
        %2326 = vmatprep.subr.bf16.mxu0 0
        %2327 = vmatpush1.bf16.msra.mxu0 %v2279
        %2328 = vmatprep.subr.bf16.mxu0 0
        %2329 = vmatpush1.bf16.msra.mxu0 %v2281
        %2330 = vmatprep.subr.bf16.mxu0 0
        %2331 = vmatpush1.bf16.msra.mxu0 %v2283
        %2332 = vmatprep.subr.bf16.mxu0 0
        %2333 = vmatpush1.bf16.msra.mxu0 %v2285
        %2334 = vmatprep.subr.bf16.mxu0 0
        %2335 = vmatpush1.bf16.msra.mxu0 %v2287
        %2336 = vmatprep.subr.bf16.mxu0 0
        %2337 = vmatpush1.bf16.msra.mxu0 %v2289
        %2338 = vmatprep.subr.bf16.mxu0 0
        %2339 = vmatpush1.bf16.msra.mxu0 %v2291
        %2340 = vmatprep.subr.bf16.mxu0 0
        %2341 = vmatpush1.bf16.msra.mxu0 %v2293
        %2342 = vmatprep.subr.bf16.mxu0 0
        %2343 = vmatpush1.bf16.msra.mxu0 %v2295
        %2344 = vmatprep.subr.bf16.mxu0 0
        %2345 = vmatpush1.bf16.msra.mxu0 %v2297
        %2346 = vmatprep.mubr.bf16.mxu0 %v2251
        %2347 = vmatmul.mubr.bf16.gmra.mrb[0].mxu0 %v2250
        %v2348 = vpop.f32.mrb[0].mxu0
        %v2349 = vadd.f32 0.0, %v2348
        %v2350 = vpop.f32.mrb[0].mxu0
        %v2351 = vpop.f32.mrb[0].mxu0
        %v2352 = vadd.f32 0.0, %v2351
        %v2353 = vpop.f32.mrb[0].mxu0
        %2354 = vmatprep.mubr.bf16.mxu0 %v2253
        %2355 = vmatmul.mubr.bf16.gmra.mrb[0].mxu0 %v2252
        %v2356 = vpop.f32.mrb[0].mxu0
        %v2357 = vadd.f32 0.0, %v2356
        %v2358 = vpop.f32.mrb[0].mxu0
        %v2359 = vpop.f32.mrb[0].mxu0
        %v2360 = vadd.f32 0.0, %v2359
        %v2361 = vpop.f32.mrb[0].mxu0
        %2362 = vmatprep.mubr.bf16.mxu0 %v2255
        %2363 = vmatmul.mubr.bf16.gmra.mrb[0].mxu0 %v2254
        %v2364 = vpop.f32.mrb[0].mxu0
        %v2365 = vadd.f32 0.0, %v2364
        %v2366 = vpop.f32.mrb[0].mxu0
        %v2367 = vpop.f32.mrb[0].mxu0
        %v2368 = vadd.f32 0.0, %v2367
        %v2369 = vpop.f32.mrb[0].mxu0
        %2370 = vmatprep.mubr.bf16.mxu0 %v2257
        %2371 = vmatmul.mubr.bf16.gmra.mrb[0].mxu0 %v2256
        %v2372 = vpop.f32.mrb[0].mxu0
        %v2373 = vadd.f32 0.0, %v2372
        %v2374 = vpop.f32.mrb[0].mxu0
        %v2375 = vpop.f32.mrb[0].mxu0
        %v2376 = vadd.f32 0.0, %v2375
        %v2377 = vpop.f32.mrb[0].mxu0
        %2378 = vmatprep.mubr.bf16.mxu0 %v2259
        %2379 = vmatmul.mubr.bf16.gmra.mrb[0].mxu0 %v2258
        %v2380 = vpop.f32.mrb[0].mxu0
        %v2381 = vadd.f32 0.0, %v2380
        %v2382 = vpop.f32.mrb[0].mxu0
        %v2383 = vpop.f32.mrb[0].mxu0
        %v2384 = vadd.f32 0.0, %v2383
        %v2385 = vpop.f32.mrb[0].mxu0
        %2386 = vmatprep.mubr.bf16.mxu0 %v2261
        %2387 = vmatmul.mubr.bf16.gmra.mrb[0].mxu0 %v2260
        %v2388 = vpop.f32.mrb[0].mxu0
        %v2389 = vadd.f32 0.0, %v2388
        %v2390 = vpop.f32.mrb[0].mxu0
        %v2391 = vpop.f32.mrb[0].mxu0
        %v2392 = vadd.f32 0.0, %v2391
        %v2393 = vpop.f32.mrb[0].mxu0
        %2394 = vmatprep.mubr.bf16.mxu0 %v2263
        %2395 = vmatmul.mubr.bf16.gmra.mrb[0].mxu0 %v2262
        %v2396 = vpop.f32.mrb[0].mxu0
        %v2397 = vadd.f32 0.0, %v2396
        %v2398 = vpop.f32.mrb[0].mxu0
        %v2399 = vpop.f32.mrb[0].mxu0
        %v2400 = vadd.f32 0.0, %v2399
        %v2401 = vpop.f32.mrb[0].mxu0
        %2402 = vmatprep.mubr.bf16.mxu0 %v2265
        %2403 = vmatmul.mubr.bf16.gmra.mrb[0].mxu0 %v2264
        %v2404 = vpop.f32.mrb[0].mxu0
        %v2405 = vadd.f32 0.0, %v2404
        %v2406 = vpop.f32.mrb[0].mxu0
        %v2407 = vpop.f32.mrb[0].mxu0
        %v2408 = vadd.f32 0.0, %v2407
        %v2409 = vpop.f32.mrb[0].mxu0
        %2410 = vdwg.mxu0
        %v2411 = vrcp.pop %v2204
        %v2412 = vrcp.pop %v2207
        %v2413 = vrcp.pop %v2210
        %v2414 = vrcp.pop %v2213
        %v2415 = vrcp.pop %v2216
        %v2416 = vrcp.pop %v2219
        %v2417 = vrcp.pop %v2222
        %v2418 = vrcp.pop %v2225
        %v2419 = vrcp.pop %v2228
        %v2420 = vrcp.pop %v2231
        %v2421 = vrcp.pop %v2234
        %v2422 = vrcp.pop %v2237
        %v2423 = vrcp.pop %v2240
        %v2424 = vrcp.pop %v2243
        %v2425 = vrcp.pop %v2246
        %v2426 = vrcp.pop %v2249
        %v2427 = vmul.f32 %v2349, %v2411
        %v2428 = vmul.f32 %v2352, %v2412
        %v2429 = vmul.f32 %v2357, %v2413
        %v2430 = vmul.f32 %v2360, %v2414
        %v2431 = vmul.f32 %v2365, %v2415
        %v2432 = vmul.f32 %v2368, %v2416
        %v2433 = vmul.f32 %v2373, %v2417
        %v2434 = vmul.f32 %v2376, %v2418
        %v2435 = vmul.f32 %v2381, %v2419
        %v2436 = vmul.f32 %v2384, %v2420
        %v2437 = vmul.f32 %v2389, %v2421
        %v2438 = vmul.f32 %v2392, %v2422
        %v2439 = vmul.f32 %v2397, %v2423
        %v2440 = vmul.f32 %v2400, %v2424
        %v2441 = vmul.f32 %v2405, %v2425
        %v2442 = vmul.f32 %v2408, %v2426
        %v2443 = vpack.c.bf16 %v2428, %v2427
        %v2444 = vpack.c.bf16 %v2430, %v2429
        %v2445 = vpack.c.bf16 %v2432, %v2431
        %v2446 = vpack.c.bf16 %v2434, %v2433
        %v2447 = vpack.c.bf16 %v2436, %v2435
        %v2448 = vpack.c.bf16 %v2438, %v2437
        %v2449 = vpack.c.bf16 %v2440, %v2439
        %v2450 = vpack.c.bf16 %v2442, %v2441
        %v2455 = vunpack.c.l.b16 %v894
        %v2456 = vunpack.c.l.b16 %v895
        %v2457 = vunpack.c.l.b16 %v896
        %v2458 = vunpack.c.l.b16 %v897
        %v2459 = vpack.c.b16 %v2456, %v2455
        %v2460 = vpack.c.b16 %v2458, %v2457
        %v2464 = vsel %vm1049, %v2443, 0
        %v2467 = vsel %vm1049, %v2444, 0
        %v2470 = vsel %vm1049, %v2445, 0
        %v2473 = vsel %vm1049, %v2446, 0
        %v2476 = vsel %vm1049, %v2447, 0
        %v2479 = vsel %vm1049, %v2448, 0
        %v2482 = vsel %vm1049, %v2449, 0
        %v2485 = vsel %vm1049, %v2450, 0
        %2487 = vmatprep.subr.bf16.mxu0 0
        %2488 = vmatpush1.bf16.msra.mxu0 %v2459
        %2489 = vmatprep.subr.bf16.mxu0 0
        %2490 = vmatpush1.bf16.msra.mxu0 %v2460
        %2491 = vmatprep.subr.bf16.mxu0 0
        %2492 = vmatpush1.bf16.msra.mxu0 0
        %2493 = vmatprep.subr.bf16.mxu0 0
        %2494 = vmatpush1.bf16.msra.mxu0 0
        %2495 = vmatprep.subr.bf16.mxu0 0
        %2496 = vmatpush1.bf16.msra.mxu0 0
        %2497 = vmatprep.subr.bf16.mxu0 0
        %2498 = vmatpush1.bf16.msra.mxu0 0
        %2499 = vmatprep.subr.bf16.mxu0 0
        %2500 = vmatpush1.bf16.msra.mxu0 0
        %2501 = vmatprep.subr.bf16.mxu0 0
        %2502 = vmatpush1.bf16.msra.mxu0 0
        %2503 = vmatprep.subr.bf16.mxu0 0
        %2504 = vmatpush1.bf16.msra.mxu0 0
        %2505 = vmatprep.subr.bf16.mxu0 0
        %2506 = vmatpush1.bf16.msra.mxu0 0
        %2507 = vmatprep.subr.bf16.mxu0 0
        %2508 = vmatpush1.bf16.msra.mxu0 0
        %2509 = vmatprep.subr.bf16.mxu0 0
        %2510 = vmatpush1.bf16.msra.mxu0 0
        %2511 = vmatprep.subr.bf16.mxu0 0
        %2512 = vmatpush1.bf16.msra.mxu0 0
        %2513 = vmatprep.subr.bf16.mxu0 0
        %2514 = vmatpush1.bf16.msra.mxu0 0
        %2515 = vmatprep.subr.bf16.mxu0 0
        %2516 = vmatpush1.bf16.msra.mxu0 0
        %2517 = vmatprep.subr.bf16.mxu0 0
        %2518 = vmatpush1.bf16.msra.mxu0 0
        %2519 = vmatprep.mubr.bf16.mxu0 0
        %2520 = vmatmul.mubr.bf16.gmra.mrb[0].mxu0 %v2464
        %v2521 = vpop.f32.mrb[0].mxu0
        %v2522 = vadd.f32 0.0, %v2521
        %v2523 = vpop.f32.mrb[0].mxu0
        %v2524 = vpop.f32.mrb[0].mxu0
        %v2525 = vadd.f32 0.0, %v2524
        %v2526 = vpop.f32.mrb[0].mxu0
        %2527 = vmatprep.mubr.bf16.mxu0 0
        %2528 = vmatmul.mubr.bf16.gmra.mrb[0].mxu0 %v2467
        %v2529 = vpop.f32.mrb[0].mxu0
        %v2530 = vadd.f32 0.0, %v2529
        %v2531 = vpop.f32.mrb[0].mxu0
        %v2532 = vpop.f32.mrb[0].mxu0
        %v2533 = vadd.f32 0.0, %v2532
        %v2534 = vpop.f32.mrb[0].mxu0
        %2535 = vmatprep.mubr.bf16.mxu0 0
        %2536 = vmatmul.mubr.bf16.gmra.mrb[0].mxu0 %v2470
        %v2537 = vpop.f32.mrb[0].mxu0
        %v2538 = vadd.f32 0.0, %v2537
        %v2539 = vpop.f32.mrb[0].mxu0
        %v2540 = vpop.f32.mrb[0].mxu0
        %v2541 = vadd.f32 0.0, %v2540
        %v2542 = vpop.f32.mrb[0].mxu0
        %2543 = vmatprep.mubr.bf16.mxu0 0
        %2544 = vmatmul.mubr.bf16.gmra.mrb[0].mxu0 %v2473
        %v2545 = vpop.f32.mrb[0].mxu0
        %v2546 = vadd.f32 0.0, %v2545
        %v2547 = vpop.f32.mrb[0].mxu0
        %v2548 = vpop.f32.mrb[0].mxu0
        %v2549 = vadd.f32 0.0, %v2548
        %v2550 = vpop.f32.mrb[0].mxu0
        %2551 = vmatprep.mubr.bf16.mxu0 0
        %2552 = vmatmul.mubr.bf16.gmra.mrb[0].mxu0 %v2476
        %v2553 = vpop.f32.mrb[0].mxu0
        %v2554 = vadd.f32 0.0, %v2553
        %v2555 = vpop.f32.mrb[0].mxu0
        %v2556 = vpop.f32.mrb[0].mxu0
        %v2557 = vadd.f32 0.0, %v2556
        %v2558 = vpop.f32.mrb[0].mxu0
        %2559 = vmatprep.mubr.bf16.mxu0 0
        %2560 = vmatmul.mubr.bf16.gmra.mrb[0].mxu0 %v2479
        %v2561 = vpop.f32.mrb[0].mxu0
        %v2562 = vadd.f32 0.0, %v2561
        %v2563 = vpop.f32.mrb[0].mxu0
        %v2564 = vpop.f32.mrb[0].mxu0
        %v2565 = vadd.f32 0.0, %v2564
        %v2566 = vpop.f32.mrb[0].mxu0
        %2567 = vmatprep.mubr.bf16.mxu0 0
        %2568 = vmatmul.mubr.bf16.gmra.mrb[0].mxu0 %v2482
        %v2569 = vpop.f32.mrb[0].mxu0
        %v2570 = vadd.f32 0.0, %v2569
        %v2571 = vpop.f32.mrb[0].mxu0
        %v2572 = vpop.f32.mrb[0].mxu0
        %v2573 = vadd.f32 0.0, %v2572
        %v2574 = vpop.f32.mrb[0].mxu0
        %2575 = vmatprep.mubr.bf16.mxu0 0
        %2576 = vmatmul.mubr.bf16.gmra.mrb[0].mxu0 %v2485
        %v2577 = vpop.f32.mrb[0].mxu0
        %v2578 = vadd.f32 0.0, %v2577
        %v2579 = vpop.f32.mrb[0].mxu0
        %v2580 = vpop.f32.mrb[0].mxu0
        %v2581 = vadd.f32 0.0, %v2580
        %v2582 = vpop.f32.mrb[0].mxu0
        %2583 = vdwg.mxu0
        %v2584 = vadd.f32 %v1809, %v2522
        %v2585 = vadd.f32 %v1810, %v2525
        %v2586 = vadd.f32 %v1811, %v2530
        %v2587 = vadd.f32 %v1812, %v2533
        %v2588 = vadd.f32 %v1813, %v2538
        %v2589 = vadd.f32 %v1814, %v2541
        %v2590 = vadd.f32 %v1815, %v2546
        %v2591 = vadd.f32 %v1816, %v2549
        %v2592 = vadd.f32 %v1817, %v2554
        %v2593 = vadd.f32 %v1818, %v2557
        %v2594 = vadd.f32 %v1819, %v2562
        %v2595 = vadd.f32 %v1820, %v2565
        %v2596 = vadd.f32 %v1821, %v2570
        %v2597 = vadd.f32 %v1822, %v2573
        %v2598 = vadd.f32 %v1823, %v2578
        %v2599 = vadd.f32 %v1824, %v2581
        %2600 = vrot.lane.b32.xlu0 %v961, 64
        %v2601 = vpop.permute.xlu0 %2600
        %2602 = vrot.lane.b32.xlu0 %v962, 64
        %v2603 = vpop.permute.xlu0 %2602
        %2604 = vrot.lane.b32.xlu0 %v963, 64
        %v2605 = vpop.permute.xlu0 %2604
        %2606 = vrot.lane.b32.xlu0 %v964, 64
        %v2607 = vpop.permute.xlu0 %2606
        %2608 = vrot.lane.b32.xlu0 %v965, 64
        %v2609 = vpop.permute.xlu0 %2608
        %2610 = vrot.lane.b32.xlu0 %v966, 64
        %v2611 = vpop.permute.xlu0 %2610
        %2612 = vrot.lane.b32.xlu0 %v967, 64
        %v2613 = vpop.permute.xlu0 %2612
        %2614 = vrot.lane.b32.xlu0 %v968, 64
        %v2615 = vpop.permute.xlu0 %2614
        %2616 = vrot.lane.b32.xlu0 %v1033, 64
        %v2617 = vpop.permute.xlu0 %2616
        %2618 = vrot.lane.b32.xlu0 %v1034, 64
        %v2619 = vpop.permute.xlu0 %2618
        %2620 = vrot.lane.b32.xlu0 %v1035, 64
        %v2621 = vpop.permute.xlu0 %2620
        %2622 = vrot.lane.b32.xlu0 %v1036, 64
        %v2623 = vpop.permute.xlu0 %2622
        %2624 = vrot.lane.b32.xlu0 %v1037, 64
        %v2625 = vpop.permute.xlu0 %2624
        %2626 = vrot.lane.b32.xlu0 %v1038, 64
        %v2627 = vpop.permute.xlu0 %2626
        %2628 = vrot.lane.b32.xlu0 %v1039, 64
        %v2629 = vpop.permute.xlu0 %2628
        %2630 = vrot.lane.b32.xlu0 %v1040, 64
        %v2631 = vpop.permute.xlu0 %2630
        %2632 = vrot.lane.b32.xlu0 %v1041, 64
        %v2633 = vpop.permute.xlu0 %2632
        %2634 = vrot.lane.b32.xlu0 %v1042, 64
        %v2635 = vpop.permute.xlu0 %2634
        %2636 = vrot.lane.b32.xlu0 %v1043, 64
        %v2637 = vpop.permute.xlu0 %2636
        %2638 = vrot.lane.b32.xlu0 %v1044, 64
        %v2639 = vpop.permute.xlu0 %2638
        %2640 = vrot.lane.b32.xlu0 %v1045, 64
        %v2641 = vpop.permute.xlu0 %2640
        %2642 = vrot.lane.b32.xlu0 %v1046, 64
        %v2643 = vpop.permute.xlu0 %2642
        %2644 = vrot.lane.b32.xlu0 %v1047, 64
        %v2645 = vpop.permute.xlu0 %2644
        %2646 = vrot.lane.b32.xlu0 %v1048, 64
        %v2647 = vpop.permute.xlu0 %2646
        %v2649 = vsel %vm1049, %v2601, 0
        %v2652 = vsel %vm1049, %v2603, 0
        %v2655 = vsel %vm1049, %v2605, 0
        %v2658 = vsel %vm1049, %v2607, 0
        %v2661 = vsel %vm1049, %v2609, 0
        %v2664 = vsel %vm1049, %v2611, 0
        %v2667 = vsel %vm1049, %v2613, 0
        %v2670 = vsel %vm1049, %v2615, 0
        %v2673 = vsel %vm1049, %v2617, 0
        %v2676 = vsel %vm1049, %v2619, 0
        %v2679 = vsel %vm1049, %v2621, 0
        %v2682 = vsel %vm1049, %v2623, 0
        %v2685 = vsel %vm1049, %v2625, 0
        %v2688 = vsel %vm1049, %v2627, 0
        %v2691 = vsel %vm1049, %v2629, 0
        %v2694 = vsel %vm1049, %v2631, 0
        %v2697 = vsel %vm1049, %v2633, 0
        %v2700 = vsel %vm1049, %v2635, 0
        %v2703 = vsel %vm1049, %v2637, 0
        %v2706 = vsel %vm1049, %v2639, 0
        %v2709 = vsel %vm1049, %v2641, 0
        %v2712 = vsel %vm1049, %v2643, 0
        %v2715 = vsel %vm1049, %v2645, 0
        %v2718 = vsel %vm1049, %v2647, 0
        %2720 = vmatprep.subr.bf16.mxu0 0
        %2721 = vmatpush1.bf16.xpose.msra.mxu0 %v2673
        %2722 = vmatprep.subr.bf16.mxu0 0
        %2723 = vmatpush1.bf16.xpose.msra.mxu0 %v2676
        %2724 = vmatprep.subr.bf16.mxu0 0
        %2725 = vmatpush1.bf16.xpose.msra.mxu0 %v2679
        %2726 = vmatprep.subr.bf16.mxu0 0
        %2727 = vmatpush1.bf16.xpose.msra.mxu0 %v2682
        %2728 = vmatprep.subr.bf16.mxu0 0
        %2729 = vmatpush1.bf16.xpose.msra.mxu0 %v2685
        %2730 = vmatprep.subr.bf16.mxu0 0
        %2731 = vmatpush1.bf16.xpose.msra.mxu0 %v2688
        %2732 = vmatprep.subr.bf16.mxu0 0
        %2733 = vmatpush1.bf16.xpose.msra.mxu0 %v2691
        %2734 = vmatprep.subr.bf16.mxu0 0
        %2735 = vmatpush1.bf16.xpose.msra.mxu0 %v2694
        %2736 = vmatprep.subr.bf16.mxu0 0
        %2737 = vmatpush1.bf16.xpose.msra.mxu0 %v2697
        %2738 = vmatprep.subr.bf16.mxu0 0
        %2739 = vmatpush1.bf16.xpose.msra.mxu0 %v2700
        %2740 = vmatprep.subr.bf16.mxu0 0
        %2741 = vmatpush1.bf16.xpose.msra.mxu0 %v2703
        %2742 = vmatprep.subr.bf16.mxu0 0
        %2743 = vmatpush1.bf16.xpose.msra.mxu0 %v2706
        %2744 = vmatprep.subr.bf16.mxu0 0
        %2745 = vmatpush1.bf16.xpose.msra.mxu0 %v2709
        %2746 = vmatprep.subr.bf16.mxu0 0
        %2747 = vmatpush1.bf16.xpose.msra.mxu0 %v2712
        %2748 = vmatprep.subr.bf16.mxu0 0
        %2749 = vmatpush1.bf16.xpose.msra.mxu0 %v2715
        %2750 = vmatprep.subr.bf16.mxu0 0
        %2751 = vmatpush1.bf16.xpose.msra.mxu0 %v2718
        %2752 = vmatprep.mubr.bf16.mxu0 0
        %2753 = vmatmul.mubr.bf16.gmra.mrb[0].mxu0 %v2649
        %v2754 = vpop.f32.mrb[0].mxu0
        %v2755 = vadd.f32 0.0, %v2754
        %v2756 = vpop.f32.mrb[0].mxu0
        %v2757 = vadd.f32 0.0, %v2756
        %v2758 = vpop.f32.mrb[0].mxu0
        %v2759 = vadd.f32 0.0, %v2758
        %v2760 = vpop.f32.mrb[0].mxu0
        %v2761 = vadd.f32 0.0, %v2760
        %2762 = vmatprep.mubr.bf16.mxu0 0
        %2763 = vmatmul.mubr.bf16.gmra.mrb[0].mxu0 %v2652
        %v2764 = vpop.f32.mrb[0].mxu0
        %v2765 = vadd.f32 0.0, %v2764
        %v2766 = vpop.f32.mrb[0].mxu0
        %v2767 = vadd.f32 0.0, %v2766
        %v2768 = vpop.f32.mrb[0].mxu0
        %v2769 = vadd.f32 0.0, %v2768
        %v2770 = vpop.f32.mrb[0].mxu0
        %v2771 = vadd.f32 0.0, %v2770
        %2772 = vmatprep.mubr.bf16.mxu0 0
        %2773 = vmatmul.mubr.bf16.gmra.mrb[0].mxu0 %v2655
        %v2774 = vpop.f32.mrb[0].mxu0
        %v2775 = vadd.f32 0.0, %v2774
        %v2776 = vpop.f32.mrb[0].mxu0
        %v2777 = vadd.f32 0.0, %v2776
        %v2778 = vpop.f32.mrb[0].mxu0
        %v2779 = vadd.f32 0.0, %v2778
        %v2780 = vpop.f32.mrb[0].mxu0
        %v2781 = vadd.f32 0.0, %v2780
        %2782 = vmatprep.mubr.bf16.mxu0 0
        %2783 = vmatmul.mubr.bf16.gmra.mrb[0].mxu0 %v2658
        %v2784 = vpop.f32.mrb[0].mxu0
        %v2785 = vadd.f32 0.0, %v2784
        %v2786 = vpop.f32.mrb[0].mxu0
        %v2787 = vadd.f32 0.0, %v2786
        %v2788 = vpop.f32.mrb[0].mxu0
        %v2789 = vadd.f32 0.0, %v2788
        %v2790 = vpop.f32.mrb[0].mxu0
        %v2791 = vadd.f32 0.0, %v2790
        %2792 = vmatprep.mubr.bf16.mxu0 0
        %2793 = vmatmul.mubr.bf16.gmra.mrb[0].mxu0 %v2661
        %v2794 = vpop.f32.mrb[0].mxu0
        %v2795 = vadd.f32 0.0, %v2794
        %v2796 = vpop.f32.mrb[0].mxu0
        %v2797 = vadd.f32 0.0, %v2796
        %v2798 = vpop.f32.mrb[0].mxu0
        %v2799 = vadd.f32 0.0, %v2798
        %v2800 = vpop.f32.mrb[0].mxu0
        %v2801 = vadd.f32 0.0, %v2800
        %2802 = vmatprep.mubr.bf16.mxu0 0
        %2803 = vmatmul.mubr.bf16.gmra.mrb[0].mxu0 %v2664
        %v2804 = vpop.f32.mrb[0].mxu0
        %v2805 = vadd.f32 0.0, %v2804
        %v2806 = vpop.f32.mrb[0].mxu0
        %v2807 = vadd.f32 0.0, %v2806
        %v2808 = vpop.f32.mrb[0].mxu0
        %v2809 = vadd.f32 0.0, %v2808
        %v2810 = vpop.f32.mrb[0].mxu0
        %v2811 = vadd.f32 0.0, %v2810
        %2812 = vmatprep.mubr.bf16.mxu0 0
        %2813 = vmatmul.mubr.bf16.gmra.mrb[0].mxu0 %v2667
        %v2814 = vpop.f32.mrb[0].mxu0
        %v2815 = vadd.f32 0.0, %v2814
        %v2816 = vpop.f32.mrb[0].mxu0
        %v2817 = vadd.f32 0.0, %v2816
        %v2818 = vpop.f32.mrb[0].mxu0
        %v2819 = vadd.f32 0.0, %v2818
        %v2820 = vpop.f32.mrb[0].mxu0
        %v2821 = vadd.f32 0.0, %v2820
        %2822 = vmatprep.mubr.bf16.mxu0 0
        %2823 = vmatmul.mubr.bf16.gmra.mrb[0].mxu0 %v2670
        %v2824 = vpop.f32.mrb[0].mxu0
        %v2825 = vadd.f32 0.0, %v2824
        %v2826 = vpop.f32.mrb[0].mxu0
        %v2827 = vadd.f32 0.0, %v2826
        %v2828 = vpop.f32.mrb[0].mxu0
        %v2829 = vadd.f32 0.0, %v2828
        %v2830 = vpop.f32.mrb[0].mxu0
        %v2831 = vadd.f32 0.0, %v2830
        %2832 = vdwg.mxu0
        %v2833 = vmax.f32 %v2755, %v2757
        %2834 = vmax.xlane.f32.xlu0 %v2833
        %v2835 = vpop.xlane.xlu0 %2834
        %v2836 = vmax.f32 %v2759, %v2761
        %2837 = vmax.xlane.f32.xlu0 %v2836
        %v2838 = vpop.xlane.xlu0 %2837
        %v2839 = vmax.f32 %v2765, %v2767
        %2840 = vmax.xlane.f32.xlu0 %v2839
        %v2841 = vpop.xlane.xlu0 %2840
        %v2842 = vmax.f32 %v2769, %v2771
        %2843 = vmax.xlane.f32.xlu0 %v2842
        %v2844 = vpop.xlane.xlu0 %2843
        %v2845 = vmax.f32 %v2775, %v2777
        %2846 = vmax.xlane.f32.xlu0 %v2845
        %v2847 = vpop.xlane.xlu0 %2846
        %v2848 = vmax.f32 %v2779, %v2781
        %2849 = vmax.xlane.f32.xlu0 %v2848
        %v2850 = vpop.xlane.xlu0 %2849
        %v2851 = vmax.f32 %v2785, %v2787
        %2852 = vmax.xlane.f32.xlu0 %v2851
        %v2853 = vpop.xlane.xlu0 %2852
        %v2854 = vmax.f32 %v2789, %v2791
        %2855 = vmax.xlane.f32.xlu0 %v2854
        %v2856 = vpop.xlane.xlu0 %2855
        %v2857 = vmax.f32 %v2795, %v2797
        %2858 = vmax.xlane.f32.xlu0 %v2857
        %v2859 = vpop.xlane.xlu0 %2858
        %v2860 = vmax.f32 %v2799, %v2801
        %2861 = vmax.xlane.f32.xlu0 %v2860
        %v2862 = vpop.xlane.xlu0 %2861
        %v2863 = vmax.f32 %v2805, %v2807
        %2864 = vmax.xlane.f32.xlu0 %v2863
        %v2865 = vpop.xlane.xlu0 %2864
        %v2866 = vmax.f32 %v2809, %v2811
        %2867 = vmax.xlane.f32.xlu0 %v2866
        %v2868 = vpop.xlane.xlu0 %2867
        %v2869 = vmax.f32 %v2815, %v2817
        %2870 = vmax.xlane.f32.xlu0 %v2869
        %v2871 = vpop.xlane.xlu0 %2870
        %v2872 = vmax.f32 %v2819, %v2821
        %2873 = vmax.xlane.f32.xlu0 %v2872
        %v2874 = vpop.xlane.xlu0 %2873
        %v2875 = vmax.f32 %v2825, %v2827
        %2876 = vmax.xlane.f32.xlu0 %v2875
        %v2877 = vpop.xlane.xlu0 %2876
        %v2878 = vmax.f32 %v2829, %v2831
        %2879 = vmax.xlane.f32.xlu0 %v2878
        %v2880 = vpop.xlane.xlu0 %2879
        %v2881 = vsub.f32 %v2755, %v2835
        %v2882 = vsub.f32 %v2757, %v2835
        %v2883 = vsub.f32 %v2759, %v2838
        %v2884 = vsub.f32 %v2761, %v2838
        %v2885 = vsub.f32 %v2765, %v2841
        %v2886 = vsub.f32 %v2767, %v2841
        %v2887 = vsub.f32 %v2769, %v2844
        %v2888 = vsub.f32 %v2771, %v2844
        %v2889 = vsub.f32 %v2775, %v2847
        %v2890 = vsub.f32 %v2777, %v2847
        %v2891 = vsub.f32 %v2779, %v2850
        %v2892 = vsub.f32 %v2781, %v2850
        %v2893 = vsub.f32 %v2785, %v2853
        %v2894 = vsub.f32 %v2787, %v2853
        %v2895 = vsub.f32 %v2789, %v2856
        %v2896 = vsub.f32 %v2791, %v2856
        %v2897 = vsub.f32 %v2795, %v2859
        %v2898 = vsub.f32 %v2797, %v2859
        %v2899 = vsub.f32 %v2799, %v2862
        %v2900 = vsub.f32 %v2801, %v2862
        %v2901 = vsub.f32 %v2805, %v2865
        %v2902 = vsub.f32 %v2807, %v2865
        %v2903 = vsub.f32 %v2809, %v2868
        %v2904 = vsub.f32 %v2811, %v2868
        %v2905 = vsub.f32 %v2815, %v2871
        %v2906 = vsub.f32 %v2817, %v2871
        %v2907 = vsub.f32 %v2819, %v2874
        %v2908 = vsub.f32 %v2821, %v2874
        %v2909 = vsub.f32 %v2825, %v2877
        %v2910 = vsub.f32 %v2827, %v2877
        %v2911 = vsub.f32 %v2829, %v2880
        %v2912 = vsub.f32 %v2831, %v2880
        %v2913 = vmul.f32 %v2881, 1.442695
        %v2914 = vpow.pop %v2913
        %v2915 = vmul.f32 %v2882, 1.442695
        %v2916 = vpow.pop %v2915
        %v2917 = vmul.f32 %v2883, 1.442695
        %v2918 = vpow.pop %v2917
        %v2919 = vmul.f32 %v2884, 1.442695
        %v2920 = vpow.pop %v2919
        %v2921 = vmul.f32 %v2885, 1.442695
        %v2922 = vpow.pop %v2921
        %v2923 = vmul.f32 %v2886, 1.442695
        %v2924 = vpow.pop %v2923
        %v2925 = vmul.f32 %v2887, 1.442695
        %v2926 = vpow.pop %v2925
        %v2927 = vmul.f32 %v2888, 1.442695
        %v2928 = vpow.pop %v2927
        %v2929 = vmul.f32 %v2889, 1.442695
        %v2930 = vpow.pop %v2929
        %v2931 = vmul.f32 %v2890, 1.442695
        %v2932 = vpow.pop %v2931
        %v2933 = vmul.f32 %v2891, 1.442695
        %v2934 = vpow.pop %v2933
        %v2935 = vmul.f32 %v2892, 1.442695
        %v2936 = vpow.pop %v2935
        %v2937 = vmul.f32 %v2893, 1.442695
        %v2938 = vpow.pop %v2937
        %v2939 = vmul.f32 %v2894, 1.442695
        %v2940 = vpow.pop %v2939
        %v2941 = vmul.f32 %v2895, 1.442695
        %v2942 = vpow.pop %v2941
        %v2943 = vmul.f32 %v2896, 1.442695
        %v2944 = vpow.pop %v2943
        %v2945 = vmul.f32 %v2897, 1.442695
        %v2946 = vpow.pop %v2945
        %v2947 = vmul.f32 %v2898, 1.442695
        %v2948 = vpow.pop %v2947
        %v2949 = vmul.f32 %v2899, 1.442695
        %v2950 = vpow.pop %v2949
        %v2951 = vmul.f32 %v2900, 1.442695
        %v2952 = vpow.pop %v2951
        %v2953 = vmul.f32 %v2901, 1.442695
        %v2954 = vpow.pop %v2953
        %v2955 = vmul.f32 %v2902, 1.442695
        %v2956 = vpow.pop %v2955
        %v2957 = vmul.f32 %v2903, 1.442695
        %v2958 = vpow.pop %v2957
        %v2959 = vmul.f32 %v2904, 1.442695
        %v2960 = vpow.pop %v2959
        %v2961 = vmul.f32 %v2905, 1.442695
        %v2962 = vpow.pop %v2961
        %v2963 = vmul.f32 %v2906, 1.442695
        %v2964 = vpow.pop %v2963
        %v2965 = vmul.f32 %v2907, 1.442695
        %v2966 = vpow.pop %v2965
        %v2967 = vmul.f32 %v2908, 1.442695
        %v2968 = vpow.pop %v2967
        %v2969 = vmul.f32 %v2909, 1.442695
        %v2970 = vpow.pop %v2969
        %v2971 = vmul.f32 %v2910, 1.442695
        %v2972 = vpow.pop %v2971
        %v2973 = vmul.f32 %v2911, 1.442695
        %v2974 = vpow.pop %v2973
        %v2975 = vmul.f32 %v2912, 1.442695
        %v2976 = vpow.pop %v2975
        %v2977 = vadd.f32 %v2914, %v2916
        %2978 = vadd.xlane.f32.xlu0 %v2977
        %v2979 = vpop.xlane.xlu0 %2978
        %v2980 = vadd.f32 %v2918, %v2920
        %2981 = vadd.xlane.f32.xlu0 %v2980
        %v2982 = vpop.xlane.xlu0 %2981
        %v2983 = vadd.f32 %v2922, %v2924
        %2984 = vadd.xlane.f32.xlu0 %v2983
        %v2985 = vpop.xlane.xlu0 %2984
        %v2986 = vadd.f32 %v2926, %v2928
        %2987 = vadd.xlane.f32.xlu0 %v2986
        %v2988 = vpop.xlane.xlu0 %2987
        %v2989 = vadd.f32 %v2930, %v2932
        %2990 = vadd.xlane.f32.xlu0 %v2989
        %v2991 = vpop.xlane.xlu0 %2990
        %v2992 = vadd.f32 %v2934, %v2936
        %2993 = vadd.xlane.f32.xlu0 %v2992
        %v2994 = vpop.xlane.xlu0 %2993
        %v2995 = vadd.f32 %v2938, %v2940
        %2996 = vadd.xlane.f32.xlu0 %v2995
        %v2997 = vpop.xlane.xlu0 %2996
        %v2998 = vadd.f32 %v2942, %v2944
        %2999 = vadd.xlane.f32.xlu0 %v2998
        %v3000 = vpop.xlane.xlu0 %2999
        %v3001 = vadd.f32 %v2946, %v2948
        %3002 = vadd.xlane.f32.xlu0 %v3001
        %v3003 = vpop.xlane.xlu0 %3002
        %v3004 = vadd.f32 %v2950, %v2952
        %3005 = vadd.xlane.f32.xlu0 %v3004
        %v3006 = vpop.xlane.xlu0 %3005
        %v3007 = vadd.f32 %v2954, %v2956
        %3008 = vadd.xlane.f32.xlu0 %v3007
        %v3009 = vpop.xlane.xlu0 %3008
        %v3010 = vadd.f32 %v2958, %v2960
        %3011 = vadd.xlane.f32.xlu0 %v3010
        %v3012 = vpop.xlane.xlu0 %3011
        %v3013 = vadd.f32 %v2962, %v2964
        %3014 = vadd.xlane.f32.xlu0 %v3013
        %v3015 = vpop.xlane.xlu0 %3014
        %v3016 = vadd.f32 %v2966, %v2968
        %3017 = vadd.xlane.f32.xlu0 %v3016
        %v3018 = vpop.xlane.xlu0 %3017
        %v3019 = vadd.f32 %v2970, %v2972
        %3020 = vadd.xlane.f32.xlu0 %v3019
        %v3021 = vpop.xlane.xlu0 %3020
        %v3022 = vadd.f32 %v2974, %v2976
        %3023 = vadd.xlane.f32.xlu0 %v3022
        %v3024 = vpop.xlane.xlu0 %3023
        %v3025 = vpack.c.bf16 %v2918, %v2914
        %v3026 = vpack.c.bf16 %v2920, %v2916
        %v3027 = vpack.c.bf16 %v2926, %v2922
        %v3028 = vpack.c.bf16 %v2928, %v2924
        %v3029 = vpack.c.bf16 %v2934, %v2930
        %v3030 = vpack.c.bf16 %v2936, %v2932
        %v3031 = vpack.c.bf16 %v2942, %v2938
        %v3032 = vpack.c.bf16 %v2944, %v2940
        %v3033 = vpack.c.bf16 %v2950, %v2946
        %v3034 = vpack.c.bf16 %v2952, %v2948
        %v3035 = vpack.c.bf16 %v2958, %v2954
        %v3036 = vpack.c.bf16 %v2960, %v2956
        %v3037 = vpack.c.bf16 %v2966, %v2962
        %v3038 = vpack.c.bf16 %v2968, %v2964
        %v3039 = vpack.c.bf16 %v2974, %v2970
        %v3040 = vpack.c.bf16 %v2976, %v2972
        %3041 = vrot.lane.b32.xlu0 %v1507, 64
        %v3042 = vpop.permute.xlu0 %3041
        %3043 = vrot.lane.b32.xlu0 %v1508, 64
        %v3044 = vpop.permute.xlu0 %3043
        %3045 = vrot.lane.b32.xlu0 %v1509, 64
        %v3046 = vpop.permute.xlu0 %3045
        %3047 = vrot.lane.b32.xlu0 %v1510, 64
        %v3048 = vpop.permute.xlu0 %3047
        %3049 = vrot.lane.b32.xlu0 %v1511, 64
        %v3050 = vpop.permute.xlu0 %3049
        %3051 = vrot.lane.b32.xlu0 %v1512, 64
        %v3052 = vpop.permute.xlu0 %3051
        %3053 = vrot.lane.b32.xlu0 %v1513, 64
        %v3054 = vpop.permute.xlu0 %3053
        %3055 = vrot.lane.b32.xlu0 %v1514, 64
        %v3056 = vpop.permute.xlu0 %3055
        %3057 = vrot.lane.b32.xlu0 %v1515, 64
        %v3058 = vpop.permute.xlu0 %3057
        %3059 = vrot.lane.b32.xlu0 %v1516, 64
        %v3060 = vpop.permute.xlu0 %3059
        %3061 = vrot.lane.b32.xlu0 %v1517, 64
        %v3062 = vpop.permute.xlu0 %3061
        %3063 = vrot.lane.b32.xlu0 %v1518, 64
        %v3064 = vpop.permute.xlu0 %3063
        %3065 = vrot.lane.b32.xlu0 %v1519, 64
        %v3066 = vpop.permute.xlu0 %3065
        %3067 = vrot.lane.b32.xlu0 %v1520, 64
        %v3068 = vpop.permute.xlu0 %3067
        %3069 = vrot.lane.b32.xlu0 %v1521, 64
        %v3070 = vpop.permute.xlu0 %3069
        %3071 = vrot.lane.b32.xlu0 %v1522, 64
        %v3072 = vpop.permute.xlu0 %3071
        %3089 = vmatprep.subr.bf16.mxu0 0
        %3090 = vmatpush1.bf16.msra.mxu0 %v3042
        %3091 = vmatprep.subr.bf16.mxu0 0
        %3092 = vmatpush1.bf16.msra.mxu0 %v3044
        %3093 = vmatprep.subr.bf16.mxu0 0
        %3094 = vmatpush1.bf16.msra.mxu0 %v3046
        %3095 = vmatprep.subr.bf16.mxu0 0
        %3096 = vmatpush1.bf16.msra.mxu0 %v3048
        %3097 = vmatprep.subr.bf16.mxu0 0
        %3098 = vmatpush1.bf16.msra.mxu0 %v3050
        %3099 = vmatprep.subr.bf16.mxu0 0
        %3100 = vmatpush1.bf16.msra.mxu0 %v3052
        %3101 = vmatprep.subr.bf16.mxu0 0
        %3102 = vmatpush1.bf16.msra.mxu0 %v3054
        %3103 = vmatprep.subr.bf16.mxu0 0
        %3104 = vmatpush1.bf16.msra.mxu0 %v3056
        %3105 = vmatprep.subr.bf16.mxu0 0
        %3106 = vmatpush1.bf16.msra.mxu0 %v3058
        %3107 = vmatprep.subr.bf16.mxu0 0
        %3108 = vmatpush1.bf16.msra.mxu0 %v3060
        %3109 = vmatprep.subr.bf16.mxu0 0
        %3110 = vmatpush1.bf16.msra.mxu0 %v3062
        %3111 = vmatprep.subr.bf16.mxu0 0
        %3112 = vmatpush1.bf16.msra.mxu0 %v3064
        %3113 = vmatprep.subr.bf16.mxu0 0
        %3114 = vmatpush1.bf16.msra.mxu0 %v3066
        %3115 = vmatprep.subr.bf16.mxu0 0
        %3116 = vmatpush1.bf16.msra.mxu0 %v3068
        %3117 = vmatprep.subr.bf16.mxu0 0
        %3118 = vmatpush1.bf16.msra.mxu0 %v3070
        %3119 = vmatprep.subr.bf16.mxu0 0
        %3120 = vmatpush1.bf16.msra.mxu0 %v3072
        %3121 = vmatprep.mubr.bf16.mxu0 %v3026
        %3122 = vmatmul.mubr.bf16.gmra.mrb[0].mxu0 %v3025
        %v3123 = vpop.f32.mrb[0].mxu0
        %v3124 = vadd.f32 0.0, %v3123
        %v3125 = vpop.f32.mrb[0].mxu0
        %v3126 = vpop.f32.mrb[0].mxu0
        %v3127 = vadd.f32 0.0, %v3126
        %v3128 = vpop.f32.mrb[0].mxu0
        %3129 = vmatprep.mubr.bf16.mxu0 %v3028
        %3130 = vmatmul.mubr.bf16.gmra.mrb[0].mxu0 %v3027
        %v3131 = vpop.f32.mrb[0].mxu0
        %v3132 = vadd.f32 0.0, %v3131
        %v3133 = vpop.f32.mrb[0].mxu0
        %v3134 = vpop.f32.mrb[0].mxu0
        %v3135 = vadd.f32 0.0, %v3134
        %v3136 = vpop.f32.mrb[0].mxu0
        %3137 = vmatprep.mubr.bf16.mxu0 %v3030
        %3138 = vmatmul.mubr.bf16.gmra.mrb[0].mxu0 %v3029
        %v3139 = vpop.f32.mrb[0].mxu0
        %v3140 = vadd.f32 0.0, %v3139
        %v3141 = vpop.f32.mrb[0].mxu0
        %v3142 = vpop.f32.mrb[0].mxu0
        %v3143 = vadd.f32 0.0, %v3142
        %v3144 = vpop.f32.mrb[0].mxu0
        %3145 = vmatprep.mubr.bf16.mxu0 %v3032
        %3146 = vmatmul.mubr.bf16.gmra.mrb[0].mxu0 %v3031
        %v3147 = vpop.f32.mrb[0].mxu0
        %v3148 = vadd.f32 0.0, %v3147
        %v3149 = vpop.f32.mrb[0].mxu0
        %v3150 = vpop.f32.mrb[0].mxu0
        %v3151 = vadd.f32 0.0, %v3150
        %v3152 = vpop.f32.mrb[0].mxu0
        %3153 = vmatprep.mubr.bf16.mxu0 %v3034
        %3154 = vmatmul.mubr.bf16.gmra.mrb[0].mxu0 %v3033
        %v3155 = vpop.f32.mrb[0].mxu0
        %v3156 = vadd.f32 0.0, %v3155
        %v3157 = vpop.f32.mrb[0].mxu0
        %v3158 = vpop.f32.mrb[0].mxu0
        %v3159 = vadd.f32 0.0, %v3158
        %v3160 = vpop.f32.mrb[0].mxu0
        %3161 = vmatprep.mubr.bf16.mxu0 %v3036
        %3162 = vmatmul.mubr.bf16.gmra.mrb[0].mxu0 %v3035
        %v3163 = vpop.f32.mrb[0].mxu0
        %v3164 = vadd.f32 0.0, %v3163
        %v3165 = vpop.f32.mrb[0].mxu0
        %v3166 = vpop.f32.mrb[0].mxu0
        %v3167 = vadd.f32 0.0, %v3166
        %v3168 = vpop.f32.mrb[0].mxu0
        %3169 = vmatprep.mubr.bf16.mxu0 %v3038
        %3170 = vmatmul.mubr.bf16.gmra.mrb[0].mxu0 %v3037
        %v3171 = vpop.f32.mrb[0].mxu0
        %v3172 = vadd.f32 0.0, %v3171
        %v3173 = vpop.f32.mrb[0].mxu0
        %v3174 = vpop.f32.mrb[0].mxu0
        %v3175 = vadd.f32 0.0, %v3174
        %v3176 = vpop.f32.mrb[0].mxu0
        %3177 = vmatprep.mubr.bf16.mxu0 %v3040
        %3178 = vmatmul.mubr.bf16.gmra.mrb[0].mxu0 %v3039
        %v3179 = vpop.f32.mrb[0].mxu0
        %v3180 = vadd.f32 0.0, %v3179
        %v3181 = vpop.f32.mrb[0].mxu0
        %v3182 = vpop.f32.mrb[0].mxu0
        %v3183 = vadd.f32 0.0, %v3182
        %v3184 = vpop.f32.mrb[0].mxu0
        %3185 = vdwg.mxu0
        %v3186 = vrcp.pop %v2979
        %v3187 = vrcp.pop %v2982
        %v3188 = vrcp.pop %v2985
        %v3189 = vrcp.pop %v2988
        %v3190 = vrcp.pop %v2991
        %v3191 = vrcp.pop %v2994
        %v3192 = vrcp.pop %v2997
        %v3193 = vrcp.pop %v3000
        %v3194 = vrcp.pop %v3003
        %v3195 = vrcp.pop %v3006
        %v3196 = vrcp.pop %v3009
        %v3197 = vrcp.pop %v3012
        %v3198 = vrcp.pop %v3015
        %v3199 = vrcp.pop %v3018
        %v3200 = vrcp.pop %v3021
        %v3201 = vrcp.pop %v3024
        %v3202 = vmul.f32 %v3124, %v3186
        %v3203 = vmul.f32 %v3127, %v3187
        %v3204 = vmul.f32 %v3132, %v3188
        %v3205 = vmul.f32 %v3135, %v3189
        %v3206 = vmul.f32 %v3140, %v3190
        %v3207 = vmul.f32 %v3143, %v3191
        %v3208 = vmul.f32 %v3148, %v3192
        %v3209 = vmul.f32 %v3151, %v3193
        %v3210 = vmul.f32 %v3156, %v3194
        %v3211 = vmul.f32 %v3159, %v3195
        %v3212 = vmul.f32 %v3164, %v3196
        %v3213 = vmul.f32 %v3167, %v3197
        %v3214 = vmul.f32 %v3172, %v3198
        %v3215 = vmul.f32 %v3175, %v3199
        %v3216 = vmul.f32 %v3180, %v3200
        %v3217 = vmul.f32 %v3183, %v3201
        %v3218 = vpack.c.bf16 %v3203, %v3202
        %v3219 = vpack.c.bf16 %v3205, %v3204
        %v3220 = vpack.c.bf16 %v3207, %v3206
        %v3221 = vpack.c.bf16 %v3209, %v3208
        %v3222 = vpack.c.bf16 %v3211, %v3210
        %v3223 = vpack.c.bf16 %v3213, %v3212
        %v3224 = vpack.c.bf16 %v3215, %v3214
        %v3225 = vpack.c.bf16 %v3217, %v3216
        %v3230 = vunpack.c.l.b16 %v898
        %v3231 = vunpack.c.l.b16 %v899
        %v3232 = vunpack.c.l.b16 %v900
        %v3233 = vunpack.c.l.b16 %v901
        %v3234 = vpack.c.b16 %v3231, %v3230
        %v3235 = vpack.c.b16 %v3233, %v3232
        %v3239 = vsel %vm1049, %v3218, 0
        %v3242 = vsel %vm1049, %v3219, 0
        %v3245 = vsel %vm1049, %v3220, 0
        %v3248 = vsel %vm1049, %v3221, 0
        %v3251 = vsel %vm1049, %v3222, 0
        %v3254 = vsel %vm1049, %v3223, 0
        %v3257 = vsel %vm1049, %v3224, 0
        %v3260 = vsel %vm1049, %v3225, 0
        %3262 = vmatprep.subr.bf16.mxu0 0
        %3263 = vmatpush1.bf16.msra.mxu0 %v3234
        %3264 = vmatprep.subr.bf16.mxu0 0
        %3265 = vmatpush1.bf16.msra.mxu0 %v3235
        %3266 = vmatprep.subr.bf16.mxu0 0
        %3267 = vmatpush1.bf16.msra.mxu0 0
        %3268 = vmatprep.subr.bf16.mxu0 0
        %3269 = vmatpush1.bf16.msra.mxu0 0
        %3270 = vmatprep.subr.bf16.mxu0 0
        %3271 = vmatpush1.bf16.msra.mxu0 0
        %3272 = vmatprep.subr.bf16.mxu0 0
        %3273 = vmatpush1.bf16.msra.mxu0 0
        %3274 = vmatprep.subr.bf16.mxu0 0
        %3275 = vmatpush1.bf16.msra.mxu0 0
        %3276 = vmatprep.subr.bf16.mxu0 0
        %3277 = vmatpush1.bf16.msra.mxu0 0
        %3278 = vmatprep.subr.bf16.mxu0 0
        %3279 = vmatpush1.bf16.msra.mxu0 0
        %3280 = vmatprep.subr.bf16.mxu0 0
        %3281 = vmatpush1.bf16.msra.mxu0 0
        %3282 = vmatprep.subr.bf16.mxu0 0
        %3283 = vmatpush1.bf16.msra.mxu0 0
        %3284 = vmatprep.subr.bf16.mxu0 0
        %3285 = vmatpush1.bf16.msra.mxu0 0
        %3286 = vmatprep.subr.bf16.mxu0 0
        %3287 = vmatpush1.bf16.msra.mxu0 0
        %3288 = vmatprep.subr.bf16.mxu0 0
        %3289 = vmatpush1.bf16.msra.mxu0 0
        %3290 = vmatprep.subr.bf16.mxu0 0
        %3291 = vmatpush1.bf16.msra.mxu0 0
        %3292 = vmatprep.subr.bf16.mxu0 0
        %3293 = vmatpush1.bf16.msra.mxu0 0
        %3294 = vmatprep.mubr.bf16.mxu0 0
        %3295 = vmatmul.mubr.bf16.gmra.mrb[0].mxu0 %v3239
        %v3296 = vpop.f32.mrb[0].mxu0
        %v3297 = vadd.f32 0.0, %v3296
        %v3298 = vpop.f32.mrb[0].mxu0
        %v3299 = vpop.f32.mrb[0].mxu0
        %v3300 = vadd.f32 0.0, %v3299
        %v3301 = vpop.f32.mrb[0].mxu0
        %3302 = vmatprep.mubr.bf16.mxu0 0
        %3303 = vmatmul.mubr.bf16.gmra.mrb[0].mxu0 %v3242
        %v3304 = vpop.f32.mrb[0].mxu0
        %v3305 = vadd.f32 0.0, %v3304
        %v3306 = vpop.f32.mrb[0].mxu0
        %v3307 = vpop.f32.mrb[0].mxu0
        %v3308 = vadd.f32 0.0, %v3307
        %v3309 = vpop.f32.mrb[0].mxu0
        %3310 = vmatprep.mubr.bf16.mxu0 0
        %3311 = vmatmul.mubr.bf16.gmra.mrb[0].mxu0 %v3245
        %v3312 = vpop.f32.mrb[0].mxu0
        %v3313 = vadd.f32 0.0, %v3312
        %v3314 = vpop.f32.mrb[0].mxu0
        %v3315 = vpop.f32.mrb[0].mxu0
        %v3316 = vadd.f32 0.0, %v3315
        %v3317 = vpop.f32.mrb[0].mxu0
        %3318 = vmatprep.mubr.bf16.mxu0 0
        %3319 = vmatmul.mubr.bf16.gmra.mrb[0].mxu0 %v3248
        %v3320 = vpop.f32.mrb[0].mxu0
        %v3321 = vadd.f32 0.0, %v3320
        %v3322 = vpop.f32.mrb[0].mxu0
        %v3323 = vpop.f32.mrb[0].mxu0
        %v3324 = vadd.f32 0.0, %v3323
        %v3325 = vpop.f32.mrb[0].mxu0
        %3326 = vmatprep.mubr.bf16.mxu0 0
        %3327 = vmatmul.mubr.bf16.gmra.mrb[0].mxu0 %v3251
        %v3328 = vpop.f32.mrb[0].mxu0
        %v3329 = vadd.f32 0.0, %v3328
        %v3330 = vpop.f32.mrb[0].mxu0
        %v3331 = vpop.f32.mrb[0].mxu0
        %v3332 = vadd.f32 0.0, %v3331
        %v3333 = vpop.f32.mrb[0].mxu0
        %3334 = vmatprep.mubr.bf16.mxu0 0
        %3335 = vmatmul.mubr.bf16.gmra.mrb[0].mxu0 %v3254
        %v3336 = vpop.f32.mrb[0].mxu0
        %v3337 = vadd.f32 0.0, %v3336
        %v3338 = vpop.f32.mrb[0].mxu0
        %v3339 = vpop.f32.mrb[0].mxu0
        %v3340 = vadd.f32 0.0, %v3339
        %v3341 = vpop.f32.mrb[0].mxu0
        %3342 = vmatprep.mubr.bf16.mxu0 0
        %3343 = vmatmul.mubr.bf16.gmra.mrb[0].mxu0 %v3257
        %v3344 = vpop.f32.mrb[0].mxu0
        %v3345 = vadd.f32 0.0, %v3344
        %v3346 = vpop.f32.mrb[0].mxu0
        %v3347 = vpop.f32.mrb[0].mxu0
        %v3348 = vadd.f32 0.0, %v3347
        %v3349 = vpop.f32.mrb[0].mxu0
        %3350 = vmatprep.mubr.bf16.mxu0 0
        %3351 = vmatmul.mubr.bf16.gmra.mrb[0].mxu0 %v3260
        %v3352 = vpop.f32.mrb[0].mxu0
        %v3353 = vadd.f32 0.0, %v3352
        %v3354 = vpop.f32.mrb[0].mxu0
        %v3355 = vpop.f32.mrb[0].mxu0
        %v3356 = vadd.f32 0.0, %v3355
        %v3357 = vpop.f32.mrb[0].mxu0
        %3358 = vdwg.mxu0
        %v3359 = vadd.f32 %v2584, %v3297
        %v3360 = vadd.f32 %v2585, %v3300
        %v3361 = vadd.f32 %v2586, %v3305
        %v3362 = vadd.f32 %v2587, %v3308
        %v3363 = vadd.f32 %v2588, %v3313
        %v3364 = vadd.f32 %v2589, %v3316
        %v3365 = vadd.f32 %v2590, %v3321
        %v3366 = vadd.f32 %v2591, %v3324
        %v3367 = vadd.f32 %v2592, %v3329
        %v3368 = vadd.f32 %v2593, %v3332
        %v3369 = vadd.f32 %v2594, %v3337
        %v3370 = vadd.f32 %v2595, %v3340
        %v3371 = vadd.f32 %v2596, %v3345
        %v3372 = vadd.f32 %v2597, %v3348
        %v3373 = vadd.f32 %v2598, %v3353
        %v3374 = vadd.f32 %v2599, %v3356
        %3375 = vrot.lane.b32.xlu0 %v961, 32
        %v3376 = vpop.permute.xlu0 %3375
        %3377 = vrot.lane.b32.xlu0 %v962, 32
        %v3378 = vpop.permute.xlu0 %3377
        %3379 = vrot.lane.b32.xlu0 %v963, 32
        %v3380 = vpop.permute.xlu0 %3379
        %3381 = vrot.lane.b32.xlu0 %v964, 32
        %v3382 = vpop.permute.xlu0 %3381
        %3383 = vrot.lane.b32.xlu0 %v965, 32
        %v3384 = vpop.permute.xlu0 %3383
        %3385 = vrot.lane.b32.xlu0 %v966, 32
        %v3386 = vpop.permute.xlu0 %3385
        %3387 = vrot.lane.b32.xlu0 %v967, 32
        %v3388 = vpop.permute.xlu0 %3387
        %3389 = vrot.lane.b32.xlu0 %v968, 32
        %v3390 = vpop.permute.xlu0 %3389
        %3391 = vrot.lane.b32.xlu0 %v1033, 32
        %v3392 = vpop.permute.xlu0 %3391
        %3393 = vrot.lane.b32.xlu0 %v1034, 32
        %v3394 = vpop.permute.xlu0 %3393
        %3395 = vrot.lane.b32.xlu0 %v1035, 32
        %v3396 = vpop.permute.xlu0 %3395
        %3397 = vrot.lane.b32.xlu0 %v1036, 32
        %v3398 = vpop.permute.xlu0 %3397
        %3399 = vrot.lane.b32.xlu0 %v1037, 32
        %v3400 = vpop.permute.xlu0 %3399
        %3401 = vrot.lane.b32.xlu0 %v1038, 32
        %v3402 = vpop.permute.xlu0 %3401
        %3403 = vrot.lane.b32.xlu0 %v1039, 32
        %v3404 = vpop.permute.xlu0 %3403
        %3405 = vrot.lane.b32.xlu0 %v1040, 32
        %v3406 = vpop.permute.xlu0 %3405
        %3407 = vrot.lane.b32.xlu0 %v1041, 32
        %v3408 = vpop.permute.xlu0 %3407
        %3409 = vrot.lane.b32.xlu0 %v1042, 32
        %v3410 = vpop.permute.xlu0 %3409
        %3411 = vrot.lane.b32.xlu0 %v1043, 32
        %v3412 = vpop.permute.xlu0 %3411
        %3413 = vrot.lane.b32.xlu0 %v1044, 32
        %v3414 = vpop.permute.xlu0 %3413
        %3415 = vrot.lane.b32.xlu0 %v1045, 32
        %v3416 = vpop.permute.xlu0 %3415
        %3417 = vrot.lane.b32.xlu0 %v1046, 32
        %v3418 = vpop.permute.xlu0 %3417
        %3419 = vrot.lane.b32.xlu0 %v1047, 32
        %v3420 = vpop.permute.xlu0 %3419
        %3421 = vrot.lane.b32.xlu0 %v1048, 32
        %v3422 = vpop.permute.xlu0 %3421
        %v3424 = vsel %vm1049, %v3376, 0
        %v3427 = vsel %vm1049, %v3378, 0
        %v3430 = vsel %vm1049, %v3380, 0
        %v3433 = vsel %vm1049, %v3382, 0
        %v3436 = vsel %vm1049, %v3384, 0
        %v3439 = vsel %vm1049, %v3386, 0
        %v3442 = vsel %vm1049, %v3388, 0
        %v3445 = vsel %vm1049, %v3390, 0
        %v3448 = vsel %vm1049, %v3392, 0
        %v3451 = vsel %vm1049, %v3394, 0
        %v3454 = vsel %vm1049, %v3396, 0
        %v3457 = vsel %vm1049, %v3398, 0
        %v3460 = vsel %vm1049, %v3400, 0
        %v3463 = vsel %vm1049, %v3402, 0
        %v3466 = vsel %vm1049, %v3404, 0
        %v3469 = vsel %vm1049, %v3406, 0
        %v3472 = vsel %vm1049, %v3408, 0
        %v3475 = vsel %vm1049, %v3410, 0
        %v3478 = vsel %vm1049, %v3412, 0
        %v3481 = vsel %vm1049, %v3414, 0
        %v3484 = vsel %vm1049, %v3416, 0
        %v3487 = vsel %vm1049, %v3418, 0
        %v3490 = vsel %vm1049, %v3420, 0
        %v3493 = vsel %vm1049, %v3422, 0
        %3495 = vmatprep.subr.bf16.mxu0 0
        %3496 = vmatpush1.bf16.xpose.msra.mxu0 %v3448
        %3497 = vmatprep.subr.bf16.mxu0 0
        %3498 = vmatpush1.bf16.xpose.msra.mxu0 %v3451
        %3499 = vmatprep.subr.bf16.mxu0 0
        %3500 = vmatpush1.bf16.xpose.msra.mxu0 %v3454
        %3501 = vmatprep.subr.bf16.mxu0 0
        %3502 = vmatpush1.bf16.xpose.msra.mxu0 %v3457
        %3503 = vmatprep.subr.bf16.mxu0 0
        %3504 = vmatpush1.bf16.xpose.msra.mxu0 %v3460
        %3505 = vmatprep.subr.bf16.mxu0 0
        %3506 = vmatpush1.bf16.xpose.msra.mxu0 %v3463
        %3507 = vmatprep.subr.bf16.mxu0 0
        %3508 = vmatpush1.bf16.xpose.msra.mxu0 %v3466
        %3509 = vmatprep.subr.bf16.mxu0 0
        %3510 = vmatpush1.bf16.xpose.msra.mxu0 %v3469
        %3511 = vmatprep.subr.bf16.mxu0 0
        %3512 = vmatpush1.bf16.xpose.msra.mxu0 %v3472
        %3513 = vmatprep.subr.bf16.mxu0 0
        %3514 = vmatpush1.bf16.xpose.msra.mxu0 %v3475
        %3515 = vmatprep.subr.bf16.mxu0 0
        %3516 = vmatpush1.bf16.xpose.msra.mxu0 %v3478
        %3517 = vmatprep.subr.bf16.mxu0 0
        %3518 = vmatpush1.bf16.xpose.msra.mxu0 %v3481
        %3519 = vmatprep.subr.bf16.mxu0 0
        %3520 = vmatpush1.bf16.xpose.msra.mxu0 %v3484
        %3521 = vmatprep.subr.bf16.mxu0 0
        %3522 = vmatpush1.bf16.xpose.msra.mxu0 %v3487
        %3523 = vmatprep.subr.bf16.mxu0 0
        %3524 = vmatpush1.bf16.xpose.msra.mxu0 %v3490
        %3525 = vmatprep.subr.bf16.mxu0 0
        %3526 = vmatpush1.bf16.xpose.msra.mxu0 %v3493
        %3527 = vmatprep.mubr.bf16.mxu0 0
        %3528 = vmatmul.mubr.bf16.gmra.mrb[0].mxu0 %v3424
        %v3529 = vpop.f32.mrb[0].mxu0
        %v3530 = vadd.f32 0.0, %v3529
        %v3531 = vpop.f32.mrb[0].mxu0
        %v3532 = vadd.f32 0.0, %v3531
        %v3533 = vpop.f32.mrb[0].mxu0
        %v3534 = vadd.f32 0.0, %v3533
        %v3535 = vpop.f32.mrb[0].mxu0
        %v3536 = vadd.f32 0.0, %v3535
        %3537 = vmatprep.mubr.bf16.mxu0 0
        %3538 = vmatmul.mubr.bf16.gmra.mrb[0].mxu0 %v3427
        %v3539 = vpop.f32.mrb[0].mxu0
        %v3540 = vadd.f32 0.0, %v3539
        %v3541 = vpop.f32.mrb[0].mxu0
        %v3542 = vadd.f32 0.0, %v3541
        %v3543 = vpop.f32.mrb[0].mxu0
        %v3544 = vadd.f32 0.0, %v3543
        %v3545 = vpop.f32.mrb[0].mxu0
        %v3546 = vadd.f32 0.0, %v3545
        %3547 = vmatprep.mubr.bf16.mxu0 0
        %3548 = vmatmul.mubr.bf16.gmra.mrb[0].mxu0 %v3430
        %v3549 = vpop.f32.mrb[0].mxu0
        %v3550 = vadd.f32 0.0, %v3549
        %v3551 = vpop.f32.mrb[0].mxu0
        %v3552 = vadd.f32 0.0, %v3551
        %v3553 = vpop.f32.mrb[0].mxu0
        %v3554 = vadd.f32 0.0, %v3553
        %v3555 = vpop.f32.mrb[0].mxu0
        %v3556 = vadd.f32 0.0, %v3555
        %3557 = vmatprep.mubr.bf16.mxu0 0
        %3558 = vmatmul.mubr.bf16.gmra.mrb[0].mxu0 %v3433
        %v3559 = vpop.f32.mrb[0].mxu0
        %v3560 = vadd.f32 0.0, %v3559
        %v3561 = vpop.f32.mrb[0].mxu0
        %v3562 = vadd.f32 0.0, %v3561
        %v3563 = vpop.f32.mrb[0].mxu0
        %v3564 = vadd.f32 0.0, %v3563
        %v3565 = vpop.f32.mrb[0].mxu0
        %v3566 = vadd.f32 0.0, %v3565
        %3567 = vmatprep.mubr.bf16.mxu0 0
        %3568 = vmatmul.mubr.bf16.gmra.mrb[0].mxu0 %v3436
        %v3569 = vpop.f32.mrb[0].mxu0
        %v3570 = vadd.f32 0.0, %v3569
        %v3571 = vpop.f32.mrb[0].mxu0
        %v3572 = vadd.f32 0.0, %v3571
        %v3573 = vpop.f32.mrb[0].mxu0
        %v3574 = vadd.f32 0.0, %v3573
        %v3575 = vpop.f32.mrb[0].mxu0
        %v3576 = vadd.f32 0.0, %v3575
        %3577 = vmatprep.mubr.bf16.mxu0 0
        %3578 = vmatmul.mubr.bf16.gmra.mrb[0].mxu0 %v3439
        %v3579 = vpop.f32.mrb[0].mxu0
        %v3580 = vadd.f32 0.0, %v3579
        %v3581 = vpop.f32.mrb[0].mxu0
        %v3582 = vadd.f32 0.0, %v3581
        %v3583 = vpop.f32.mrb[0].mxu0
        %v3584 = vadd.f32 0.0, %v3583
        %v3585 = vpop.f32.mrb[0].mxu0
        %v3586 = vadd.f32 0.0, %v3585
        %3587 = vmatprep.mubr.bf16.mxu0 0
        %3588 = vmatmul.mubr.bf16.gmra.mrb[0].mxu0 %v3442
        %v3589 = vpop.f32.mrb[0].mxu0
        %v3590 = vadd.f32 0.0, %v3589
        %v3591 = vpop.f32.mrb[0].mxu0
        %v3592 = vadd.f32 0.0, %v3591
        %v3593 = vpop.f32.mrb[0].mxu0
        %v3594 = vadd.f32 0.0, %v3593
        %v3595 = vpop.f32.mrb[0].mxu0
        %v3596 = vadd.f32 0.0, %v3595
        %3597 = vmatprep.mubr.bf16.mxu0 0
        %3598 = vmatmul.mubr.bf16.gmra.mrb[0].mxu0 %v3445
        %v3599 = vpop.f32.mrb[0].mxu0
        %v3600 = vadd.f32 0.0, %v3599
        %v3601 = vpop.f32.mrb[0].mxu0
        %v3602 = vadd.f32 0.0, %v3601
        %v3603 = vpop.f32.mrb[0].mxu0
        %v3604 = vadd.f32 0.0, %v3603
        %v3605 = vpop.f32.mrb[0].mxu0
        %v3606 = vadd.f32 0.0, %v3605
        %3607 = vdwg.mxu0
        %v3608 = vmax.f32 %v3530, %v3532
        %3609 = vmax.xlane.f32.xlu0 %v3608
        %v3610 = vpop.xlane.xlu0 %3609
        %v3611 = vmax.f32 %v3534, %v3536
        %3612 = vmax.xlane.f32.xlu0 %v3611
        %v3613 = vpop.xlane.xlu0 %3612
        %v3614 = vmax.f32 %v3540, %v3542
        %3615 = vmax.xlane.f32.xlu0 %v3614
        %v3616 = vpop.xlane.xlu0 %3615
        %v3617 = vmax.f32 %v3544, %v3546
        %3618 = vmax.xlane.f32.xlu0 %v3617
        %v3619 = vpop.xlane.xlu0 %3618
        %v3620 = vmax.f32 %v3550, %v3552
        %3621 = vmax.xlane.f32.xlu0 %v3620
        %v3622 = vpop.xlane.xlu0 %3621
        %v3623 = vmax.f32 %v3554, %v3556
        %3624 = vmax.xlane.f32.xlu0 %v3623
        %v3625 = vpop.xlane.xlu0 %3624
        %v3626 = vmax.f32 %v3560, %v3562
        %3627 = vmax.xlane.f32.xlu0 %v3626
        %v3628 = vpop.xlane.xlu0 %3627
        %v3629 = vmax.f32 %v3564, %v3566
        %3630 = vmax.xlane.f32.xlu0 %v3629
        %v3631 = vpop.xlane.xlu0 %3630
        %v3632 = vmax.f32 %v3570, %v3572
        %3633 = vmax.xlane.f32.xlu0 %v3632
        %v3634 = vpop.xlane.xlu0 %3633
        %v3635 = vmax.f32 %v3574, %v3576
        %3636 = vmax.xlane.f32.xlu0 %v3635
        %v3637 = vpop.xlane.xlu0 %3636
        %v3638 = vmax.f32 %v3580, %v3582
        %3639 = vmax.xlane.f32.xlu0 %v3638
        %v3640 = vpop.xlane.xlu0 %3639
        %v3641 = vmax.f32 %v3584, %v3586
        %3642 = vmax.xlane.f32.xlu0 %v3641
        %v3643 = vpop.xlane.xlu0 %3642
        %v3644 = vmax.f32 %v3590, %v3592
        %3645 = vmax.xlane.f32.xlu0 %v3644
        %v3646 = vpop.xlane.xlu0 %3645
        %v3647 = vmax.f32 %v3594, %v3596
        %3648 = vmax.xlane.f32.xlu0 %v3647
        %v3649 = vpop.xlane.xlu0 %3648
        %v3650 = vmax.f32 %v3600, %v3602
        %3651 = vmax.xlane.f32.xlu0 %v3650
        %v3652 = vpop.xlane.xlu0 %3651
        %v3653 = vmax.f32 %v3604, %v3606
        %3654 = vmax.xlane.f32.xlu0 %v3653
        %v3655 = vpop.xlane.xlu0 %3654
        %v3656 = vsub.f32 %v3530, %v3610
        %v3657 = vsub.f32 %v3532, %v3610
        %v3658 = vsub.f32 %v3534, %v3613
        %v3659 = vsub.f32 %v3536, %v3613
        %v3660 = vsub.f32 %v3540, %v3616
        %v3661 = vsub.f32 %v3542, %v3616
        %v3662 = vsub.f32 %v3544, %v3619
        %v3663 = vsub.f32 %v3546, %v3619
        %v3664 = vsub.f32 %v3550, %v3622
        %v3665 = vsub.f32 %v3552, %v3622
        %v3666 = vsub.f32 %v3554, %v3625
        %v3667 = vsub.f32 %v3556, %v3625
        %v3668 = vsub.f32 %v3560, %v3628
        %v3669 = vsub.f32 %v3562, %v3628
        %v3670 = vsub.f32 %v3564, %v3631
        %v3671 = vsub.f32 %v3566, %v3631
        %v3672 = vsub.f32 %v3570, %v3634
        %v3673 = vsub.f32 %v3572, %v3634
        %v3674 = vsub.f32 %v3574, %v3637
        %v3675 = vsub.f32 %v3576, %v3637
        %v3676 = vsub.f32 %v3580, %v3640
        %v3677 = vsub.f32 %v3582, %v3640
        %v3678 = vsub.f32 %v3584, %v3643
        %v3679 = vsub.f32 %v3586, %v3643
        %v3680 = vsub.f32 %v3590, %v3646
        %v3681 = vsub.f32 %v3592, %v3646
        %v3682 = vsub.f32 %v3594, %v3649
        %v3683 = vsub.f32 %v3596, %v3649
        %v3684 = vsub.f32 %v3600, %v3652
        %v3685 = vsub.f32 %v3602, %v3652
        %v3686 = vsub.f32 %v3604, %v3655
        %v3687 = vsub.f32 %v3606, %v3655
        %v3688 = vmul.f32 %v3656, 1.442695
        %v3689 = vpow.pop %v3688
        %v3690 = vmul.f32 %v3657, 1.442695
        %v3691 = vpow.pop %v3690
        %v3692 = vmul.f32 %v3658, 1.442695
        %v3693 = vpow.pop %v3692
        %v3694 = vmul.f32 %v3659, 1.442695
        %v3695 = vpow.pop %v3694
        %v3696 = vmul.f32 %v3660, 1.442695
        %v3697 = vpow.pop %v3696
        %v3698 = vmul.f32 %v3661, 1.442695
        %v3699 = vpow.pop %v3698
        %v3700 = vmul.f32 %v3662, 1.442695
        %v3701 = vpow.pop %v3700
        %v3702 = vmul.f32 %v3663, 1.442695
        %v3703 = vpow.pop %v3702
        %v3704 = vmul.f32 %v3664, 1.442695
        %v3705 = vpow.pop %v3704
        %v3706 = vmul.f32 %v3665, 1.442695
        %v3707 = vpow.pop %v3706
        %v3708 = vmul.f32 %v3666, 1.442695
        %v3709 = vpow.pop %v3708
        %v3710 = vmul.f32 %v3667, 1.442695
        %v3711 = vpow.pop %v3710
        %v3712 = vmul.f32 %v3668, 1.442695
        %v3713 = vpow.pop %v3712
        %v3714 = vmul.f32 %v3669, 1.442695
        %v3715 = vpow.pop %v3714
        %v3716 = vmul.f32 %v3670, 1.442695
        %v3717 = vpow.pop %v3716
        %v3718 = vmul.f32 %v3671, 1.442695
        %v3719 = vpow.pop %v3718
        %v3720 = vmul.f32 %v3672, 1.442695
        %v3721 = vpow.pop %v3720
        %v3722 = vmul.f32 %v3673, 1.442695
        %v3723 = vpow.pop %v3722
        %v3724 = vmul.f32 %v3674, 1.442695
        %v3725 = vpow.pop %v3724
        %v3726 = vmul.f32 %v3675, 1.442695
        %v3727 = vpow.pop %v3726
        %v3728 = vmul.f32 %v3676, 1.442695
        %v3729 = vpow.pop %v3728
        %v3730 = vmul.f32 %v3677, 1.442695
        %v3731 = vpow.pop %v3730
        %v3732 = vmul.f32 %v3678, 1.442695
        %v3733 = vpow.pop %v3732
        %v3734 = vmul.f32 %v3679, 1.442695
        %v3735 = vpow.pop %v3734
        %v3736 = vmul.f32 %v3680, 1.442695
        %v3737 = vpow.pop %v3736
        %v3738 = vmul.f32 %v3681, 1.442695
        %v3739 = vpow.pop %v3738
        %v3740 = vmul.f32 %v3682, 1.442695
        %v3741 = vpow.pop %v3740
        %v3742 = vmul.f32 %v3683, 1.442695
        %v3743 = vpow.pop %v3742
        %v3744 = vmul.f32 %v3684, 1.442695
        %v3745 = vpow.pop %v3744
        %v3746 = vmul.f32 %v3685, 1.442695
        %v3747 = vpow.pop %v3746
        %v3748 = vmul.f32 %v3686, 1.442695
        %v3749 = vpow.pop %v3748
        %v3750 = vmul.f32 %v3687, 1.442695
        %v3751 = vpow.pop %v3750
        %v3752 = vadd.f32 %v3689, %v3691
        %3753 = vadd.xlane.f32.xlu0 %v3752
        %v3754 = vpop.xlane.xlu0 %3753
        %v3755 = vadd.f32 %v3693, %v3695
        %3756 = vadd.xlane.f32.xlu0 %v3755
        %v3757 = vpop.xlane.xlu0 %3756
        %v3758 = vadd.f32 %v3697, %v3699
        %3759 = vadd.xlane.f32.xlu0 %v3758
        %v3760 = vpop.xlane.xlu0 %3759
        %v3761 = vadd.f32 %v3701, %v3703
        %3762 = vadd.xlane.f32.xlu0 %v3761
        %v3763 = vpop.xlane.xlu0 %3762
        %v3764 = vadd.f32 %v3705, %v3707
        %3765 = vadd.xlane.f32.xlu0 %v3764
        %v3766 = vpop.xlane.xlu0 %3765
        %v3767 = vadd.f32 %v3709, %v3711
        %3768 = vadd.xlane.f32.xlu0 %v3767
        %v3769 = vpop.xlane.xlu0 %3768
        %v3770 = vadd.f32 %v3713, %v3715
        %3771 = vadd.xlane.f32.xlu0 %v3770
        %v3772 = vpop.xlane.xlu0 %3771
        %v3773 = vadd.f32 %v3717, %v3719
        %3774 = vadd.xlane.f32.xlu0 %v3773
        %v3775 = vpop.xlane.xlu0 %3774
        %v3776 = vadd.f32 %v3721, %v3723
        %3777 = vadd.xlane.f32.xlu0 %v3776
        %v3778 = vpop.xlane.xlu0 %3777
        %v3779 = vadd.f32 %v3725, %v3727
        %3780 = vadd.xlane.f32.xlu0 %v3779
        %v3781 = vpop.xlane.xlu0 %3780
        %v3782 = vadd.f32 %v3729, %v3731
        %3783 = vadd.xlane.f32.xlu0 %v3782
        %v3784 = vpop.xlane.xlu0 %3783
        %v3785 = vadd.f32 %v3733, %v3735
        %3786 = vadd.xlane.f32.xlu0 %v3785
        %v3787 = vpop.xlane.xlu0 %3786
        %v3788 = vadd.f32 %v3737, %v3739
        %3789 = vadd.xlane.f32.xlu0 %v3788
        %v3790 = vpop.xlane.xlu0 %3789
        %v3791 = vadd.f32 %v3741, %v3743
        %3792 = vadd.xlane.f32.xlu0 %v3791
        %v3793 = vpop.xlane.xlu0 %3792
        %v3794 = vadd.f32 %v3745, %v3747
        %3795 = vadd.xlane.f32.xlu0 %v3794
        %v3796 = vpop.xlane.xlu0 %3795
        %v3797 = vadd.f32 %v3749, %v3751
        %3798 = vadd.xlane.f32.xlu0 %v3797
        %v3799 = vpop.xlane.xlu0 %3798
        %v3800 = vpack.c.bf16 %v3693, %v3689
        %v3801 = vpack.c.bf16 %v3695, %v3691
        %v3802 = vpack.c.bf16 %v3701, %v3697
        %v3803 = vpack.c.bf16 %v3703, %v3699
        %v3804 = vpack.c.bf16 %v3709, %v3705
        %v3805 = vpack.c.bf16 %v3711, %v3707
        %v3806 = vpack.c.bf16 %v3717, %v3713
        %v3807 = vpack.c.bf16 %v3719, %v3715
        %v3808 = vpack.c.bf16 %v3725, %v3721
        %v3809 = vpack.c.bf16 %v3727, %v3723
        %v3810 = vpack.c.bf16 %v3733, %v3729
        %v3811 = vpack.c.bf16 %v3735, %v3731
        %v3812 = vpack.c.bf16 %v3741, %v3737
        %v3813 = vpack.c.bf16 %v3743, %v3739
        %v3814 = vpack.c.bf16 %v3749, %v3745
        %v3815 = vpack.c.bf16 %v3751, %v3747
        %3816 = vrot.lane.b32.xlu0 %v1507, 32
        %v3817 = vpop.permute.xlu0 %3816
        %3818 = vrot.lane.b32.xlu0 %v1508, 32
        %v3819 = vpop.permute.xlu0 %3818
        %3820 = vrot.lane.b32.xlu0 %v1509, 32
        %v3821 = vpop.permute.xlu0 %3820
        %3822 = vrot.lane.b32.xlu0 %v1510, 32
        %v3823 = vpop.permute.xlu0 %3822
        %3824 = vrot.lane.b32.xlu0 %v1511, 32
        %v3825 = vpop.permute.xlu0 %3824
        %3826 = vrot.lane.b32.xlu0 %v1512, 32
        %v3827 = vpop.permute.xlu0 %3826
        %3828 = vrot.lane.b32.xlu0 %v1513, 32
        %v3829 = vpop.permute.xlu0 %3828
        %3830 = vrot.lane.b32.xlu0 %v1514, 32
        %v3831 = vpop.permute.xlu0 %3830
        %3832 = vrot.lane.b32.xlu0 %v1515, 32
        %v3833 = vpop.permute.xlu0 %3832
        %3834 = vrot.lane.b32.xlu0 %v1516, 32
        %v3835 = vpop.permute.xlu0 %3834
        %3836 = vrot.lane.b32.xlu0 %v1517, 32
        %v3837 = vpop.permute.xlu0 %3836
        %3838 = vrot.lane.b32.xlu0 %v1518, 32
        %v3839 = vpop.permute.xlu0 %3838
        %3840 = vrot.lane.b32.xlu0 %v1519, 32
        %v3841 = vpop.permute.xlu0 %3840
        %3842 = vrot.lane.b32.xlu0 %v1520, 32
        %v3843 = vpop.permute.xlu0 %3842
        %3844 = vrot.lane.b32.xlu0 %v1521, 32
        %v3845 = vpop.permute.xlu0 %3844
        %3846 = vrot.lane.b32.xlu0 %v1522, 32
        %v3847 = vpop.permute.xlu0 %3846
        %3864 = vmatprep.subr.bf16.mxu0 0
        %3865 = vmatpush1.bf16.msra.mxu0 %v3817
        %3866 = vmatprep.subr.bf16.mxu0 0
        %3867 = vmatpush1.bf16.msra.mxu0 %v3819
        %3868 = vmatprep.subr.bf16.mxu0 0
        %3869 = vmatpush1.bf16.msra.mxu0 %v3821
        %3870 = vmatprep.subr.bf16.mxu0 0
        %3871 = vmatpush1.bf16.msra.mxu0 %v3823
        %3872 = vmatprep.subr.bf16.mxu0 0
        %3873 = vmatpush1.bf16.msra.mxu0 %v3825
        %3874 = vmatprep.subr.bf16.mxu0 0
        %3875 = vmatpush1.bf16.msra.mxu0 %v3827
        %3876 = vmatprep.subr.bf16.mxu0 0
        %3877 = vmatpush1.bf16.msra.mxu0 %v3829
        %3878 = vmatprep.subr.bf16.mxu0 0
        %3879 = vmatpush1.bf16.msra.mxu0 %v3831
        %3880 = vmatprep.subr.bf16.mxu0 0
        %3881 = vmatpush1.bf16.msra.mxu0 %v3833
        %3882 = vmatprep.subr.bf16.mxu0 0
        %3883 = vmatpush1.bf16.msra.mxu0 %v3835
        %3884 = vmatprep.subr.bf16.mxu0 0
        %3885 = vmatpush1.bf16.msra.mxu0 %v3837
        %3886 = vmatprep.subr.bf16.mxu0 0
        %3887 = vmatpush1.bf16.msra.mxu0 %v3839
        %3888 = vmatprep.subr.bf16.mxu0 0
        %3889 = vmatpush1.bf16.msra.mxu0 %v3841
        %3890 = vmatprep.subr.bf16.mxu0 0
        %3891 = vmatpush1.bf16.msra.mxu0 %v3843
        %3892 = vmatprep.subr.bf16.mxu0 0
        %3893 = vmatpush1.bf16.msra.mxu0 %v3845
        %3894 = vmatprep.subr.bf16.mxu0 0
        %3895 = vmatpush1.bf16.msra.mxu0 %v3847
        %3896 = vmatprep.mubr.bf16.mxu0 %v3801
        %3897 = vmatmul.mubr.bf16.gmra.mrb[0].mxu0 %v3800
        %v3898 = vpop.f32.mrb[0].mxu0
        %v3899 = vadd.f32 0.0, %v3898
        %v3900 = vpop.f32.mrb[0].mxu0
        %v3901 = vpop.f32.mrb[0].mxu0
        %v3902 = vadd.f32 0.0, %v3901
        %v3903 = vpop.f32.mrb[0].mxu0
        %3904 = vmatprep.mubr.bf16.mxu0 %v3803
        %3905 = vmatmul.mubr.bf16.gmra.mrb[0].mxu0 %v3802
        %v3906 = vpop.f32.mrb[0].mxu0
        %v3907 = vadd.f32 0.0, %v3906
        %v3908 = vpop.f32.mrb[0].mxu0
        %v3909 = vpop.f32.mrb[0].mxu0
        %v3910 = vadd.f32 0.0, %v3909
        %v3911 = vpop.f32.mrb[0].mxu0
        %3912 = vmatprep.mubr.bf16.mxu0 %v3805
        %3913 = vmatmul.mubr.bf16.gmra.mrb[0].mxu0 %v3804
        %v3914 = vpop.f32.mrb[0].mxu0
        %v3915 = vadd.f32 0.0, %v3914
        %v3916 = vpop.f32.mrb[0].mxu0
        %v3917 = vpop.f32.mrb[0].mxu0
        %v3918 = vadd.f32 0.0, %v3917
        %v3919 = vpop.f32.mrb[0].mxu0
        %3920 = vmatprep.mubr.bf16.mxu0 %v3807
        %3921 = vmatmul.mubr.bf16.gmra.mrb[0].mxu0 %v3806
        %v3922 = vpop.f32.mrb[0].mxu0
        %v3923 = vadd.f32 0.0, %v3922
        %v3924 = vpop.f32.mrb[0].mxu0
        %v3925 = vpop.f32.mrb[0].mxu0
        %v3926 = vadd.f32 0.0, %v3925
        %v3927 = vpop.f32.mrb[0].mxu0
        %3928 = vmatprep.mubr.bf16.mxu0 %v3809
        %3929 = vmatmul.mubr.bf16.gmra.mrb[0].mxu0 %v3808
        %v3930 = vpop.f32.mrb[0].mxu0
        %v3931 = vadd.f32 0.0, %v3930
        %v3932 = vpop.f32.mrb[0].mxu0
        %v3933 = vpop.f32.mrb[0].mxu0
        %v3934 = vadd.f32 0.0, %v3933
        %v3935 = vpop.f32.mrb[0].mxu0
        %3936 = vmatprep.mubr.bf16.mxu0 %v3811
        %3937 = vmatmul.mubr.bf16.gmra.mrb[0].mxu0 %v3810
        %v3938 = vpop.f32.mrb[0].mxu0
        %v3939 = vadd.f32 0.0, %v3938
        %v3940 = vpop.f32.mrb[0].mxu0
        %v3941 = vpop.f32.mrb[0].mxu0
        %v3942 = vadd.f32 0.0, %v3941
        %v3943 = vpop.f32.mrb[0].mxu0
        %3944 = vmatprep.mubr.bf16.mxu0 %v3813
        %3945 = vmatmul.mubr.bf16.gmra.mrb[0].mxu0 %v3812
        %v3946 = vpop.f32.mrb[0].mxu0
        %v3947 = vadd.f32 0.0, %v3946
        %v3948 = vpop.f32.mrb[0].mxu0
        %v3949 = vpop.f32.mrb[0].mxu0
        %v3950 = vadd.f32 0.0, %v3949
        %v3951 = vpop.f32.mrb[0].mxu0
        %3952 = vmatprep.mubr.bf16.mxu0 %v3815
        %3953 = vmatmul.mubr.bf16.gmra.mrb[0].mxu0 %v3814
        %v3954 = vpop.f32.mrb[0].mxu0
        %v3955 = vadd.f32 0.0, %v3954
        %v3956 = vpop.f32.mrb[0].mxu0
        %v3957 = vpop.f32.mrb[0].mxu0
        %v3958 = vadd.f32 0.0, %v3957
        %v3959 = vpop.f32.mrb[0].mxu0
        %3960 = vdwg.mxu0
        %v3961 = vrcp.pop %v3754
        %v3962 = vrcp.pop %v3757
        %v3963 = vrcp.pop %v3760
        %v3964 = vrcp.pop %v3763
        %v3965 = vrcp.pop %v3766
        %v3966 = vrcp.pop %v3769
        %v3967 = vrcp.pop %v3772
        %v3968 = vrcp.pop %v3775
        %v3969 = vrcp.pop %v3778
        %v3970 = vrcp.pop %v3781
        %v3971 = vrcp.pop %v3784
        %v3972 = vrcp.pop %v3787
        %v3973 = vrcp.pop %v3790
        %v3974 = vrcp.pop %v3793
        %v3975 = vrcp.pop %v3796
        %v3976 = vrcp.pop %v3799
        %v3977 = vmul.f32 %v3899, %v3961
        %v3978 = vmul.f32 %v3902, %v3962
        %v3979 = vmul.f32 %v3907, %v3963
        %v3980 = vmul.f32 %v3910, %v3964
        %v3981 = vmul.f32 %v3915, %v3965
        %v3982 = vmul.f32 %v3918, %v3966
        %v3983 = vmul.f32 %v3923, %v3967
        %v3984 = vmul.f32 %v3926, %v3968
        %v3985 = vmul.f32 %v3931, %v3969
        %v3986 = vmul.f32 %v3934, %v3970
        %v3987 = vmul.f32 %v3939, %v3971
        %v3988 = vmul.f32 %v3942, %v3972
        %v3989 = vmul.f32 %v3947, %v3973
        %v3990 = vmul.f32 %v3950, %v3974
        %v3991 = vmul.f32 %v3955, %v3975
        %v3992 = vmul.f32 %v3958, %v3976
        %v3993 = vpack.c.bf16 %v3978, %v3977
        %v3994 = vpack.c.bf16 %v3980, %v3979
        %v3995 = vpack.c.bf16 %v3982, %v3981
        %v3996 = vpack.c.bf16 %v3984, %v3983
        %v3997 = vpack.c.bf16 %v3986, %v3985
        %v3998 = vpack.c.bf16 %v3988, %v3987
        %v3999 = vpack.c.bf16 %v3990, %v3989
        %v4000 = vpack.c.bf16 %v3992, %v3991
        %v4005 = vunpack.c.l.b16 %v902
        %v4006 = vunpack.c.l.b16 %v903
        %v4007 = vunpack.c.l.b16 %v904
        %v4008 = vunpack.c.l.b16 %v905
        %v4009 = vpack.c.b16 %v4006, %v4005
        %v4010 = vpack.c.b16 %v4008, %v4007
        %v4014 = vsel %vm1049, %v3993, 0
        %v4017 = vsel %vm1049, %v3994, 0
        %v4020 = vsel %vm1049, %v3995, 0
        %v4023 = vsel %vm1049, %v3996, 0
        %v4026 = vsel %vm1049, %v3997, 0
        %v4029 = vsel %vm1049, %v3998, 0
        %v4032 = vsel %vm1049, %v3999, 0
        %v4035 = vsel %vm1049, %v4000, 0
        %4037 = vmatprep.subr.bf16.mxu0 0
        %4038 = vmatpush1.bf16.msra.mxu0 %v4009
        %4039 = vmatprep.subr.bf16.mxu0 0
        %4040 = vmatpush1.bf16.msra.mxu0 %v4010
        %4041 = vmatprep.subr.bf16.mxu0 0
        %4042 = vmatpush1.bf16.msra.mxu0 0
        %4043 = vmatprep.subr.bf16.mxu0 0
        %4044 = vmatpush1.bf16.msra.mxu0 0
        %4045 = vmatprep.subr.bf16.mxu0 0
        %4046 = vmatpush1.bf16.msra.mxu0 0
        %4047 = vmatprep.subr.bf16.mxu0 0
        %4048 = vmatpush1.bf16.msra.mxu0 0
        %4049 = vmatprep.subr.bf16.mxu0 0
        %4050 = vmatpush1.bf16.msra.mxu0 0
        %4051 = vmatprep.subr.bf16.mxu0 0
        %4052 = vmatpush1.bf16.msra.mxu0 0
        %4053 = vmatprep.subr.bf16.mxu0 0
        %4054 = vmatpush1.bf16.msra.mxu0 0
        %4055 = vmatprep.subr.bf16.mxu0 0
        %4056 = vmatpush1.bf16.msra.mxu0 0
        %4057 = vmatprep.subr.bf16.mxu0 0
        %4058 = vmatpush1.bf16.msra.mxu0 0
        %4059 = vmatprep.subr.bf16.mxu0 0
        %4060 = vmatpush1.bf16.msra.mxu0 0
        %4061 = vmatprep.subr.bf16.mxu0 0
        %4062 = vmatpush1.bf16.msra.mxu0 0
        %4063 = vmatprep.subr.bf16.mxu0 0
        %4064 = vmatpush1.bf16.msra.mxu0 0
        %4065 = vmatprep.subr.bf16.mxu0 0
        %4066 = vmatpush1.bf16.msra.mxu0 0
        %4067 = vmatprep.subr.bf16.mxu0 0
        %4068 = vmatpush1.bf16.msra.mxu0 0
        %4069 = vmatprep.mubr.bf16.mxu0 0
        %4070 = vmatmul.mubr.bf16.gmra.mrb[0].mxu0 %v4014
        %v4071 = vpop.f32.mrb[0].mxu0
        %v4072 = vadd.f32 0.0, %v4071
        %v4073 = vpop.f32.mrb[0].mxu0
        %v4074 = vpop.f32.mrb[0].mxu0
        %v4075 = vadd.f32 0.0, %v4074
        %v4076 = vpop.f32.mrb[0].mxu0
        %4077 = vmatprep.mubr.bf16.mxu0 0
        %4078 = vmatmul.mubr.bf16.gmra.mrb[0].mxu0 %v4017
        %v4079 = vpop.f32.mrb[0].mxu0
        %v4080 = vadd.f32 0.0, %v4079
        %v4081 = vpop.f32.mrb[0].mxu0
        %v4082 = vpop.f32.mrb[0].mxu0
        %v4083 = vadd.f32 0.0, %v4082
        %v4084 = vpop.f32.mrb[0].mxu0
        %4085 = vmatprep.mubr.bf16.mxu0 0
        %4086 = vmatmul.mubr.bf16.gmra.mrb[0].mxu0 %v4020
        %v4087 = vpop.f32.mrb[0].mxu0
        %v4088 = vadd.f32 0.0, %v4087
        %v4089 = vpop.f32.mrb[0].mxu0
        %v4090 = vpop.f32.mrb[0].mxu0
        %v4091 = vadd.f32 0.0, %v4090
        %v4092 = vpop.f32.mrb[0].mxu0
        %4093 = vmatprep.mubr.bf16.mxu0 0
        %4094 = vmatmul.mubr.bf16.gmra.mrb[0].mxu0 %v4023
        %v4095 = vpop.f32.mrb[0].mxu0
        %v4096 = vadd.f32 0.0, %v4095
        %v4097 = vpop.f32.mrb[0].mxu0
        %v4098 = vpop.f32.mrb[0].mxu0
        %v4099 = vadd.f32 0.0, %v4098
        %v4100 = vpop.f32.mrb[0].mxu0
        %4101 = vmatprep.mubr.bf16.mxu0 0
        %4102 = vmatmul.mubr.bf16.gmra.mrb[0].mxu0 %v4026
        %v4103 = vpop.f32.mrb[0].mxu0
        %v4104 = vadd.f32 0.0, %v4103
        %v4105 = vpop.f32.mrb[0].mxu0
        %v4106 = vpop.f32.mrb[0].mxu0
        %v4107 = vadd.f32 0.0, %v4106
        %v4108 = vpop.f32.mrb[0].mxu0
        %4109 = vmatprep.mubr.bf16.mxu0 0
        %4110 = vmatmul.mubr.bf16.gmra.mrb[0].mxu0 %v4029
        %v4111 = vpop.f32.mrb[0].mxu0
        %v4112 = vadd.f32 0.0, %v4111
        %v4113 = vpop.f32.mrb[0].mxu0
        %v4114 = vpop.f32.mrb[0].mxu0
        %v4115 = vadd.f32 0.0, %v4114
        %v4116 = vpop.f32.mrb[0].mxu0
        %4117 = vmatprep.mubr.bf16.mxu0 0
        %4118 = vmatmul.mubr.bf16.gmra.mrb[0].mxu0 %v4032
        %v4119 = vpop.f32.mrb[0].mxu0
        %v4120 = vadd.f32 0.0, %v4119
        %v4121 = vpop.f32.mrb[0].mxu0
        %v4122 = vpop.f32.mrb[0].mxu0
        %v4123 = vadd.f32 0.0, %v4122
        %v4124 = vpop.f32.mrb[0].mxu0
        %4125 = vmatprep.mubr.bf16.mxu0 0
        %4126 = vmatmul.mubr.bf16.gmra.mrb[0].mxu0 %v4035
        %v4127 = vpop.f32.mrb[0].mxu0
        %v4128 = vadd.f32 0.0, %v4127
        %v4129 = vpop.f32.mrb[0].mxu0
        %v4130 = vpop.f32.mrb[0].mxu0
        %v4131 = vadd.f32 0.0, %v4130
        %v4132 = vpop.f32.mrb[0].mxu0
        %4133 = vdwg.mxu0
        %v4134 = vadd.f32 %v3359, %v4072
        %v4135 = vadd.f32 %v3360, %v4075
        %v4136 = vadd.f32 %v3361, %v4080
        %v4137 = vadd.f32 %v3362, %v4083
        %v4138 = vadd.f32 %v3363, %v4088
        %v4139 = vadd.f32 %v3364, %v4091
        %v4140 = vadd.f32 %v3365, %v4096
        %v4141 = vadd.f32 %v3366, %v4099
        %v4142 = vadd.f32 %v3367, %v4104
        %v4143 = vadd.f32 %v3368, %v4107
        %v4144 = vadd.f32 %v3369, %v4112
        %v4145 = vadd.f32 %v3370, %v4115
        %v4146 = vadd.f32 %v3371, %v4120
        %v4147 = vadd.f32 %v3372, %v4123
        %v4148 = vadd.f32 %v3373, %v4128
        %v4149 = vadd.f32 %v3374, %v4131
        %4150 = vst [vmem:[%s791] sm:$0xff] %v4134
        %4151 = vst [vmem:[%s791 + $0x8] sm:$0xff] %v4135
        %4152 = vst [vmem:[%s791 + $0x10] sm:$0xff] %v4136
        %4153 = vst [vmem:[%s791 + $0x18] sm:$0xff] %v4137
        %4154 = vst [vmem:[%s791 + $0x20] sm:$0xff] %v4138
        %4155 = vst [vmem:[%s791 + $0x28] sm:$0xff] %v4139
        %4156 = vst [vmem:[%s791 + $0x30] sm:$0xff] %v4140
        %4157 = vst [vmem:[%s791 + $0x38] sm:$0xff] %v4141
        %4158 = vst [vmem:[%s791 + $0x40] sm:$0xff] %v4142
        %4159 = vst [vmem:[%s791 + $0x48] sm:$0xff] %v4143
        %4160 = vst [vmem:[%s791 + $0x50] sm:$0xff] %v4144
        %4161 = vst [vmem:[%s791 + $0x58] sm:$0xff] %v4145
        %4162 = vst [vmem:[%s791 + $0x60] sm:$0xff] %v4146
        %4163 = vst [vmem:[%s791 + $0x68] sm:$0xff] %v4147
        %4164 = vst [vmem:[%s791 + $0x70] sm:$0xff] %v4148
        %4165 = vst [vmem:[%s791 + $0x78] sm:$0xff] %v4149
        %s4166 = smul.u32 16, %s22
        %p4167 = scmp.lt.s32.totalorder %s21, 1
        %s4168 = scalar_select %p4167, %s21, 1
        %p4169 = scmp.lt.s32.totalorder %s4166, 31
        %s4170 = scalar_select %p4169, %s4166, 31
        %s4171 = smul.addr %s4168, 32
        %s4172 = sadd.s32 %s4170, %s4171
        %s4173 = smul.addr %s4172, 8
        %s4174 = scalar_lea.vmem %s6, %s4173
        // Predicated region
        $region168: #{transformer_forward.7} parent=154 // pred_check
          %p4175 = pneg %p199
        $region169: #{transformer_forward.7} parent=154 // pred_check_branch
          %4177 = sbr.rel (%p4175) target = $region171
        $region170: #{transformer_forward.7} parent=154 // pred_region
          %s4178 = smul.u32 16, %s22
        $region171: #{transformer_forward.7} parent=154 // pred_fallthru
          _
      $region155: #{transformer_forward.7} parent=5 // pred_fallthru
        _
      %p4179 = scmp.le.s32.totalorder 2, %s12
      // Predicated region
      $region172: #{transformer_forward.7} parent=5 // pred_check
        %p4180 = pneg %p4179
      $region173: #{transformer_forward.7} parent=5 // pred_check_branch
        %4182 = sbr.rel (%p4180) target = $region175
      $region174: #{transformer_forward.7} parent=5 // pred_region
        %s4183 = ssub.s32 %s12, 2
        // Predicated region
        $region176: #{transformer_forward.7} parent=174 // pred_check
          %p4184 = pneg %p205
        $region177: #{transformer_forward.7} parent=174 // pred_check_branch
          %4186 = sbr.rel (%p4184) target = $region179
        $region178: #{transformer_forward.7} parent=174 // pred_region
          %s4187 = smul.u32 16, %s24
          %p4188 = scmp.lt.s32.totalorder %s23, 1
          %s4189 = scalar_select %p4188, %s23, 1
          %p4190 = scmp.lt.s32.totalorder %s4187, 31
          %s4191 = scalar_select %p4190, %s4187, 31
          %s4192 = smul.addr %s4189, 32
          %s4193 = sadd.s32 %s4191, %s4192
          %s4194 = smul.addr %s4193, 8
          %s4195 = scalar_lea.vmem %s6, %s4194
        $region179: #{transformer_forward.7} parent=174 // pred_fallthru
          _
      $region175: #{transformer_forward.7} parent=5 // pred_fallthru
        _
    $region6: #{transformer_forward.7} parent=1 // loop_footer
      %s16 = sadd.s32 1, %s12
    $region7: #{transformer_forward.7} parent=1 // loop_footer_branch
      %11 = sbr.rel target = $region3
    $region8: #{transformer_forward.7} parent=1 // loop_exit
      _

</llo_original>
